<compile_context>
chip_gen: v7x
topology: tpu7x:2x2x1
jax: 0.10.0
libtpu: 0.0.40
codegen_flags: <defaults>
</compile_context>

<pallas_src>
import functools

import jax
import jax.numpy as jnp
from jax import lax
from jax.experimental import pallas as pl
from jax.experimental.pallas import tpu as pltpu

BN_EPS = 1e-5
LANE = 128
MATMUL_DTYPE = jnp.float32   # set to jnp.bfloat16 for 2x MXU throughput (looser tol)


# --------------------------- kernels ---------------------------

def _conv1_kernel(p_ref, w_ref, b_ref, o_ref):
    # One fused matmul per tile: (tm, 9*Cin_pad) @ (9*Cin_pad, Cp) + bias.
    o_ref[...] = (jnp.dot(p_ref[...], w_ref[...],
                          preferred_element_type=jnp.float32) + b_ref[...])


def _bn1_relu_conv2_kernel(c1_ref, s1_ref, t1_ref, w2_ref, b2_ref, o_ref, h_scr,
                           *, width, pad):
    """Per image: h = relu(bn1(conv1)); conv2(h) via 9 shifted K=Cp matmuls."""
    hw = c1_ref.shape[1]
    cp = c1_ref.shape[2]

    # Flat zero-haloed buffer: [pad | h (hw rows) | pad].  Only the halos are
    # zeroed (no full-buffer memset); all stores are 128-lane dense.
    h_scr[0:pad, :] = jnp.zeros((pad, cp), jnp.float32)
    h_scr[pad + hw:pad + hw + pad, :] = jnp.zeros((pad, cp), jnp.float32)
    h_scr[pad:pad + hw, :] = jnp.maximum(
        c1_ref[0] * s1_ref[...] + t1_ref[...], 0.0)

    # Column-within-row index of each flattened pixel (hoisted out of the loop).
    col = lax.broadcasted_iota(jnp.int32, (hw, 1), 0) % width
    not_first_col = col != 0            # tap looks one pixel to the left
    not_last_col = col != (width - 1)   # tap looks one pixel to the right

    for ky in range(3):
        for kx in range(3):
            delta = (ky - 1) * width + (kx - 1)
            # Contiguous sublane-offset slice = shifted image; the H border is
            # covered by the zero halo, the W border by the column mask.
            lhs = h_scr[pad + delta:pad + delta + hw, :]
            if kx == 0:
                lhs = jnp.where(not_first_col, lhs, 0.0)
            elif kx == 2:
                lhs = jnp.where(not_last_col, lhs, 0.0)
            tap = jnp.dot(lhs.astype(MATMUL_DTYPE), w2_ref[ky * 3 + kx],
                          preferred_element_type=jnp.float32)
            if ky == 0 and kx == 0:
                o_ref[0, :, :] = tap                 # init from first tap
            else:
                o_ref[0, :, :] = o_ref[0, :, :] + tap
    o_ref[0, :, :] = o_ref[0, :, :] + b2_ref[...]


def _bn2_add_relu_kernel(c2_ref, id_ref, s2_ref, t2_ref, o_ref):
    o_ref[...] = jnp.maximum(
        c2_ref[...] * s2_ref[...] + t2_ref[...] + id_ref[...], 0.0)


# --------------------------- wrapper ---------------------------

def _pick_tile(m):
    for t in (256, 128, 64, 32, 16, 8):
        if m % t == 0:
            return t
    return m


@jax.jit
def unet_conv2_forward(x_nchw, params):
    """x_nchw: (N, Cin, H, W) float32.  Returns (N, Cout, H, W)."""
    x = jnp.transpose(x_nchw, (0, 2, 3, 1)).astype(jnp.float32)     # NHWC
    N, H, W, Cin = x.shape
    Cout = params["w1"].shape[0]

    Cp = ((Cout + LANE - 1) // LANE) * LANE                         # lane-padded C
    M = N * H * W
    HW = H * W
    K1 = 9 * Cin
    K1p = ((K1 + LANE - 1) // LANE) * LANE                          # lane-padded K
    pad_c = Cp - Cout

    # ---- conv1 im2col in the wrapper (cheap XLA gather; K fused to 9*Cin) ----
    xpad = jnp.pad(x, ((0, 0), (1, 1), (1, 1), (0, 0)))
    cols = [xpad[:, ky:ky + H, kx:kx + W, :]
            for ky in range(3) for kx in range(3)]
    p1 = jnp.concatenate(cols, axis=-1).reshape(M, K1)
    p1 = jnp.pad(p1, ((0, 0), (0, K1p - K1))).astype(MATMUL_DTYPE)

    # ---- weights / BN params, channel-padded to Cp ----
    w1 = jnp.transpose(params["w1"], (2, 3, 1, 0)).reshape(K1, Cout)    # (ky,kx,ci)->co
    w1 = jnp.pad(w1, ((0, K1p - K1), (0, pad_c))).astype(MATMUL_DTYPE)
    b1 = jnp.pad(params["b1"], (0, pad_c)).reshape(1, Cp).astype(jnp.float32)

    w2 = jnp.transpose(params["w2"], (2, 3, 1, 0))                       # (3,3,ci,co)
    w2 = jnp.pad(w2, ((0, 0), (0, 0), (0, pad_c), (0, pad_c)))
    w2 = w2.reshape(9, Cp, Cp).astype(MATMUL_DTYPE)
    b2 = jnp.pad(params["b2"], (0, pad_c)).reshape(1, Cp).astype(jnp.float32)

    g1 = jnp.pad(params["g1"], (0, pad_c)).reshape(1, Cp)
    be1 = jnp.pad(params["be1"], (0, pad_c)).reshape(1, Cp)
    g2 = jnp.pad(params["g2"], (0, pad_c)).reshape(1, Cp)
    be2 = jnp.pad(params["be2"], (0, pad_c)).reshape(1, Cp)

    cparams = pltpu.CompilerParams(dimension_semantics=("parallel",),
                                   vmem_limit_bytes=32 * 1024 * 1024)
    tm = _pick_tile(M)

    # ---------------- pass 1: conv1 (+bias) ----------------
    conv1 = pl.pallas_call(
        _conv1_kernel,
        out_shape=jax.ShapeDtypeStruct((M, Cp), jnp.float32),
        grid=(M // tm,),
        in_specs=[pl.BlockSpec((tm, K1p), lambda i: (i, 0)),
                  pl.BlockSpec((K1p, Cp), lambda i: (0, 0)),
                  pl.BlockSpec((1, Cp), lambda i: (0, 0))],
        out_specs=pl.BlockSpec((tm, Cp), lambda i: (i, 0)),
        compiler_params=cparams,
        cost_estimate=pl.CostEstimate(
            flops=2 * M * K1p * Cp, transcendentals=0,
            bytes_accessed=4 * (M * K1p + K1p * Cp + M * Cp)),
    )(p1, w1, b1)

    # ---- bn1 batch statistics (training mode), centered variance ----
    # TODO(synk): for very large N*H*W fold this cross-tile reduction into the
    # conv1 kernel as a pl.when-finalized SMEM/VMEM accumulator.
    mean1 = jnp.mean(conv1, axis=0, keepdims=True)
    var1 = jnp.mean(jnp.square(conv1 - mean1), axis=0, keepdims=True)
    scale1 = (g1 * lax.rsqrt(var1 + BN_EPS)).astype(jnp.float32)
    shift1 = (be1 - mean1 * scale1).astype(jnp.float32)

    # ---------------- pass 2: bn1 + ReLU + conv2 (+bias), per image ----------------
    halo = ((W + 1 + 7) // 8) * 8        # >= W+1, multiple of 8
    kernel_b = functools.partial(_bn1_relu_conv2_kernel, width=W, pad=halo)
    conv2 = pl.pallas_call(
        kernel_b,
        out_shape=jax.ShapeDtypeStruct((N, HW, Cp), jnp.float32),
        grid=(N,),
        in_specs=[pl.BlockSpec((1, HW, Cp), lambda i: (i, 0, 0)),
                  pl.BlockSpec((1, Cp), lambda i: (0, 0)),
                  pl.BlockSpec((1, Cp), lambda i: (0, 0)),
                  pl.BlockSpec((9, Cp, Cp), lambda i: (0, 0, 0)),
                  pl.BlockSpec((1, Cp), lambda i: (0, 0))],
        out_specs=pl.BlockSpec((1, HW, Cp), lambda i: (i, 0, 0)),
        scratch_shapes=[pltpu.VMEM((HW + 2 * halo, Cp), jnp.float32)],
        compiler_params=cparams,
        cost_estimate=pl.CostEstimate(
            flops=2 * 9 * M * Cp * Cp, transcendentals=0,
            bytes_accessed=4 * (2 * M * Cp + 9 * Cp * Cp)),
    )(conv1.reshape(N, HW, Cp), scale1, shift1, w2, b2)
    conv2 = conv2.reshape(M, Cp)

    # ---- bn2 batch statistics ----
    mean2 = jnp.mean(conv2, axis=0, keepdims=True)
    var2 = jnp.mean(jnp.square(conv2 - mean2), axis=0, keepdims=True)
    scale2 = (g2 * lax.rsqrt(var2 + BN_EPS)).astype(jnp.float32)
    shift2 = (be2 - mean2 * scale2).astype(jnp.float32)

    # ---------------- pass 3: bn2 + residual + ReLU ----------------
    out_flat = pl.pallas_call(
        _bn2_add_relu_kernel,
        out_shape=jax.ShapeDtypeStruct((M, Cp), jnp.float32),
        grid=(M // tm,),
        in_specs=[pl.BlockSpec((tm, Cp), lambda i: (i, 0)),
                  pl.BlockSpec((tm, Cp), lambda i: (i, 0)),
                  pl.BlockSpec((1, Cp), lambda i: (0, 0)),
                  pl.BlockSpec((1, Cp), lambda i: (0, 0))],
        out_specs=pl.BlockSpec((tm, Cp), lambda i: (i, 0)),
        compiler_params=cparams,
    )(conv2, conv1, scale2, shift2)

    out = out_flat.reshape(N, H, W, Cp)[..., :Cout]
    return jnp.transpose(out, (0, 3, 1, 2))                          # -> NCHW


# ---------------- pure-JAX reference (NCHW, for correctness check) ----------------

def _conv3x3_ref(x, w, b):
    y = lax.conv_general_dilated(
        x, w, window_strides=(1, 1), padding=((1, 1), (1, 1)),
        dimension_numbers=("NCHW", "OIHW", "NCHW"))
    return y + b[None, :, None, None]


def _bn_ref(x, gamma, beta):
    mean = jnp.mean(x, axis=(0, 2, 3), keepdims=True)
    var = jnp.mean(jnp.square(x - mean), axis=(0, 2, 3), keepdims=True)
    return ((x - mean) * lax.rsqrt(var + BN_EPS)
            * gamma[None, :, None, None] + beta[None, :, None, None])


def unet_conv2_reference(x, p):
    h = _conv3x3_ref(x, p["w1"], p["b1"])
    identity = h
    h = jnp.maximum(_bn_ref(h, p["g1"], p["be1"]), 0.0)
    h = _conv3x3_ref(h, p["w2"], p["b2"])
    h = _bn_ref(h, p["g2"], p["be2"])
    return jnp.maximum(h + identity, 0.0)


if __name__ == "__main__":
    in_ch, out_ch = 4, 8
    N, H, W = 2, 16, 16

    key = jax.random.PRNGKey(0)
    k0, k1, k2, k3, k4, k5, k6, k7, k8 = jax.random.split(key, 9)

    x = jax.random.normal(k0, (N, in_ch, H, W), jnp.float32)
    params = {
        "w1": jax.random.normal(k1, (out_ch, in_ch, 3, 3), jnp.float32) * 0.1,
        "b1": jax.random.normal(k2, (out_ch,), jnp.float32) * 0.1,
        "g1": 1.0 + 0.1 * jax.random.normal(k3, (out_ch,), jnp.float32),
        "be1": 0.1 * jax.random.normal(k4, (out_ch,), jnp.float32),
        "w2": jax.random.normal(k5, (out_ch, out_ch, 3, 3), jnp.float32) * 0.1,
        "b2": jax.random.normal(k6, (out_ch,), jnp.float32) * 0.1,
        "g2": 1.0 + 0.1 * jax.random.normal(k7, (out_ch,), jnp.float32),
        "be2": 0.1 * jax.random.normal(k8, (out_ch,), jnp.float32),
    }

    out = jax.block_until_ready(unet_conv2_forward(x, params))
    ref = jax.block_until_ready(unet_conv2_reference(x, params))

    assert out.shape == (N, out_ch, H, W), out.shape
    max_err = float(jnp.max(jnp.abs(out - ref)))
    assert jnp.allclose(out, ref, atol=1e-4, rtol=1e-4), max_err
    print("KERNEL_OK")
</pallas_src>

<mosaic_0001>
module attributes {stable_mosaic.version = 11 : i64} {
  func.func @_conv1_kernel(%arg0: i32, %arg1: memref<256x128xf32, #tpu.memory_space<vmem>>, %arg2: memref<128x128xf32, #tpu.memory_space<vmem>>, %arg3: memref<1x128xf32, #tpu.memory_space<vmem>>, %arg4: memref<256x128xf32, #tpu.memory_space<vmem>>) attributes {dimension_semantics = [#tpu.dimension_semantics<parallel>], iteration_bounds = array<i64: 2>, scalar_prefetch = 0 : i64, scratch_operands = 0 : i64, tpu.core_type = #tpu.core_type<tc>, window_params = [{transform_indices = @transform_0, window_bounds = array<i64: 256, 128>}, {pipeline_mode = #tpu.pipeline_mode<synchronous>, transform_indices = @transform_1, window_bounds = array<i64: 128, 128>}, {pipeline_mode = #tpu.pipeline_mode<synchronous>, transform_indices = @transform_2, window_bounds = array<i64: 1, 128>}, {transform_indices = @transform_3, window_bounds = array<i64: 256, 128>}]} {
    %c0 = arith.constant 0 : index
    %c0_0 = arith.constant 0 : index
    %0 = vector.load %arg1[%c0, %c0_0] : memref<256x128xf32, #tpu.memory_space<vmem>>, vector<256x128xf32>
    %c0_1 = arith.constant 0 : index
    %c0_2 = arith.constant 0 : index
    %1 = vector.load %arg2[%c0_1, %c0_2] : memref<128x128xf32, #tpu.memory_space<vmem>>, vector<128x128xf32>
    %cst = arith.constant dense<0.000000e+00> : vector<256x128xf32>
    %2 = tpu.matmul %0, %1, %cst {dimension_numbers = #tpu.dot_dimension_numbers<[1], [0], [0], [1], [0, 0, 1, 1], [], []>} : vector<256x128xf32>, vector<128x128xf32>, vector<256x128xf32> -> vector<256x128xf32>
    %c0_3 = arith.constant 0 : index
    %c0_4 = arith.constant 0 : index
    %3 = vector.load %arg3[%c0_3, %c0_4] : memref<1x128xf32, #tpu.memory_space<vmem>>, vector<1x128xf32>
    %4 = vector.broadcast %3 : vector<1x128xf32> to vector<256x128xf32>
    %5 = arith.addf %2, %4 : vector<256x128xf32>
    %c0_5 = arith.constant 0 : index
    %c0_6 = arith.constant 0 : index
    %6 = vector.load %arg4[%c0_5, %c0_6] : memref<256x128xf32, #tpu.memory_space<vmem>>, vector<256x128xf32>
    tpu.vector_store %arg4[%c0_5, %c0_6], %5 {strides = array<i32>} : memref<256x128xf32, #tpu.memory_space<vmem>>, vector<256x128xf32>,
    return
  }
  func.func @transform_0(%arg0: i32) -> (i32, i32) {
    %c0_i32 = arith.constant 0 : i32
    %c0_i32_0 = arith.constant 0 : i32
    return %arg0, %c0_i32 : i32, i32
  }
  func.func @transform_1(%arg0: i32) -> (i32, i32) {
    %c0_i32 = arith.constant 0 : i32
    %c0_i32_0 = arith.constant 0 : i32
    %c0_i32_1 = arith.constant 0 : i32
    return %c0_i32, %c0_i32_0 : i32, i32
  }
  func.func @transform_2(%arg0: i32) -> (i32, i32) {
    %c0_i32 = arith.constant 0 : i32
    %c0_i32_0 = arith.constant 0 : i32
    %c0_i32_1 = arith.constant 0 : i32
    return %c0_i32, %c0_i32_0 : i32, i32
  }
  func.func @transform_3(%arg0: i32) -> (i32, i32) {
    %c0_i32 = arith.constant 0 : i32
    %c0_i32_0 = arith.constant 0 : i32
    return %arg0, %c0_i32 : i32, i32
  }
}

module attributes {stable_mosaic.version = 11 : i64} {
  func.func @_bn1_relu_conv2_kernel(%arg0: i32, %arg1: memref<1x256x128xf32, #tpu.memory_space<vmem>>, %arg2: memref<1x128xf32, #tpu.memory_space<vmem>>, %arg3: memref<1x128xf32, #tpu.memory_space<vmem>>, %arg4: memref<9x128x128xf32, #tpu.memory_space<vmem>>, %arg5: memref<1x128xf32, #tpu.memory_space<vmem>>, %arg6: memref<1x256x128xf32, #tpu.memory_space<vmem>>, %arg7: memref<304x128xf32, #tpu.memory_space<vmem>>) attributes {dimension_semantics = [#tpu.dimension_semantics<parallel>], iteration_bounds = array<i64: 2>, scalar_prefetch = 0 : i64, scratch_operands = 1 : i64, tpu.core_type = #tpu.core_type<tc>, window_params = [{transform_indices = @transform_0, window_bounds = array<i64: 1, 256, 128>}, {pipeline_mode = #tpu.pipeline_mode<synchronous>, transform_indices = @transform_1, window_bounds = array<i64: 1, 128>}, {pipeline_mode = #tpu.pipeline_mode<synchronous>, transform_indices = @transform_2, window_bounds = array<i64: 1, 128>}, {pipeline_mode = #tpu.pipeline_mode<synchronous>, transform_indices = @transform_3, window_bounds = array<i64: 9, 128, 128>}, {pipeline_mode = #tpu.pipeline_mode<synchronous>, transform_indices = @transform_4, window_bounds = array<i64: 1, 128>}, {transform_indices = @transform_5, window_bounds = array<i64: 1, 256, 128>}]} {
    %cst = arith.constant 0.000000e+00 : f32
    %0 = vector.broadcast %cst : f32 to vector<24x128xf32>
    %c0 = arith.constant 0 : index
    %c0_0 = arith.constant 0 : index
    %1 = vector.load %arg7[%c0, %c0_0] : memref<304x128xf32, #tpu.memory_space<vmem>>, vector<24x128xf32>
    tpu.vector_store %arg7[%c0, %c0_0], %0 {strides = array<i32>} : memref<304x128xf32, #tpu.memory_space<vmem>>, vector<24x128xf32>,
    %cst_1 = arith.constant 0.000000e+00 : f32
    %2 = vector.broadcast %cst_1 : f32 to vector<24x128xf32>
    %c280 = arith.constant 280 : index
    %c0_2 = arith.constant 0 : index
    %3 = vector.load %arg7[%c280, %c0_2] : memref<304x128xf32, #tpu.memory_space<vmem>>, vector<24x128xf32>
    tpu.vector_store %arg7[%c280, %c0_2], %2 {strides = array<i32>} : memref<304x128xf32, #tpu.memory_space<vmem>>, vector<24x128xf32>,
    %c0_3 = arith.constant 0 : index
    %c0_4 = arith.constant 0 : index
    %c0_5 = arith.constant 0 : index
    %4 = vector.load %arg1[%c0_3, %c0_4, %c0_5] : memref<1x256x128xf32, #tpu.memory_space<vmem>>, vector<1x256x128xf32>
    %5 = vector.shape_cast %4 : vector<1x256x128xf32> to vector<256x128xf32>
    %c0_6 = arith.constant 0 : index
    %c0_7 = arith.constant 0 : index
    %6 = vector.load %arg2[%c0_6, %c0_7] : memref<1x128xf32, #tpu.memory_space<vmem>>, vector<1x128xf32>
    %7 = vector.broadcast %6 : vector<1x128xf32> to vector<256x128xf32>
    %8 = arith.mulf %5, %7 : vector<256x128xf32>
    %c0_8 = arith.constant 0 : index
    %c0_9 = arith.constant 0 : index
    %9 = vector.load %arg3[%c0_8, %c0_9] : memref<1x128xf32, #tpu.memory_space<vmem>>, vector<1x128xf32>
    %10 = vector.broadcast %9 : vector<1x128xf32> to vector<256x128xf32>
    %11 = arith.addf %8, %10 : vector<256x128xf32>
    %cst_10 = arith.constant 0.000000e+00 : f32
    %12 = vector.broadcast %cst_10 : f32 to vector<256x128xf32>
    %13 = arith.maximumf %11, %12 : vector<256x128xf32>
    %c24 = arith.constant 24 : index
    %c0_11 = arith.constant 0 : index
    %14 = vector.load %arg7[%c24, %c0_11] : memref<304x128xf32, #tpu.memory_space<vmem>>, vector<256x128xf32>
    tpu.vector_store %arg7[%c24, %c0_11], %13 {strides = array<i32>} : memref<304x128xf32, #tpu.memory_space<vmem>>, vector<256x128xf32>,
    %15 = tpu.iota {dimensions = array<i32: 0>} : vector<256x1xi32>
    %c16_i32 = arith.constant 16 : i32
    %c0_i32 = arith.constant 0 : i32
    %16 = arith.cmpi eq, %c16_i32, %c0_i32 : i32
    %c1_i32 = arith.constant 1 : i32
    %17 = arith.select %16, %c1_i32, %c16_i32 : i32
    %18 = vector.broadcast %17 : i32 to vector<256x1xi32>
    %19 = arith.remsi %15, %18 : vector<256x1xi32>
    %c0_i32_12 = arith.constant 0 : i32
    %20 = vector.broadcast %c0_i32_12 : i32 to vector<256x1xi32>
    %21 = arith.cmpi ne, %19, %20 : vector<256x1xi32>
    %c0_i32_13 = arith.constant 0 : i32
    %22 = vector.broadcast %c0_i32_13 : i32 to vector<256x1xi32>
    %23 = arith.cmpi slt, %19, %22 : vector<256x1xi32>
    %c0_i32_14 = arith.constant 0 : i32
    %24 = arith.cmpi slt, %17, %c0_i32_14 : i32
    %25 = vector.broadcast %24 : i1 to vector<256x1xi1>
    %26 = vector.broadcast %25 : vector<256x1xi1> to vector<256x1xi1>
    %27 = arith.xori %23, %26 : vector<256x1xi1>
    %28 = arith.andi %27, %21 : vector<256x1xi1>
    %29 = vector.broadcast %17 : i32 to vector<256x1xi32>
    %30 = arith.addi %19, %29 : vector<256x1xi32>
    %31 = arith.select %28, %30, %19 : vector<256x1xi1>, vector<256x1xi32>
    %c0_i32_15 = arith.constant 0 : i32
    %32 = vector.broadcast %c0_i32_15 : i32 to vector<256x1xi32>
    %33 = arith.cmpi ne, %31, %32 : vector<256x1xi32>
    %c15_i32 = arith.constant 15 : i32
    %34 = vector.broadcast %c15_i32 : i32 to vector<256x1xi32>
    %35 = arith.cmpi ne, %31, %34 : vector<256x1xi32>
    %c7 = arith.constant 7 : index
    %c0_16 = arith.constant 0 : index
    %36 = vector.load %arg7[%c7, %c0_16] : memref<304x128xf32, #tpu.memory_space<vmem>>, vector<256x128xf32>
    %cst_17 = arith.constant 0.000000e+00 : f32
    %37 = vector.shape_cast %33 : vector<256x1xi1> to vector<256x1xi1>
    %38 = vector.broadcast %37 : vector<256x1xi1> to vector<256x128xi1>
    %39 = vector.broadcast %cst_17 : f32 to vector<256x128xf32>
    %40 = arith.select %38, %36, %39 : vector<256x128xi1>, vector<256x128xf32>
    %c0_18 = arith.constant 0 : index
    %c0_19 = arith.constant 0 : index
    %c0_20 = arith.constant 0 : index
    %41 = vector.load %arg4[%c0_18, %c0_19, %c0_20] : memref<9x128x128xf32, #tpu.memory_space<vmem>>, vector<1x128x128xf32>
    %42 = vector.shape_cast %41 : vector<1x128x128xf32> to vector<128x128xf32>
    %cst_21 = arith.constant dense<0.000000e+00> : vector<256x128xf32>
    %43 = tpu.matmul %40, %42, %cst_21 {dimension_numbers = #tpu.dot_dimension_numbers<[1], [0], [0], [1], [0, 0, 1, 1], [], []>} : vector<256x128xf32>, vector<128x128xf32>, vector<256x128xf32> -> vector<256x128xf32>
    %c0_22 = arith.constant 0 : index
    %c0_23 = arith.constant 0 : index
    %c0_24 = arith.constant 0 : index
    %44 = vector.load %arg6[%c0_22, %c0_23, %c0_24] : memref<1x256x128xf32, #tpu.memory_space<vmem>>, vector<1x256x128xf32>
    %45 = vector.shape_cast %44 : vector<1x256x128xf32> to vector<256x128xf32>
    %46 = vector.shape_cast %43 : vector<256x128xf32> to vector<1x256x128xf32>
    tpu.vector_store %arg6[%c0_22, %c0_23, %c0_24], %46 {strides = array<i32>} : memref<1x256x128xf32, #tpu.memory_space<vmem>>, vector<1x256x128xf32>,
    %c8 = arith.constant 8 : index
    %c0_25 = arith.constant 0 : index
    %47 = vector.load %arg7[%c8, %c0_25] : memref<304x128xf32, #tpu.memory_space<vmem>>, vector<256x128xf32>
    %c1 = arith.constant 1 : index
    %c0_26 = arith.constant 0 : index
    %c0_27 = arith.constant 0 : index
    %48 = vector.load %arg4[%c1, %c0_26, %c0_27] : memref<9x128x128xf32, #tpu.memory_space<vmem>>, vector<1x128x128xf32>
    %49 = vector.shape_cast %48 : vector<1x128x128xf32> to vector<128x128xf32>
    %cst_28 = arith.constant dense<0.000000e+00> : vector<256x128xf32>
    %50 = tpu.matmul %47, %49, %cst_28 {dimension_numbers = #tpu.dot_dimension_numbers<[1], [0], [0], [1], [0, 0, 1, 1], [], []>} : vector<256x128xf32>, vector<128x128xf32>, vector<256x128xf32> -> vector<256x128xf32>
    %c0_29 = arith.constant 0 : index
    %c0_30 = arith.constant 0 : index
    %c0_31 = arith.constant 0 : index
    %51 = vector.load %arg6[%c0_29, %c0_30, %c0_31] : memref<1x256x128xf32, #tpu.memory_space<vmem>>, vector<1x256x128xf32>
    %52 = vector.shape_cast %51 : vector<1x256x128xf32> to vector<256x128xf32>
    %53 = arith.addf %52, %50 : vector<256x128xf32>
    %c0_32 = arith.constant 0 : index
    %c0_33 = arith.constant 0 : index
    %c0_34 = arith.constant 0 : index
    %54 = vector.load %arg6[%c0_32, %c0_33, %c0_34] : memref<1x256x128xf32, #tpu.memory_space<vmem>>, vector<1x256x128xf32>
    %55 = vector.shape_cast %54 : vector<1x256x128xf32> to vector<256x128xf32>
    %56 = vector.shape_cast %53 : vector<256x128xf32> to vector<1x256x128xf32>
    tpu.vector_store %arg6[%c0_32, %c0_33, %c0_34], %56 {strides = array<i32>} : memref<1x256x128xf32, #tpu.memory_space<vmem>>, vector<1x256x128xf32>,
    %c9 = arith.constant 9 : index
    %c0_35 = arith.constant 0 : index
    %57 = vector.load %arg7[%c9, %c0_35] : memref<304x128xf32, #tpu.memory_space<vmem>>, vector<256x128xf32>
    %cst_36 = arith.constant 0.000000e+00 : f32
    %58 = vector.shape_cast %35 : vector<256x1xi1> to vector<256x1xi1>
    %59 = vector.broadcast %58 : vector<256x1xi1> to vector<256x128xi1>
    %60 = vector.broadcast %cst_36 : f32 to vector<256x128xf32>
    %61 = arith.select %59, %57, %60 : vector<256x128xi1>, vector<256x128xf32>
    %c2 = arith.constant 2 : index
    %c0_37 = arith.constant 0 : index
    %c0_38 = arith.constant 0 : index
    %62 = vector.load %arg4[%c2, %c0_37, %c0_38] : memref<9x128x128xf32, #tpu.memory_space<vmem>>, vector<1x128x128xf32>
    %63 = vector.shape_cast %62 : vector<1x128x128xf32> to vector<128x128xf32>
    %cst_39 = arith.constant dense<0.000000e+00> : vector<256x128xf32>
    %64 = tpu.matmul %61, %63, %cst_39 {dimension_numbers = #tpu.dot_dimension_numbers<[1], [0], [0], [1], [0, 0, 1, 1], [], []>} : vector<256x128xf32>, vector<128x128xf32>, vector<256x128xf32> -> vector<256x128xf32>
    %c0_40 = arith.constant 0 : index
    %c0_41 = arith.constant 0 : index
    %c0_42 = arith.constant 0 : index
    %65 = vector.load %arg6[%c0_40, %c0_41, %c0_42] : memref<1x256x128xf32, #tpu.memory_space<vmem>>, vector<1x256x128xf32>
    %66 = vector.shape_cast %65 : vector<1x256x128xf32> to vector<256x128xf32>
    %67 = arith.addf %66, %64 : vector<256x128xf32>
    %c0_43 = arith.constant 0 : index
    %c0_44 = arith.constant 0 : index
    %c0_45 = arith.constant 0 : index
    %68 = vector.load %arg6[%c0_43, %c0_44, %c0_45] : memref<1x256x128xf32, #tpu.memory_space<vmem>>, vector<1x256x128xf32>
    %69 = vector.shape_cast %68 : vector<1x256x128xf32> to vector<256x128xf32>
    %70 = vector.shape_cast %67 : vector<256x128xf32> to vector<1x256x128xf32>
    tpu.vector_store %arg6[%c0_43, %c0_44, %c0_45], %70 {strides = array<i32>} : memref<1x256x128xf32, #tpu.memory_space<vmem>>, vector<1x256x128xf32>,
    %c23 = arith.constant 23 : index
    %c0_46 = arith.constant 0 : index
    %71 = vector.load %arg7[%c23, %c0_46] : memref<304x128xf32, #tpu.memory_space<vmem>>, vector<256x128xf32>
    %cst_47 = arith.constant 0.000000e+00 : f32
    %72 = vector.shape_cast %33 : vector<256x1xi1> to vector<256x1xi1>
    %73 = vector.broadcast %72 : vector<256x1xi1> to vector<256x128xi1>
    %74 = vector.broadcast %cst_47 : f32 to vector<256x128xf32>
    %75 = arith.select %73, %71, %74 : vector<256x128xi1>, vector<256x128xf32>
    %c3 = arith.constant 3 : index
    %c0_48 = arith.constant 0 : index
    %c0_49 = arith.constant 0 : index
    %76 = vector.load %arg4[%c3, %c0_48, %c0_49] : memref<9x128x128xf32, #tpu.memory_space<vmem>>, vector<1x128x128xf32>
    %77 = vector.shape_cast %76 : vector<1x128x128xf32> to vector<128x128xf32>
    %cst_50 = arith.constant dense<0.000000e+00> : vector<256x128xf32>
    %78 = tpu.matmul %75, %77, %cst_50 {dimension_numbers = #tpu.dot_dimension_numbers<[1], [0], [0], [1], [0, 0, 1, 1], [], []>} : vector<256x128xf32>, vector<128x128xf32>, vector<256x128xf32> -> vector<256x128xf32>
    %c0_51 = arith.constant 0 : index
    %c0_52 = arith.constant 0 : index
    %c0_53 = arith.constant 0 : index
    %79 = vector.load %arg6[%c0_51, %c0_52, %c0_53] : memref<1x256x128xf32, #tpu.memory_space<vmem>>, vector<1x256x128xf32>
    %80 = vector.shape_cast %79 : vector<1x256x128xf32> to vector<256x128xf32>
    %81 = arith.addf %80, %78 : vector<256x128xf32>
    %c0_54 = arith.constant 0 : index
    %c0_55 = arith.constant 0 : index
    %c0_56 = arith.constant 0 : index
    %82 = vector.load %arg6[%c0_54, %c0_55, %c0_56] : memref<1x256x128xf32, #tpu.memory_space<vmem>>, vector<1x256x128xf32>
    %83 = vector.shape_cast %82 : vector<1x256x128xf32> to vector<256x128xf32>
    %84 = vector.shape_cast %81 : vector<256x128xf32> to vector<1x256x128xf32>
    tpu.vector_store %arg6[%c0_54, %c0_55, %c0_56], %84 {strides = array<i32>} : memref<1x256x128xf32, #tpu.memory_space<vmem>>, vector<1x256x128xf32>,
    %c24_57 = arith.constant 24 : index
    %c0_58 = arith.constant 0 : index
    %85 = vector.load %arg7[%c24_57, %c0_58] : memref<304x128xf32, #tpu.memory_space<vmem>>, vector<256x128xf32>
    %c4 = arith.constant 4 : index
    %c0_59 = arith.constant 0 : index
    %c0_60 = arith.constant 0 : index
    %86 = vector.load %arg4[%c4, %c0_59, %c0_60] : memref<9x128x128xf32, #tpu.memory_space<vmem>>, vector<1x128x128xf32>
    %87 = vector.shape_cast %86 : vector<1x128x128xf32> to vector<128x128xf32>
    %cst_61 = arith.constant dense<0.000000e+00> : vector<256x128xf32>
    %88 = tpu.matmul %85, %87, %cst_61 {dimension_numbers = #tpu.dot_dimension_numbers<[1], [0], [0], [1], [0, 0, 1, 1], [], []>} : vector<256x128xf32>, vector<128x128xf32>, vector<256x128xf32> -> vector<256x128xf32>
    %c0_62 = arith.constant 0 : index
    %c0_63 = arith.constant 0 : index
    %c0_64 = arith.constant 0 : index
    %89 = vector.load %arg6[%c0_62, %c0_63, %c0_64] : memref<1x256x128xf32, #tpu.memory_space<vmem>>, vector<1x256x128xf32>
    %90 = vector.shape_cast %89 : vector<1x256x128xf32> to vector<256x128xf32>
    %91 = arith.addf %90, %88 : vector<256x128xf32>
    %c0_65 = arith.constant 0 : index
    %c0_66 = arith.constant 0 : index
    %c0_67 = arith.constant 0 : index
    %92 = vector.load %arg6[%c0_65, %c0_66, %c0_67] : memref<1x256x128xf32, #tpu.memory_space<vmem>>, vector<1x256x128xf32>
    %93 = vector.shape_cast %92 : vector<1x256x128xf32> to vector<256x128xf32>
    %94 = vector.shape_cast %91 : vector<256x128xf32> to vector<1x256x128xf32>
    tpu.vector_store %arg6[%c0_65, %c0_66, %c0_67], %94 {strides = array<i32>} : memref<1x256x128xf32, #tpu.memory_space<vmem>>, vector<1x256x128xf32>,
    %c25 = arith.constant 25 : index
    %c0_68 = arith.constant 0 : index
    %95 = vector.load %arg7[%c25, %c0_68] : memref<304x128xf32, #tpu.memory_space<vmem>>, vector<256x128xf32>
    %cst_69 = arith.constant 0.000000e+00 : f32
    %96 = vector.shape_cast %35 : vector<256x1xi1> to vector<256x1xi1>
    %97 = vector.broadcast %96 : vector<256x1xi1> to vector<256x128xi1>
    %98 = vector.broadcast %cst_69 : f32 to vector<256x128xf32>
    %99 = arith.select %97, %95, %98 : vector<256x128xi1>, vector<256x128xf32>
    %c5 = arith.constant 5 : index
    %c0_70 = arith.constant 0 : index
    %c0_71 = arith.constant 0 : index
    %100 = vector.load %arg4[%c5, %c0_70, %c0_71] : memref<9x128x128xf32, #tpu.memory_space<vmem>>, vector<1x128x128xf32>
    %101 = vector.shape_cast %100 : vector<1x128x128xf32> to vector<128x128xf32>
    %cst_72 = arith.constant dense<0.000000e+00> : vector<256x128xf32>
    %102 = tpu.matmul %99, %101, %cst_72 {dimension_numbers = #tpu.dot_dimension_numbers<[1], [0], [0], [1], [0, 0, 1, 1], [], []>} : vector<256x128xf32>, vector<128x128xf32>, vector<256x128xf32> -> vector<256x128xf32>
    %c0_73 = arith.constant 0 : index
    %c0_74 = arith.constant 0 : index
    %c0_75 = arith.constant 0 : index
    %103 = vector.load %arg6[%c0_73, %c0_74, %c0_75] : memref<1x256x128xf32, #tpu.memory_space<vmem>>, vector<1x256x128xf32>
    %104 = vector.shape_cast %103 : vector<1x256x128xf32> to vector<256x128xf32>
    %105 = arith.addf %104, %102 : vector<256x128xf32>
    %c0_76 = arith.constant 0 : index
    %c0_77 = arith.constant 0 : index
    %c0_78 = arith.constant 0 : index
    %106 = vector.load %arg6[%c0_76, %c0_77, %c0_78] : memref<1x256x128xf32, #tpu.memory_space<vmem>>, vector<1x256x128xf32>
    %107 = vector.shape_cast %106 : vector<1x256x128xf32> to vector<256x128xf32>
    %108 = vector.shape_cast %105 : vector<256x128xf32> to vector<1x256x128xf32>
    tpu.vector_store %arg6[%c0_76, %c0_77, %c0_78], %108 {strides = array<i32>} : memref<1x256x128xf32, #tpu.memory_space<vmem>>, vector<1x256x128xf32>,
    %c39 = arith.constant 39 : index
    %c0_79 = arith.constant 0 : index
    %109 = vector.load %arg7[%c39, %c0_79] : memref<304x128xf32, #tpu.memory_space<vmem>>, vector<256x128xf32>
    %cst_80 = arith.constant 0.000000e+00 : f32
    %110 = vector.shape_cast %33 : vector<256x1xi1> to vector<256x1xi1>
    %111 = vector.broadcast %110 : vector<256x1xi1> to vector<256x128xi1>
    %112 = vector.broadcast %cst_80 : f32 to vector<256x128xf32>
    %113 = arith.select %111, %109, %112 : vector<256x128xi1>, vector<256x128xf32>
    %c6 = arith.constant 6 : index
    %c0_81 = arith.constant 0 : index
    %c0_82 = arith.constant 0 : index
    %114 = vector.load %arg4[%c6, %c0_81, %c0_82] : memref<9x128x128xf32, #tpu.memory_space<vmem>>, vector<1x128x128xf32>
    %115 = vector.shape_cast %114 : vector<1x128x128xf32> to vector<128x128xf32>
    %cst_83 = arith.constant dense<0.000000e+00> : vector<256x128xf32>
    %116 = tpu.matmul %113, %115, %cst_83 {dimension_numbers = #tpu.dot_dimension_numbers<[1], [0], [0], [1], [0, 0, 1, 1], [], []>} : vector<256x128xf32>, vector<128x128xf32>, vector<256x128xf32> -> vector<256x128xf32>
    %c0_84 = arith.constant 0 : index
    %c0_85 = arith.constant 0 : index
    %c0_86 = arith.constant 0 : index
    %117 = vector.load %arg6[%c0_84, %c0_85, %c0_86] : memref<1x256x128xf32, #tpu.memory_space<vmem>>, vector<1x256x128xf32>
    %118 = vector.shape_cast %117 : vector<1x256x128xf32> to vector<256x128xf32>
    %119 = arith.addf %118, %116 : vector<256x128xf32>
    %c0_87 = arith.constant 0 : index
    %c0_88 = arith.constant 0 : index
    %c0_89 = arith.constant 0 : index
    %120 = vector.load %arg6[%c0_87, %c0_88, %c0_89] : memref<1x256x128xf32, #tpu.memory_space<vmem>>, vector<1x256x128xf32>
    %121 = vector.shape_cast %120 : vector<1x256x128xf32> to vector<256x128xf32>
    %122 = vector.shape_cast %119 : vector<256x128xf32> to vector<1x256x128xf32>
    tpu.vector_store %arg6[%c0_87, %c0_88, %c0_89], %122 {strides = array<i32>} : memref<1x256x128xf32, #tpu.memory_space<vmem>>, vector<1x256x128xf32>,
    %c40 = arith.constant 40 : index
    %c0_90 = arith.constant 0 : index
    %123 = vector.load %arg7[%c40, %c0_90] : memref<304x128xf32, #tpu.memory_space<vmem>>, vector<256x128xf32>
    %c7_91 = arith.constant 7 : index
    %c0_92 = arith.constant 0 : index
    %c0_93 = arith.constant 0 : index
    %124 = vector.load %arg4[%c7_91, %c0_92, %c0_93] : memref<9x128x128xf32, #tpu.memory_space<vmem>>, vector<1x128x128xf32>
    %125 = vector.shape_cast %124 : vector<1x128x128xf32> to vector<128x128xf32>
    %cst_94 = arith.constant dense<0.000000e+00> : vector<256x128xf32>
    %126 = tpu.matmul %123, %125, %cst_94 {dimension_numbers = #tpu.dot_dimension_numbers<[1], [0], [0], [1], [0, 0, 1, 1], [], []>} : vector<256x128xf32>, vector<128x128xf32>, vector<256x128xf32> -> vector<256x128xf32>
    %c0_95 = arith.constant 0 : index
    %c0_96 = arith.constant 0 : index
    %c0_97 = arith.constant 0 : index
    %127 = vector.load %arg6[%c0_95, %c0_96, %c0_97] : memref<1x256x128xf32, #tpu.memory_space<vmem>>, vector<1x256x128xf32>
    %128 = vector.shape_cast %127 : vector<1x256x128xf32> to vector<256x128xf32>
    %129 = arith.addf %128, %126 : vector<256x128xf32>
    %c0_98 = arith.constant 0 : index
    %c0_99 = arith.constant 0 : index
    %c0_100 = arith.constant 0 : index
    %130 = vector.load %arg6[%c0_98, %c0_99, %c0_100] : memref<1x256x128xf32, #tpu.memory_space<vmem>>, vector<1x256x128xf32>
    %131 = vector.shape_cast %130 : vector<1x256x128xf32> to vector<256x128xf32>
    %132 = vector.shape_cast %129 : vector<256x128xf32> to vector<1x256x128xf32>
    tpu.vector_store %arg6[%c0_98, %c0_99, %c0_100], %132 {strides = array<i32>} : memref<1x256x128xf32, #tpu.memory_space<vmem>>, vector<1x256x128xf32>,
    %c41 = arith.constant 41 : index
    %c0_101 = arith.constant 0 : index
    %133 = vector.load %arg7[%c41, %c0_101] : memref<304x128xf32, #tpu.memory_space<vmem>>, vector<256x128xf32>
    %cst_102 = arith.constant 0.000000e+00 : f32
    %134 = vector.shape_cast %35 : vector<256x1xi1> to vector<256x1xi1>
    %135 = vector.broadcast %134 : vector<256x1xi1> to vector<256x128xi1>
    %136 = vector.broadcast %cst_102 : f32 to vector<256x128xf32>
    %137 = arith.select %135, %133, %136 : vector<256x128xi1>, vector<256x128xf32>
    %c8_103 = arith.constant 8 : index
    %c0_104 = arith.constant 0 : index
    %c0_105 = arith.constant 0 : index
    %138 = vector.load %arg4[%c8_103, %c0_104, %c0_105] : memref<9x128x128xf32, #tpu.memory_space<vmem>>, vector<1x128x128xf32>
    %139 = vector.shape_cast %138 : vector<1x128x128xf32> to vector<128x128xf32>
    %cst_106 = arith.constant dense<0.000000e+00> : vector<256x128xf32>
    %140 = tpu.matmul %137, %139, %cst_106 {dimension_numbers = #tpu.dot_dimension_numbers<[1], [0], [0], [1], [0, 0, 1, 1], [], []>} : vector<256x128xf32>, vector<128x128xf32>, vector<256x128xf32> -> vector<256x128xf32>
    %c0_107 = arith.constant 0 : index
    %c0_108 = arith.constant 0 : index
    %c0_109 = arith.constant 0 : index
    %141 = vector.load %arg6[%c0_107, %c0_108, %c0_109] : memref<1x256x128xf32, #tpu.memory_space<vmem>>, vector<1x256x128xf32>
    %142 = vector.shape_cast %141 : vector<1x256x128xf32> to vector<256x128xf32>
    %143 = arith.addf %142, %140 : vector<256x128xf32>
    %c0_110 = arith.constant 0 : index
    %c0_111 = arith.constant 0 : index
    %c0_112 = arith.constant 0 : index
    %144 = vector.load %arg6[%c0_110, %c0_111, %c0_112] : memref<1x256x128xf32, #tpu.memory_space<vmem>>, vector<1x256x128xf32>
    %145 = vector.shape_cast %144 : vector<1x256x128xf32> to vector<256x128xf32>
    %146 = vector.shape_cast %143 : vector<256x128xf32> to vector<1x256x128xf32>
    tpu.vector_store %arg6[%c0_110, %c0_111, %c0_112], %146 {strides = array<i32>} : memref<1x256x128xf32, #tpu.memory_space<vmem>>, vector<1x256x128xf32>,
    %c0_113 = arith.constant 0 : index
    %c0_114 = arith.constant 0 : index
    %c0_115 = arith.constant 0 : index
    %147 = vector.load %arg6[%c0_113, %c0_114, %c0_115] : memref<1x256x128xf32, #tpu.memory_space<vmem>>, vector<1x256x128xf32>
    %148 = vector.shape_cast %147 : vector<1x256x128xf32> to vector<256x128xf32>
    %c0_116 = arith.constant 0 : index
    %c0_117 = arith.constant 0 : index
    %149 = vector.load %arg5[%c0_116, %c0_117] : memref<1x128xf32, #tpu.memory_space<vmem>>, vector<1x128xf32>
    %150 = vector.broadcast %149 : vector<1x128xf32> to vector<256x128xf32>
    %151 = arith.addf %148, %150 : vector<256x128xf32>
    %c0_118 = arith.constant 0 : index
    %c0_119 = arith.constant 0 : index
    %c0_120 = arith.constant 0 : index
    %152 = vector.load %arg6[%c0_118, %c0_119, %c0_120] : memref<1x256x128xf32, #tpu.memory_space<vmem>>, vector<1x256x128xf32>
    %153 = vector.shape_cast %152 : vector<1x256x128xf32> to vector<256x128xf32>
    %154 = vector.shape_cast %151 : vector<256x128xf32> to vector<1x256x128xf32>
    tpu.vector_store %arg6[%c0_118, %c0_119, %c0_120], %154 {strides = array<i32>} : memref<1x256x128xf32, #tpu.memory_space<vmem>>, vector<1x256x128xf32>,
    return
  }
  func.func @transform_0(%arg0: i32) -> (i32, i32, i32) {
    %c0_i32 = arith.constant 0 : i32
    %c0_i32_0 = arith.constant 0 : i32
    %c0_i32_1 = arith.constant 0 : i32
    return %arg0, %c0_i32, %c0_i32_0 : i32, i32, i32
  }
  func.func @transform_1(%arg0: i32) -> (i32, i32) {
    %c0_i32 = arith.constant 0 : i32
    %c0_i32_0 = arith.constant 0 : i32
    %c0_i32_1 = arith.constant 0 : i32
    return %c0_i32, %c0_i32_0 : i32, i32
  }
  func.func @transform_2(%arg0: i32) -> (i32, i32) {
    %c0_i32 = arith.constant 0 : i32
    %c0_i32_0 = arith.constant 0 : i32
    %c0_i32_1 = arith.constant 0 : i32
    return %c0_i32, %c0_i32_0 : i32, i32
  }
  func.func @transform_3(%arg0: i32) -> (i32, i32, i32) {
    %c0_i32 = arith.constant 0 : i32
    %c0_i32_0 = arith.constant 0 : i32
    %c0_i32_1 = arith.constant 0 : i32
    %c0_i32_2 = arith.constant 0 : i32
    return %c0_i32, %c0_i32_0, %c0_i32_1 : i32, i32, i32
  }
  func.func @transform_4(%arg0: i32) -> (i32, i32) {
    %c0_i32 = arith.constant 0 : i32
    %c0_i32_0 = arith.constant 0 : i32
    %c0_i32_1 = arith.constant 0 : i32
    return %c0_i32, %c0_i32_0 : i32, i32
  }
  func.func @transform_5(%arg0: i32) -> (i32, i32, i32) {
    %c0_i32 = arith.constant 0 : i32
    %c0_i32_0 = arith.constant 0 : i32
    %c0_i32_1 = arith.constant 0 : i32
    return %arg0, %c0_i32, %c0_i32_0 : i32, i32, i32
  }
}

module attributes {stable_mosaic.version = 11 : i64} {
  func.func @_bn2_add_relu_kernel(%arg0: i32, %arg1: memref<256x128xf32, #tpu.memory_space<vmem>>, %arg2: memref<256x128xf32, #tpu.memory_space<vmem>>, %arg3: memref<1x128xf32, #tpu.memory_space<vmem>>, %arg4: memref<1x128xf32, #tpu.memory_space<vmem>>, %arg5: memref<256x128xf32, #tpu.memory_space<vmem>>) attributes {dimension_semantics = [#tpu.dimension_semantics<parallel>], iteration_bounds = array<i64: 2>, scalar_prefetch = 0 : i64, scratch_operands = 0 : i64, tpu.core_type = #tpu.core_type<tc>, window_params = [{transform_indices = @transform_0, window_bounds = array<i64: 256, 128>}, {transform_indices = @transform_1, window_bounds = array<i64: 256, 128>}, {pipeline_mode = #tpu.pipeline_mode<synchronous>, transform_indices = @transform_2, window_bounds = array<i64: 1, 128>}, {pipeline_mode = #tpu.pipeline_mode<synchronous>, transform_indices = @transform_3, window_bounds = array<i64: 1, 128>}, {transform_indices = @transform_4, window_bounds = array<i64: 256, 128>}]} {
    %c0 = arith.constant 0 : index
    %c0_0 = arith.constant 0 : index
    %0 = vector.load %arg1[%c0, %c0_0] : memref<256x128xf32, #tpu.memory_space<vmem>>, vector<256x128xf32>
    %c0_1 = arith.constant 0 : index
    %c0_2 = arith.constant 0 : index
    %1 = vector.load %arg3[%c0_1, %c0_2] : memref<1x128xf32, #tpu.memory_space<vmem>>, vector<1x128xf32>
    %2 = vector.broadcast %1 : vector<1x128xf32> to vector<256x128xf32>
    %3 = arith.mulf %0, %2 : vector<256x128xf32>
    %c0_3 = arith.constant 0 : index
    %c0_4 = arith.constant 0 : index
    %4 = vector.load %arg4[%c0_3, %c0_4] : memref<1x128xf32, #tpu.memory_space<vmem>>, vector<1x128xf32>
    %5 = vector.broadcast %4 : vector<1x128xf32> to vector<256x128xf32>
    %6 = arith.addf %3, %5 : vector<256x128xf32>
    %c0_5 = arith.constant 0 : index
    %c0_6 = arith.constant 0 : index
    %7 = vector.load %arg2[%c0_5, %c0_6] : memref<256x128xf32, #tpu.memory_space<vmem>>, vector<256x128xf32>
    %8 = arith.addf %6, %7 : vector<256x128xf32>
    %cst = arith.constant 0.000000e+00 : f32
    %9 = vector.broadcast %cst : f32 to vector<256x128xf32>
    %10 = arith.maximumf %8, %9 : vector<256x128xf32>
    %c0_7 = arith.constant 0 : index
    %c0_8 = arith.constant 0 : index
    %11 = vector.load %arg5[%c0_7, %c0_8] : memref<256x128xf32, #tpu.memory_space<vmem>>, vector<256x128xf32>
    tpu.vector_store %arg5[%c0_7, %c0_8], %10 {strides = array<i32>} : memref<256x128xf32, #tpu.memory_space<vmem>>, vector<256x128xf32>,
    return
  }
  func.func @transform_0(%arg0: i32) -> (i32, i32) {
    %c0_i32 = arith.constant 0 : i32
    %c0_i32_0 = arith.constant 0 : i32
    return %arg0, %c0_i32 : i32, i32
  }
  func.func @transform_1(%arg0: i32) -> (i32, i32) {
    %c0_i32 = arith.constant 0 : i32
    %c0_i32_0 = arith.constant 0 : i32
    return %arg0, %c0_i32 : i32, i32
  }
  func.func @transform_2(%arg0: i32) -> (i32, i32) {
    %c0_i32 = arith.constant 0 : i32
    %c0_i32_0 = arith.constant 0 : i32
    %c0_i32_1 = arith.constant 0 : i32
    return %c0_i32, %c0_i32_0 : i32, i32
  }
  func.func @transform_3(%arg0: i32) -> (i32, i32) {
    %c0_i32 = arith.constant 0 : i32
    %c0_i32_0 = arith.constant 0 : i32
    %c0_i32_1 = arith.constant 0 : i32
    return %c0_i32, %c0_i32_0 : i32, i32
  }
  func.func @transform_4(%arg0: i32) -> (i32, i32) {
    %c0_i32 = arith.constant 0 : i32
    %c0_i32_0 = arith.constant 0 : i32
    return %arg0, %c0_i32 : i32, i32
  }
}

</mosaic_0001>

<llo_original>
// kernel: unet_conv2_forward.3
$region0: #{unet_conv2_forward.3}
  #allocation0 [shape = 'u32[]', space=smem, size = 0x4, offset = 0x4, fixed_abs, tag = 'smem constant byte address 0x4 - core index']
  #allocation1 [shape = 'u32[144,128]{1,0:T(1,128)}', space=vmem, size = 0x12000, scoped, tag = 'internal scratch']
  %s0 = inlined_call_operand.vmem [shape: f32[512,128], index: 0, kind: input, shape index: {}]
  %s1 = inlined_call_operand.vmem [shape: f32[128,128], index: 1, kind: input, shape index: {}]
  %s2 = inlined_call_operand.vmem [shape: f32[1,128], index: 2, kind: input, shape index: {}]
  %s3 = inlined_call_operand.vmem [shape: f32[512,128], index: 3, kind: output, shape index: {}]
  %s4 = sld [smem:[#allocation0]]
  $region45: #{unet_conv2_forward.3} parent=0
    _
  %s6 = ssub.s32 1, %s4
  %s7 = scalar_select 0, %s6, %s4
  loop: start=0, step=1, limit=4
  $region2: #{unet_conv2_forward.3} parent=0 // loop_pre_header
    _
  $region3: #{unet_conv2_forward.3} parent=0 // loop_header
    %s9 = sphi 0, %s13
    %p10 = scmp.ge.s32.totalorder %s9, 4
    %s19 = sphi 0, %s21
    %s22 = sphi 0, %s19
    %s23 = sphi 0, %s22
    %s39 = sphi 0, %s23
    %s43 = sphi 0, %s43
    %s45 = sphi 0, %s43
    %s46 = sphi 0, %s45
    %s60 = sphi 0, %s46
    %s64 = sphi 0, %s64
    %s66 = sphi 0, %s64
    %s67 = sphi 0, %s66
    %s81 = sphi 0, %s67
    %s87 = sphi 0, %s89
    %s90 = sphi 0, %s87
    %s91 = sphi 0, %s90
    %s107 = sphi 0, %s91
  $region4: #{unet_conv2_forward.3} parent=0 // loop_header_branch
    %12 = sbr.rel (%p10) target = $region8
  $region5: #{unet_conv2_forward.3} parent=0 // loop_body
    %s14 = ssub.s32 %s9, 1
    %s15 = ssub.s32 %s9, 2
    %s16 = sadd.s32 %s9, 1
    %s17 = ssub.s32 %s9, %s16
    %p18 = scmp.eq.s32.totalorder %s17, 0
    %s20 = sadd.s32 %s19, 1
    %s21 = scalar_select %p18, %s19, %s20
    %p24 = pneg %p18
    %p25 = scmp.eq.s32.totalorder %s9, 1
    %p26 = por %p24, %p25
    %p27 = scmp.ne.s32.totalorder %s19, %s22
    %p28 = scmp.eq.s32.totalorder %s9, 0
    %p29 = por %p27, %p28
    %p30 = scmp.ne.s32.totalorder %s19, %s22
    %p31 = scmp.eq.s32.totalorder %s14, 1
    %p32 = por %p30, %p31
    %p33 = scmp.ne.s32.totalorder %s22, %s23
    %p34 = scmp.eq.s32.totalorder %s14, 0
    %p35 = por %p33, %p34
    %p36 = scmp.ne.s32.totalorder %s22, %s23
    %p37 = scmp.eq.s32.totalorder %s15, 1
    %p38 = por %p36, %p37
    %p40 = scmp.ne.s32.totalorder %s23, %s39
    %p41 = scmp.eq.s32.totalorder %s15, 0
    %p42 = por %p40, %p41
    %s44 = sadd.s32 %s43, 1
    %p47 = scmp.eq.s32.totalorder %s9, 1
    %p48 = scmp.ne.s32.totalorder %s43, %s45
    %p49 = scmp.eq.s32.totalorder %s9, 0
    %p50 = por %p48, %p49
    %p51 = scmp.ne.s32.totalorder %s43, %s45
    %p52 = scmp.eq.s32.totalorder %s14, 1
    %p53 = por %p51, %p52
    %p54 = scmp.ne.s32.totalorder %s45, %s46
    %p55 = scmp.eq.s32.totalorder %s14, 0
    %p56 = por %p54, %p55
    %p57 = scmp.ne.s32.totalorder %s45, %s46
    %p58 = scmp.eq.s32.totalorder %s15, 1
    %p59 = por %p57, %p58
    %p61 = scmp.ne.s32.totalorder %s46, %s60
    %p62 = scmp.eq.s32.totalorder %s15, 0
    %p63 = por %p61, %p62
    %s65 = sadd.s32 %s64, 1
    %p68 = scmp.eq.s32.totalorder %s9, 1
    %p69 = scmp.ne.s32.totalorder %s64, %s66
    %p70 = scmp.eq.s32.totalorder %s9, 0
    %p71 = por %p69, %p70
    %p72 = scmp.ne.s32.totalorder %s64, %s66
    %p73 = scmp.eq.s32.totalorder %s14, 1
    %p74 = por %p72, %p73
    %p75 = scmp.ne.s32.totalorder %s66, %s67
    %p76 = scmp.eq.s32.totalorder %s14, 0
    %p77 = por %p75, %p76
    %p78 = scmp.ne.s32.totalorder %s66, %s67
    %p79 = scmp.eq.s32.totalorder %s15, 1
    %p80 = por %p78, %p79
    %p82 = scmp.ne.s32.totalorder %s67, %s81
    %p83 = scmp.eq.s32.totalorder %s15, 0
    %p84 = por %p82, %p83
    %s85 = ssub.s32 %s9, %s16
    %p86 = scmp.eq.s32.totalorder %s85, 0
    %s88 = sadd.s32 %s87, 1
    %s89 = scalar_select %p86, %s87, %s88
    %p92 = pneg %p86
    %p93 = scmp.eq.s32.totalorder %s9, 1
    %p94 = por %p92, %p93
    %p95 = scmp.ne.s32.totalorder %s87, %s90
    %p96 = scmp.eq.s32.totalorder %s9, 0
    %p97 = por %p95, %p96
    %p98 = scmp.ne.s32.totalorder %s87, %s90
    %p99 = scmp.eq.s32.totalorder %s14, 1
    %p100 = por %p98, %p99
    %p101 = scmp.ne.s32.totalorder %s90, %s91
    %p102 = scmp.eq.s32.totalorder %s14, 0
    %p103 = por %p101, %p102
    %p104 = scmp.ne.s32.totalorder %s90, %s91
    %p105 = scmp.eq.s32.totalorder %s15, 1
    %p106 = por %p104, %p105
    %p108 = scmp.ne.s32.totalorder %s91, %s107
    %p109 = scmp.eq.s32.totalorder %s15, 0
    %p110 = por %p108, %p109
    %p111 = scmp.le.s32.totalorder 1, %s9
    %p112 = scmp.lt.s32.totalorder %s9, 3
    %p113 = pnand %p111, %p112
    %p114 = pneg %p113
    // Predicated region
    $region9: #{unet_conv2_forward.3} parent=5 // pred_check
      _
    $region10: #{unet_conv2_forward.3} parent=5 // pred_check_branch
      %116 = sbr.rel (%p113) target = $region12
    $region11: #{unet_conv2_forward.3} parent=5 // pred_region
      %s117 = ssub.s32 %s9, 1
      // Predicated region
      $region13: #{unet_conv2_forward.3} parent=11 // pred_check
        %p118 = pneg %p56
      $region14: #{unet_conv2_forward.3} parent=11 // pred_check_branch
        %120 = sbr.rel (%p118) target = $region16
      $region15: #{unet_conv2_forward.3} parent=11 // pred_region
        _
      $region16: #{unet_conv2_forward.3} parent=11 // pred_fallthru
        _
      // Predicated region
      $region17: #{unet_conv2_forward.3} parent=11 // pred_check
        %p121 = pneg %p77
      $region18: #{unet_conv2_forward.3} parent=11 // pred_check_branch
        %123 = sbr.rel (%p121) target = $region20
      $region19: #{unet_conv2_forward.3} parent=11 // pred_region
        _
      $region20: #{unet_conv2_forward.3} parent=11 // pred_fallthru
        _
    $region12: #{unet_conv2_forward.3} parent=5 // pred_fallthru
      _
    %p124 = scmp.lt.s32.totalorder %s9, 2
    // Predicated region
    $region21: #{unet_conv2_forward.3} parent=5 // pred_check
      %p125 = pneg %p124
    $region22: #{unet_conv2_forward.3} parent=5 // pred_check_branch
      %127 = sbr.rel (%p125) target = $region24
    $region23: #{unet_conv2_forward.3} parent=5 // pred_region
      // Predicated region
      $region25: #{unet_conv2_forward.3} parent=23 // pred_check
        %p128 = pneg %p29
      $region26: #{unet_conv2_forward.3} parent=23 // pred_check_branch
        %130 = sbr.rel (%p128) target = $region28
      $region27: #{unet_conv2_forward.3} parent=23 // pred_region
        %s131 = smul.u32 32, %s9
        %p132 = scmp.lt.s32.totalorder %s131, 63
        %s133 = scalar_select %p132, %s131, 63
        %s134 = smul.addr %s133, 8
        %s135 = scalar_lea.vmem %s0, %s134
        %s136 = smul.u32 32, %s9
      $region28: #{unet_conv2_forward.3} parent=23 // pred_fallthru
        _
    $region24: #{unet_conv2_forward.3} parent=5 // pred_fallthru
      _
    %p137 = scmp.le.s32.totalorder 1, %s9
    %p138 = scmp.lt.s32.totalorder %s9, 3
    %p139 = pnand %p137, %p138
    %p140 = pneg %p139
    // Predicated region
    $region29: #{unet_conv2_forward.3} parent=5 // pred_check
      _
    $region30: #{unet_conv2_forward.3} parent=5 // pred_check_branch
      %142 = sbr.rel (%p139) target = $region32
    $region31: #{unet_conv2_forward.3} parent=5 // pred_region
      %s143 = ssub.s32 %s9, 1
      %s144 = smul.u32 32, %s14
      %p145 = scmp.lt.s32.totalorder %s144, 63
      %s146 = scalar_select %p145, %s144, 63
      %s147 = smul.addr %s146, 8
      %s148 = scalar_lea.vmem %s0, %s147
      %p149 = pneg %p35
      %p150 = pneg %p32
      %p151 = pneg %p56
      %p152 = pneg %p53
      %p153 = pneg %p77
      %p154 = pneg %p74
      %p155 = pneg %p103
      %p156 = pneg %p100
      %s157 = smul.u32 32, %s14
      %p158 = scmp.lt.s32.totalorder %s157, 63
      %s159 = scalar_select %p158, %s157, 63
      %s160 = smul.addr %s159, 8
      %s161 = scalar_lea.vmem %s3, %s160
      %s162 = smul.u32 32, %s14
      %p163 = scmp.lt.s32.totalorder %s162, 63
      %s164 = scalar_select %p163, %s162, 63
      %s165 = smul.addr %s164, 8
      %s166 = scalar_lea.vmem %s0, %s165
      %s167 = smul.u32 32, %s14
      %s168 = smul.u32 32, %s14
      %p169 = scmp.lt.s32.totalorder %s168, 63
      %s170 = scalar_select %p169, %s168, 63
      %s171 = smul.addr %s170, 8
      %s172 = scalar_lea.vmem %s3, %s171
      %s173 = smul.u32 32, %s14
      %v174 = vld [vmem:[%s166] sm:$0xff]
      %v175 = vld [vmem:[%s166 + $0x8] sm:$0xff]
      %v176 = vld [vmem:[%s166 + $0x10] sm:$0xff]
      %v177 = vld [vmem:[%s166 + $0x18] sm:$0xff]
      %v178 = vld [vmem:[%s166 + $0x20] sm:$0xff]
      %v179 = vld [vmem:[%s166 + $0x28] sm:$0xff]
      %v180 = vld [vmem:[%s166 + $0x30] sm:$0xff]
      %v181 = vld [vmem:[%s166 + $0x38] sm:$0xff]
      %v182 = vld [vmem:[%s166 + $0x40] sm:$0xff]
      %v183 = vld [vmem:[%s166 + $0x48] sm:$0xff]
      %v184 = vld [vmem:[%s166 + $0x50] sm:$0xff]
      %v185 = vld [vmem:[%s166 + $0x58] sm:$0xff]
      %v186 = vld [vmem:[%s166 + $0x60] sm:$0xff]
      %v187 = vld [vmem:[%s166 + $0x68] sm:$0xff]
      %v188 = vld [vmem:[%s166 + $0x70] sm:$0xff]
      %v189 = vld [vmem:[%s166 + $0x78] sm:$0xff]
      %v190 = vld [vmem:[%s166 + $0x80] sm:$0xff]
      %v191 = vld [vmem:[%s166 + $0x88] sm:$0xff]
      %v192 = vld [vmem:[%s166 + $0x90] sm:$0xff]
      %v193 = vld [vmem:[%s166 + $0x98] sm:$0xff]
      %v194 = vld [vmem:[%s166 + $0xa0] sm:$0xff]
      %v195 = vld [vmem:[%s166 + $0xa8] sm:$0xff]
      %v196 = vld [vmem:[%s166 + $0xb0] sm:$0xff]
      %v197 = vld [vmem:[%s166 + $0xb8] sm:$0xff]
      %v198 = vld [vmem:[%s166 + $0xc0] sm:$0xff]
      %v199 = vld [vmem:[%s166 + $0xc8] sm:$0xff]
      %v200 = vld [vmem:[%s166 + $0xd0] sm:$0xff]
      %v201 = vld [vmem:[%s166 + $0xd8] sm:$0xff]
      %v202 = vld [vmem:[%s166 + $0xe0] sm:$0xff]
      %v203 = vld [vmem:[%s166 + $0xe8] sm:$0xff]
      %v204 = vld [vmem:[%s166 + $0xf0] sm:$0xff]
      %v205 = vld [vmem:[%s166 + $0xf8] sm:$0xff]
      %v206 = vld [vmem:[%s1] sm:$0xff]
      %v207 = vld [vmem:[%s1 + $0x8] sm:$0xff]
      %v208 = vld [vmem:[%s1 + $0x10] sm:$0xff]
      %v209 = vld [vmem:[%s1 + $0x18] sm:$0xff]
      %v210 = vld [vmem:[%s1 + $0x20] sm:$0xff]
      %v211 = vld [vmem:[%s1 + $0x28] sm:$0xff]
      %v212 = vld [vmem:[%s1 + $0x30] sm:$0xff]
      %v213 = vld [vmem:[%s1 + $0x38] sm:$0xff]
      %v214 = vld [vmem:[%s1 + $0x40] sm:$0xff]
      %v215 = vld [vmem:[%s1 + $0x48] sm:$0xff]
      %v216 = vld [vmem:[%s1 + $0x50] sm:$0xff]
      %v217 = vld [vmem:[%s1 + $0x58] sm:$0xff]
      %v218 = vld [vmem:[%s1 + $0x60] sm:$0xff]
      %v219 = vld [vmem:[%s1 + $0x68] sm:$0xff]
      %v220 = vld [vmem:[%s1 + $0x70] sm:$0xff]
      %v221 = vld [vmem:[%s1 + $0x78] sm:$0xff]
      %v222 = vld [vmem:[%s2] sm:$0x1]
      %v224 = vlaneseq
      %v225 = vshrl.u32 %v224, 7
      %v226 = vsub.s32 0, %v225
      %v227 = vrot.slane %v222, %v226
      %229 = vmatprep.subr.mxu0 0.0
      %230 = vmatpush1.msra.mxu0 %v206
      %231 = vmatprep.subr.mxu0 0.0
      %232 = vmatpush1.msra.mxu0 %v207
      %233 = vmatprep.subr.mxu0 0.0
      %234 = vmatpush1.msra.mxu0 %v208
      %235 = vmatprep.subr.mxu0 0.0
      %236 = vmatpush1.msra.mxu0 %v209
      %237 = vmatprep.subr.mxu0 0.0
      %238 = vmatpush1.msra.mxu0 %v210
      %239 = vmatprep.subr.mxu0 0.0
      %240 = vmatpush1.msra.mxu0 %v211
      %241 = vmatprep.subr.mxu0 0.0
      %242 = vmatpush1.msra.mxu0 %v212
      %243 = vmatprep.subr.mxu0 0.0
      %244 = vmatpush1.msra.mxu0 %v213
      %245 = vmatprep.subr.mxu0 0.0
      %246 = vmatpush1.msra.mxu0 %v214
      %247 = vmatprep.subr.mxu0 0.0
      %248 = vmatpush1.msra.mxu0 %v215
      %249 = vmatprep.subr.mxu0 0.0
      %250 = vmatpush1.msra.mxu0 %v216
      %251 = vmatprep.subr.mxu0 0.0
      %252 = vmatpush1.msra.mxu0 %v217
      %253 = vmatprep.subr.mxu0 0.0
      %254 = vmatpush1.msra.mxu0 %v218
      %255 = vmatprep.subr.mxu0 0.0
      %256 = vmatpush1.msra.mxu0 %v219
      %257 = vmatprep.subr.mxu0 0.0
      %258 = vmatpush1.msra.mxu0 %v220
      %259 = vmatprep.subr.mxu0 0.0
      %260 = vmatpush1.msra.mxu0 %v221
      %261 = vmatprep.subr.mxu0 0.0
      %262 = vmatpush1.msra.mxu0 0.0
      %263 = vmatprep.subr.mxu0 0.0
      %264 = vmatpush1.msra.mxu0 0.0
      %265 = vmatprep.subr.mxu0 0.0
      %266 = vmatpush1.msra.mxu0 0.0
      %267 = vmatprep.subr.mxu0 0.0
      %268 = vmatpush1.msra.mxu0 0.0
      %269 = vmatprep.subr.mxu0 0.0
      %270 = vmatpush1.msra.mxu0 0.0
      %271 = vmatprep.subr.mxu0 0.0
      %272 = vmatpush1.msra.mxu0 0.0
      %273 = vmatprep.subr.mxu0 0.0
      %274 = vmatpush1.msra.mxu0 0.0
      %275 = vmatprep.subr.mxu0 0.0
      %276 = vmatpush1.msra.mxu0 0.0
      %277 = vmatprep.subr.mxu0 0.0
      %278 = vmatpush1.msra.mxu0 0.0
      %279 = vmatprep.subr.mxu0 0.0
      %280 = vmatpush1.msra.mxu0 0.0
      %281 = vmatprep.subr.mxu0 0.0
      %282 = vmatpush1.msra.mxu0 0.0
      %283 = vmatprep.subr.mxu0 0.0
      %284 = vmatpush1.msra.mxu0 0.0
      %285 = vmatprep.subr.mxu0 0.0
      %286 = vmatpush1.msra.mxu0 0.0
      %287 = vmatprep.subr.mxu0 0.0
      %288 = vmatpush1.msra.mxu0 0.0
      %289 = vmatprep.subr.mxu0 0.0
      %290 = vmatpush1.msra.mxu0 0.0
      %291 = vmatprep.subr.mxu0 0.0
      %292 = vmatpush1.msra.mxu0 0.0
      %293 = vmatprep.mubr.f32.mxu0 0.0
      %294 = vmatmul.mubr.f32.gmra.mrb[0].mxu0 %v174
      %v295 = vpop.f32.mrb[0].mxu0
      %v296 = vadd.f32 %v227, %v295
      %v297 = vpop.f32.mrb[0].mxu0
      %298 = vmatprep.mubr.f32.mxu0 0.0
      %299 = vmatmul.mubr.f32.gmra.mrb[0].mxu0 %v175
      %v300 = vpop.f32.mrb[0].mxu0
      %v301 = vadd.f32 %v227, %v300
      %v302 = vpop.f32.mrb[0].mxu0
      %303 = vmatprep.mubr.f32.mxu0 0.0
      %304 = vmatmul.mubr.f32.gmra.mrb[0].mxu0 %v176
      %v305 = vpop.f32.mrb[0].mxu0
      %v306 = vadd.f32 %v227, %v305
      %v307 = vpop.f32.mrb[0].mxu0
      %308 = vmatprep.mubr.f32.mxu0 0.0
      %309 = vmatmul.mubr.f32.gmra.mrb[0].mxu0 %v177
      %v310 = vpop.f32.mrb[0].mxu0
      %v311 = vadd.f32 %v227, %v310
      %v312 = vpop.f32.mrb[0].mxu0
      %313 = vmatprep.mubr.f32.mxu0 0.0
      %314 = vmatmul.mubr.f32.gmra.mrb[0].mxu0 %v178
      %v315 = vpop.f32.mrb[0].mxu0
      %v316 = vadd.f32 %v227, %v315
      %v317 = vpop.f32.mrb[0].mxu0
      %318 = vmatprep.mubr.f32.mxu0 0.0
      %319 = vmatmul.mubr.f32.gmra.mrb[0].mxu0 %v179
      %v320 = vpop.f32.mrb[0].mxu0
      %v321 = vadd.f32 %v227, %v320
      %v322 = vpop.f32.mrb[0].mxu0
      %323 = vmatprep.mubr.f32.mxu0 0.0
      %324 = vmatmul.mubr.f32.gmra.mrb[0].mxu0 %v180
      %v325 = vpop.f32.mrb[0].mxu0
      %v326 = vadd.f32 %v227, %v325
      %v327 = vpop.f32.mrb[0].mxu0
      %328 = vmatprep.mubr.f32.mxu0 0.0
      %329 = vmatmul.mubr.f32.gmra.mrb[0].mxu0 %v181
      %v330 = vpop.f32.mrb[0].mxu0
      %v331 = vadd.f32 %v227, %v330
      %v332 = vpop.f32.mrb[0].mxu0
      %333 = vmatprep.mubr.f32.mxu0 0.0
      %334 = vmatmul.mubr.f32.gmra.mrb[0].mxu0 %v182
      %v335 = vpop.f32.mrb[0].mxu0
      %v336 = vadd.f32 %v227, %v335
      %v337 = vpop.f32.mrb[0].mxu0
      %338 = vmatprep.mubr.f32.mxu0 0.0
      %339 = vmatmul.mubr.f32.gmra.mrb[0].mxu0 %v183
      %v340 = vpop.f32.mrb[0].mxu0
      %v341 = vadd.f32 %v227, %v340
      %v342 = vpop.f32.mrb[0].mxu0
      %343 = vmatprep.mubr.f32.mxu0 0.0
      %344 = vmatmul.mubr.f32.gmra.mrb[0].mxu0 %v184
      %v345 = vpop.f32.mrb[0].mxu0
      %v346 = vadd.f32 %v227, %v345
      %v347 = vpop.f32.mrb[0].mxu0
      %348 = vmatprep.mubr.f32.mxu0 0.0
      %349 = vmatmul.mubr.f32.gmra.mrb[0].mxu0 %v185
      %v350 = vpop.f32.mrb[0].mxu0
      %v351 = vadd.f32 %v227, %v350
      %v352 = vpop.f32.mrb[0].mxu0
      %353 = vmatprep.mubr.f32.mxu0 0.0
      %354 = vmatmul.mubr.f32.gmra.mrb[0].mxu0 %v186
      %v355 = vpop.f32.mrb[0].mxu0
      %v356 = vadd.f32 %v227, %v355
      %v357 = vpop.f32.mrb[0].mxu0
      %358 = vmatprep.mubr.f32.mxu0 0.0
      %359 = vmatmul.mubr.f32.gmra.mrb[0].mxu0 %v187
      %v360 = vpop.f32.mrb[0].mxu0
      %v361 = vadd.f32 %v227, %v360
      %v362 = vpop.f32.mrb[0].mxu0
      %363 = vmatprep.mubr.f32.mxu0 0.0
      %364 = vmatmul.mubr.f32.gmra.mrb[0].mxu0 %v188
      %v365 = vpop.f32.mrb[0].mxu0
      %v366 = vadd.f32 %v227, %v365
      %v367 = vpop.f32.mrb[0].mxu0
      %368 = vmatprep.mubr.f32.mxu0 0.0
      %369 = vmatmul.mubr.f32.gmra.mrb[0].mxu0 %v189
      %v370 = vpop.f32.mrb[0].mxu0
      %v371 = vadd.f32 %v227, %v370
      %v372 = vpop.f32.mrb[0].mxu0
      %373 = vmatprep.mubr.f32.mxu0 0.0
      %374 = vmatmul.mubr.f32.gmra.mrb[0].mxu0 %v190
      %v375 = vpop.f32.mrb[0].mxu0
      %v376 = vadd.f32 %v227, %v375
      %v377 = vpop.f32.mrb[0].mxu0
      %378 = vmatprep.mubr.f32.mxu0 0.0
      %379 = vmatmul.mubr.f32.gmra.mrb[0].mxu0 %v191
      %v380 = vpop.f32.mrb[0].mxu0
      %v381 = vadd.f32 %v227, %v380
      %v382 = vpop.f32.mrb[0].mxu0
      %383 = vmatprep.mubr.f32.mxu0 0.0
      %384 = vmatmul.mubr.f32.gmra.mrb[0].mxu0 %v192
      %v385 = vpop.f32.mrb[0].mxu0
      %v386 = vadd.f32 %v227, %v385
      %v387 = vpop.f32.mrb[0].mxu0
      %388 = vmatprep.mubr.f32.mxu0 0.0
      %389 = vmatmul.mubr.f32.gmra.mrb[0].mxu0 %v193
      %v390 = vpop.f32.mrb[0].mxu0
      %v391 = vadd.f32 %v227, %v390
      %v392 = vpop.f32.mrb[0].mxu0
      %393 = vmatprep.mubr.f32.mxu0 0.0
      %394 = vmatmul.mubr.f32.gmra.mrb[0].mxu0 %v194
      %v395 = vpop.f32.mrb[0].mxu0
      %v396 = vadd.f32 %v227, %v395
      %v397 = vpop.f32.mrb[0].mxu0
      %398 = vmatprep.mubr.f32.mxu0 0.0
      %399 = vmatmul.mubr.f32.gmra.mrb[0].mxu0 %v195
      %v400 = vpop.f32.mrb[0].mxu0
      %v401 = vadd.f32 %v227, %v400
      %v402 = vpop.f32.mrb[0].mxu0
      %403 = vmatprep.mubr.f32.mxu0 0.0
      %404 = vmatmul.mubr.f32.gmra.mrb[0].mxu0 %v196
      %v405 = vpop.f32.mrb[0].mxu0
      %v406 = vadd.f32 %v227, %v405
      %v407 = vpop.f32.mrb[0].mxu0
      %408 = vmatprep.mubr.f32.mxu0 0.0
      %409 = vmatmul.mubr.f32.gmra.mrb[0].mxu0 %v197
      %v410 = vpop.f32.mrb[0].mxu0
      %v411 = vadd.f32 %v227, %v410
      %v412 = vpop.f32.mrb[0].mxu0
      %413 = vmatprep.mubr.f32.mxu0 0.0
      %414 = vmatmul.mubr.f32.gmra.mrb[0].mxu0 %v198
      %v415 = vpop.f32.mrb[0].mxu0
      %v416 = vadd.f32 %v227, %v415
      %v417 = vpop.f32.mrb[0].mxu0
      %418 = vmatprep.mubr.f32.mxu0 0.0
      %419 = vmatmul.mubr.f32.gmra.mrb[0].mxu0 %v199
      %v420 = vpop.f32.mrb[0].mxu0
      %v421 = vadd.f32 %v227, %v420
      %v422 = vpop.f32.mrb[0].mxu0
      %423 = vmatprep.mubr.f32.mxu0 0.0
      %424 = vmatmul.mubr.f32.gmra.mrb[0].mxu0 %v200
      %v425 = vpop.f32.mrb[0].mxu0
      %v426 = vadd.f32 %v227, %v425
      %v427 = vpop.f32.mrb[0].mxu0
      %428 = vmatprep.mubr.f32.mxu0 0.0
      %429 = vmatmul.mubr.f32.gmra.mrb[0].mxu0 %v201
      %v430 = vpop.f32.mrb[0].mxu0
      %v431 = vadd.f32 %v227, %v430
      %v432 = vpop.f32.mrb[0].mxu0
      %433 = vmatprep.mubr.f32.mxu0 0.0
      %434 = vmatmul.mubr.f32.gmra.mrb[0].mxu0 %v202
      %v435 = vpop.f32.mrb[0].mxu0
      %v436 = vadd.f32 %v227, %v435
      %v437 = vpop.f32.mrb[0].mxu0
      %438 = vmatprep.mubr.f32.mxu0 0.0
      %439 = vmatmul.mubr.f32.gmra.mrb[0].mxu0 %v203
      %v440 = vpop.f32.mrb[0].mxu0
      %v441 = vadd.f32 %v227, %v440
      %v442 = vpop.f32.mrb[0].mxu0
      %443 = vmatprep.mubr.f32.mxu0 0.0
      %444 = vmatmul.mubr.f32.gmra.mrb[0].mxu0 %v204
      %v445 = vpop.f32.mrb[0].mxu0
      %v446 = vadd.f32 %v227, %v445
      %v447 = vpop.f32.mrb[0].mxu0
      %448 = vmatprep.mubr.f32.mxu0 0.0
      %449 = vmatmul.mubr.f32.gmra.mrb[0].mxu0 %v205
      %v450 = vpop.f32.mrb[0].mxu0
      %v451 = vadd.f32 %v227, %v450
      %v452 = vpop.f32.mrb[0].mxu0
      %453 = vdwg.mxu0
      %454 = vst [vmem:[%s172] sm:$0xff] %v296
      %455 = vst [vmem:[%s172 + $0x8] sm:$0xff] %v301
      %456 = vst [vmem:[%s172 + $0x10] sm:$0xff] %v306
      %457 = vst [vmem:[%s172 + $0x18] sm:$0xff] %v311
      %458 = vst [vmem:[%s172 + $0x20] sm:$0xff] %v316
      %459 = vst [vmem:[%s172 + $0x28] sm:$0xff] %v321
      %460 = vst [vmem:[%s172 + $0x30] sm:$0xff] %v326
      %461 = vst [vmem:[%s172 + $0x38] sm:$0xff] %v331
      %462 = vst [vmem:[%s172 + $0x40] sm:$0xff] %v336
      %463 = vst [vmem:[%s172 + $0x48] sm:$0xff] %v341
      %464 = vst [vmem:[%s172 + $0x50] sm:$0xff] %v346
      %465 = vst [vmem:[%s172 + $0x58] sm:$0xff] %v351
      %466 = vst [vmem:[%s172 + $0x60] sm:$0xff] %v356
      %467 = vst [vmem:[%s172 + $0x68] sm:$0xff] %v361
      %468 = vst [vmem:[%s172 + $0x70] sm:$0xff] %v366
      %469 = vst [vmem:[%s172 + $0x78] sm:$0xff] %v371
      %470 = vst [vmem:[%s172 + $0x80] sm:$0xff] %v376
      %471 = vst [vmem:[%s172 + $0x88] sm:$0xff] %v381
      %472 = vst [vmem:[%s172 + $0x90] sm:$0xff] %v386
      %473 = vst [vmem:[%s172 + $0x98] sm:$0xff] %v391
      %474 = vst [vmem:[%s172 + $0xa0] sm:$0xff] %v396
      %475 = vst [vmem:[%s172 + $0xa8] sm:$0xff] %v401
      %476 = vst [vmem:[%s172 + $0xb0] sm:$0xff] %v406
      %477 = vst [vmem:[%s172 + $0xb8] sm:$0xff] %v411
      %478 = vst [vmem:[%s172 + $0xc0] sm:$0xff] %v416
      %479 = vst [vmem:[%s172 + $0xc8] sm:$0xff] %v421
      %480 = vst [vmem:[%s172 + $0xd0] sm:$0xff] %v426
      %481 = vst [vmem:[%s172 + $0xd8] sm:$0xff] %v431
      %482 = vst [vmem:[%s172 + $0xe0] sm:$0xff] %v436
      %483 = vst [vmem:[%s172 + $0xe8] sm:$0xff] %v441
      %484 = vst [vmem:[%s172 + $0xf0] sm:$0xff] %v446
      %485 = vst [vmem:[%s172 + $0xf8] sm:$0xff] %v451
      %s486 = smul.u32 32, %s14
      %p487 = scmp.lt.s32.totalorder %s486, 63
      %s488 = scalar_select %p487, %s486, 63
      %s489 = smul.addr %s488, 8
      %s490 = scalar_lea.vmem %s3, %s489
      // Predicated region
      $region33: #{unet_conv2_forward.3} parent=31 // pred_check
        %p491 = pneg %p100
      $region34: #{unet_conv2_forward.3} parent=31 // pred_check_branch
        %493 = sbr.rel (%p491) target = $region36
      $region35: #{unet_conv2_forward.3} parent=31 // pred_region
        %s494 = smul.u32 32, %s14
      $region36: #{unet_conv2_forward.3} parent=31 // pred_fallthru
        _
    $region32: #{unet_conv2_forward.3} parent=5 // pred_fallthru
      _
    %p495 = scmp.le.s32.totalorder 2, %s9
    // Predicated region
    $region37: #{unet_conv2_forward.3} parent=5 // pred_check
      %p496 = pneg %p495
    $region38: #{unet_conv2_forward.3} parent=5 // pred_check_branch
      %498 = sbr.rel (%p496) target = $region40
    $region39: #{unet_conv2_forward.3} parent=5 // pred_region
      %s499 = ssub.s32 %s9, 2
      // Predicated region
      $region41: #{unet_conv2_forward.3} parent=39 // pred_check
        %p500 = pneg %p106
      $region42: #{unet_conv2_forward.3} parent=39 // pred_check_branch
        %502 = sbr.rel (%p500) target = $region44
      $region43: #{unet_conv2_forward.3} parent=39 // pred_region
        %s503 = smul.u32 32, %s15
        %p504 = scmp.lt.s32.totalorder %s503, 63
        %s505 = scalar_select %p504, %s503, 63
        %s506 = smul.addr %s505, 8
        %s507 = scalar_lea.vmem %s3, %s506
      $region44: #{unet_conv2_forward.3} parent=39 // pred_fallthru
        _
    $region40: #{unet_conv2_forward.3} parent=5 // pred_fallthru
      _
  $region6: #{unet_conv2_forward.3} parent=0 // loop_footer
    %s13 = sadd.s32 1, %s9
  $region7: #{unet_conv2_forward.3} parent=0 // loop_footer_branch
    %8 = sbr.rel target = $region3
  $region8: #{unet_conv2_forward.3} parent=0 // loop_exit
    _

// kernel: unet_conv2_forward.5
$region0: #{unet_conv2_forward.5}
  #allocation0 [shape = 'u32[]', space=smem, size = 0x4, offset = 0x4, fixed_abs, tag = 'smem constant byte address 0x4 - core index']
  #allocation1 [shape = 'u32[144,128]{1,0:T(1,128)}', space=vmem, size = 0x12000, scoped, tag = 'internal scratch']
  %s0 = inlined_call_operand.vmem [shape: f32[512,128], index: 0, kind: input, shape index: {}]
  %s1 = inlined_call_operand.vmem [shape: f32[512,128], index: 1, kind: input, shape index: {}]
  %s2 = inlined_call_operand.vmem [shape: f32[1,128], index: 2, kind: input, shape index: {}]
  %s3 = inlined_call_operand.vmem [shape: f32[1,128], index: 3, kind: input, shape index: {}]
  %s4 = inlined_call_operand.vmem [shape: f32[512,128], index: 4, kind: output, shape index: {}]
  %s5 = sld [smem:[#allocation0]]
  $region49: #{unet_conv2_forward.5} parent=0
    _
  %s7 = ssub.s32 1, %s5
  %s8 = scalar_select 0, %s7, %s5
  loop: start=0, step=1, limit=4
  $region2: #{unet_conv2_forward.5} parent=0 // loop_pre_header
    _
  $region3: #{unet_conv2_forward.5} parent=0 // loop_header
    %s10 = sphi 0, %s14
    %p11 = scmp.ge.s32.totalorder %s10, 4
    %s20 = sphi 0, %s22
    %s23 = sphi 0, %s20
    %s24 = sphi 0, %s23
    %s40 = sphi 0, %s24
    %s46 = sphi 0, %s48
    %s49 = sphi 0, %s46
    %s50 = sphi 0, %s49
    %s66 = sphi 0, %s50
    %s70 = sphi 0, %s70
    %s72 = sphi 0, %s70
    %s73 = sphi 0, %s72
    %s87 = sphi 0, %s73
    %s91 = sphi 0, %s91
    %s93 = sphi 0, %s91
    %s94 = sphi 0, %s93
    %s108 = sphi 0, %s94
    %s114 = sphi 0, %s116
    %s117 = sphi 0, %s114
    %s118 = sphi 0, %s117
    %s134 = sphi 0, %s118
  $region4: #{unet_conv2_forward.5} parent=0 // loop_header_branch
    %13 = sbr.rel (%p11) target = $region8
  $region5: #{unet_conv2_forward.5} parent=0 // loop_body
    %s15 = ssub.s32 %s10, 1
    %s16 = ssub.s32 %s10, 2
    %s17 = sadd.s32 %s10, 1
    %s18 = ssub.s32 %s10, %s17
    %p19 = scmp.eq.s32.totalorder %s18, 0
    %s21 = sadd.s32 %s20, 1
    %s22 = scalar_select %p19, %s20, %s21
    %p25 = pneg %p19
    %p26 = scmp.eq.s32.totalorder %s10, 1
    %p27 = por %p25, %p26
    %p28 = scmp.ne.s32.totalorder %s20, %s23
    %p29 = scmp.eq.s32.totalorder %s10, 0
    %p30 = por %p28, %p29
    %p31 = scmp.ne.s32.totalorder %s20, %s23
    %p32 = scmp.eq.s32.totalorder %s15, 1
    %p33 = por %p31, %p32
    %p34 = scmp.ne.s32.totalorder %s23, %s24
    %p35 = scmp.eq.s32.totalorder %s15, 0
    %p36 = por %p34, %p35
    %p37 = scmp.ne.s32.totalorder %s23, %s24
    %p38 = scmp.eq.s32.totalorder %s16, 1
    %p39 = por %p37, %p38
    %p41 = scmp.ne.s32.totalorder %s24, %s40
    %p42 = scmp.eq.s32.totalorder %s16, 0
    %p43 = por %p41, %p42
    %s44 = ssub.s32 %s10, %s17
    %p45 = scmp.eq.s32.totalorder %s44, 0
    %s47 = sadd.s32 %s46, 1
    %s48 = scalar_select %p45, %s46, %s47
    %p51 = pneg %p45
    %p52 = scmp.eq.s32.totalorder %s10, 1
    %p53 = por %p51, %p52
    %p54 = scmp.ne.s32.totalorder %s46, %s49
    %p55 = scmp.eq.s32.totalorder %s10, 0
    %p56 = por %p54, %p55
    %p57 = scmp.ne.s32.totalorder %s46, %s49
    %p58 = scmp.eq.s32.totalorder %s15, 1
    %p59 = por %p57, %p58
    %p60 = scmp.ne.s32.totalorder %s49, %s50
    %p61 = scmp.eq.s32.totalorder %s15, 0
    %p62 = por %p60, %p61
    %p63 = scmp.ne.s32.totalorder %s49, %s50
    %p64 = scmp.eq.s32.totalorder %s16, 1
    %p65 = por %p63, %p64
    %p67 = scmp.ne.s32.totalorder %s50, %s66
    %p68 = scmp.eq.s32.totalorder %s16, 0
    %p69 = por %p67, %p68
    %s71 = sadd.s32 %s70, 1
    %p74 = scmp.eq.s32.totalorder %s10, 1
    %p75 = scmp.ne.s32.totalorder %s70, %s72
    %p76 = scmp.eq.s32.totalorder %s10, 0
    %p77 = por %p75, %p76
    %p78 = scmp.ne.s32.totalorder %s70, %s72
    %p79 = scmp.eq.s32.totalorder %s15, 1
    %p80 = por %p78, %p79
    %p81 = scmp.ne.s32.totalorder %s72, %s73
    %p82 = scmp.eq.s32.totalorder %s15, 0
    %p83 = por %p81, %p82
    %p84 = scmp.ne.s32.totalorder %s72, %s73
    %p85 = scmp.eq.s32.totalorder %s16, 1
    %p86 = por %p84, %p85
    %p88 = scmp.ne.s32.totalorder %s73, %s87
    %p89 = scmp.eq.s32.totalorder %s16, 0
    %p90 = por %p88, %p89
    %s92 = sadd.s32 %s91, 1
    %p95 = scmp.eq.s32.totalorder %s10, 1
    %p96 = scmp.ne.s32.totalorder %s91, %s93
    %p97 = scmp.eq.s32.totalorder %s10, 0
    %p98 = por %p96, %p97
    %p99 = scmp.ne.s32.totalorder %s91, %s93
    %p100 = scmp.eq.s32.totalorder %s15, 1
    %p101 = por %p99, %p100
    %p102 = scmp.ne.s32.totalorder %s93, %s94
    %p103 = scmp.eq.s32.totalorder %s15, 0
    %p104 = por %p102, %p103
    %p105 = scmp.ne.s32.totalorder %s93, %s94
    %p106 = scmp.eq.s32.totalorder %s16, 1
    %p107 = por %p105, %p106
    %p109 = scmp.ne.s32.totalorder %s94, %s108
    %p110 = scmp.eq.s32.totalorder %s16, 0
    %p111 = por %p109, %p110
    %s112 = ssub.s32 %s10, %s17
    %p113 = scmp.eq.s32.totalorder %s112, 0
    %s115 = sadd.s32 %s114, 1
    %s116 = scalar_select %p113, %s114, %s115
    %p119 = pneg %p113
    %p120 = scmp.eq.s32.totalorder %s10, 1
    %p121 = por %p119, %p120
    %p122 = scmp.ne.s32.totalorder %s114, %s117
    %p123 = scmp.eq.s32.totalorder %s10, 0
    %p124 = por %p122, %p123
    %p125 = scmp.ne.s32.totalorder %s114, %s117
    %p126 = scmp.eq.s32.totalorder %s15, 1
    %p127 = por %p125, %p126
    %p128 = scmp.ne.s32.totalorder %s117, %s118
    %p129 = scmp.eq.s32.totalorder %s15, 0
    %p130 = por %p128, %p129
    %p131 = scmp.ne.s32.totalorder %s117, %s118
    %p132 = scmp.eq.s32.totalorder %s16, 1
    %p133 = por %p131, %p132
    %p135 = scmp.ne.s32.totalorder %s118, %s134
    %p136 = scmp.eq.s32.totalorder %s16, 0
    %p137 = por %p135, %p136
    %p138 = scmp.le.s32.totalorder 1, %s10
    %p139 = scmp.lt.s32.totalorder %s10, 3
    %p140 = pnand %p138, %p139
    %p141 = pneg %p140
    // Predicated region
    $region9: #{unet_conv2_forward.5} parent=5 // pred_check
      _
    $region10: #{unet_conv2_forward.5} parent=5 // pred_check_branch
      %143 = sbr.rel (%p140) target = $region12
    $region11: #{unet_conv2_forward.5} parent=5 // pred_region
      %s144 = ssub.s32 %s10, 1
      // Predicated region
      $region13: #{unet_conv2_forward.5} parent=11 // pred_check
        %p145 = pneg %p83
      $region14: #{unet_conv2_forward.5} parent=11 // pred_check_branch
        %147 = sbr.rel (%p145) target = $region16
      $region15: #{unet_conv2_forward.5} parent=11 // pred_region
        _
      $region16: #{unet_conv2_forward.5} parent=11 // pred_fallthru
        _
      // Predicated region
      $region17: #{unet_conv2_forward.5} parent=11 // pred_check
        %p148 = pneg %p104
      $region18: #{unet_conv2_forward.5} parent=11 // pred_check_branch
        %150 = sbr.rel (%p148) target = $region20
      $region19: #{unet_conv2_forward.5} parent=11 // pred_region
        _
      $region20: #{unet_conv2_forward.5} parent=11 // pred_fallthru
        _
    $region12: #{unet_conv2_forward.5} parent=5 // pred_fallthru
      _
    %p151 = scmp.lt.s32.totalorder %s10, 2
    // Predicated region
    $region21: #{unet_conv2_forward.5} parent=5 // pred_check
      %p152 = pneg %p151
    $region22: #{unet_conv2_forward.5} parent=5 // pred_check_branch
      %154 = sbr.rel (%p152) target = $region24
    $region23: #{unet_conv2_forward.5} parent=5 // pred_region
      // Predicated region
      $region25: #{unet_conv2_forward.5} parent=23 // pred_check
        %p155 = pneg %p30
      $region26: #{unet_conv2_forward.5} parent=23 // pred_check_branch
        %157 = sbr.rel (%p155) target = $region28
      $region27: #{unet_conv2_forward.5} parent=23 // pred_region
        %s158 = smul.u32 32, %s10
        %p159 = scmp.lt.s32.totalorder %s158, 63
        %s160 = scalar_select %p159, %s158, 63
        %s161 = smul.addr %s160, 8
        %s162 = scalar_lea.vmem %s0, %s161
        %s163 = smul.u32 32, %s10
      $region28: #{unet_conv2_forward.5} parent=23 // pred_fallthru
        _
      // Predicated region
      $region29: #{unet_conv2_forward.5} parent=23 // pred_check
        %p164 = pneg %p56
      $region30: #{unet_conv2_forward.5} parent=23 // pred_check_branch
        %166 = sbr.rel (%p164) target = $region32
      $region31: #{unet_conv2_forward.5} parent=23 // pred_region
        %s167 = smul.u32 32, %s10
        %p168 = scmp.lt.s32.totalorder %s167, 63
        %s169 = scalar_select %p168, %s167, 63
        %s170 = smul.addr %s169, 8
        %s171 = scalar_lea.vmem %s1, %s170
        %s172 = smul.u32 32, %s10
      $region32: #{unet_conv2_forward.5} parent=23 // pred_fallthru
        _
    $region24: #{unet_conv2_forward.5} parent=5 // pred_fallthru
      _
    %p173 = scmp.le.s32.totalorder 1, %s10
    %p174 = scmp.lt.s32.totalorder %s10, 3
    %p175 = pnand %p173, %p174
    %p176 = pneg %p175
    // Predicated region
    $region33: #{unet_conv2_forward.5} parent=5 // pred_check
      _
    $region34: #{unet_conv2_forward.5} parent=5 // pred_check_branch
      %178 = sbr.rel (%p175) target = $region36
    $region35: #{unet_conv2_forward.5} parent=5 // pred_region
      %s179 = ssub.s32 %s10, 1
      %s180 = smul.u32 32, %s15
      %p181 = scmp.lt.s32.totalorder %s180, 63
      %s182 = scalar_select %p181, %s180, 63
      %s183 = smul.addr %s182, 8
      %s184 = scalar_lea.vmem %s0, %s183
      %p185 = pneg %p36
      %p186 = pneg %p33
      %s187 = smul.u32 32, %s15
      %p188 = scmp.lt.s32.totalorder %s187, 63
      %s189 = scalar_select %p188, %s187, 63
      %s190 = smul.addr %s189, 8
      %s191 = scalar_lea.vmem %s1, %s190
      %p192 = pneg %p62
      %p193 = pneg %p59
      %p194 = pneg %p83
      %p195 = pneg %p80
      %p196 = pneg %p104
      %p197 = pneg %p101
      %p198 = pneg %p130
      %p199 = pneg %p127
      %s200 = smul.u32 32, %s15
      %p201 = scmp.lt.s32.totalorder %s200, 63
      %s202 = scalar_select %p201, %s200, 63
      %s203 = smul.addr %s202, 8
      %s204 = scalar_lea.vmem %s4, %s203
      %s205 = smul.u32 32, %s15
      %p206 = scmp.lt.s32.totalorder %s205, 63
      %s207 = scalar_select %p206, %s205, 63
      %s208 = smul.addr %s207, 8
      %s209 = scalar_lea.vmem %s0, %s208
      %s210 = smul.u32 32, %s15
      %s211 = smul.u32 32, %s15
      %p212 = scmp.lt.s32.totalorder %s211, 63
      %s213 = scalar_select %p212, %s211, 63
      %s214 = smul.addr %s213, 8
      %s215 = scalar_lea.vmem %s1, %s214
      %s216 = smul.u32 32, %s15
      %s217 = smul.u32 32, %s15
      %p218 = scmp.lt.s32.totalorder %s217, 63
      %s219 = scalar_select %p218, %s217, 63
      %s220 = smul.addr %s219, 8
      %s221 = scalar_lea.vmem %s4, %s220
      %s222 = smul.u32 32, %s15
      %v223 = vld [vmem:[%s209] sm:$0xff]
      %v224 = vld [vmem:[%s209 + $0x8] sm:$0xff]
      %v225 = vld [vmem:[%s209 + $0x10] sm:$0xff]
      %v226 = vld [vmem:[%s209 + $0x18] sm:$0xff]
      %v227 = vld [vmem:[%s209 + $0x20] sm:$0xff]
      %v228 = vld [vmem:[%s209 + $0x28] sm:$0xff]
      %v229 = vld [vmem:[%s209 + $0x30] sm:$0xff]
      %v230 = vld [vmem:[%s209 + $0x38] sm:$0xff]
      %v231 = vld [vmem:[%s209 + $0x40] sm:$0xff]
      %v232 = vld [vmem:[%s209 + $0x48] sm:$0xff]
      %v233 = vld [vmem:[%s209 + $0x50] sm:$0xff]
      %v234 = vld [vmem:[%s209 + $0x58] sm:$0xff]
      %v235 = vld [vmem:[%s209 + $0x60] sm:$0xff]
      %v236 = vld [vmem:[%s209 + $0x68] sm:$0xff]
      %v237 = vld [vmem:[%s209 + $0x70] sm:$0xff]
      %v238 = vld [vmem:[%s209 + $0x78] sm:$0xff]
      %v239 = vld [vmem:[%s209 + $0x80] sm:$0xff]
      %v240 = vld [vmem:[%s209 + $0x88] sm:$0xff]
      %v241 = vld [vmem:[%s209 + $0x90] sm:$0xff]
      %v242 = vld [vmem:[%s209 + $0x98] sm:$0xff]
      %v243 = vld [vmem:[%s209 + $0xa0] sm:$0xff]
      %v244 = vld [vmem:[%s209 + $0xa8] sm:$0xff]
      %v245 = vld [vmem:[%s209 + $0xb0] sm:$0xff]
      %v246 = vld [vmem:[%s209 + $0xb8] sm:$0xff]
      %v247 = vld [vmem:[%s209 + $0xc0] sm:$0xff]
      %v248 = vld [vmem:[%s209 + $0xc8] sm:$0xff]
      %v249 = vld [vmem:[%s209 + $0xd0] sm:$0xff]
      %v250 = vld [vmem:[%s209 + $0xd8] sm:$0xff]
      %v251 = vld [vmem:[%s209 + $0xe0] sm:$0xff]
      %v252 = vld [vmem:[%s209 + $0xe8] sm:$0xff]
      %v253 = vld [vmem:[%s209 + $0xf0] sm:$0xff]
      %v254 = vld [vmem:[%s209 + $0xf8] sm:$0xff]
      %v255 = vld [vmem:[%s2] sm:$0x1]
      %v257 = vlaneseq
      %v258 = vshrl.u32 %v257, 7
      %v259 = vsub.s32 0, %v258
      %v260 = vrot.slane %v255, %v259
      %v262 = vmul.f32 %v223, %v260
      %v263 = vmul.f32 %v224, %v260
      %v264 = vmul.f32 %v225, %v260
      %v265 = vmul.f32 %v226, %v260
      %v266 = vmul.f32 %v227, %v260
      %v267 = vmul.f32 %v228, %v260
      %v268 = vmul.f32 %v229, %v260
      %v269 = vmul.f32 %v230, %v260
      %v270 = vmul.f32 %v231, %v260
      %v271 = vmul.f32 %v232, %v260
      %v272 = vmul.f32 %v233, %v260
      %v273 = vmul.f32 %v234, %v260
      %v274 = vmul.f32 %v235, %v260
      %v275 = vmul.f32 %v236, %v260
      %v276 = vmul.f32 %v237, %v260
      %v277 = vmul.f32 %v238, %v260
      %v278 = vmul.f32 %v239, %v260
      %v279 = vmul.f32 %v240, %v260
      %v280 = vmul.f32 %v241, %v260
      %v281 = vmul.f32 %v242, %v260
      %v282 = vmul.f32 %v243, %v260
      %v283 = vmul.f32 %v244, %v260
      %v284 = vmul.f32 %v245, %v260
      %v285 = vmul.f32 %v246, %v260
      %v286 = vmul.f32 %v247, %v260
      %v287 = vmul.f32 %v248, %v260
      %v288 = vmul.f32 %v249, %v260
      %v289 = vmul.f32 %v250, %v260
      %v290 = vmul.f32 %v251, %v260
      %v291 = vmul.f32 %v252, %v260
      %v292 = vmul.f32 %v253, %v260
      %v293 = vmul.f32 %v254, %v260
      %v294 = vld [vmem:[%s3] sm:$0x1]
      %v296 = vlaneseq
      %v297 = vshrl.u32 %v296, 7
      %v298 = vsub.s32 0, %v297
      %v299 = vrot.slane %v294, %v298
      %v301 = vadd.f32 %v262, %v299
      %v302 = vadd.f32 %v263, %v299
      %v303 = vadd.f32 %v264, %v299
      %v304 = vadd.f32 %v265, %v299
      %v305 = vadd.f32 %v266, %v299
      %v306 = vadd.f32 %v267, %v299
      %v307 = vadd.f32 %v268, %v299
      %v308 = vadd.f32 %v269, %v299
      %v309 = vadd.f32 %v270, %v299
      %v310 = vadd.f32 %v271, %v299
      %v311 = vadd.f32 %v272, %v299
      %v312 = vadd.f32 %v273, %v299
      %v313 = vadd.f32 %v274, %v299
      %v314 = vadd.f32 %v275, %v299
      %v315 = vadd.f32 %v276, %v299
      %v316 = vadd.f32 %v277, %v299
      %v317 = vadd.f32 %v278, %v299
      %v318 = vadd.f32 %v279, %v299
      %v319 = vadd.f32 %v280, %v299
      %v320 = vadd.f32 %v281, %v299
      %v321 = vadd.f32 %v282, %v299
      %v322 = vadd.f32 %v283, %v299
      %v323 = vadd.f32 %v284, %v299
      %v324 = vadd.f32 %v285, %v299
      %v325 = vadd.f32 %v286, %v299
      %v326 = vadd.f32 %v287, %v299
      %v327 = vadd.f32 %v288, %v299
      %v328 = vadd.f32 %v289, %v299
      %v329 = vadd.f32 %v290, %v299
      %v330 = vadd.f32 %v291, %v299
      %v331 = vadd.f32 %v292, %v299
      %v332 = vadd.f32 %v293, %v299
      %v333 = vld [vmem:[%s215] sm:$0xff]
      %v334 = vld [vmem:[%s215 + $0x8] sm:$0xff]
      %v335 = vld [vmem:[%s215 + $0x10] sm:$0xff]
      %v336 = vld [vmem:[%s215 + $0x18] sm:$0xff]
      %v337 = vld [vmem:[%s215 + $0x20] sm:$0xff]
      %v338 = vld [vmem:[%s215 + $0x28] sm:$0xff]
      %v339 = vld [vmem:[%s215 + $0x30] sm:$0xff]
      %v340 = vld [vmem:[%s215 + $0x38] sm:$0xff]
      %v341 = vld [vmem:[%s215 + $0x40] sm:$0xff]
      %v342 = vld [vmem:[%s215 + $0x48] sm:$0xff]
      %v343 = vld [vmem:[%s215 + $0x50] sm:$0xff]
      %v344 = vld [vmem:[%s215 + $0x58] sm:$0xff]
      %v345 = vld [vmem:[%s215 + $0x60] sm:$0xff]
      %v346 = vld [vmem:[%s215 + $0x68] sm:$0xff]
      %v347 = vld [vmem:[%s215 + $0x70] sm:$0xff]
      %v348 = vld [vmem:[%s215 + $0x78] sm:$0xff]
      %v349 = vld [vmem:[%s215 + $0x80] sm:$0xff]
      %v350 = vld [vmem:[%s215 + $0x88] sm:$0xff]
      %v351 = vld [vmem:[%s215 + $0x90] sm:$0xff]
      %v352 = vld [vmem:[%s215 + $0x98] sm:$0xff]
      %v353 = vld [vmem:[%s215 + $0xa0] sm:$0xff]
      %v354 = vld [vmem:[%s215 + $0xa8] sm:$0xff]
      %v355 = vld [vmem:[%s215 + $0xb0] sm:$0xff]
      %v356 = vld [vmem:[%s215 + $0xb8] sm:$0xff]
      %v357 = vld [vmem:[%s215 + $0xc0] sm:$0xff]
      %v358 = vld [vmem:[%s215 + $0xc8] sm:$0xff]
      %v359 = vld [vmem:[%s215 + $0xd0] sm:$0xff]
      %v360 = vld [vmem:[%s215 + $0xd8] sm:$0xff]
      %v361 = vld [vmem:[%s215 + $0xe0] sm:$0xff]
      %v362 = vld [vmem:[%s215 + $0xe8] sm:$0xff]
      %v363 = vld [vmem:[%s215 + $0xf0] sm:$0xff]
      %v364 = vld [vmem:[%s215 + $0xf8] sm:$0xff]
      %v365 = vadd.f32 %v301, %v333
      %v366 = vadd.f32 %v302, %v334
      %v367 = vadd.f32 %v303, %v335
      %v368 = vadd.f32 %v304, %v336
      %v369 = vadd.f32 %v305, %v337
      %v370 = vadd.f32 %v306, %v338
      %v371 = vadd.f32 %v307, %v339
      %v372 = vadd.f32 %v308, %v340
      %v373 = vadd.f32 %v309, %v341
      %v374 = vadd.f32 %v310, %v342
      %v375 = vadd.f32 %v311, %v343
      %v376 = vadd.f32 %v312, %v344
      %v377 = vadd.f32 %v313, %v345
      %v378 = vadd.f32 %v314, %v346
      %v379 = vadd.f32 %v315, %v347
      %v380 = vadd.f32 %v316, %v348
      %v381 = vadd.f32 %v317, %v349
      %v382 = vadd.f32 %v318, %v350
      %v383 = vadd.f32 %v319, %v351
      %v384 = vadd.f32 %v320, %v352
      %v385 = vadd.f32 %v321, %v353
      %v386 = vadd.f32 %v322, %v354
      %v387 = vadd.f32 %v323, %v355
      %v388 = vadd.f32 %v324, %v356
      %v389 = vadd.f32 %v325, %v357
      %v390 = vadd.f32 %v326, %v358
      %v391 = vadd.f32 %v327, %v359
      %v392 = vadd.f32 %v328, %v360
      %v393 = vadd.f32 %v329, %v361
      %v394 = vadd.f32 %v330, %v362
      %v395 = vadd.f32 %v331, %v363
      %v396 = vadd.f32 %v332, %v364
      %v397 = vmax.f32 %v365, 0.0
      %v398 = vmax.f32 %v366, 0.0
      %v399 = vmax.f32 %v367, 0.0
      %v400 = vmax.f32 %v368, 0.0
      %v401 = vmax.f32 %v369, 0.0
      %v402 = vmax.f32 %v370, 0.0
      %v403 = vmax.f32 %v371, 0.0
      %v404 = vmax.f32 %v372, 0.0
      %v405 = vmax.f32 %v373, 0.0
      %v406 = vmax.f32 %v374, 0.0
      %v407 = vmax.f32 %v375, 0.0
      %v408 = vmax.f32 %v376, 0.0
      %v409 = vmax.f32 %v377, 0.0
      %v410 = vmax.f32 %v378, 0.0
      %v411 = vmax.f32 %v379, 0.0
      %v412 = vmax.f32 %v380, 0.0
      %v413 = vmax.f32 %v381, 0.0
      %v414 = vmax.f32 %v382, 0.0
      %v415 = vmax.f32 %v383, 0.0
      %v416 = vmax.f32 %v384, 0.0
      %v417 = vmax.f32 %v385, 0.0
      %v418 = vmax.f32 %v386, 0.0
      %v419 = vmax.f32 %v387, 0.0
      %v420 = vmax.f32 %v388, 0.0
      %v421 = vmax.f32 %v389, 0.0
      %v422 = vmax.f32 %v390, 0.0
      %v423 = vmax.f32 %v391, 0.0
      %v424 = vmax.f32 %v392, 0.0
      %v425 = vmax.f32 %v393, 0.0
      %v426 = vmax.f32 %v394, 0.0
      %v427 = vmax.f32 %v395, 0.0
      %v428 = vmax.f32 %v396, 0.0
      %429 = vst [vmem:[%s221] sm:$0xff] %v397
      %430 = vst [vmem:[%s221 + $0x8] sm:$0xff] %v398
      %431 = vst [vmem:[%s221 + $0x10] sm:$0xff] %v399
      %432 = vst [vmem:[%s221 + $0x18] sm:$0xff] %v400
      %433 = vst [vmem:[%s221 + $0x20] sm:$0xff] %v401
      %434 = vst [vmem:[%s221 + $0x28] sm:$0xff] %v402
      %435 = vst [vmem:[%s221 + $0x30] sm:$0xff] %v403
      %436 = vst [vmem:[%s221 + $0x38] sm:$0xff] %v404
      %437 = vst [vmem:[%s221 + $0x40] sm:$0xff] %v405
      %438 = vst [vmem:[%s221 + $0x48] sm:$0xff] %v406
      %439 = vst [vmem:[%s221 + $0x50] sm:$0xff] %v407
      %440 = vst [vmem:[%s221 + $0x58] sm:$0xff] %v408
      %441 = vst [vmem:[%s221 + $0x60] sm:$0xff] %v409
      %442 = vst [vmem:[%s221 + $0x68] sm:$0xff] %v410
      %443 = vst [vmem:[%s221 + $0x70] sm:$0xff] %v411
      %444 = vst [vmem:[%s221 + $0x78] sm:$0xff] %v412
      %445 = vst [vmem:[%s221 + $0x80] sm:$0xff] %v413
      %446 = vst [vmem:[%s221 + $0x88] sm:$0xff] %v414
      %447 = vst [vmem:[%s221 + $0x90] sm:$0xff] %v415
      %448 = vst [vmem:[%s221 + $0x98] sm:$0xff] %v416
      %449 = vst [vmem:[%s221 + $0xa0] sm:$0xff] %v417
      %450 = vst [vmem:[%s221 + $0xa8] sm:$0xff] %v418
      %451 = vst [vmem:[%s221 + $0xb0] sm:$0xff] %v419
      %452 = vst [vmem:[%s221 + $0xb8] sm:$0xff] %v420
      %453 = vst [vmem:[%s221 + $0xc0] sm:$0xff] %v421
      %454 = vst [vmem:[%s221 + $0xc8] sm:$0xff] %v422
      %455 = vst [vmem:[%s221 + $0xd0] sm:$0xff] %v423
      %456 = vst [vmem:[%s221 + $0xd8] sm:$0xff] %v424
      %457 = vst [vmem:[%s221 + $0xe0] sm:$0xff] %v425
      %458 = vst [vmem:[%s221 + $0xe8] sm:$0xff] %v426
      %459 = vst [vmem:[%s221 + $0xf0] sm:$0xff] %v427
      %460 = vst [vmem:[%s221 + $0xf8] sm:$0xff] %v428
      %s461 = smul.u32 32, %s15
      %p462 = scmp.lt.s32.totalorder %s461, 63
      %s463 = scalar_select %p462, %s461, 63
      %s464 = smul.addr %s463, 8
      %s465 = scalar_lea.vmem %s4, %s464
      // Predicated region
      $region37: #{unet_conv2_forward.5} parent=35 // pred_check
        %p466 = pneg %p127
      $region38: #{unet_conv2_forward.5} parent=35 // pred_check_branch
        %468 = sbr.rel (%p466) target = $region40
      $region39: #{unet_conv2_forward.5} parent=35 // pred_region
        %s469 = smul.u32 32, %s15
      $region40: #{unet_conv2_forward.5} parent=35 // pred_fallthru
        _
    $region36: #{unet_conv2_forward.5} parent=5 // pred_fallthru
      _
    %p470 = scmp.le.s32.totalorder 2, %s10
    // Predicated region
    $region41: #{unet_conv2_forward.5} parent=5 // pred_check
      %p471 = pneg %p470
    $region42: #{unet_conv2_forward.5} parent=5 // pred_check_branch
      %473 = sbr.rel (%p471) target = $region44
    $region43: #{unet_conv2_forward.5} parent=5 // pred_region
      %s474 = ssub.s32 %s10, 2
      // Predicated region
      $region45: #{unet_conv2_forward.5} parent=43 // pred_check
        %p475 = pneg %p133
      $region46: #{unet_conv2_forward.5} parent=43 // pred_check_branch
        %477 = sbr.rel (%p475) target = $region48
      $region47: #{unet_conv2_forward.5} parent=43 // pred_region
        %s478 = smul.u32 32, %s16
        %p479 = scmp.lt.s32.totalorder %s478, 63
        %s480 = scalar_select %p479, %s478, 63
        %s481 = smul.addr %s480, 8
        %s482 = scalar_lea.vmem %s4, %s481
      $region48: #{unet_conv2_forward.5} parent=43 // pred_fallthru
        _
    $region44: #{unet_conv2_forward.5} parent=5 // pred_fallthru
      _
  $region6: #{unet_conv2_forward.5} parent=0 // loop_footer
    %s14 = sadd.s32 1, %s10
  $region7: #{unet_conv2_forward.5} parent=0 // loop_footer_branch
    %9 = sbr.rel target = $region3
  $region8: #{unet_conv2_forward.5} parent=0 // loop_exit
    _

// kernel: unet_conv2_forward.4
$region0: #{unet_conv2_forward.4}
  #allocation0 [shape = 'u32[]', space=smem, size = 0x4, offset = 0x4, fixed_abs, tag = 'smem constant byte address 0x4 - core index']
  #allocation1 [shape = 'u32[144,128]{1,0:T(1,128)}', space=vmem, size = 0x12000, scoped, tag = 'internal scratch']
  #allocation2 [shape = 'f32[304,128]{1,0:T(8,128)}', space=vmem, size = 0x26000, scoped, tag = 'scratch operand']
  %s0 = inlined_call_operand.vmem [shape: f32[2,256,128], index: 0, kind: input, shape index: {}]
  %s1 = inlined_call_operand.vmem [shape: f32[1,128], index: 1, kind: input, shape index: {}]
  %s2 = inlined_call_operand.vmem [shape: f32[1,128], index: 2, kind: input, shape index: {}]
  %s3 = inlined_call_operand.vmem [shape: f32[9,128,128], index: 3, kind: input, shape index: {}]
  %s4 = inlined_call_operand.vmem [shape: f32[1,128], index: 4, kind: input, shape index: {}]
  %s5 = inlined_call_operand.vmem [shape: f32[2,256,128], index: 5, kind: output, shape index: {}]
  %s6 = sld [smem:[#allocation0]]
  $region53: #{unet_conv2_forward.4} parent=0
    _
  %s8 = ssub.s32 1, %s6
  %s9 = scalar_select 0, %s8, %s6
  loop: start=0, step=1, limit=4
  $region2: #{unet_conv2_forward.4} parent=0 // loop_pre_header
    _
  $region3: #{unet_conv2_forward.4} parent=0 // loop_header
    %s11 = sphi 0, %s15
    %p12 = scmp.ge.s32.totalorder %s11, 4
    %s21 = sphi 0, %s23
    %s24 = sphi 0, %s21
    %s25 = sphi 0, %s24
    %s41 = sphi 0, %s25
    %s45 = sphi 0, %s45
    %s47 = sphi 0, %s45
    %s48 = sphi 0, %s47
    %s62 = sphi 0, %s48
    %s66 = sphi 0, %s66
    %s68 = sphi 0, %s66
    %s69 = sphi 0, %s68
    %s83 = sphi 0, %s69
    %s87 = sphi 0, %s87
    %s89 = sphi 0, %s87
    %s90 = sphi 0, %s89
    %s104 = sphi 0, %s90
    %s108 = sphi 0, %s108
    %s110 = sphi 0, %s108
    %s111 = sphi 0, %s110
    %s125 = sphi 0, %s111
    %s131 = sphi 0, %s133
    %s134 = sphi 0, %s131
    %s135 = sphi 0, %s134
    %s151 = sphi 0, %s135
  $region4: #{unet_conv2_forward.4} parent=0 // loop_header_branch
    %14 = sbr.rel (%p12) target = $region8
  $region5: #{unet_conv2_forward.4} parent=0 // loop_body
    %s16 = ssub.s32 %s11, 1
    %s17 = ssub.s32 %s11, 2
    %s18 = sadd.s32 %s11, 1
    %s19 = ssub.s32 %s11, %s18
    %p20 = scmp.eq.s32.totalorder %s19, 0
    %s22 = sadd.s32 %s21, 1
    %s23 = scalar_select %p20, %s21, %s22
    %p26 = pneg %p20
    %p27 = scmp.eq.s32.totalorder %s11, 1
    %p28 = por %p26, %p27
    %p29 = scmp.ne.s32.totalorder %s21, %s24
    %p30 = scmp.eq.s32.totalorder %s11, 0
    %p31 = por %p29, %p30
    %p32 = scmp.ne.s32.totalorder %s21, %s24
    %p33 = scmp.eq.s32.totalorder %s16, 1
    %p34 = por %p32, %p33
    %p35 = scmp.ne.s32.totalorder %s24, %s25
    %p36 = scmp.eq.s32.totalorder %s16, 0
    %p37 = por %p35, %p36
    %p38 = scmp.ne.s32.totalorder %s24, %s25
    %p39 = scmp.eq.s32.totalorder %s17, 1
    %p40 = por %p38, %p39
    %p42 = scmp.ne.s32.totalorder %s25, %s41
    %p43 = scmp.eq.s32.totalorder %s17, 0
    %p44 = por %p42, %p43
    %s46 = sadd.s32 %s45, 1
    %p49 = scmp.eq.s32.totalorder %s11, 1
    %p50 = scmp.ne.s32.totalorder %s45, %s47
    %p51 = scmp.eq.s32.totalorder %s11, 0
    %p52 = por %p50, %p51
    %p53 = scmp.ne.s32.totalorder %s45, %s47
    %p54 = scmp.eq.s32.totalorder %s16, 1
    %p55 = por %p53, %p54
    %p56 = scmp.ne.s32.totalorder %s47, %s48
    %p57 = scmp.eq.s32.totalorder %s16, 0
    %p58 = por %p56, %p57
    %p59 = scmp.ne.s32.totalorder %s47, %s48
    %p60 = scmp.eq.s32.totalorder %s17, 1
    %p61 = por %p59, %p60
    %p63 = scmp.ne.s32.totalorder %s48, %s62
    %p64 = scmp.eq.s32.totalorder %s17, 0
    %p65 = por %p63, %p64
    %s67 = sadd.s32 %s66, 1
    %p70 = scmp.eq.s32.totalorder %s11, 1
    %p71 = scmp.ne.s32.totalorder %s66, %s68
    %p72 = scmp.eq.s32.totalorder %s11, 0
    %p73 = por %p71, %p72
    %p74 = scmp.ne.s32.totalorder %s66, %s68
    %p75 = scmp.eq.s32.totalorder %s16, 1
    %p76 = por %p74, %p75
    %p77 = scmp.ne.s32.totalorder %s68, %s69
    %p78 = scmp.eq.s32.totalorder %s16, 0
    %p79 = por %p77, %p78
    %p80 = scmp.ne.s32.totalorder %s68, %s69
    %p81 = scmp.eq.s32.totalorder %s17, 1
    %p82 = por %p80, %p81
    %p84 = scmp.ne.s32.totalorder %s69, %s83
    %p85 = scmp.eq.s32.totalorder %s17, 0
    %p86 = por %p84, %p85
    %s88 = sadd.s32 %s87, 1
    %p91 = scmp.eq.s32.totalorder %s11, 1
    %p92 = scmp.ne.s32.totalorder %s87, %s89
    %p93 = scmp.eq.s32.totalorder %s11, 0
    %p94 = por %p92, %p93
    %p95 = scmp.ne.s32.totalorder %s87, %s89
    %p96 = scmp.eq.s32.totalorder %s16, 1
    %p97 = por %p95, %p96
    %p98 = scmp.ne.s32.totalorder %s89, %s90
    %p99 = scmp.eq.s32.totalorder %s16, 0
    %p100 = por %p98, %p99
    %p101 = scmp.ne.s32.totalorder %s89, %s90
    %p102 = scmp.eq.s32.totalorder %s17, 1
    %p103 = por %p101, %p102
    %p105 = scmp.ne.s32.totalorder %s90, %s104
    %p106 = scmp.eq.s32.totalorder %s17, 0
    %p107 = por %p105, %p106
    %s109 = sadd.s32 %s108, 1
    %p112 = scmp.eq.s32.totalorder %s11, 1
    %p113 = scmp.ne.s32.totalorder %s108, %s110
    %p114 = scmp.eq.s32.totalorder %s11, 0
    %p115 = por %p113, %p114
    %p116 = scmp.ne.s32.totalorder %s108, %s110
    %p117 = scmp.eq.s32.totalorder %s16, 1
    %p118 = por %p116, %p117
    %p119 = scmp.ne.s32.totalorder %s110, %s111
    %p120 = scmp.eq.s32.totalorder %s16, 0
    %p121 = por %p119, %p120
    %p122 = scmp.ne.s32.totalorder %s110, %s111
    %p123 = scmp.eq.s32.totalorder %s17, 1
    %p124 = por %p122, %p123
    %p126 = scmp.ne.s32.totalorder %s111, %s125
    %p127 = scmp.eq.s32.totalorder %s17, 0
    %p128 = por %p126, %p127
    %s129 = ssub.s32 %s11, %s18
    %p130 = scmp.eq.s32.totalorder %s129, 0
    %s132 = sadd.s32 %s131, 1
    %s133 = scalar_select %p130, %s131, %s132
    %p136 = pneg %p130
    %p137 = scmp.eq.s32.totalorder %s11, 1
    %p138 = por %p136, %p137
    %p139 = scmp.ne.s32.totalorder %s131, %s134
    %p140 = scmp.eq.s32.totalorder %s11, 0
    %p141 = por %p139, %p140
    %p142 = scmp.ne.s32.totalorder %s131, %s134
    %p143 = scmp.eq.s32.totalorder %s16, 1
    %p144 = por %p142, %p143
    %p145 = scmp.ne.s32.totalorder %s134, %s135
    %p146 = scmp.eq.s32.totalorder %s16, 0
    %p147 = por %p145, %p146
    %p148 = scmp.ne.s32.totalorder %s134, %s135
    %p149 = scmp.eq.s32.totalorder %s17, 1
    %p150 = por %p148, %p149
    %p152 = scmp.ne.s32.totalorder %s135, %s151
    %p153 = scmp.eq.s32.totalorder %s17, 0
    %p154 = por %p152, %p153
    %p155 = scmp.le.s32.totalorder 1, %s11
    %p156 = scmp.lt.s32.totalorder %s11, 3
    %p157 = pnand %p155, %p156
    %p158 = pneg %p157
    // Predicated region
    $region9: #{unet_conv2_forward.4} parent=5 // pred_check
      _
    $region10: #{unet_conv2_forward.4} parent=5 // pred_check_branch
      %160 = sbr.rel (%p157) target = $region12
    $region11: #{unet_conv2_forward.4} parent=5 // pred_region
      %s161 = ssub.s32 %s11, 1
      // Predicated region
      $region13: #{unet_conv2_forward.4} parent=11 // pred_check
        %p162 = pneg %p58
      $region14: #{unet_conv2_forward.4} parent=11 // pred_check_branch
        %164 = sbr.rel (%p162) target = $region16
      $region15: #{unet_conv2_forward.4} parent=11 // pred_region
        _
      $region16: #{unet_conv2_forward.4} parent=11 // pred_fallthru
        _
      // Predicated region
      $region17: #{unet_conv2_forward.4} parent=11 // pred_check
        %p165 = pneg %p79
      $region18: #{unet_conv2_forward.4} parent=11 // pred_check_branch
        %167 = sbr.rel (%p165) target = $region20
      $region19: #{unet_conv2_forward.4} parent=11 // pred_region
        _
      $region20: #{unet_conv2_forward.4} parent=11 // pred_fallthru
        _
      // Predicated region
      $region21: #{unet_conv2_forward.4} parent=11 // pred_check
        %p168 = pneg %p100
      $region22: #{unet_conv2_forward.4} parent=11 // pred_check_branch
        %170 = sbr.rel (%p168) target = $region24
      $region23: #{unet_conv2_forward.4} parent=11 // pred_region
        _
      $region24: #{unet_conv2_forward.4} parent=11 // pred_fallthru
        _
      // Predicated region
      $region25: #{unet_conv2_forward.4} parent=11 // pred_check
        %p171 = pneg %p121
      $region26: #{unet_conv2_forward.4} parent=11 // pred_check_branch
        %173 = sbr.rel (%p171) target = $region28
      $region27: #{unet_conv2_forward.4} parent=11 // pred_region
        _
      $region28: #{unet_conv2_forward.4} parent=11 // pred_fallthru
        _
    $region12: #{unet_conv2_forward.4} parent=5 // pred_fallthru
      _
    %p174 = scmp.lt.s32.totalorder %s11, 2
    // Predicated region
    $region29: #{unet_conv2_forward.4} parent=5 // pred_check
      %p175 = pneg %p174
    $region30: #{unet_conv2_forward.4} parent=5 // pred_check_branch
      %177 = sbr.rel (%p175) target = $region32
    $region31: #{unet_conv2_forward.4} parent=5 // pred_region
      // Predicated region
      $region33: #{unet_conv2_forward.4} parent=31 // pred_check
        %p178 = pneg %p31
      $region34: #{unet_conv2_forward.4} parent=31 // pred_check_branch
        %180 = sbr.rel (%p178) target = $region36
      $region35: #{unet_conv2_forward.4} parent=31 // pred_region
        %p181 = scmp.lt.s32.totalorder %s11, 1
        %s182 = scalar_select %p181, %s11, 1
        %s183 = smul.addr %s182, 32
        %s184 = smul.addr %s183, 8
        %s185 = scalar_lea.vmem %s0, %s184
      $region36: #{unet_conv2_forward.4} parent=31 // pred_fallthru
        _
    $region32: #{unet_conv2_forward.4} parent=5 // pred_fallthru
      _
    %p186 = scmp.le.s32.totalorder 1, %s11
    %p187 = scmp.lt.s32.totalorder %s11, 3
    %p188 = pnand %p186, %p187
    %p189 = pneg %p188
    // Predicated region
    $region37: #{unet_conv2_forward.4} parent=5 // pred_check
      _
    $region38: #{unet_conv2_forward.4} parent=5 // pred_check_branch
      %191 = sbr.rel (%p188) target = $region40
    $region39: #{unet_conv2_forward.4} parent=5 // pred_region
      %s192 = ssub.s32 %s11, 1
      %p193 = scmp.lt.s32.totalorder %s16, 1
      %s194 = scalar_select %p193, %s16, 1
      %s195 = smul.addr %s194, 32
      %s196 = smul.addr %s195, 8
      %s197 = scalar_lea.vmem %s0, %s196
      %p198 = pneg %p37
      %p199 = pneg %p34
      %p200 = pneg %p58
      %p201 = pneg %p55
      %p202 = pneg %p79
      %p203 = pneg %p76
      %p204 = pneg %p100
      %p205 = pneg %p97
      %p206 = pneg %p121
      %p207 = pneg %p118
      %p208 = pneg %p147
      %p209 = pneg %p144
      %p210 = scmp.lt.s32.totalorder %s16, 1
      %s211 = scalar_select %p210, %s16, 1
      %s212 = smul.addr %s211, 32
      %s213 = smul.addr %s212, 8
      %s214 = scalar_lea.vmem %s5, %s213
      %p215 = scmp.lt.s32.totalorder %s16, 1
      %s216 = scalar_select %p215, %s16, 1
      %s217 = smul.addr %s216, 32
      %s218 = smul.addr %s217, 8
      %s219 = scalar_lea.vmem %s0, %s218
      %p220 = scmp.lt.s32.totalorder %s16, 1
      %s221 = scalar_select %p220, %s16, 1
      %s222 = smul.addr %s221, 32
      %s223 = smul.addr %s222, 8
      %s224 = scalar_lea.vmem %s5, %s223
      %225 = vst [vmem:[#allocation2] sm:$0xff] 0.0
      %226 = vst [vmem:[#allocation2 + $0x8] sm:$0xff] 0.0
      %227 = vst [vmem:[#allocation2 + $0x10] sm:$0xff] 0.0
      %228 = vst [vmem:[#allocation2 + $0x118] sm:$0xff] 0.0
      %229 = vst [vmem:[#allocation2 + $0x120] sm:$0xff] 0.0
      %230 = vst [vmem:[#allocation2 + $0x128] sm:$0xff] 0.0
      %v231 = vld [vmem:[%s219] sm:$0xff]
      %v232 = vld [vmem:[%s219 + $0x8] sm:$0xff]
      %v233 = vld [vmem:[%s219 + $0x10] sm:$0xff]
      %v234 = vld [vmem:[%s219 + $0x18] sm:$0xff]
      %v235 = vld [vmem:[%s219 + $0x20] sm:$0xff]
      %v236 = vld [vmem:[%s219 + $0x28] sm:$0xff]
      %v237 = vld [vmem:[%s219 + $0x30] sm:$0xff]
      %v238 = vld [vmem:[%s219 + $0x38] sm:$0xff]
      %v239 = vld [vmem:[%s219 + $0x40] sm:$0xff]
      %v240 = vld [vmem:[%s219 + $0x48] sm:$0xff]
      %v241 = vld [vmem:[%s219 + $0x50] sm:$0xff]
      %v242 = vld [vmem:[%s219 + $0x58] sm:$0xff]
      %v243 = vld [vmem:[%s219 + $0x60] sm:$0xff]
      %v244 = vld [vmem:[%s219 + $0x68] sm:$0xff]
      %v245 = vld [vmem:[%s219 + $0x70] sm:$0xff]
      %v246 = vld [vmem:[%s219 + $0x78] sm:$0xff]
      %v247 = vld [vmem:[%s219 + $0x80] sm:$0xff]
      %v248 = vld [vmem:[%s219 + $0x88] sm:$0xff]
      %v249 = vld [vmem:[%s219 + $0x90] sm:$0xff]
      %v250 = vld [vmem:[%s219 + $0x98] sm:$0xff]
      %v251 = vld [vmem:[%s219 + $0xa0] sm:$0xff]
      %v252 = vld [vmem:[%s219 + $0xa8] sm:$0xff]
      %v253 = vld [vmem:[%s219 + $0xb0] sm:$0xff]
      %v254 = vld [vmem:[%s219 + $0xb8] sm:$0xff]
      %v255 = vld [vmem:[%s219 + $0xc0] sm:$0xff]
      %v256 = vld [vmem:[%s219 + $0xc8] sm:$0xff]
      %v257 = vld [vmem:[%s219 + $0xd0] sm:$0xff]
      %v258 = vld [vmem:[%s219 + $0xd8] sm:$0xff]
      %v259 = vld [vmem:[%s219 + $0xe0] sm:$0xff]
      %v260 = vld [vmem:[%s219 + $0xe8] sm:$0xff]
      %v261 = vld [vmem:[%s219 + $0xf0] sm:$0xff]
      %v262 = vld [vmem:[%s219 + $0xf8] sm:$0xff]
      %v263 = vld [vmem:[%s1] sm:$0x1]
      %v265 = vlaneseq
      %v266 = vshrl.u32 %v265, 7
      %v267 = vsub.s32 0, %v266
      %v268 = vrot.slane %v263, %v267
      %v270 = vmul.f32 %v231, %v268
      %v271 = vmul.f32 %v232, %v268
      %v272 = vmul.f32 %v233, %v268
      %v273 = vmul.f32 %v234, %v268
      %v274 = vmul.f32 %v235, %v268
      %v275 = vmul.f32 %v236, %v268
      %v276 = vmul.f32 %v237, %v268
      %v277 = vmul.f32 %v238, %v268
      %v278 = vmul.f32 %v239, %v268
      %v279 = vmul.f32 %v240, %v268
      %v280 = vmul.f32 %v241, %v268
      %v281 = vmul.f32 %v242, %v268
      %v282 = vmul.f32 %v243, %v268
      %v283 = vmul.f32 %v244, %v268
      %v284 = vmul.f32 %v245, %v268
      %v285 = vmul.f32 %v246, %v268
      %v286 = vmul.f32 %v247, %v268
      %v287 = vmul.f32 %v248, %v268
      %v288 = vmul.f32 %v249, %v268
      %v289 = vmul.f32 %v250, %v268
      %v290 = vmul.f32 %v251, %v268
      %v291 = vmul.f32 %v252, %v268
      %v292 = vmul.f32 %v253, %v268
      %v293 = vmul.f32 %v254, %v268
      %v294 = vmul.f32 %v255, %v268
      %v295 = vmul.f32 %v256, %v268
      %v296 = vmul.f32 %v257, %v268
      %v297 = vmul.f32 %v258, %v268
      %v298 = vmul.f32 %v259, %v268
      %v299 = vmul.f32 %v260, %v268
      %v300 = vmul.f32 %v261, %v268
      %v301 = vmul.f32 %v262, %v268
      %v302 = vld [vmem:[%s2] sm:$0x1]
      %v304 = vlaneseq
      %v305 = vshrl.u32 %v304, 7
      %v306 = vsub.s32 0, %v305
      %v307 = vrot.slane %v302, %v306
      %v309 = vadd.f32 %v270, %v307
      %v310 = vadd.f32 %v271, %v307
      %v311 = vadd.f32 %v272, %v307
      %v312 = vadd.f32 %v273, %v307
      %v313 = vadd.f32 %v274, %v307
      %v314 = vadd.f32 %v275, %v307
      %v315 = vadd.f32 %v276, %v307
      %v316 = vadd.f32 %v277, %v307
      %v317 = vadd.f32 %v278, %v307
      %v318 = vadd.f32 %v279, %v307
      %v319 = vadd.f32 %v280, %v307
      %v320 = vadd.f32 %v281, %v307
      %v321 = vadd.f32 %v282, %v307
      %v322 = vadd.f32 %v283, %v307
      %v323 = vadd.f32 %v284, %v307
      %v324 = vadd.f32 %v285, %v307
      %v325 = vadd.f32 %v286, %v307
      %v326 = vadd.f32 %v287, %v307
      %v327 = vadd.f32 %v288, %v307
      %v328 = vadd.f32 %v289, %v307
      %v329 = vadd.f32 %v290, %v307
      %v330 = vadd.f32 %v291, %v307
      %v331 = vadd.f32 %v292, %v307
      %v332 = vadd.f32 %v293, %v307
      %v333 = vadd.f32 %v294, %v307
      %v334 = vadd.f32 %v295, %v307
      %v335 = vadd.f32 %v296, %v307
      %v336 = vadd.f32 %v297, %v307
      %v337 = vadd.f32 %v298, %v307
      %v338 = vadd.f32 %v299, %v307
      %v339 = vadd.f32 %v300, %v307
      %v340 = vadd.f32 %v301, %v307
      %v341 = vmax.f32 %v309, 0.0
      %v342 = vmax.f32 %v310, 0.0
      %v343 = vmax.f32 %v311, 0.0
      %v344 = vmax.f32 %v312, 0.0
      %v345 = vmax.f32 %v313, 0.0
      %v346 = vmax.f32 %v314, 0.0
      %v347 = vmax.f32 %v315, 0.0
      %v348 = vmax.f32 %v316, 0.0
      %v349 = vmax.f32 %v317, 0.0
      %v350 = vmax.f32 %v318, 0.0
      %v351 = vmax.f32 %v319, 0.0
      %v352 = vmax.f32 %v320, 0.0
      %v353 = vmax.f32 %v321, 0.0
      %v354 = vmax.f32 %v322, 0.0
      %v355 = vmax.f32 %v323, 0.0
      %v356 = vmax.f32 %v324, 0.0
      %v357 = vmax.f32 %v325, 0.0
      %v358 = vmax.f32 %v326, 0.0
      %v359 = vmax.f32 %v327, 0.0
      %v360 = vmax.f32 %v328, 0.0
      %v361 = vmax.f32 %v329, 0.0
      %v362 = vmax.f32 %v330, 0.0
      %v363 = vmax.f32 %v331, 0.0
      %v364 = vmax.f32 %v332, 0.0
      %v365 = vmax.f32 %v333, 0.0
      %v366 = vmax.f32 %v334, 0.0
      %v367 = vmax.f32 %v335, 0.0
      %v368 = vmax.f32 %v336, 0.0
      %v369 = vmax.f32 %v337, 0.0
      %v370 = vmax.f32 %v338, 0.0
      %v371 = vmax.f32 %v339, 0.0
      %v372 = vmax.f32 %v340, 0.0
      %373 = vst [vmem:[#allocation2 + $0x18] sm:$0xff] %v341
      %374 = vst [vmem:[#allocation2 + $0x20] sm:$0xff] %v342
      %375 = vst [vmem:[#allocation2 + $0x28] sm:$0xff] %v343
      %376 = vst [vmem:[#allocation2 + $0x30] sm:$0xff] %v344
      %377 = vst [vmem:[#allocation2 + $0x38] sm:$0xff] %v345
      %378 = vst [vmem:[#allocation2 + $0x40] sm:$0xff] %v346
      %379 = vst [vmem:[#allocation2 + $0x48] sm:$0xff] %v347
      %380 = vst [vmem:[#allocation2 + $0x50] sm:$0xff] %v348
      %381 = vst [vmem:[#allocation2 + $0x58] sm:$0xff] %v349
      %382 = vst [vmem:[#allocation2 + $0x60] sm:$0xff] %v350
      %383 = vst [vmem:[#allocation2 + $0x68] sm:$0xff] %v351
      %384 = vst [vmem:[#allocation2 + $0x70] sm:$0xff] %v352
      %385 = vst [vmem:[#allocation2 + $0x78] sm:$0xff] %v353
      %386 = vst [vmem:[#allocation2 + $0x80] sm:$0xff] %v354
      %387 = vst [vmem:[#allocation2 + $0x88] sm:$0xff] %v355
      %388 = vst [vmem:[#allocation2 + $0x90] sm:$0xff] %v356
      %389 = vst [vmem:[#allocation2 + $0x98] sm:$0xff] %v357
      %390 = vst [vmem:[#allocation2 + $0xa0] sm:$0xff] %v358
      %391 = vst [vmem:[#allocation2 + $0xa8] sm:$0xff] %v359
      %392 = vst [vmem:[#allocation2 + $0xb0] sm:$0xff] %v360
      %393 = vst [vmem:[#allocation2 + $0xb8] sm:$0xff] %v361
      %394 = vst [vmem:[#allocation2 + $0xc0] sm:$0xff] %v362
      %395 = vst [vmem:[#allocation2 + $0xc8] sm:$0xff] %v363
      %396 = vst [vmem:[#allocation2 + $0xd0] sm:$0xff] %v364
      %397 = vst [vmem:[#allocation2 + $0xd8] sm:$0xff] %v365
      %398 = vst [vmem:[#allocation2 + $0xe0] sm:$0xff] %v366
      %399 = vst [vmem:[#allocation2 + $0xe8] sm:$0xff] %v367
      %400 = vst [vmem:[#allocation2 + $0xf0] sm:$0xff] %v368
      %401 = vst [vmem:[#allocation2 + $0xf8] sm:$0xff] %v369
      %402 = vst [vmem:[#allocation2 + $0x100] sm:$0xff] %v370
      %403 = vst [vmem:[#allocation2 + $0x108] sm:$0xff] %v371
      %404 = vst [vmem:[#allocation2 + $0x110] sm:$0xff] %v372
      %v405 = vlaneseq
      %v406 = vshrl.u32 %v405, 7
      %v407 = vadd.s32 %v406, 8
      %v408 = vadd.s32 %v406, 16
      %v409 = vadd.s32 %v406, 24
      %v410 = vadd.s32 %v406, 32
      %v411 = vadd.s32 %v406, 40
      %v412 = vadd.s32 %v406, 48
      %v413 = vadd.s32 %v406, 56
      %v414 = vadd.s32 %v406, 64
      %v415 = vadd.s32 %v406, 72
      %v416 = vadd.s32 %v406, 80
      %v417 = vadd.s32 %v406, 88
      %v418 = vadd.s32 %v406, 96
      %v419 = vadd.s32 %v406, 104
      %v420 = vadd.s32 %v406, 112
      %v421 = vadd.s32 %v406, 120
      %v422 = vadd.s32 %v406, 128
      %v423 = vadd.s32 %v406, 136
      %v424 = vadd.s32 %v406, 144
      %v425 = vadd.s32 %v406, 152
      %v426 = vadd.s32 %v406, 160
      %v427 = vadd.s32 %v406, 168
      %v428 = vadd.s32 %v406, 176
      %v429 = vadd.s32 %v406, 184
      %v430 = vadd.s32 %v406, 192
      %v431 = vadd.s32 %v406, 200
      %v432 = vadd.s32 %v406, 208
      %v433 = vadd.s32 %v406, 216
      %v434 = vadd.s32 %v406, 224
      %v435 = vadd.s32 %v406, 232
      %v436 = vadd.s32 %v406, 240
      %v437 = vadd.s32 %v406, 248
      %vm438 = vcmp.lt.s32.totalorder %v406, 0
      %v439 = vsub.s32 0, %v406
      %v440 = vsel %vm438, %v439, %v406
      %v441 = vshrl.u32 %v440, 4
      %v442 = vand.u32 %v440, 15
      %v443 = vsub.s32 0, %v442
      %v444 = vsel %vm438, %v443, %v442
      %vm445 = vcmp.lt.s32.totalorder %v407, 0
      %v446 = vsub.s32 0, %v407
      %v447 = vsel %vm445, %v446, %v407
      %v448 = vshrl.u32 %v447, 4
      %v449 = vand.u32 %v447, 15
      %v450 = vsub.s32 0, %v449
      %v451 = vsel %vm445, %v450, %v449
      %vm452 = vcmp.lt.s32.totalorder %v408, 0
      %v453 = vsub.s32 0, %v408
      %v454 = vsel %vm452, %v453, %v408
      %v455 = vshrl.u32 %v454, 4
      %v456 = vand.u32 %v454, 15
      %v457 = vsub.s32 0, %v456
      %v458 = vsel %vm452, %v457, %v456
      %vm459 = vcmp.lt.s32.totalorder %v409, 0
      %v460 = vsub.s32 0, %v409
      %v461 = vsel %vm459, %v460, %v409
      %v462 = vshrl.u32 %v461, 4
      %v463 = vand.u32 %v461, 15
      %v464 = vsub.s32 0, %v463
      %v465 = vsel %vm459, %v464, %v463
      %vm466 = vcmp.lt.s32.totalorder %v410, 0
      %v467 = vsub.s32 0, %v410
      %v468 = vsel %vm466, %v467, %v410
      %v469 = vshrl.u32 %v468, 4
      %v470 = vand.u32 %v468, 15
      %v471 = vsub.s32 0, %v470
      %v472 = vsel %vm466, %v471, %v470
      %vm473 = vcmp.lt.s32.totalorder %v411, 0
      %v474 = vsub.s32 0, %v411
      %v475 = vsel %vm473, %v474, %v411
      %v476 = vshrl.u32 %v475, 4
      %v477 = vand.u32 %v475, 15
      %v478 = vsub.s32 0, %v477
      %v479 = vsel %vm473, %v478, %v477
      %vm480 = vcmp.lt.s32.totalorder %v412, 0
      %v481 = vsub.s32 0, %v412
      %v482 = vsel %vm480, %v481, %v412
      %v483 = vshrl.u32 %v482, 4
      %v484 = vand.u32 %v482, 15
      %v485 = vsub.s32 0, %v484
      %v486 = vsel %vm480, %v485, %v484
      %vm487 = vcmp.lt.s32.totalorder %v413, 0
      %v488 = vsub.s32 0, %v413
      %v489 = vsel %vm487, %v488, %v413
      %v490 = vshrl.u32 %v489, 4
      %v491 = vand.u32 %v489, 15
      %v492 = vsub.s32 0, %v491
      %v493 = vsel %vm487, %v492, %v491
      %vm494 = vcmp.lt.s32.totalorder %v414, 0
      %v495 = vsub.s32 0, %v414
      %v496 = vsel %vm494, %v495, %v414
      %v497 = vshrl.u32 %v496, 4
      %v498 = vand.u32 %v496, 15
      %v499 = vsub.s32 0, %v498
      %v500 = vsel %vm494, %v499, %v498
      %vm501 = vcmp.lt.s32.totalorder %v415, 0
      %v502 = vsub.s32 0, %v415
      %v503 = vsel %vm501, %v502, %v415
      %v504 = vshrl.u32 %v503, 4
      %v505 = vand.u32 %v503, 15
      %v506 = vsub.s32 0, %v505
      %v507 = vsel %vm501, %v506, %v505
      %vm508 = vcmp.lt.s32.totalorder %v416, 0
      %v509 = vsub.s32 0, %v416
      %v510 = vsel %vm508, %v509, %v416
      %v511 = vshrl.u32 %v510, 4
      %v512 = vand.u32 %v510, 15
      %v513 = vsub.s32 0, %v512
      %v514 = vsel %vm508, %v513, %v512
      %vm515 = vcmp.lt.s32.totalorder %v417, 0
      %v516 = vsub.s32 0, %v417
      %v517 = vsel %vm515, %v516, %v417
      %v518 = vshrl.u32 %v517, 4
      %v519 = vand.u32 %v517, 15
      %v520 = vsub.s32 0, %v519
      %v521 = vsel %vm515, %v520, %v519
      %vm522 = vcmp.lt.s32.totalorder %v418, 0
      %v523 = vsub.s32 0, %v418
      %v524 = vsel %vm522, %v523, %v418
      %v525 = vshrl.u32 %v524, 4
      %v526 = vand.u32 %v524, 15
      %v527 = vsub.s32 0, %v526
      %v528 = vsel %vm522, %v527, %v526
      %vm529 = vcmp.lt.s32.totalorder %v419, 0
      %v530 = vsub.s32 0, %v419
      %v531 = vsel %vm529, %v530, %v419
      %v532 = vshrl.u32 %v531, 4
      %v533 = vand.u32 %v531, 15
      %v534 = vsub.s32 0, %v533
      %v535 = vsel %vm529, %v534, %v533
      %vm536 = vcmp.lt.s32.totalorder %v420, 0
      %v537 = vsub.s32 0, %v420
      %v538 = vsel %vm536, %v537, %v420
      %v539 = vshrl.u32 %v538, 4
      %v540 = vand.u32 %v538, 15
      %v541 = vsub.s32 0, %v540
      %v542 = vsel %vm536, %v541, %v540
      %vm543 = vcmp.lt.s32.totalorder %v421, 0
      %v544 = vsub.s32 0, %v421
      %v545 = vsel %vm543, %v544, %v421
      %v546 = vshrl.u32 %v545, 4
      %v547 = vand.u32 %v545, 15
      %v548 = vsub.s32 0, %v547
      %v549 = vsel %vm543, %v548, %v547
      %vm550 = vcmp.lt.s32.totalorder %v422, 0
      %v551 = vsub.s32 0, %v422
      %v552 = vsel %vm550, %v551, %v422
      %v553 = vshrl.u32 %v552, 4
      %v554 = vand.u32 %v552, 15
      %v555 = vsub.s32 0, %v554
      %v556 = vsel %vm550, %v555, %v554
      %vm557 = vcmp.lt.s32.totalorder %v423, 0
      %v558 = vsub.s32 0, %v423
      %v559 = vsel %vm557, %v558, %v423
      %v560 = vshrl.u32 %v559, 4
      %v561 = vand.u32 %v559, 15
      %v562 = vsub.s32 0, %v561
      %v563 = vsel %vm557, %v562, %v561
      %vm564 = vcmp.lt.s32.totalorder %v424, 0
      %v565 = vsub.s32 0, %v424
      %v566 = vsel %vm564, %v565, %v424
      %v567 = vshrl.u32 %v566, 4
      %v568 = vand.u32 %v566, 15
      %v569 = vsub.s32 0, %v568
      %v570 = vsel %vm564, %v569, %v568
      %vm571 = vcmp.lt.s32.totalorder %v425, 0
      %v572 = vsub.s32 0, %v425
      %v573 = vsel %vm571, %v572, %v425
      %v574 = vshrl.u32 %v573, 4
      %v575 = vand.u32 %v573, 15
      %v576 = vsub.s32 0, %v575
      %v577 = vsel %vm571, %v576, %v575
      %vm578 = vcmp.lt.s32.totalorder %v426, 0
      %v579 = vsub.s32 0, %v426
      %v580 = vsel %vm578, %v579, %v426
      %v581 = vshrl.u32 %v580, 4
      %v582 = vand.u32 %v580, 15
      %v583 = vsub.s32 0, %v582
      %v584 = vsel %vm578, %v583, %v582
      %vm585 = vcmp.lt.s32.totalorder %v427, 0
      %v586 = vsub.s32 0, %v427
      %v587 = vsel %vm585, %v586, %v427
      %v588 = vshrl.u32 %v587, 4
      %v589 = vand.u32 %v587, 15
      %v590 = vsub.s32 0, %v589
      %v591 = vsel %vm585, %v590, %v589
      %vm592 = vcmp.lt.s32.totalorder %v428, 0
      %v593 = vsub.s32 0, %v428
      %v594 = vsel %vm592, %v593, %v428
      %v595 = vshrl.u32 %v594, 4
      %v596 = vand.u32 %v594, 15
      %v597 = vsub.s32 0, %v596
      %v598 = vsel %vm592, %v597, %v596
      %vm599 = vcmp.lt.s32.totalorder %v429, 0
      %v600 = vsub.s32 0, %v429
      %v601 = vsel %vm599, %v600, %v429
      %v602 = vshrl.u32 %v601, 4
      %v603 = vand.u32 %v601, 15
      %v604 = vsub.s32 0, %v603
      %v605 = vsel %vm599, %v604, %v603
      %vm606 = vcmp.lt.s32.totalorder %v430, 0
      %v607 = vsub.s32 0, %v430
      %v608 = vsel %vm606, %v607, %v430
      %v609 = vshrl.u32 %v608, 4
      %v610 = vand.u32 %v608, 15
      %v611 = vsub.s32 0, %v610
      %v612 = vsel %vm606, %v611, %v610
      %vm613 = vcmp.lt.s32.totalorder %v431, 0
      %v614 = vsub.s32 0, %v431
      %v615 = vsel %vm613, %v614, %v431
      %v616 = vshrl.u32 %v615, 4
      %v617 = vand.u32 %v615, 15
      %v618 = vsub.s32 0, %v617
      %v619 = vsel %vm613, %v618, %v617
      %vm620 = vcmp.lt.s32.totalorder %v432, 0
      %v621 = vsub.s32 0, %v432
      %v622 = vsel %vm620, %v621, %v432
      %v623 = vshrl.u32 %v622, 4
      %v624 = vand.u32 %v622, 15
      %v625 = vsub.s32 0, %v624
      %v626 = vsel %vm620, %v625, %v624
      %vm627 = vcmp.lt.s32.totalorder %v433, 0
      %v628 = vsub.s32 0, %v433
      %v629 = vsel %vm627, %v628, %v433
      %v630 = vshrl.u32 %v629, 4
      %v631 = vand.u32 %v629, 15
      %v632 = vsub.s32 0, %v631
      %v633 = vsel %vm627, %v632, %v631
      %vm634 = vcmp.lt.s32.totalorder %v434, 0
      %v635 = vsub.s32 0, %v434
      %v636 = vsel %vm634, %v635, %v434
      %v637 = vshrl.u32 %v636, 4
      %v638 = vand.u32 %v636, 15
      %v639 = vsub.s32 0, %v638
      %v640 = vsel %vm634, %v639, %v638
      %vm641 = vcmp.lt.s32.totalorder %v435, 0
      %v642 = vsub.s32 0, %v435
      %v643 = vsel %vm641, %v642, %v435
      %v644 = vshrl.u32 %v643, 4
      %v645 = vand.u32 %v643, 15
      %v646 = vsub.s32 0, %v645
      %v647 = vsel %vm641, %v646, %v645
      %vm648 = vcmp.lt.s32.totalorder %v436, 0
      %v649 = vsub.s32 0, %v436
      %v650 = vsel %vm648, %v649, %v436
      %v651 = vshrl.u32 %v650, 4
      %v652 = vand.u32 %v650, 15
      %v653 = vsub.s32 0, %v652
      %v654 = vsel %vm648, %v653, %v652
      %vm655 = vcmp.lt.s32.totalorder %v437, 0
      %v656 = vsub.s32 0, %v437
      %v657 = vsel %vm655, %v656, %v437
      %v658 = vshrl.u32 %v657, 4
      %v659 = vand.u32 %v657, 15
      %v660 = vsub.s32 0, %v659
      %v661 = vsel %vm655, %v660, %v659
      %vm662 = vcmp.ne.s32.totalorder %v444, 0
      %vm663 = vcmp.ne.s32.totalorder %v451, 0
      %vm664 = vcmp.ne.s32.totalorder %v458, 0
      %vm665 = vcmp.ne.s32.totalorder %v465, 0
      %vm666 = vcmp.ne.s32.totalorder %v472, 0
      %vm667 = vcmp.ne.s32.totalorder %v479, 0
      %vm668 = vcmp.ne.s32.totalorder %v486, 0
      %vm669 = vcmp.ne.s32.totalorder %v493, 0
      %vm670 = vcmp.ne.s32.totalorder %v500, 0
      %vm671 = vcmp.ne.s32.totalorder %v507, 0
      %vm672 = vcmp.ne.s32.totalorder %v514, 0
      %vm673 = vcmp.ne.s32.totalorder %v521, 0
      %vm674 = vcmp.ne.s32.totalorder %v528, 0
      %vm675 = vcmp.ne.s32.totalorder %v535, 0
      %vm676 = vcmp.ne.s32.totalorder %v542, 0
      %vm677 = vcmp.ne.s32.totalorder %v549, 0
      %vm678 = vcmp.ne.s32.totalorder %v556, 0
      %vm679 = vcmp.ne.s32.totalorder %v563, 0
      %vm680 = vcmp.ne.s32.totalorder %v570, 0
      %vm681 = vcmp.ne.s32.totalorder %v577, 0
      %vm682 = vcmp.ne.s32.totalorder %v584, 0
      %vm683 = vcmp.ne.s32.totalorder %v591, 0
      %vm684 = vcmp.ne.s32.totalorder %v598, 0
      %vm685 = vcmp.ne.s32.totalorder %v605, 0
      %vm686 = vcmp.ne.s32.totalorder %v612, 0
      %vm687 = vcmp.ne.s32.totalorder %v619, 0
      %vm688 = vcmp.ne.s32.totalorder %v626, 0
      %vm689 = vcmp.ne.s32.totalorder %v633, 0
      %vm690 = vcmp.ne.s32.totalorder %v640, 0
      %vm691 = vcmp.ne.s32.totalorder %v647, 0
      %vm692 = vcmp.ne.s32.totalorder %v654, 0
      %vm693 = vcmp.ne.s32.totalorder %v661, 0
      %vm694 = vcmp.lt.s32.totalorder %v444, 0
      %vm695 = vcmp.lt.s32.totalorder %v451, 0
      %vm696 = vcmp.lt.s32.totalorder %v458, 0
      %vm697 = vcmp.lt.s32.totalorder %v465, 0
      %vm698 = vcmp.lt.s32.totalorder %v472, 0
      %vm699 = vcmp.lt.s32.totalorder %v479, 0
      %vm700 = vcmp.lt.s32.totalorder %v486, 0
      %vm701 = vcmp.lt.s32.totalorder %v493, 0
      %vm702 = vcmp.lt.s32.totalorder %v500, 0
      %vm703 = vcmp.lt.s32.totalorder %v507, 0
      %vm704 = vcmp.lt.s32.totalorder %v514, 0
      %vm705 = vcmp.lt.s32.totalorder %v521, 0
      %vm706 = vcmp.lt.s32.totalorder %v528, 0
      %vm707 = vcmp.lt.s32.totalorder %v535, 0
      %vm708 = vcmp.lt.s32.totalorder %v542, 0
      %vm709 = vcmp.lt.s32.totalorder %v549, 0
      %vm710 = vcmp.lt.s32.totalorder %v556, 0
      %vm711 = vcmp.lt.s32.totalorder %v563, 0
      %vm712 = vcmp.lt.s32.totalorder %v570, 0
      %vm713 = vcmp.lt.s32.totalorder %v577, 0
      %vm714 = vcmp.lt.s32.totalorder %v584, 0
      %vm715 = vcmp.lt.s32.totalorder %v591, 0
      %vm716 = vcmp.lt.s32.totalorder %v598, 0
      %vm717 = vcmp.lt.s32.totalorder %v605, 0
      %vm718 = vcmp.lt.s32.totalorder %v612, 0
      %vm719 = vcmp.lt.s32.totalorder %v619, 0
      %vm720 = vcmp.lt.s32.totalorder %v626, 0
      %vm721 = vcmp.lt.s32.totalorder %v633, 0
      %vm722 = vcmp.lt.s32.totalorder %v640, 0
      %vm723 = vcmp.lt.s32.totalorder %v647, 0
      %vm724 = vcmp.lt.s32.totalorder %v654, 0
      %vm725 = vcmp.lt.s32.totalorder %v661, 0
      %vm726 = vmand %vm694, %vm662
      %vm727 = vmand %vm695, %vm663
      %vm728 = vmand %vm696, %vm664
      %vm729 = vmand %vm697, %vm665
      %vm730 = vmand %vm698, %vm666
      %vm731 = vmand %vm699, %vm667
      %vm732 = vmand %vm700, %vm668
      %vm733 = vmand %vm701, %vm669
      %vm734 = vmand %vm702, %vm670
      %vm735 = vmand %vm703, %vm671
      %vm736 = vmand %vm704, %vm672
      %vm737 = vmand %vm705, %vm673
      %vm738 = vmand %vm706, %vm674
      %vm739 = vmand %vm707, %vm675
      %vm740 = vmand %vm708, %vm676
      %vm741 = vmand %vm709, %vm677
      %vm742 = vmand %vm710, %vm678
      %vm743 = vmand %vm711, %vm679
      %vm744 = vmand %vm712, %vm680
      %vm745 = vmand %vm713, %vm681
      %vm746 = vmand %vm714, %vm682
      %vm747 = vmand %vm715, %vm683
      %vm748 = vmand %vm716, %vm684
      %vm749 = vmand %vm717, %vm685
      %vm750 = vmand %vm718, %vm686
      %vm751 = vmand %vm719, %vm687
      %vm752 = vmand %vm720, %vm688
      %vm753 = vmand %vm721, %vm689
      %vm754 = vmand %vm722, %vm690
      %vm755 = vmand %vm723, %vm691
      %vm756 = vmand %vm724, %vm692
      %vm757 = vmand %vm725, %vm693
      %v758 = vadd.s32 %v444, 16
      %v759 = vadd.s32 %v451, 16
      %v760 = vadd.s32 %v458, 16
      %v761 = vadd.s32 %v465, 16
      %v762 = vadd.s32 %v472, 16
      %v763 = vadd.s32 %v479, 16
      %v764 = vadd.s32 %v486, 16
      %v765 = vadd.s32 %v493, 16
      %v766 = vadd.s32 %v500, 16
      %v767 = vadd.s32 %v507, 16
      %v768 = vadd.s32 %v514, 16
      %v769 = vadd.s32 %v521, 16
      %v770 = vadd.s32 %v528, 16
      %v771 = vadd.s32 %v535, 16
      %v772 = vadd.s32 %v542, 16
      %v773 = vadd.s32 %v549, 16
      %v774 = vadd.s32 %v556, 16
      %v775 = vadd.s32 %v563, 16
      %v776 = vadd.s32 %v570, 16
      %v777 = vadd.s32 %v577, 16
      %v778 = vadd.s32 %v584, 16
      %v779 = vadd.s32 %v591, 16
      %v780 = vadd.s32 %v598, 16
      %v781 = vadd.s32 %v605, 16
      %v782 = vadd.s32 %v612, 16
      %v783 = vadd.s32 %v619, 16
      %v784 = vadd.s32 %v626, 16
      %v785 = vadd.s32 %v633, 16
      %v786 = vadd.s32 %v640, 16
      %v787 = vadd.s32 %v647, 16
      %v788 = vadd.s32 %v654, 16
      %v789 = vadd.s32 %v661, 16
      %v790 = vsel %vm726, %v758, %v444
      %v791 = vsel %vm727, %v759, %v451
      %v792 = vsel %vm728, %v760, %v458
      %v793 = vsel %vm729, %v761, %v465
      %v794 = vsel %vm730, %v762, %v472
      %v795 = vsel %vm731, %v763, %v479
      %v796 = vsel %vm732, %v764, %v486
      %v797 = vsel %vm733, %v765, %v493
      %v798 = vsel %vm734, %v766, %v500
      %v799 = vsel %vm735, %v767, %v507
      %v800 = vsel %vm736, %v768, %v514
      %v801 = vsel %vm737, %v769, %v521
      %v802 = vsel %vm738, %v770, %v528
      %v803 = vsel %vm739, %v771, %v535
      %v804 = vsel %vm740, %v772, %v542
      %v805 = vsel %vm741, %v773, %v549
      %v806 = vsel %vm742, %v774, %v556
      %v807 = vsel %vm743, %v775, %v563
      %v808 = vsel %vm744, %v776, %v570
      %v809 = vsel %vm745, %v777, %v577
      %v810 = vsel %vm746, %v778, %v584
      %v811 = vsel %vm747, %v779, %v591
      %v812 = vsel %vm748, %v780, %v598
      %v813 = vsel %vm749, %v781, %v605
      %v814 = vsel %vm750, %v782, %v612
      %v815 = vsel %vm751, %v783, %v619
      %v816 = vsel %vm752, %v784, %v626
      %v817 = vsel %vm753, %v785, %v633
      %v818 = vsel %vm754, %v786, %v640
      %v819 = vsel %vm755, %v787, %v647
      %v820 = vsel %vm756, %v788, %v654
      %v821 = vsel %vm757, %v789, %v661
      %vm822 = vcmp.ne.s32.totalorder %v790, 0
      %vm823 = vcmp.ne.s32.totalorder %v791, 0
      %vm824 = vcmp.ne.s32.totalorder %v792, 0
      %vm825 = vcmp.ne.s32.totalorder %v793, 0
      %vm826 = vcmp.ne.s32.totalorder %v794, 0
      %vm827 = vcmp.ne.s32.totalorder %v795, 0
      %vm828 = vcmp.ne.s32.totalorder %v796, 0
      %vm829 = vcmp.ne.s32.totalorder %v797, 0
      %vm830 = vcmp.ne.s32.totalorder %v798, 0
      %vm831 = vcmp.ne.s32.totalorder %v799, 0
      %vm832 = vcmp.ne.s32.totalorder %v800, 0
      %vm833 = vcmp.ne.s32.totalorder %v801, 0
      %vm834 = vcmp.ne.s32.totalorder %v802, 0
      %vm835 = vcmp.ne.s32.totalorder %v803, 0
      %vm836 = vcmp.ne.s32.totalorder %v804, 0
      %vm837 = vcmp.ne.s32.totalorder %v805, 0
      %vm838 = vcmp.ne.s32.totalorder %v806, 0
      %vm839 = vcmp.ne.s32.totalorder %v807, 0
      %vm840 = vcmp.ne.s32.totalorder %v808, 0
      %vm841 = vcmp.ne.s32.totalorder %v809, 0
      %vm842 = vcmp.ne.s32.totalorder %v810, 0
      %vm843 = vcmp.ne.s32.totalorder %v811, 0
      %vm844 = vcmp.ne.s32.totalorder %v812, 0
      %vm845 = vcmp.ne.s32.totalorder %v813, 0
      %vm846 = vcmp.ne.s32.totalorder %v814, 0
      %vm847 = vcmp.ne.s32.totalorder %v815, 0
      %vm848 = vcmp.ne.s32.totalorder %v816, 0
      %vm849 = vcmp.ne.s32.totalorder %v817, 0
      %vm850 = vcmp.ne.s32.totalorder %v818, 0
      %vm851 = vcmp.ne.s32.totalorder %v819, 0
      %vm852 = vcmp.ne.s32.totalorder %v820, 0
      %vm853 = vcmp.ne.s32.totalorder %v821, 0
      %vm854 = vcmp.ne.s32.totalorder %v790, 15
      %vm855 = vcmp.ne.s32.totalorder %v791, 15
      %vm856 = vcmp.ne.s32.totalorder %v792, 15
      %vm857 = vcmp.ne.s32.totalorder %v793, 15
      %vm858 = vcmp.ne.s32.totalorder %v794, 15
      %vm859 = vcmp.ne.s32.totalorder %v795, 15
      %vm860 = vcmp.ne.s32.totalorder %v796, 15
      %vm861 = vcmp.ne.s32.totalorder %v797, 15
      %vm862 = vcmp.ne.s32.totalorder %v798, 15
      %vm863 = vcmp.ne.s32.totalorder %v799, 15
      %vm864 = vcmp.ne.s32.totalorder %v800, 15
      %vm865 = vcmp.ne.s32.totalorder %v801, 15
      %vm866 = vcmp.ne.s32.totalorder %v802, 15
      %vm867 = vcmp.ne.s32.totalorder %v803, 15
      %vm868 = vcmp.ne.s32.totalorder %v804, 15
      %vm869 = vcmp.ne.s32.totalorder %v805, 15
      %vm870 = vcmp.ne.s32.totalorder %v806, 15
      %vm871 = vcmp.ne.s32.totalorder %v807, 15
      %vm872 = vcmp.ne.s32.totalorder %v808, 15
      %vm873 = vcmp.ne.s32.totalorder %v809, 15
      %vm874 = vcmp.ne.s32.totalorder %v810, 15
      %vm875 = vcmp.ne.s32.totalorder %v811, 15
      %vm876 = vcmp.ne.s32.totalorder %v812, 15
      %vm877 = vcmp.ne.s32.totalorder %v813, 15
      %vm878 = vcmp.ne.s32.totalorder %v814, 15
      %vm879 = vcmp.ne.s32.totalorder %v815, 15
      %vm880 = vcmp.ne.s32.totalorder %v816, 15
      %vm881 = vcmp.ne.s32.totalorder %v817, 15
      %vm882 = vcmp.ne.s32.totalorder %v818, 15
      %vm883 = vcmp.ne.s32.totalorder %v819, 15
      %vm884 = vcmp.ne.s32.totalorder %v820, 15
      %vm885 = vcmp.ne.s32.totalorder %v821, 15
      %v886 = vld [vmem:[#allocation2 + $0x7] sm:$0xff]
      %v887 = vld [vmem:[#allocation2 + $0xf] sm:$0xff]
      %v888 = vld [vmem:[#allocation2 + $0x17] sm:$0xff]
      %v889 = vld [vmem:[#allocation2 + $0x1f] sm:$0xff]
      %v890 = vld [vmem:[#allocation2 + $0x27] sm:$0xff]
      %v891 = vld [vmem:[#allocation2 + $0x2f] sm:$0xff]
      %v892 = vld [vmem:[#allocation2 + $0x37] sm:$0xff]
      %v893 = vld [vmem:[#allocation2 + $0x3f] sm:$0xff]
      %v894 = vld [vmem:[#allocation2 + $0x47] sm:$0xff]
      %v895 = vld [vmem:[#allocation2 + $0x4f] sm:$0xff]
      %v896 = vld [vmem:[#allocation2 + $0x57] sm:$0xff]
      %v897 = vld [vmem:[#allocation2 + $0x5f] sm:$0xff]
      %v898 = vld [vmem:[#allocation2 + $0x67] sm:$0xff]
      %v899 = vld [vmem:[#allocation2 + $0x6f] sm:$0xff]
      %v900 = vld [vmem:[#allocation2 + $0x77] sm:$0xff]
      %v901 = vld [vmem:[#allocation2 + $0x7f] sm:$0xff]
      %v902 = vld [vmem:[#allocation2 + $0x87] sm:$0xff]
      %v903 = vld [vmem:[#allocation2 + $0x8f] sm:$0xff]
      %v904 = vld [vmem:[#allocation2 + $0x97] sm:$0xff]
      %v905 = vld [vmem:[#allocation2 + $0x9f] sm:$0xff]
      %v906 = vld [vmem:[#allocation2 + $0xa7] sm:$0xff]
      %v907 = vld [vmem:[#allocation2 + $0xaf] sm:$0xff]
      %v908 = vld [vmem:[#allocation2 + $0xb7] sm:$0xff]
      %v909 = vld [vmem:[#allocation2 + $0xbf] sm:$0xff]
      %v910 = vld [vmem:[#allocation2 + $0xc7] sm:$0xff]
      %v911 = vld [vmem:[#allocation2 + $0xcf] sm:$0xff]
      %v912 = vld [vmem:[#allocation2 + $0xd7] sm:$0xff]
      %v913 = vld [vmem:[#allocation2 + $0xdf] sm:$0xff]
      %v914 = vld [vmem:[#allocation2 + $0xe7] sm:$0xff]
      %v915 = vld [vmem:[#allocation2 + $0xef] sm:$0xff]
      %v916 = vld [vmem:[#allocation2 + $0xf7] sm:$0xff]
      %v917 = vld [vmem:[#allocation2 + $0xff] sm:$0xff]
      %v918 = vsel %vm822, 1, 0
      %v919 = vsel %vm823, 1, 0
      %v920 = vsel %vm824, 1, 0
      %v921 = vsel %vm825, 1, 0
      %v922 = vsel %vm826, 1, 0
      %v923 = vsel %vm827, 1, 0
      %v924 = vsel %vm828, 1, 0
      %v925 = vsel %vm829, 1, 0
      %v926 = vsel %vm830, 1, 0
      %v927 = vsel %vm831, 1, 0
      %v928 = vsel %vm832, 1, 0
      %v929 = vsel %vm833, 1, 0
      %v930 = vsel %vm834, 1, 0
      %v931 = vsel %vm835, 1, 0
      %v932 = vsel %vm836, 1, 0
      %v933 = vsel %vm837, 1, 0
      %v934 = vsel %vm838, 1, 0
      %v935 = vsel %vm839, 1, 0
      %v936 = vsel %vm840, 1, 0
      %v937 = vsel %vm841, 1, 0
      %v938 = vsel %vm842, 1, 0
      %v939 = vsel %vm843, 1, 0
      %v940 = vsel %vm844, 1, 0
      %v941 = vsel %vm845, 1, 0
      %v942 = vsel %vm846, 1, 0
      %v943 = vsel %vm847, 1, 0
      %v944 = vsel %vm848, 1, 0
      %v945 = vsel %vm849, 1, 0
      %v946 = vsel %vm850, 1, 0
      %v947 = vsel %vm851, 1, 0
      %v948 = vsel %vm852, 1, 0
      %v949 = vsel %vm853, 1, 0
      %vm950 = vcmp.eq.s32.totalorder %v918, 1
      %vm951 = vcmp.eq.s32.totalorder %v919, 1
      %vm952 = vcmp.eq.s32.totalorder %v920, 1
      %vm953 = vcmp.eq.s32.totalorder %v921, 1
      %vm954 = vcmp.eq.s32.totalorder %v922, 1
      %vm955 = vcmp.eq.s32.totalorder %v923, 1
      %vm956 = vcmp.eq.s32.totalorder %v924, 1
      %vm957 = vcmp.eq.s32.totalorder %v925, 1
      %vm958 = vcmp.eq.s32.totalorder %v926, 1
      %vm959 = vcmp.eq.s32.totalorder %v927, 1
      %vm960 = vcmp.eq.s32.totalorder %v928, 1
      %vm961 = vcmp.eq.s32.totalorder %v929, 1
      %vm962 = vcmp.eq.s32.totalorder %v930, 1
      %vm963 = vcmp.eq.s32.totalorder %v931, 1
      %vm964 = vcmp.eq.s32.totalorder %v932, 1
      %vm965 = vcmp.eq.s32.totalorder %v933, 1
      %vm966 = vcmp.eq.s32.totalorder %v934, 1
      %vm967 = vcmp.eq.s32.totalorder %v935, 1
      %vm968 = vcmp.eq.s32.totalorder %v936, 1
      %vm969 = vcmp.eq.s32.totalorder %v937, 1
      %vm970 = vcmp.eq.s32.totalorder %v938, 1
      %vm971 = vcmp.eq.s32.totalorder %v939, 1
      %vm972 = vcmp.eq.s32.totalorder %v940, 1
      %vm973 = vcmp.eq.s32.totalorder %v941, 1
      %vm974 = vcmp.eq.s32.totalorder %v942, 1
      %vm975 = vcmp.eq.s32.totalorder %v943, 1
      %vm976 = vcmp.eq.s32.totalorder %v944, 1
      %vm977 = vcmp.eq.s32.totalorder %v945, 1
      %vm978 = vcmp.eq.s32.totalorder %v946, 1
      %vm979 = vcmp.eq.s32.totalorder %v947, 1
      %vm980 = vcmp.eq.s32.totalorder %v948, 1
      %vm981 = vcmp.eq.s32.totalorder %v949, 1
      %v982 = vsel %vm950, %v886, 0.0
      %v983 = vsel %vm951, %v887, 0.0
      %v984 = vsel %vm952, %v888, 0.0
      %v985 = vsel %vm953, %v889, 0.0
      %v986 = vsel %vm954, %v890, 0.0
      %v987 = vsel %vm955, %v891, 0.0
      %v988 = vsel %vm956, %v892, 0.0
      %v989 = vsel %vm957, %v893, 0.0
      %v990 = vsel %vm958, %v894, 0.0
      %v991 = vsel %vm959, %v895, 0.0
      %v992 = vsel %vm960, %v896, 0.0
      %v993 = vsel %vm961, %v897, 0.0
      %v994 = vsel %vm962, %v898, 0.0
      %v995 = vsel %vm963, %v899, 0.0
      %v996 = vsel %vm964, %v900, 0.0
      %v997 = vsel %vm965, %v901, 0.0
      %v998 = vsel %vm966, %v902, 0.0
      %v999 = vsel %vm967, %v903, 0.0
      %v1000 = vsel %vm968, %v904, 0.0
      %v1001 = vsel %vm969, %v905, 0.0
      %v1002 = vsel %vm970, %v906, 0.0
      %v1003 = vsel %vm971, %v907, 0.0
      %v1004 = vsel %vm972, %v908, 0.0
      %v1005 = vsel %vm973, %v909, 0.0
      %v1006 = vsel %vm974, %v910, 0.0
      %v1007 = vsel %vm975, %v911, 0.0
      %v1008 = vsel %vm976, %v912, 0.0
      %v1009 = vsel %vm977, %v913, 0.0
      %v1010 = vsel %vm978, %v914, 0.0
      %v1011 = vsel %vm979, %v915, 0.0
      %v1012 = vsel %vm980, %v916, 0.0
      %v1013 = vsel %vm981, %v917, 0.0
      %v1014 = vld [vmem:[%s3] sm:$0xff]
      %v1015 = vld [vmem:[%s3 + $0x8] sm:$0xff]
      %v1016 = vld [vmem:[%s3 + $0x10] sm:$0xff]
      %v1017 = vld [vmem:[%s3 + $0x18] sm:$0xff]
      %v1018 = vld [vmem:[%s3 + $0x20] sm:$0xff]
      %v1019 = vld [vmem:[%s3 + $0x28] sm:$0xff]
      %v1020 = vld [vmem:[%s3 + $0x30] sm:$0xff]
      %v1021 = vld [vmem:[%s3 + $0x38] sm:$0xff]
      %v1022 = vld [vmem:[%s3 + $0x40] sm:$0xff]
      %v1023 = vld [vmem:[%s3 + $0x48] sm:$0xff]
      %v1024 = vld [vmem:[%s3 + $0x50] sm:$0xff]
      %v1025 = vld [vmem:[%s3 + $0x58] sm:$0xff]
      %v1026 = vld [vmem:[%s3 + $0x60] sm:$0xff]
      %v1027 = vld [vmem:[%s3 + $0x68] sm:$0xff]
      %v1028 = vld [vmem:[%s3 + $0x70] sm:$0xff]
      %v1029 = vld [vmem:[%s3 + $0x78] sm:$0xff]
      %1030 = vmatprep.subr.mxu0 0.0
      %1031 = vmatpush1.msra.mxu0 %v1014
      %1032 = vmatprep.subr.mxu0 0.0
      %1033 = vmatpush1.msra.mxu0 %v1015
      %1034 = vmatprep.subr.mxu0 0.0
      %1035 = vmatpush1.msra.mxu0 %v1016
      %1036 = vmatprep.subr.mxu0 0.0
      %1037 = vmatpush1.msra.mxu0 %v1017
      %1038 = vmatprep.subr.mxu0 0.0
      %1039 = vmatpush1.msra.mxu0 %v1018
      %1040 = vmatprep.subr.mxu0 0.0
      %1041 = vmatpush1.msra.mxu0 %v1019
      %1042 = vmatprep.subr.mxu0 0.0
      %1043 = vmatpush1.msra.mxu0 %v1020
      %1044 = vmatprep.subr.mxu0 0.0
      %1045 = vmatpush1.msra.mxu0 %v1021
      %1046 = vmatprep.subr.mxu0 0.0
      %1047 = vmatpush1.msra.mxu0 %v1022
      %1048 = vmatprep.subr.mxu0 0.0
      %1049 = vmatpush1.msra.mxu0 %v1023
      %1050 = vmatprep.subr.mxu0 0.0
      %1051 = vmatpush1.msra.mxu0 %v1024
      %1052 = vmatprep.subr.mxu0 0.0
      %1053 = vmatpush1.msra.mxu0 %v1025
      %1054 = vmatprep.subr.mxu0 0.0
      %1055 = vmatpush1.msra.mxu0 %v1026
      %1056 = vmatprep.subr.mxu0 0.0
      %1057 = vmatpush1.msra.mxu0 %v1027
      %1058 = vmatprep.subr.mxu0 0.0
      %1059 = vmatpush1.msra.mxu0 %v1028
      %1060 = vmatprep.subr.mxu0 0.0
      %1061 = vmatpush1.msra.mxu0 %v1029
      %1062 = vmatprep.subr.mxu0 0.0
      %1063 = vmatpush1.msra.mxu0 0.0
      %1064 = vmatprep.subr.mxu0 0.0
      %1065 = vmatpush1.msra.mxu0 0.0
      %1066 = vmatprep.subr.mxu0 0.0
      %1067 = vmatpush1.msra.mxu0 0.0
      %1068 = vmatprep.subr.mxu0 0.0
      %1069 = vmatpush1.msra.mxu0 0.0
      %1070 = vmatprep.subr.mxu0 0.0
      %1071 = vmatpush1.msra.mxu0 0.0
      %1072 = vmatprep.subr.mxu0 0.0
      %1073 = vmatpush1.msra.mxu0 0.0
      %1074 = vmatprep.subr.mxu0 0.0
      %1075 = vmatpush1.msra.mxu0 0.0
      %1076 = vmatprep.subr.mxu0 0.0
      %1077 = vmatpush1.msra.mxu0 0.0
      %1078 = vmatprep.subr.mxu0 0.0
      %1079 = vmatpush1.msra.mxu0 0.0
      %1080 = vmatprep.subr.mxu0 0.0
      %1081 = vmatpush1.msra.mxu0 0.0
      %1082 = vmatprep.subr.mxu0 0.0
      %1083 = vmatpush1.msra.mxu0 0.0
      %1084 = vmatprep.subr.mxu0 0.0
      %1085 = vmatpush1.msra.mxu0 0.0
      %1086 = vmatprep.subr.mxu0 0.0
      %1087 = vmatpush1.msra.mxu0 0.0
      %1088 = vmatprep.subr.mxu0 0.0
      %1089 = vmatpush1.msra.mxu0 0.0
      %1090 = vmatprep.subr.mxu0 0.0
      %1091 = vmatpush1.msra.mxu0 0.0
      %1092 = vmatprep.subr.mxu0 0.0
      %1093 = vmatpush1.msra.mxu0 0.0
      %1094 = vmatprep.mubr.f32.mxu0 0.0
      %1095 = vmatmul.mubr.f32.gmra.mrb[0].mxu0 %v982
      %v1096 = vpop.f32.mrb[0].mxu0
      %v1097 = vadd.f32 0.0, %v1096
      %v1098 = vpop.f32.mrb[0].mxu0
      %1099 = vmatprep.mubr.f32.mxu0 0.0
      %1100 = vmatmul.mubr.f32.gmra.mrb[0].mxu0 %v983
      %v1101 = vpop.f32.mrb[0].mxu0
      %v1102 = vadd.f32 0.0, %v1101
      %v1103 = vpop.f32.mrb[0].mxu0
      %1104 = vmatprep.mubr.f32.mxu0 0.0
      %1105 = vmatmul.mubr.f32.gmra.mrb[0].mxu0 %v984
      %v1106 = vpop.f32.mrb[0].mxu0
      %v1107 = vadd.f32 0.0, %v1106
      %v1108 = vpop.f32.mrb[0].mxu0
      %1109 = vmatprep.mubr.f32.mxu0 0.0
      %1110 = vmatmul.mubr.f32.gmra.mrb[0].mxu0 %v985
      %v1111 = vpop.f32.mrb[0].mxu0
      %v1112 = vadd.f32 0.0, %v1111
      %v1113 = vpop.f32.mrb[0].mxu0
      %1114 = vmatprep.mubr.f32.mxu0 0.0
      %1115 = vmatmul.mubr.f32.gmra.mrb[0].mxu0 %v986
      %v1116 = vpop.f32.mrb[0].mxu0
      %v1117 = vadd.f32 0.0, %v1116
      %v1118 = vpop.f32.mrb[0].mxu0
      %1119 = vmatprep.mubr.f32.mxu0 0.0
      %1120 = vmatmul.mubr.f32.gmra.mrb[0].mxu0 %v987
      %v1121 = vpop.f32.mrb[0].mxu0
      %v1122 = vadd.f32 0.0, %v1121
      %v1123 = vpop.f32.mrb[0].mxu0
      %1124 = vmatprep.mubr.f32.mxu0 0.0
      %1125 = vmatmul.mubr.f32.gmra.mrb[0].mxu0 %v988
      %v1126 = vpop.f32.mrb[0].mxu0
      %v1127 = vadd.f32 0.0, %v1126
      %v1128 = vpop.f32.mrb[0].mxu0
      %1129 = vmatprep.mubr.f32.mxu0 0.0
      %1130 = vmatmul.mubr.f32.gmra.mrb[0].mxu0 %v989
      %v1131 = vpop.f32.mrb[0].mxu0
      %v1132 = vadd.f32 0.0, %v1131
      %v1133 = vpop.f32.mrb[0].mxu0
      %1134 = vmatprep.mubr.f32.mxu0 0.0
      %1135 = vmatmul.mubr.f32.gmra.mrb[0].mxu0 %v990
      %v1136 = vpop.f32.mrb[0].mxu0
      %v1137 = vadd.f32 0.0, %v1136
      %v1138 = vpop.f32.mrb[0].mxu0
      %1139 = vmatprep.mubr.f32.mxu0 0.0
      %1140 = vmatmul.mubr.f32.gmra.mrb[0].mxu0 %v991
      %v1141 = vpop.f32.mrb[0].mxu0
      %v1142 = vadd.f32 0.0, %v1141
      %v1143 = vpop.f32.mrb[0].mxu0
      %1144 = vmatprep.mubr.f32.mxu0 0.0
      %1145 = vmatmul.mubr.f32.gmra.mrb[0].mxu0 %v992
      %v1146 = vpop.f32.mrb[0].mxu0
      %v1147 = vadd.f32 0.0, %v1146
      %v1148 = vpop.f32.mrb[0].mxu0
      %1149 = vmatprep.mubr.f32.mxu0 0.0
      %1150 = vmatmul.mubr.f32.gmra.mrb[0].mxu0 %v993
      %v1151 = vpop.f32.mrb[0].mxu0
      %v1152 = vadd.f32 0.0, %v1151
      %v1153 = vpop.f32.mrb[0].mxu0
      %1154 = vmatprep.mubr.f32.mxu0 0.0
      %1155 = vmatmul.mubr.f32.gmra.mrb[0].mxu0 %v994
      %v1156 = vpop.f32.mrb[0].mxu0
      %v1157 = vadd.f32 0.0, %v1156
      %v1158 = vpop.f32.mrb[0].mxu0
      %1159 = vmatprep.mubr.f32.mxu0 0.0
      %1160 = vmatmul.mubr.f32.gmra.mrb[0].mxu0 %v995
      %v1161 = vpop.f32.mrb[0].mxu0
      %v1162 = vadd.f32 0.0, %v1161
      %v1163 = vpop.f32.mrb[0].mxu0
      %1164 = vmatprep.mubr.f32.mxu0 0.0
      %1165 = vmatmul.mubr.f32.gmra.mrb[0].mxu0 %v996
      %v1166 = vpop.f32.mrb[0].mxu0
      %v1167 = vadd.f32 0.0, %v1166
      %v1168 = vpop.f32.mrb[0].mxu0
      %1169 = vmatprep.mubr.f32.mxu0 0.0
      %1170 = vmatmul.mubr.f32.gmra.mrb[0].mxu0 %v997
      %v1171 = vpop.f32.mrb[0].mxu0
      %v1172 = vadd.f32 0.0, %v1171
      %v1173 = vpop.f32.mrb[0].mxu0
      %1174 = vmatprep.mubr.f32.mxu0 0.0
      %1175 = vmatmul.mubr.f32.gmra.mrb[0].mxu0 %v998
      %v1176 = vpop.f32.mrb[0].mxu0
      %v1177 = vadd.f32 0.0, %v1176
      %v1178 = vpop.f32.mrb[0].mxu0
      %1179 = vmatprep.mubr.f32.mxu0 0.0
      %1180 = vmatmul.mubr.f32.gmra.mrb[0].mxu0 %v999
      %v1181 = vpop.f32.mrb[0].mxu0
      %v1182 = vadd.f32 0.0, %v1181
      %v1183 = vpop.f32.mrb[0].mxu0
      %1184 = vmatprep.mubr.f32.mxu0 0.0
      %1185 = vmatmul.mubr.f32.gmra.mrb[0].mxu0 %v1000
      %v1186 = vpop.f32.mrb[0].mxu0
      %v1187 = vadd.f32 0.0, %v1186
      %v1188 = vpop.f32.mrb[0].mxu0
      %1189 = vmatprep.mubr.f32.mxu0 0.0
      %1190 = vmatmul.mubr.f32.gmra.mrb[0].mxu0 %v1001
      %v1191 = vpop.f32.mrb[0].mxu0
      %v1192 = vadd.f32 0.0, %v1191
      %v1193 = vpop.f32.mrb[0].mxu0
      %1194 = vmatprep.mubr.f32.mxu0 0.0
      %1195 = vmatmul.mubr.f32.gmra.mrb[0].mxu0 %v1002
      %v1196 = vpop.f32.mrb[0].mxu0
      %v1197 = vadd.f32 0.0, %v1196
      %v1198 = vpop.f32.mrb[0].mxu0
      %1199 = vmatprep.mubr.f32.mxu0 0.0
      %1200 = vmatmul.mubr.f32.gmra.mrb[0].mxu0 %v1003
      %v1201 = vpop.f32.mrb[0].mxu0
      %v1202 = vadd.f32 0.0, %v1201
      %v1203 = vpop.f32.mrb[0].mxu0
      %1204 = vmatprep.mubr.f32.mxu0 0.0
      %1205 = vmatmul.mubr.f32.gmra.mrb[0].mxu0 %v1004
      %v1206 = vpop.f32.mrb[0].mxu0
      %v1207 = vadd.f32 0.0, %v1206
      %v1208 = vpop.f32.mrb[0].mxu0
      %1209 = vmatprep.mubr.f32.mxu0 0.0
      %1210 = vmatmul.mubr.f32.gmra.mrb[0].mxu0 %v1005
      %v1211 = vpop.f32.mrb[0].mxu0
      %v1212 = vadd.f32 0.0, %v1211
      %v1213 = vpop.f32.mrb[0].mxu0
      %1214 = vmatprep.mubr.f32.mxu0 0.0
      %1215 = vmatmul.mubr.f32.gmra.mrb[0].mxu0 %v1006
      %v1216 = vpop.f32.mrb[0].mxu0
      %v1217 = vadd.f32 0.0, %v1216
      %v1218 = vpop.f32.mrb[0].mxu0
      %1219 = vmatprep.mubr.f32.mxu0 0.0
      %1220 = vmatmul.mubr.f32.gmra.mrb[0].mxu0 %v1007
      %v1221 = vpop.f32.mrb[0].mxu0
      %v1222 = vadd.f32 0.0, %v1221
      %v1223 = vpop.f32.mrb[0].mxu0
      %1224 = vmatprep.mubr.f32.mxu0 0.0
      %1225 = vmatmul.mubr.f32.gmra.mrb[0].mxu0 %v1008
      %v1226 = vpop.f32.mrb[0].mxu0
      %v1227 = vadd.f32 0.0, %v1226
      %v1228 = vpop.f32.mrb[0].mxu0
      %1229 = vmatprep.mubr.f32.mxu0 0.0
      %1230 = vmatmul.mubr.f32.gmra.mrb[0].mxu0 %v1009
      %v1231 = vpop.f32.mrb[0].mxu0
      %v1232 = vadd.f32 0.0, %v1231
      %v1233 = vpop.f32.mrb[0].mxu0
      %1234 = vmatprep.mubr.f32.mxu0 0.0
      %1235 = vmatmul.mubr.f32.gmra.mrb[0].mxu0 %v1010
      %v1236 = vpop.f32.mrb[0].mxu0
      %v1237 = vadd.f32 0.0, %v1236
      %v1238 = vpop.f32.mrb[0].mxu0
      %1239 = vmatprep.mubr.f32.mxu0 0.0
      %1240 = vmatmul.mubr.f32.gmra.mrb[0].mxu0 %v1011
      %v1241 = vpop.f32.mrb[0].mxu0
      %v1242 = vadd.f32 0.0, %v1241
      %v1243 = vpop.f32.mrb[0].mxu0
      %1244 = vmatprep.mubr.f32.mxu0 0.0
      %1245 = vmatmul.mubr.f32.gmra.mrb[0].mxu0 %v1012
      %v1246 = vpop.f32.mrb[0].mxu0
      %v1247 = vadd.f32 0.0, %v1246
      %v1248 = vpop.f32.mrb[0].mxu0
      %1249 = vmatprep.mubr.f32.mxu0 0.0
      %1250 = vmatmul.mubr.f32.gmra.mrb[0].mxu0 %v1013
      %v1251 = vpop.f32.mrb[0].mxu0
      %v1252 = vadd.f32 0.0, %v1251
      %v1253 = vpop.f32.mrb[0].mxu0
      %1254 = vdwg.mxu0
      %1255 = vst [vmem:[%s224] sm:$0xff] %v1097
      %1256 = vst [vmem:[%s224 + $0x8] sm:$0xff] %v1102
      %1257 = vst [vmem:[%s224 + $0x10] sm:$0xff] %v1107
      %1258 = vst [vmem:[%s224 + $0x18] sm:$0xff] %v1112
      %1259 = vst [vmem:[%s224 + $0x20] sm:$0xff] %v1117
      %1260 = vst [vmem:[%s224 + $0x28] sm:$0xff] %v1122
      %1261 = vst [vmem:[%s224 + $0x30] sm:$0xff] %v1127
      %1262 = vst [vmem:[%s224 + $0x38] sm:$0xff] %v1132
      %1263 = vst [vmem:[%s224 + $0x40] sm:$0xff] %v1137
      %1264 = vst [vmem:[%s224 + $0x48] sm:$0xff] %v1142
      %1265 = vst [vmem:[%s224 + $0x50] sm:$0xff] %v1147
      %1266 = vst [vmem:[%s224 + $0x58] sm:$0xff] %v1152
      %1267 = vst [vmem:[%s224 + $0x60] sm:$0xff] %v1157
      %1268 = vst [vmem:[%s224 + $0x68] sm:$0xff] %v1162
      %1269 = vst [vmem:[%s224 + $0x70] sm:$0xff] %v1167
      %1270 = vst [vmem:[%s224 + $0x78] sm:$0xff] %v1172
      %1271 = vst [vmem:[%s224 + $0x80] sm:$0xff] %v1177
      %1272 = vst [vmem:[%s224 + $0x88] sm:$0xff] %v1182
      %1273 = vst [vmem:[%s224 + $0x90] sm:$0xff] %v1187
      %1274 = vst [vmem:[%s224 + $0x98] sm:$0xff] %v1192
      %1275 = vst [vmem:[%s224 + $0xa0] sm:$0xff] %v1197
      %1276 = vst [vmem:[%s224 + $0xa8] sm:$0xff] %v1202
      %1277 = vst [vmem:[%s224 + $0xb0] sm:$0xff] %v1207
      %1278 = vst [vmem:[%s224 + $0xb8] sm:$0xff] %v1212
      %1279 = vst [vmem:[%s224 + $0xc0] sm:$0xff] %v1217
      %1280 = vst [vmem:[%s224 + $0xc8] sm:$0xff] %v1222
      %1281 = vst [vmem:[%s224 + $0xd0] sm:$0xff] %v1227
      %1282 = vst [vmem:[%s224 + $0xd8] sm:$0xff] %v1232
      %1283 = vst [vmem:[%s224 + $0xe0] sm:$0xff] %v1237
      %1284 = vst [vmem:[%s224 + $0xe8] sm:$0xff] %v1242
      %1285 = vst [vmem:[%s224 + $0xf0] sm:$0xff] %v1247
      %1286 = vst [vmem:[%s224 + $0xf8] sm:$0xff] %v1252
      %v1287 = vld [vmem:[#allocation2 + $0x8] sm:$0xff]
      %v1288 = vld [vmem:[#allocation2 + $0x10] sm:$0xff]
      %v1289 = vld [vmem:[#allocation2 + $0x18] sm:$0xff]
      %v1290 = vld [vmem:[#allocation2 + $0x20] sm:$0xff]
      %v1291 = vld [vmem:[#allocation2 + $0x28] sm:$0xff]
      %v1292 = vld [vmem:[#allocation2 + $0x30] sm:$0xff]
      %v1293 = vld [vmem:[#allocation2 + $0x38] sm:$0xff]
      %v1294 = vld [vmem:[#allocation2 + $0x40] sm:$0xff]
      %v1295 = vld [vmem:[#allocation2 + $0x48] sm:$0xff]
      %v1296 = vld [vmem:[#allocation2 + $0x50] sm:$0xff]
      %v1297 = vld [vmem:[#allocation2 + $0x58] sm:$0xff]
      %v1298 = vld [vmem:[#allocation2 + $0x60] sm:$0xff]
      %v1299 = vld [vmem:[#allocation2 + $0x68] sm:$0xff]
      %v1300 = vld [vmem:[#allocation2 + $0x70] sm:$0xff]
      %v1301 = vld [vmem:[#allocation2 + $0x78] sm:$0xff]
      %v1302 = vld [vmem:[#allocation2 + $0x80] sm:$0xff]
      %v1303 = vld [vmem:[#allocation2 + $0x88] sm:$0xff]
      %v1304 = vld [vmem:[#allocation2 + $0x90] sm:$0xff]
      %v1305 = vld [vmem:[#allocation2 + $0x98] sm:$0xff]
      %v1306 = vld [vmem:[#allocation2 + $0xa0] sm:$0xff]
      %v1307 = vld [vmem:[#allocation2 + $0xa8] sm:$0xff]
      %v1308 = vld [vmem:[#allocation2 + $0xb0] sm:$0xff]
      %v1309 = vld [vmem:[#allocation2 + $0xb8] sm:$0xff]
      %v1310 = vld [vmem:[#allocation2 + $0xc0] sm:$0xff]
      %v1311 = vld [vmem:[#allocation2 + $0xc8] sm:$0xff]
      %v1312 = vld [vmem:[#allocation2 + $0xd0] sm:$0xff]
      %v1313 = vld [vmem:[#allocation2 + $0xd8] sm:$0xff]
      %v1314 = vld [vmem:[#allocation2 + $0xe0] sm:$0xff]
      %v1315 = vld [vmem:[#allocation2 + $0xe8] sm:$0xff]
      %v1316 = vld [vmem:[#allocation2 + $0xf0] sm:$0xff]
      %v1317 = vld [vmem:[#allocation2 + $0xf8] sm:$0xff]
      %v1318 = vld [vmem:[#allocation2 + $0x100] sm:$0xff]
      %s1319 = scalar_lea.vmem %s3, 128
      %v1320 = vld [vmem:[%s1319] sm:$0xff]
      %v1321 = vld [vmem:[%s1319 + $0x8] sm:$0xff]
      %v1322 = vld [vmem:[%s1319 + $0x10] sm:$0xff]
      %v1323 = vld [vmem:[%s1319 + $0x18] sm:$0xff]
      %v1324 = vld [vmem:[%s1319 + $0x20] sm:$0xff]
      %v1325 = vld [vmem:[%s1319 + $0x28] sm:$0xff]
      %v1326 = vld [vmem:[%s1319 + $0x30] sm:$0xff]
      %v1327 = vld [vmem:[%s1319 + $0x38] sm:$0xff]
      %v1328 = vld [vmem:[%s1319 + $0x40] sm:$0xff]
      %v1329 = vld [vmem:[%s1319 + $0x48] sm:$0xff]
      %v1330 = vld [vmem:[%s1319 + $0x50] sm:$0xff]
      %v1331 = vld [vmem:[%s1319 + $0x58] sm:$0xff]
      %v1332 = vld [vmem:[%s1319 + $0x60] sm:$0xff]
      %v1333 = vld [vmem:[%s1319 + $0x68] sm:$0xff]
      %v1334 = vld [vmem:[%s1319 + $0x70] sm:$0xff]
      %v1335 = vld [vmem:[%s1319 + $0x78] sm:$0xff]
      %1336 = vmatprep.subr.mxu0 0.0
      %1337 = vmatpush1.msra.mxu0 %v1320
      %1338 = vmatprep.subr.mxu0 0.0
      %1339 = vmatpush1.msra.mxu0 %v1321
      %1340 = vmatprep.subr.mxu0 0.0
      %1341 = vmatpush1.msra.mxu0 %v1322
      %1342 = vmatprep.subr.mxu0 0.0
      %1343 = vmatpush1.msra.mxu0 %v1323
      %1344 = vmatprep.subr.mxu0 0.0
      %1345 = vmatpush1.msra.mxu0 %v1324
      %1346 = vmatprep.subr.mxu0 0.0
      %1347 = vmatpush1.msra.mxu0 %v1325
      %1348 = vmatprep.subr.mxu0 0.0
      %1349 = vmatpush1.msra.mxu0 %v1326
      %1350 = vmatprep.subr.mxu0 0.0
      %1351 = vmatpush1.msra.mxu0 %v1327
      %1352 = vmatprep.subr.mxu0 0.0
      %1353 = vmatpush1.msra.mxu0 %v1328
      %1354 = vmatprep.subr.mxu0 0.0
      %1355 = vmatpush1.msra.mxu0 %v1329
      %1356 = vmatprep.subr.mxu0 0.0
      %1357 = vmatpush1.msra.mxu0 %v1330
      %1358 = vmatprep.subr.mxu0 0.0
      %1359 = vmatpush1.msra.mxu0 %v1331
      %1360 = vmatprep.subr.mxu0 0.0
      %1361 = vmatpush1.msra.mxu0 %v1332
      %1362 = vmatprep.subr.mxu0 0.0
      %1363 = vmatpush1.msra.mxu0 %v1333
      %1364 = vmatprep.subr.mxu0 0.0
      %1365 = vmatpush1.msra.mxu0 %v1334
      %1366 = vmatprep.subr.mxu0 0.0
      %1367 = vmatpush1.msra.mxu0 %v1335
      %1368 = vmatprep.subr.mxu0 0.0
      %1369 = vmatpush1.msra.mxu0 0.0
      %1370 = vmatprep.subr.mxu0 0.0
      %1371 = vmatpush1.msra.mxu0 0.0
      %1372 = vmatprep.subr.mxu0 0.0
      %1373 = vmatpush1.msra.mxu0 0.0
      %1374 = vmatprep.subr.mxu0 0.0
      %1375 = vmatpush1.msra.mxu0 0.0
      %1376 = vmatprep.subr.mxu0 0.0
      %1377 = vmatpush1.msra.mxu0 0.0
      %1378 = vmatprep.subr.mxu0 0.0
      %1379 = vmatpush1.msra.mxu0 0.0
      %1380 = vmatprep.subr.mxu0 0.0
      %1381 = vmatpush1.msra.mxu0 0.0
      %1382 = vmatprep.subr.mxu0 0.0
      %1383 = vmatpush1.msra.mxu0 0.0
      %1384 = vmatprep.subr.mxu0 0.0
      %1385 = vmatpush1.msra.mxu0 0.0
      %1386 = vmatprep.subr.mxu0 0.0
      %1387 = vmatpush1.msra.mxu0 0.0
      %1388 = vmatprep.subr.mxu0 0.0
      %1389 = vmatpush1.msra.mxu0 0.0
      %1390 = vmatprep.subr.mxu0 0.0
      %1391 = vmatpush1.msra.mxu0 0.0
      %1392 = vmatprep.subr.mxu0 0.0
      %1393 = vmatpush1.msra.mxu0 0.0
      %1394 = vmatprep.subr.mxu0 0.0
      %1395 = vmatpush1.msra.mxu0 0.0
      %1396 = vmatprep.subr.mxu0 0.0
      %1397 = vmatpush1.msra.mxu0 0.0
      %1398 = vmatprep.subr.mxu0 0.0
      %1399 = vmatpush1.msra.mxu0 0.0
      %1400 = vmatprep.mubr.f32.mxu0 0.0
      %1401 = vmatmul.mubr.f32.gmra.mrb[0].mxu0 %v1287
      %v1402 = vpop.f32.mrb[0].mxu0
      %v1403 = vadd.f32 0.0, %v1402
      %v1404 = vpop.f32.mrb[0].mxu0
      %1405 = vmatprep.mubr.f32.mxu0 0.0
      %1406 = vmatmul.mubr.f32.gmra.mrb[0].mxu0 %v1288
      %v1407 = vpop.f32.mrb[0].mxu0
      %v1408 = vadd.f32 0.0, %v1407
      %v1409 = vpop.f32.mrb[0].mxu0
      %1410 = vmatprep.mubr.f32.mxu0 0.0
      %1411 = vmatmul.mubr.f32.gmra.mrb[0].mxu0 %v1289
      %v1412 = vpop.f32.mrb[0].mxu0
      %v1413 = vadd.f32 0.0, %v1412
      %v1414 = vpop.f32.mrb[0].mxu0
      %1415 = vmatprep.mubr.f32.mxu0 0.0
      %1416 = vmatmul.mubr.f32.gmra.mrb[0].mxu0 %v1290
      %v1417 = vpop.f32.mrb[0].mxu0
      %v1418 = vadd.f32 0.0, %v1417
      %v1419 = vpop.f32.mrb[0].mxu0
      %1420 = vmatprep.mubr.f32.mxu0 0.0
      %1421 = vmatmul.mubr.f32.gmra.mrb[0].mxu0 %v1291
      %v1422 = vpop.f32.mrb[0].mxu0
      %v1423 = vadd.f32 0.0, %v1422
      %v1424 = vpop.f32.mrb[0].mxu0
      %1425 = vmatprep.mubr.f32.mxu0 0.0
      %1426 = vmatmul.mubr.f32.gmra.mrb[0].mxu0 %v1292
      %v1427 = vpop.f32.mrb[0].mxu0
      %v1428 = vadd.f32 0.0, %v1427
      %v1429 = vpop.f32.mrb[0].mxu0
      %1430 = vmatprep.mubr.f32.mxu0 0.0
      %1431 = vmatmul.mubr.f32.gmra.mrb[0].mxu0 %v1293
      %v1432 = vpop.f32.mrb[0].mxu0
      %v1433 = vadd.f32 0.0, %v1432
      %v1434 = vpop.f32.mrb[0].mxu0
      %1435 = vmatprep.mubr.f32.mxu0 0.0
      %1436 = vmatmul.mubr.f32.gmra.mrb[0].mxu0 %v1294
      %v1437 = vpop.f32.mrb[0].mxu0
      %v1438 = vadd.f32 0.0, %v1437
      %v1439 = vpop.f32.mrb[0].mxu0
      %1440 = vmatprep.mubr.f32.mxu0 0.0
      %1441 = vmatmul.mubr.f32.gmra.mrb[0].mxu0 %v1295
      %v1442 = vpop.f32.mrb[0].mxu0
      %v1443 = vadd.f32 0.0, %v1442
      %v1444 = vpop.f32.mrb[0].mxu0
      %1445 = vmatprep.mubr.f32.mxu0 0.0
      %1446 = vmatmul.mubr.f32.gmra.mrb[0].mxu0 %v1296
      %v1447 = vpop.f32.mrb[0].mxu0
      %v1448 = vadd.f32 0.0, %v1447
      %v1449 = vpop.f32.mrb[0].mxu0
      %1450 = vmatprep.mubr.f32.mxu0 0.0
      %1451 = vmatmul.mubr.f32.gmra.mrb[0].mxu0 %v1297
      %v1452 = vpop.f32.mrb[0].mxu0
      %v1453 = vadd.f32 0.0, %v1452
      %v1454 = vpop.f32.mrb[0].mxu0
      %1455 = vmatprep.mubr.f32.mxu0 0.0
      %1456 = vmatmul.mubr.f32.gmra.mrb[0].mxu0 %v1298
      %v1457 = vpop.f32.mrb[0].mxu0
      %v1458 = vadd.f32 0.0, %v1457
      %v1459 = vpop.f32.mrb[0].mxu0
      %1460 = vmatprep.mubr.f32.mxu0 0.0
      %1461 = vmatmul.mubr.f32.gmra.mrb[0].mxu0 %v1299
      %v1462 = vpop.f32.mrb[0].mxu0
      %v1463 = vadd.f32 0.0, %v1462
      %v1464 = vpop.f32.mrb[0].mxu0
      %1465 = vmatprep.mubr.f32.mxu0 0.0
      %1466 = vmatmul.mubr.f32.gmra.mrb[0].mxu0 %v1300
      %v1467 = vpop.f32.mrb[0].mxu0
      %v1468 = vadd.f32 0.0, %v1467
      %v1469 = vpop.f32.mrb[0].mxu0
      %1470 = vmatprep.mubr.f32.mxu0 0.0
      %1471 = vmatmul.mubr.f32.gmra.mrb[0].mxu0 %v1301
      %v1472 = vpop.f32.mrb[0].mxu0
      %v1473 = vadd.f32 0.0, %v1472
      %v1474 = vpop.f32.mrb[0].mxu0
      %1475 = vmatprep.mubr.f32.mxu0 0.0
      %1476 = vmatmul.mubr.f32.gmra.mrb[0].mxu0 %v1302
      %v1477 = vpop.f32.mrb[0].mxu0
      %v1478 = vadd.f32 0.0, %v1477
      %v1479 = vpop.f32.mrb[0].mxu0
      %1480 = vmatprep.mubr.f32.mxu0 0.0
      %1481 = vmatmul.mubr.f32.gmra.mrb[0].mxu0 %v1303
      %v1482 = vpop.f32.mrb[0].mxu0
      %v1483 = vadd.f32 0.0, %v1482
      %v1484 = vpop.f32.mrb[0].mxu0
      %1485 = vmatprep.mubr.f32.mxu0 0.0
      %1486 = vmatmul.mubr.f32.gmra.mrb[0].mxu0 %v1304
      %v1487 = vpop.f32.mrb[0].mxu0
      %v1488 = vadd.f32 0.0, %v1487
      %v1489 = vpop.f32.mrb[0].mxu0
      %1490 = vmatprep.mubr.f32.mxu0 0.0
      %1491 = vmatmul.mubr.f32.gmra.mrb[0].mxu0 %v1305
      %v1492 = vpop.f32.mrb[0].mxu0
      %v1493 = vadd.f32 0.0, %v1492
      %v1494 = vpop.f32.mrb[0].mxu0
      %1495 = vmatprep.mubr.f32.mxu0 0.0
      %1496 = vmatmul.mubr.f32.gmra.mrb[0].mxu0 %v1306
      %v1497 = vpop.f32.mrb[0].mxu0
      %v1498 = vadd.f32 0.0, %v1497
      %v1499 = vpop.f32.mrb[0].mxu0
      %1500 = vmatprep.mubr.f32.mxu0 0.0
      %1501 = vmatmul.mubr.f32.gmra.mrb[0].mxu0 %v1307
      %v1502 = vpop.f32.mrb[0].mxu0
      %v1503 = vadd.f32 0.0, %v1502
      %v1504 = vpop.f32.mrb[0].mxu0
      %1505 = vmatprep.mubr.f32.mxu0 0.0
      %1506 = vmatmul.mubr.f32.gmra.mrb[0].mxu0 %v1308
      %v1507 = vpop.f32.mrb[0].mxu0
      %v1508 = vadd.f32 0.0, %v1507
      %v1509 = vpop.f32.mrb[0].mxu0
      %1510 = vmatprep.mubr.f32.mxu0 0.0
      %1511 = vmatmul.mubr.f32.gmra.mrb[0].mxu0 %v1309
      %v1512 = vpop.f32.mrb[0].mxu0
      %v1513 = vadd.f32 0.0, %v1512
      %v1514 = vpop.f32.mrb[0].mxu0
      %1515 = vmatprep.mubr.f32.mxu0 0.0
      %1516 = vmatmul.mubr.f32.gmra.mrb[0].mxu0 %v1310
      %v1517 = vpop.f32.mrb[0].mxu0
      %v1518 = vadd.f32 0.0, %v1517
      %v1519 = vpop.f32.mrb[0].mxu0
      %1520 = vmatprep.mubr.f32.mxu0 0.0
      %1521 = vmatmul.mubr.f32.gmra.mrb[0].mxu0 %v1311
      %v1522 = vpop.f32.mrb[0].mxu0
      %v1523 = vadd.f32 0.0, %v1522
      %v1524 = vpop.f32.mrb[0].mxu0
      %1525 = vmatprep.mubr.f32.mxu0 0.0
      %1526 = vmatmul.mubr.f32.gmra.mrb[0].mxu0 %v1312
      %v1527 = vpop.f32.mrb[0].mxu0
      %v1528 = vadd.f32 0.0, %v1527
      %v1529 = vpop.f32.mrb[0].mxu0
      %1530 = vmatprep.mubr.f32.mxu0 0.0
      %1531 = vmatmul.mubr.f32.gmra.mrb[0].mxu0 %v1313
      %v1532 = vpop.f32.mrb[0].mxu0
      %v1533 = vadd.f32 0.0, %v1532
      %v1534 = vpop.f32.mrb[0].mxu0
      %1535 = vmatprep.mubr.f32.mxu0 0.0
      %1536 = vmatmul.mubr.f32.gmra.mrb[0].mxu0 %v1314
      %v1537 = vpop.f32.mrb[0].mxu0
      %v1538 = vadd.f32 0.0, %v1537
      %v1539 = vpop.f32.mrb[0].mxu0
      %1540 = vmatprep.mubr.f32.mxu0 0.0
      %1541 = vmatmul.mubr.f32.gmra.mrb[0].mxu0 %v1315
      %v1542 = vpop.f32.mrb[0].mxu0
      %v1543 = vadd.f32 0.0, %v1542
      %v1544 = vpop.f32.mrb[0].mxu0
      %1545 = vmatprep.mubr.f32.mxu0 0.0
      %1546 = vmatmul.mubr.f32.gmra.mrb[0].mxu0 %v1316
      %v1547 = vpop.f32.mrb[0].mxu0
      %v1548 = vadd.f32 0.0, %v1547
      %v1549 = vpop.f32.mrb[0].mxu0
      %1550 = vmatprep.mubr.f32.mxu0 0.0
      %1551 = vmatmul.mubr.f32.gmra.mrb[0].mxu0 %v1317
      %v1552 = vpop.f32.mrb[0].mxu0
      %v1553 = vadd.f32 0.0, %v1552
      %v1554 = vpop.f32.mrb[0].mxu0
      %1555 = vmatprep.mubr.f32.mxu0 0.0
      %1556 = vmatmul.mubr.f32.gmra.mrb[0].mxu0 %v1318
      %v1557 = vpop.f32.mrb[0].mxu0
      %v1558 = vadd.f32 0.0, %v1557
      %v1559 = vpop.f32.mrb[0].mxu0
      %1560 = vdwg.mxu0
      %v1561 = vld [vmem:[%s224] sm:$0xff]
      %v1562 = vld [vmem:[%s224 + $0x8] sm:$0xff]
      %v1563 = vld [vmem:[%s224 + $0x10] sm:$0xff]
      %v1564 = vld [vmem:[%s224 + $0x18] sm:$0xff]
      %v1565 = vld [vmem:[%s224 + $0x20] sm:$0xff]
      %v1566 = vld [vmem:[%s224 + $0x28] sm:$0xff]
      %v1567 = vld [vmem:[%s224 + $0x30] sm:$0xff]
      %v1568 = vld [vmem:[%s224 + $0x38] sm:$0xff]
      %v1569 = vld [vmem:[%s224 + $0x40] sm:$0xff]
      %v1570 = vld [vmem:[%s224 + $0x48] sm:$0xff]
      %v1571 = vld [vmem:[%s224 + $0x50] sm:$0xff]
      %v1572 = vld [vmem:[%s224 + $0x58] sm:$0xff]
      %v1573 = vld [vmem:[%s224 + $0x60] sm:$0xff]
      %v1574 = vld [vmem:[%s224 + $0x68] sm:$0xff]
      %v1575 = vld [vmem:[%s224 + $0x70] sm:$0xff]
      %v1576 = vld [vmem:[%s224 + $0x78] sm:$0xff]
      %v1577 = vld [vmem:[%s224 + $0x80] sm:$0xff]
      %v1578 = vld [vmem:[%s224 + $0x88] sm:$0xff]
      %v1579 = vld [vmem:[%s224 + $0x90] sm:$0xff]
      %v1580 = vld [vmem:[%s224 + $0x98] sm:$0xff]
      %v1581 = vld [vmem:[%s224 + $0xa0] sm:$0xff]
      %v1582 = vld [vmem:[%s224 + $0xa8] sm:$0xff]
      %v1583 = vld [vmem:[%s224 + $0xb0] sm:$0xff]
      %v1584 = vld [vmem:[%s224 + $0xb8] sm:$0xff]
      %v1585 = vld [vmem:[%s224 + $0xc0] sm:$0xff]
      %v1586 = vld [vmem:[%s224 + $0xc8] sm:$0xff]
      %v1587 = vld [vmem:[%s224 + $0xd0] sm:$0xff]
      %v1588 = vld [vmem:[%s224 + $0xd8] sm:$0xff]
      %v1589 = vld [vmem:[%s224 + $0xe0] sm:$0xff]
      %v1590 = vld [vmem:[%s224 + $0xe8] sm:$0xff]
      %v1591 = vld [vmem:[%s224 + $0xf0] sm:$0xff]
      %v1592 = vld [vmem:[%s224 + $0xf8] sm:$0xff]
      %v1593 = vadd.f32 %v1561, %v1403
      %v1594 = vadd.f32 %v1562, %v1408
      %v1595 = vadd.f32 %v1563, %v1413
      %v1596 = vadd.f32 %v1564, %v1418
      %v1597 = vadd.f32 %v1565, %v1423
      %v1598 = vadd.f32 %v1566, %v1428
      %v1599 = vadd.f32 %v1567, %v1433
      %v1600 = vadd.f32 %v1568, %v1438
      %v1601 = vadd.f32 %v1569, %v1443
      %v1602 = vadd.f32 %v1570, %v1448
      %v1603 = vadd.f32 %v1571, %v1453
      %v1604 = vadd.f32 %v1572, %v1458
      %v1605 = vadd.f32 %v1573, %v1463
      %v1606 = vadd.f32 %v1574, %v1468
      %v1607 = vadd.f32 %v1575, %v1473
      %v1608 = vadd.f32 %v1576, %v1478
      %v1609 = vadd.f32 %v1577, %v1483
      %v1610 = vadd.f32 %v1578, %v1488
      %v1611 = vadd.f32 %v1579, %v1493
      %v1612 = vadd.f32 %v1580, %v1498
      %v1613 = vadd.f32 %v1581, %v1503
      %v1614 = vadd.f32 %v1582, %v1508
      %v1615 = vadd.f32 %v1583, %v1513
      %v1616 = vadd.f32 %v1584, %v1518
      %v1617 = vadd.f32 %v1585, %v1523
      %v1618 = vadd.f32 %v1586, %v1528
      %v1619 = vadd.f32 %v1587, %v1533
      %v1620 = vadd.f32 %v1588, %v1538
      %v1621 = vadd.f32 %v1589, %v1543
      %v1622 = vadd.f32 %v1590, %v1548
      %v1623 = vadd.f32 %v1591, %v1553
      %v1624 = vadd.f32 %v1592, %v1558
      %1625 = vst [vmem:[%s224] sm:$0xff] %v1593
      %1626 = vst [vmem:[%s224 + $0x8] sm:$0xff] %v1594
      %1627 = vst [vmem:[%s224 + $0x10] sm:$0xff] %v1595
      %1628 = vst [vmem:[%s224 + $0x18] sm:$0xff] %v1596
      %1629 = vst [vmem:[%s224 + $0x20] sm:$0xff] %v1597
      %1630 = vst [vmem:[%s224 + $0x28] sm:$0xff] %v1598
      %1631 = vst [vmem:[%s224 + $0x30] sm:$0xff] %v1599
      %1632 = vst [vmem:[%s224 + $0x38] sm:$0xff] %v1600
      %1633 = vst [vmem:[%s224 + $0x40] sm:$0xff] %v1601
      %1634 = vst [vmem:[%s224 + $0x48] sm:$0xff] %v1602
      %1635 = vst [vmem:[%s224 + $0x50] sm:$0xff] %v1603
      %1636 = vst [vmem:[%s224 + $0x58] sm:$0xff] %v1604
      %1637 = vst [vmem:[%s224 + $0x60] sm:$0xff] %v1605
      %1638 = vst [vmem:[%s224 + $0x68] sm:$0xff] %v1606
      %1639 = vst [vmem:[%s224 + $0x70] sm:$0xff] %v1607
      %1640 = vst [vmem:[%s224 + $0x78] sm:$0xff] %v1608
      %1641 = vst [vmem:[%s224 + $0x80] sm:$0xff] %v1609
      %1642 = vst [vmem:[%s224 + $0x88] sm:$0xff] %v1610
      %1643 = vst [vmem:[%s224 + $0x90] sm:$0xff] %v1611
      %1644 = vst [vmem:[%s224 + $0x98] sm:$0xff] %v1612
      %1645 = vst [vmem:[%s224 + $0xa0] sm:$0xff] %v1613
      %1646 = vst [vmem:[%s224 + $0xa8] sm:$0xff] %v1614
      %1647 = vst [vmem:[%s224 + $0xb0] sm:$0xff] %v1615
      %1648 = vst [vmem:[%s224 + $0xb8] sm:$0xff] %v1616
      %1649 = vst [vmem:[%s224 + $0xc0] sm:$0xff] %v1617
      %1650 = vst [vmem:[%s224 + $0xc8] sm:$0xff] %v1618
      %1651 = vst [vmem:[%s224 + $0xd0] sm:$0xff] %v1619
      %1652 = vst [vmem:[%s224 + $0xd8] sm:$0xff] %v1620
      %1653 = vst [vmem:[%s224 + $0xe0] sm:$0xff] %v1621
      %1654 = vst [vmem:[%s224 + $0xe8] sm:$0xff] %v1622
      %1655 = vst [vmem:[%s224 + $0xf0] sm:$0xff] %v1623
      %1656 = vst [vmem:[%s224 + $0xf8] sm:$0xff] %v1624
      %v1657 = vld [vmem:[#allocation2 + $0x9] sm:$0xff]
      %v1658 = vld [vmem:[#allocation2 + $0x11] sm:$0xff]
      %v1659 = vld [vmem:[#allocation2 + $0x19] sm:$0xff]
      %v1660 = vld [vmem:[#allocation2 + $0x21] sm:$0xff]
      %v1661 = vld [vmem:[#allocation2 + $0x29] sm:$0xff]
      %v1662 = vld [vmem:[#allocation2 + $0x31] sm:$0xff]
      %v1663 = vld [vmem:[#allocation2 + $0x39] sm:$0xff]
      %v1664 = vld [vmem:[#allocation2 + $0x41] sm:$0xff]
      %v1665 = vld [vmem:[#allocation2 + $0x49] sm:$0xff]
      %v1666 = vld [vmem:[#allocation2 + $0x51] sm:$0xff]
      %v1667 = vld [vmem:[#allocation2 + $0x59] sm:$0xff]
      %v1668 = vld [vmem:[#allocation2 + $0x61] sm:$0xff]
      %v1669 = vld [vmem:[#allocation2 + $0x69] sm:$0xff]
      %v1670 = vld [vmem:[#allocation2 + $0x71] sm:$0xff]
      %v1671 = vld [vmem:[#allocation2 + $0x79] sm:$0xff]
      %v1672 = vld [vmem:[#allocation2 + $0x81] sm:$0xff]
      %v1673 = vld [vmem:[#allocation2 + $0x89] sm:$0xff]
      %v1674 = vld [vmem:[#allocation2 + $0x91] sm:$0xff]
      %v1675 = vld [vmem:[#allocation2 + $0x99] sm:$0xff]
      %v1676 = vld [vmem:[#allocation2 + $0xa1] sm:$0xff]
      %v1677 = vld [vmem:[#allocation2 + $0xa9] sm:$0xff]
      %v1678 = vld [vmem:[#allocation2 + $0xb1] sm:$0xff]
      %v1679 = vld [vmem:[#allocation2 + $0xb9] sm:$0xff]
      %v1680 = vld [vmem:[#allocation2 + $0xc1] sm:$0xff]
      %v1681 = vld [vmem:[#allocation2 + $0xc9] sm:$0xff]
      %v1682 = vld [vmem:[#allocation2 + $0xd1] sm:$0xff]
      %v1683 = vld [vmem:[#allocation2 + $0xd9] sm:$0xff]
      %v1684 = vld [vmem:[#allocation2 + $0xe1] sm:$0xff]
      %v1685 = vld [vmem:[#allocation2 + $0xe9] sm:$0xff]
      %v1686 = vld [vmem:[#allocation2 + $0xf1] sm:$0xff]
      %v1687 = vld [vmem:[#allocation2 + $0xf9] sm:$0xff]
      %v1688 = vld [vmem:[#allocation2 + $0x101] sm:$0xff]
      %v1689 = vsel %vm854, 1, 0
      %v1690 = vsel %vm855, 1, 0
      %v1691 = vsel %vm856, 1, 0
      %v1692 = vsel %vm857, 1, 0
      %v1693 = vsel %vm858, 1, 0
      %v1694 = vsel %vm859, 1, 0
      %v1695 = vsel %vm860, 1, 0
      %v1696 = vsel %vm861, 1, 0
      %v1697 = vsel %vm862, 1, 0
      %v1698 = vsel %vm863, 1, 0
      %v1699 = vsel %vm864, 1, 0
      %v1700 = vsel %vm865, 1, 0
      %v1701 = vsel %vm866, 1, 0
      %v1702 = vsel %vm867, 1, 0
      %v1703 = vsel %vm868, 1, 0
      %v1704 = vsel %vm869, 1, 0
      %v1705 = vsel %vm870, 1, 0
      %v1706 = vsel %vm871, 1, 0
      %v1707 = vsel %vm872, 1, 0
      %v1708 = vsel %vm873, 1, 0
      %v1709 = vsel %vm874, 1, 0
      %v1710 = vsel %vm875, 1, 0
      %v1711 = vsel %vm876, 1, 0
      %v1712 = vsel %vm877, 1, 0
      %v1713 = vsel %vm878, 1, 0
      %v1714 = vsel %vm879, 1, 0
      %v1715 = vsel %vm880, 1, 0
      %v1716 = vsel %vm881, 1, 0
      %v1717 = vsel %vm882, 1, 0
      %v1718 = vsel %vm883, 1, 0
      %v1719 = vsel %vm884, 1, 0
      %v1720 = vsel %vm885, 1, 0
      %vm1721 = vcmp.eq.s32.totalorder %v1689, 1
      %vm1722 = vcmp.eq.s32.totalorder %v1690, 1
      %vm1723 = vcmp.eq.s32.totalorder %v1691, 1
      %vm1724 = vcmp.eq.s32.totalorder %v1692, 1
      %vm1725 = vcmp.eq.s32.totalorder %v1693, 1
      %vm1726 = vcmp.eq.s32.totalorder %v1694, 1
      %vm1727 = vcmp.eq.s32.totalorder %v1695, 1
      %vm1728 = vcmp.eq.s32.totalorder %v1696, 1
      %vm1729 = vcmp.eq.s32.totalorder %v1697, 1
      %vm1730 = vcmp.eq.s32.totalorder %v1698, 1
      %vm1731 = vcmp.eq.s32.totalorder %v1699, 1
      %vm1732 = vcmp.eq.s32.totalorder %v1700, 1
      %vm1733 = vcmp.eq.s32.totalorder %v1701, 1
      %vm1734 = vcmp.eq.s32.totalorder %v1702, 1
      %vm1735 = vcmp.eq.s32.totalorder %v1703, 1
      %vm1736 = vcmp.eq.s32.totalorder %v1704, 1
      %vm1737 = vcmp.eq.s32.totalorder %v1705, 1
      %vm1738 = vcmp.eq.s32.totalorder %v1706, 1
      %vm1739 = vcmp.eq.s32.totalorder %v1707, 1
      %vm1740 = vcmp.eq.s32.totalorder %v1708, 1
      %vm1741 = vcmp.eq.s32.totalorder %v1709, 1
      %vm1742 = vcmp.eq.s32.totalorder %v1710, 1
      %vm1743 = vcmp.eq.s32.totalorder %v1711, 1
      %vm1744 = vcmp.eq.s32.totalorder %v1712, 1
      %vm1745 = vcmp.eq.s32.totalorder %v1713, 1
      %vm1746 = vcmp.eq.s32.totalorder %v1714, 1
      %vm1747 = vcmp.eq.s32.totalorder %v1715, 1
      %vm1748 = vcmp.eq.s32.totalorder %v1716, 1
      %vm1749 = vcmp.eq.s32.totalorder %v1717, 1
      %vm1750 = vcmp.eq.s32.totalorder %v1718, 1
      %vm1751 = vcmp.eq.s32.totalorder %v1719, 1
      %vm1752 = vcmp.eq.s32.totalorder %v1720, 1
      %v1753 = vsel %vm1721, %v1657, 0.0
      %v1754 = vsel %vm1722, %v1658, 0.0
      %v1755 = vsel %vm1723, %v1659, 0.0
      %v1756 = vsel %vm1724, %v1660, 0.0
      %v1757 = vsel %vm1725, %v1661, 0.0
      %v1758 = vsel %vm1726, %v1662, 0.0
      %v1759 = vsel %vm1727, %v1663, 0.0
      %v1760 = vsel %vm1728, %v1664, 0.0
      %v1761 = vsel %vm1729, %v1665, 0.0
      %v1762 = vsel %vm1730, %v1666, 0.0
      %v1763 = vsel %vm1731, %v1667, 0.0
      %v1764 = vsel %vm1732, %v1668, 0.0
      %v1765 = vsel %vm1733, %v1669, 0.0
      %v1766 = vsel %vm1734, %v1670, 0.0
      %v1767 = vsel %vm1735, %v1671, 0.0
      %v1768 = vsel %vm1736, %v1672, 0.0
      %v1769 = vsel %vm1737, %v1673, 0.0
      %v1770 = vsel %vm1738, %v1674, 0.0
      %v1771 = vsel %vm1739, %v1675, 0.0
      %v1772 = vsel %vm1740, %v1676, 0.0
      %v1773 = vsel %vm1741, %v1677, 0.0
      %v1774 = vsel %vm1742, %v1678, 0.0
      %v1775 = vsel %vm1743, %v1679, 0.0
      %v1776 = vsel %vm1744, %v1680, 0.0
      %v1777 = vsel %vm1745, %v1681, 0.0
      %v1778 = vsel %vm1746, %v1682, 0.0
      %v1779 = vsel %vm1747, %v1683, 0.0
      %v1780 = vsel %vm1748, %v1684, 0.0
      %v1781 = vsel %vm1749, %v1685, 0.0
      %v1782 = vsel %vm1750, %v1686, 0.0
      %v1783 = vsel %vm1751, %v1687, 0.0
      %v1784 = vsel %vm1752, %v1688, 0.0
      %s1785 = scalar_lea.vmem %s3, 256
      %v1786 = vld [vmem:[%s1785] sm:$0xff]
      %v1787 = vld [vmem:[%s1785 + $0x8] sm:$0xff]
      %v1788 = vld [vmem:[%s1785 + $0x10] sm:$0xff]
      %v1789 = vld [vmem:[%s1785 + $0x18] sm:$0xff]
      %v1790 = vld [vmem:[%s1785 + $0x20] sm:$0xff]
      %v1791 = vld [vmem:[%s1785 + $0x28] sm:$0xff]
      %v1792 = vld [vmem:[%s1785 + $0x30] sm:$0xff]
      %v1793 = vld [vmem:[%s1785 + $0x38] sm:$0xff]
      %v1794 = vld [vmem:[%s1785 + $0x40] sm:$0xff]
      %v1795 = vld [vmem:[%s1785 + $0x48] sm:$0xff]
      %v1796 = vld [vmem:[%s1785 + $0x50] sm:$0xff]
      %v1797 = vld [vmem:[%s1785 + $0x58] sm:$0xff]
      %v1798 = vld [vmem:[%s1785 + $0x60] sm:$0xff]
      %v1799 = vld [vmem:[%s1785 + $0x68] sm:$0xff]
      %v1800 = vld [vmem:[%s1785 + $0x70] sm:$0xff]
      %v1801 = vld [vmem:[%s1785 + $0x78] sm:$0xff]
      %1802 = vmatprep.subr.mxu0 0.0
      %1803 = vmatpush1.msra.mxu0 %v1786
      %1804 = vmatprep.subr.mxu0 0.0
      %1805 = vmatpush1.msra.mxu0 %v1787
      %1806 = vmatprep.subr.mxu0 0.0
      %1807 = vmatpush1.msra.mxu0 %v1788
      %1808 = vmatprep.subr.mxu0 0.0
      %1809 = vmatpush1.msra.mxu0 %v1789
      %1810 = vmatprep.subr.mxu0 0.0
      %1811 = vmatpush1.msra.mxu0 %v1790
      %1812 = vmatprep.subr.mxu0 0.0
      %1813 = vmatpush1.msra.mxu0 %v1791
      %1814 = vmatprep.subr.mxu0 0.0
      %1815 = vmatpush1.msra.mxu0 %v1792
      %1816 = vmatprep.subr.mxu0 0.0
      %1817 = vmatpush1.msra.mxu0 %v1793
      %1818 = vmatprep.subr.mxu0 0.0
      %1819 = vmatpush1.msra.mxu0 %v1794
      %1820 = vmatprep.subr.mxu0 0.0
      %1821 = vmatpush1.msra.mxu0 %v1795
      %1822 = vmatprep.subr.mxu0 0.0
      %1823 = vmatpush1.msra.mxu0 %v1796
      %1824 = vmatprep.subr.mxu0 0.0
      %1825 = vmatpush1.msra.mxu0 %v1797
      %1826 = vmatprep.subr.mxu0 0.0
      %1827 = vmatpush1.msra.mxu0 %v1798
      %1828 = vmatprep.subr.mxu0 0.0
      %1829 = vmatpush1.msra.mxu0 %v1799
      %1830 = vmatprep.subr.mxu0 0.0
      %1831 = vmatpush1.msra.mxu0 %v1800
      %1832 = vmatprep.subr.mxu0 0.0
      %1833 = vmatpush1.msra.mxu0 %v1801
      %1834 = vmatprep.subr.mxu0 0.0
      %1835 = vmatpush1.msra.mxu0 0.0
      %1836 = vmatprep.subr.mxu0 0.0
      %1837 = vmatpush1.msra.mxu0 0.0
      %1838 = vmatprep.subr.mxu0 0.0
      %1839 = vmatpush1.msra.mxu0 0.0
      %1840 = vmatprep.subr.mxu0 0.0
      %1841 = vmatpush1.msra.mxu0 0.0
      %1842 = vmatprep.subr.mxu0 0.0
      %1843 = vmatpush1.msra.mxu0 0.0
      %1844 = vmatprep.subr.mxu0 0.0
      %1845 = vmatpush1.msra.mxu0 0.0
      %1846 = vmatprep.subr.mxu0 0.0
      %1847 = vmatpush1.msra.mxu0 0.0
      %1848 = vmatprep.subr.mxu0 0.0
      %1849 = vmatpush1.msra.mxu0 0.0
      %1850 = vmatprep.subr.mxu0 0.0
      %1851 = vmatpush1.msra.mxu0 0.0
      %1852 = vmatprep.subr.mxu0 0.0
      %1853 = vmatpush1.msra.mxu0 0.0
      %1854 = vmatprep.subr.mxu0 0.0
      %1855 = vmatpush1.msra.mxu0 0.0
      %1856 = vmatprep.subr.mxu0 0.0
      %1857 = vmatpush1.msra.mxu0 0.0
      %1858 = vmatprep.subr.mxu0 0.0
      %1859 = vmatpush1.msra.mxu0 0.0
      %1860 = vmatprep.subr.mxu0 0.0
      %1861 = vmatpush1.msra.mxu0 0.0
      %1862 = vmatprep.subr.mxu0 0.0
      %1863 = vmatpush1.msra.mxu0 0.0
      %1864 = vmatprep.subr.mxu0 0.0
      %1865 = vmatpush1.msra.mxu0 0.0
      %1866 = vmatprep.mubr.f32.mxu0 0.0
      %1867 = vmatmul.mubr.f32.gmra.mrb[0].mxu0 %v1753
      %v1868 = vpop.f32.mrb[0].mxu0
      %v1869 = vadd.f32 0.0, %v1868
      %v1870 = vpop.f32.mrb[0].mxu0
      %1871 = vmatprep.mubr.f32.mxu0 0.0
      %1872 = vmatmul.mubr.f32.gmra.mrb[0].mxu0 %v1754
      %v1873 = vpop.f32.mrb[0].mxu0
      %v1874 = vadd.f32 0.0, %v1873
      %v1875 = vpop.f32.mrb[0].mxu0
      %1876 = vmatprep.mubr.f32.mxu0 0.0
      %1877 = vmatmul.mubr.f32.gmra.mrb[0].mxu0 %v1755
      %v1878 = vpop.f32.mrb[0].mxu0
      %v1879 = vadd.f32 0.0, %v1878
      %v1880 = vpop.f32.mrb[0].mxu0
      %1881 = vmatprep.mubr.f32.mxu0 0.0
      %1882 = vmatmul.mubr.f32.gmra.mrb[0].mxu0 %v1756
      %v1883 = vpop.f32.mrb[0].mxu0
      %v1884 = vadd.f32 0.0, %v1883
      %v1885 = vpop.f32.mrb[0].mxu0
      %1886 = vmatprep.mubr.f32.mxu0 0.0
      %1887 = vmatmul.mubr.f32.gmra.mrb[0].mxu0 %v1757
      %v1888 = vpop.f32.mrb[0].mxu0
      %v1889 = vadd.f32 0.0, %v1888
      %v1890 = vpop.f32.mrb[0].mxu0
      %1891 = vmatprep.mubr.f32.mxu0 0.0
      %1892 = vmatmul.mubr.f32.gmra.mrb[0].mxu0 %v1758
      %v1893 = vpop.f32.mrb[0].mxu0
      %v1894 = vadd.f32 0.0, %v1893
      %v1895 = vpop.f32.mrb[0].mxu0
      %1896 = vmatprep.mubr.f32.mxu0 0.0
      %1897 = vmatmul.mubr.f32.gmra.mrb[0].mxu0 %v1759
      %v1898 = vpop.f32.mrb[0].mxu0
      %v1899 = vadd.f32 0.0, %v1898
      %v1900 = vpop.f32.mrb[0].mxu0
      %1901 = vmatprep.mubr.f32.mxu0 0.0
      %1902 = vmatmul.mubr.f32.gmra.mrb[0].mxu0 %v1760
      %v1903 = vpop.f32.mrb[0].mxu0
      %v1904 = vadd.f32 0.0, %v1903
      %v1905 = vpop.f32.mrb[0].mxu0
      %1906 = vmatprep.mubr.f32.mxu0 0.0
      %1907 = vmatmul.mubr.f32.gmra.mrb[0].mxu0 %v1761
      %v1908 = vpop.f32.mrb[0].mxu0
      %v1909 = vadd.f32 0.0, %v1908
      %v1910 = vpop.f32.mrb[0].mxu0
      %1911 = vmatprep.mubr.f32.mxu0 0.0
      %1912 = vmatmul.mubr.f32.gmra.mrb[0].mxu0 %v1762
      %v1913 = vpop.f32.mrb[0].mxu0
      %v1914 = vadd.f32 0.0, %v1913
      %v1915 = vpop.f32.mrb[0].mxu0
      %1916 = vmatprep.mubr.f32.mxu0 0.0
      %1917 = vmatmul.mubr.f32.gmra.mrb[0].mxu0 %v1763
      %v1918 = vpop.f32.mrb[0].mxu0
      %v1919 = vadd.f32 0.0, %v1918
      %v1920 = vpop.f32.mrb[0].mxu0
      %1921 = vmatprep.mubr.f32.mxu0 0.0
      %1922 = vmatmul.mubr.f32.gmra.mrb[0].mxu0 %v1764
      %v1923 = vpop.f32.mrb[0].mxu0
      %v1924 = vadd.f32 0.0, %v1923
      %v1925 = vpop.f32.mrb[0].mxu0
      %1926 = vmatprep.mubr.f32.mxu0 0.0
      %1927 = vmatmul.mubr.f32.gmra.mrb[0].mxu0 %v1765
      %v1928 = vpop.f32.mrb[0].mxu0
      %v1929 = vadd.f32 0.0, %v1928
      %v1930 = vpop.f32.mrb[0].mxu0
      %1931 = vmatprep.mubr.f32.mxu0 0.0
      %1932 = vmatmul.mubr.f32.gmra.mrb[0].mxu0 %v1766
      %v1933 = vpop.f32.mrb[0].mxu0
      %v1934 = vadd.f32 0.0, %v1933
      %v1935 = vpop.f32.mrb[0].mxu0
      %1936 = vmatprep.mubr.f32.mxu0 0.0
      %1937 = vmatmul.mubr.f32.gmra.mrb[0].mxu0 %v1767
      %v1938 = vpop.f32.mrb[0].mxu0
      %v1939 = vadd.f32 0.0, %v1938
      %v1940 = vpop.f32.mrb[0].mxu0
      %1941 = vmatprep.mubr.f32.mxu0 0.0
      %1942 = vmatmul.mubr.f32.gmra.mrb[0].mxu0 %v1768
      %v1943 = vpop.f32.mrb[0].mxu0
      %v1944 = vadd.f32 0.0, %v1943
      %v1945 = vpop.f32.mrb[0].mxu0
      %1946 = vmatprep.mubr.f32.mxu0 0.0
      %1947 = vmatmul.mubr.f32.gmra.mrb[0].mxu0 %v1769
      %v1948 = vpop.f32.mrb[0].mxu0
      %v1949 = vadd.f32 0.0, %v1948
      %v1950 = vpop.f32.mrb[0].mxu0
      %1951 = vmatprep.mubr.f32.mxu0 0.0
      %1952 = vmatmul.mubr.f32.gmra.mrb[0].mxu0 %v1770
      %v1953 = vpop.f32.mrb[0].mxu0
      %v1954 = vadd.f32 0.0, %v1953
      %v1955 = vpop.f32.mrb[0].mxu0
      %1956 = vmatprep.mubr.f32.mxu0 0.0
      %1957 = vmatmul.mubr.f32.gmra.mrb[0].mxu0 %v1771
      %v1958 = vpop.f32.mrb[0].mxu0
      %v1959 = vadd.f32 0.0, %v1958
      %v1960 = vpop.f32.mrb[0].mxu0
      %1961 = vmatprep.mubr.f32.mxu0 0.0
      %1962 = vmatmul.mubr.f32.gmra.mrb[0].mxu0 %v1772
      %v1963 = vpop.f32.mrb[0].mxu0
      %v1964 = vadd.f32 0.0, %v1963
      %v1965 = vpop.f32.mrb[0].mxu0
      %1966 = vmatprep.mubr.f32.mxu0 0.0
      %1967 = vmatmul.mubr.f32.gmra.mrb[0].mxu0 %v1773
      %v1968 = vpop.f32.mrb[0].mxu0
      %v1969 = vadd.f32 0.0, %v1968
      %v1970 = vpop.f32.mrb[0].mxu0
      %1971 = vmatprep.mubr.f32.mxu0 0.0
      %1972 = vmatmul.mubr.f32.gmra.mrb[0].mxu0 %v1774
      %v1973 = vpop.f32.mrb[0].mxu0
      %v1974 = vadd.f32 0.0, %v1973
      %v1975 = vpop.f32.mrb[0].mxu0
      %1976 = vmatprep.mubr.f32.mxu0 0.0
      %1977 = vmatmul.mubr.f32.gmra.mrb[0].mxu0 %v1775
      %v1978 = vpop.f32.mrb[0].mxu0
      %v1979 = vadd.f32 0.0, %v1978
      %v1980 = vpop.f32.mrb[0].mxu0
      %1981 = vmatprep.mubr.f32.mxu0 0.0
      %1982 = vmatmul.mubr.f32.gmra.mrb[0].mxu0 %v1776
      %v1983 = vpop.f32.mrb[0].mxu0
      %v1984 = vadd.f32 0.0, %v1983
      %v1985 = vpop.f32.mrb[0].mxu0
      %1986 = vmatprep.mubr.f32.mxu0 0.0
      %1987 = vmatmul.mubr.f32.gmra.mrb[0].mxu0 %v1777
      %v1988 = vpop.f32.mrb[0].mxu0
      %v1989 = vadd.f32 0.0, %v1988
      %v1990 = vpop.f32.mrb[0].mxu0
      %1991 = vmatprep.mubr.f32.mxu0 0.0
      %1992 = vmatmul.mubr.f32.gmra.mrb[0].mxu0 %v1778
      %v1993 = vpop.f32.mrb[0].mxu0
      %v1994 = vadd.f32 0.0, %v1993
      %v1995 = vpop.f32.mrb[0].mxu0
      %1996 = vmatprep.mubr.f32.mxu0 0.0
      %1997 = vmatmul.mubr.f32.gmra.mrb[0].mxu0 %v1779
      %v1998 = vpop.f32.mrb[0].mxu0
      %v1999 = vadd.f32 0.0, %v1998
      %v2000 = vpop.f32.mrb[0].mxu0
      %2001 = vmatprep.mubr.f32.mxu0 0.0
      %2002 = vmatmul.mubr.f32.gmra.mrb[0].mxu0 %v1780
      %v2003 = vpop.f32.mrb[0].mxu0
      %v2004 = vadd.f32 0.0, %v2003
      %v2005 = vpop.f32.mrb[0].mxu0
      %2006 = vmatprep.mubr.f32.mxu0 0.0
      %2007 = vmatmul.mubr.f32.gmra.mrb[0].mxu0 %v1781
      %v2008 = vpop.f32.mrb[0].mxu0
      %v2009 = vadd.f32 0.0, %v2008
      %v2010 = vpop.f32.mrb[0].mxu0
      %2011 = vmatprep.mubr.f32.mxu0 0.0
      %2012 = vmatmul.mubr.f32.gmra.mrb[0].mxu0 %v1782
      %v2013 = vpop.f32.mrb[0].mxu0
      %v2014 = vadd.f32 0.0, %v2013
      %v2015 = vpop.f32.mrb[0].mxu0
      %2016 = vmatprep.mubr.f32.mxu0 0.0
      %2017 = vmatmul.mubr.f32.gmra.mrb[0].mxu0 %v1783
      %v2018 = vpop.f32.mrb[0].mxu0
      %v2019 = vadd.f32 0.0, %v2018
      %v2020 = vpop.f32.mrb[0].mxu0
      %2021 = vmatprep.mubr.f32.mxu0 0.0
      %2022 = vmatmul.mubr.f32.gmra.mrb[0].mxu0 %v1784
      %v2023 = vpop.f32.mrb[0].mxu0
      %v2024 = vadd.f32 0.0, %v2023
      %v2025 = vpop.f32.mrb[0].mxu0
      %2026 = vdwg.mxu0
      %v2027 = vld [vmem:[%s224] sm:$0xff]
      %v2028 = vld [vmem:[%s224 + $0x8] sm:$0xff]
      %v2029 = vld [vmem:[%s224 + $0x10] sm:$0xff]
      %v2030 = vld [vmem:[%s224 + $0x18] sm:$0xff]
      %v2031 = vld [vmem:[%s224 + $0x20] sm:$0xff]
      %v2032 = vld [vmem:[%s224 + $0x28] sm:$0xff]
      %v2033 = vld [vmem:[%s224 + $0x30] sm:$0xff]
      %v2034 = vld [vmem:[%s224 + $0x38] sm:$0xff]
      %v2035 = vld [vmem:[%s224 + $0x40] sm:$0xff]
      %v2036 = vld [vmem:[%s224 + $0x48] sm:$0xff]
      %v2037 = vld [vmem:[%s224 + $0x50] sm:$0xff]
      %v2038 = vld [vmem:[%s224 + $0x58] sm:$0xff]
      %v2039 = vld [vmem:[%s224 + $0x60] sm:$0xff]
      %v2040 = vld [vmem:[%s224 + $0x68] sm:$0xff]
      %v2041 = vld [vmem:[%s224 + $0x70] sm:$0xff]
      %v2042 = vld [vmem:[%s224 + $0x78] sm:$0xff]
      %v2043 = vld [vmem:[%s224 + $0x80] sm:$0xff]
      %v2044 = vld [vmem:[%s224 + $0x88] sm:$0xff]
      %v2045 = vld [vmem:[%s224 + $0x90] sm:$0xff]
      %v2046 = vld [vmem:[%s224 + $0x98] sm:$0xff]
      %v2047 = vld [vmem:[%s224 + $0xa0] sm:$0xff]
      %v2048 = vld [vmem:[%s224 + $0xa8] sm:$0xff]
      %v2049 = vld [vmem:[%s224 + $0xb0] sm:$0xff]
      %v2050 = vld [vmem:[%s224 + $0xb8] sm:$0xff]
      %v2051 = vld [vmem:[%s224 + $0xc0] sm:$0xff]
      %v2052 = vld [vmem:[%s224 + $0xc8] sm:$0xff]
      %v2053 = vld [vmem:[%s224 + $0xd0] sm:$0xff]
      %v2054 = vld [vmem:[%s224 + $0xd8] sm:$0xff]
      %v2055 = vld [vmem:[%s224 + $0xe0] sm:$0xff]
      %v2056 = vld [vmem:[%s224 + $0xe8] sm:$0xff]
      %v2057 = vld [vmem:[%s224 + $0xf0] sm:$0xff]
      %v2058 = vld [vmem:[%s224 + $0xf8] sm:$0xff]
      %v2059 = vadd.f32 %v2027, %v1869
      %v2060 = vadd.f32 %v2028, %v1874
      %v2061 = vadd.f32 %v2029, %v1879
      %v2062 = vadd.f32 %v2030, %v1884
      %v2063 = vadd.f32 %v2031, %v1889
      %v2064 = vadd.f32 %v2032, %v1894
      %v2065 = vadd.f32 %v2033, %v1899
      %v2066 = vadd.f32 %v2034, %v1904
      %v2067 = vadd.f32 %v2035, %v1909
      %v2068 = vadd.f32 %v2036, %v1914
      %v2069 = vadd.f32 %v2037, %v1919
      %v2070 = vadd.f32 %v2038, %v1924
      %v2071 = vadd.f32 %v2039, %v1929
      %v2072 = vadd.f32 %v2040, %v1934
      %v2073 = vadd.f32 %v2041, %v1939
      %v2074 = vadd.f32 %v2042, %v1944
      %v2075 = vadd.f32 %v2043, %v1949
      %v2076 = vadd.f32 %v2044, %v1954
      %v2077 = vadd.f32 %v2045, %v1959
      %v2078 = vadd.f32 %v2046, %v1964
      %v2079 = vadd.f32 %v2047, %v1969
      %v2080 = vadd.f32 %v2048, %v1974
      %v2081 = vadd.f32 %v2049, %v1979
      %v2082 = vadd.f32 %v2050, %v1984
      %v2083 = vadd.f32 %v2051, %v1989
      %v2084 = vadd.f32 %v2052, %v1994
      %v2085 = vadd.f32 %v2053, %v1999
      %v2086 = vadd.f32 %v2054, %v2004
      %v2087 = vadd.f32 %v2055, %v2009
      %v2088 = vadd.f32 %v2056, %v2014
      %v2089 = vadd.f32 %v2057, %v2019
      %v2090 = vadd.f32 %v2058, %v2024
      %2091 = vst [vmem:[%s224] sm:$0xff] %v2059
      %2092 = vst [vmem:[%s224 + $0x8] sm:$0xff] %v2060
      %2093 = vst [vmem:[%s224 + $0x10] sm:$0xff] %v2061
      %2094 = vst [vmem:[%s224 + $0x18] sm:$0xff] %v2062
      %2095 = vst [vmem:[%s224 + $0x20] sm:$0xff] %v2063
      %2096 = vst [vmem:[%s224 + $0x28] sm:$0xff] %v2064
      %2097 = vst [vmem:[%s224 + $0x30] sm:$0xff] %v2065
      %2098 = vst [vmem:[%s224 + $0x38] sm:$0xff] %v2066
      %2099 = vst [vmem:[%s224 + $0x40] sm:$0xff] %v2067
      %2100 = vst [vmem:[%s224 + $0x48] sm:$0xff] %v2068
      %2101 = vst [vmem:[%s224 + $0x50] sm:$0xff] %v2069
      %2102 = vst [vmem:[%s224 + $0x58] sm:$0xff] %v2070
      %2103 = vst [vmem:[%s224 + $0x60] sm:$0xff] %v2071
      %2104 = vst [vmem:[%s224 + $0x68] sm:$0xff] %v2072
      %2105 = vst [vmem:[%s224 + $0x70] sm:$0xff] %v2073
      %2106 = vst [vmem:[%s224 + $0x78] sm:$0xff] %v2074
      %2107 = vst [vmem:[%s224 + $0x80] sm:$0xff] %v2075
      %2108 = vst [vmem:[%s224 + $0x88] sm:$0xff] %v2076
      %2109 = vst [vmem:[%s224 + $0x90] sm:$0xff] %v2077
      %2110 = vst [vmem:[%s224 + $0x98] sm:$0xff] %v2078
      %2111 = vst [vmem:[%s224 + $0xa0] sm:$0xff] %v2079
      %2112 = vst [vmem:[%s224 + $0xa8] sm:$0xff] %v2080
      %2113 = vst [vmem:[%s224 + $0xb0] sm:$0xff] %v2081
      %2114 = vst [vmem:[%s224 + $0xb8] sm:$0xff] %v2082
      %2115 = vst [vmem:[%s224 + $0xc0] sm:$0xff] %v2083
      %2116 = vst [vmem:[%s224 + $0xc8] sm:$0xff] %v2084
      %2117 = vst [vmem:[%s224 + $0xd0] sm:$0xff] %v2085
      %2118 = vst [vmem:[%s224 + $0xd8] sm:$0xff] %v2086
      %2119 = vst [vmem:[%s224 + $0xe0] sm:$0xff] %v2087
      %2120 = vst [vmem:[%s224 + $0xe8] sm:$0xff] %v2088
      %2121 = vst [vmem:[%s224 + $0xf0] sm:$0xff] %v2089
      %2122 = vst [vmem:[%s224 + $0xf8] sm:$0xff] %v2090
      %v2123 = vld [vmem:[#allocation2 + $0x17] sm:$0xff]
      %v2124 = vld [vmem:[#allocation2 + $0x1f] sm:$0xff]
      %v2125 = vld [vmem:[#allocation2 + $0x27] sm:$0xff]
      %v2126 = vld [vmem:[#allocation2 + $0x2f] sm:$0xff]
      %v2127 = vld [vmem:[#allocation2 + $0x37] sm:$0xff]
      %v2128 = vld [vmem:[#allocation2 + $0x3f] sm:$0xff]
      %v2129 = vld [vmem:[#allocation2 + $0x47] sm:$0xff]
      %v2130 = vld [vmem:[#allocation2 + $0x4f] sm:$0xff]
      %v2131 = vld [vmem:[#allocation2 + $0x57] sm:$0xff]
      %v2132 = vld [vmem:[#allocation2 + $0x5f] sm:$0xff]
      %v2133 = vld [vmem:[#allocation2 + $0x67] sm:$0xff]
      %v2134 = vld [vmem:[#allocation2 + $0x6f] sm:$0xff]
      %v2135 = vld [vmem:[#allocation2 + $0x77] sm:$0xff]
      %v2136 = vld [vmem:[#allocation2 + $0x7f] sm:$0xff]
      %v2137 = vld [vmem:[#allocation2 + $0x87] sm:$0xff]
      %v2138 = vld [vmem:[#allocation2 + $0x8f] sm:$0xff]
      %v2139 = vld [vmem:[#allocation2 + $0x97] sm:$0xff]
      %v2140 = vld [vmem:[#allocation2 + $0x9f] sm:$0xff]
      %v2141 = vld [vmem:[#allocation2 + $0xa7] sm:$0xff]
      %v2142 = vld [vmem:[#allocation2 + $0xaf] sm:$0xff]
      %v2143 = vld [vmem:[#allocation2 + $0xb7] sm:$0xff]
      %v2144 = vld [vmem:[#allocation2 + $0xbf] sm:$0xff]
      %v2145 = vld [vmem:[#allocation2 + $0xc7] sm:$0xff]
      %v2146 = vld [vmem:[#allocation2 + $0xcf] sm:$0xff]
      %v2147 = vld [vmem:[#allocation2 + $0xd7] sm:$0xff]
      %v2148 = vld [vmem:[#allocation2 + $0xdf] sm:$0xff]
      %v2149 = vld [vmem:[#allocation2 + $0xe7] sm:$0xff]
      %v2150 = vld [vmem:[#allocation2 + $0xef] sm:$0xff]
      %v2151 = vld [vmem:[#allocation2 + $0xf7] sm:$0xff]
      %v2152 = vld [vmem:[#allocation2 + $0xff] sm:$0xff]
      %v2153 = vld [vmem:[#allocation2 + $0x107] sm:$0xff]
      %v2154 = vld [vmem:[#allocation2 + $0x10f] sm:$0xff]
      %v2155 = vsel %vm950, %v2123, 0.0
      %v2156 = vsel %vm951, %v2124, 0.0
      %v2157 = vsel %vm952, %v2125, 0.0
      %v2158 = vsel %vm953, %v2126, 0.0
      %v2159 = vsel %vm954, %v2127, 0.0
      %v2160 = vsel %vm955, %v2128, 0.0
      %v2161 = vsel %vm956, %v2129, 0.0
      %v2162 = vsel %vm957, %v2130, 0.0
      %v2163 = vsel %vm958, %v2131, 0.0
      %v2164 = vsel %vm959, %v2132, 0.0
      %v2165 = vsel %vm960, %v2133, 0.0
      %v2166 = vsel %vm961, %v2134, 0.0
      %v2167 = vsel %vm962, %v2135, 0.0
      %v2168 = vsel %vm963, %v2136, 0.0
      %v2169 = vsel %vm964, %v2137, 0.0
      %v2170 = vsel %vm965, %v2138, 0.0
      %v2171 = vsel %vm966, %v2139, 0.0
      %v2172 = vsel %vm967, %v2140, 0.0
      %v2173 = vsel %vm968, %v2141, 0.0
      %v2174 = vsel %vm969, %v2142, 0.0
      %v2175 = vsel %vm970, %v2143, 0.0
      %v2176 = vsel %vm971, %v2144, 0.0
      %v2177 = vsel %vm972, %v2145, 0.0
      %v2178 = vsel %vm973, %v2146, 0.0
      %v2179 = vsel %vm974, %v2147, 0.0
      %v2180 = vsel %vm975, %v2148, 0.0
      %v2181 = vsel %vm976, %v2149, 0.0
      %v2182 = vsel %vm977, %v2150, 0.0
      %v2183 = vsel %vm978, %v2151, 0.0
      %v2184 = vsel %vm979, %v2152, 0.0
      %v2185 = vsel %vm980, %v2153, 0.0
      %v2186 = vsel %vm981, %v2154, 0.0
      %s2187 = scalar_lea.vmem %s3, 384
      %v2188 = vld [vmem:[%s2187] sm:$0xff]
      %v2189 = vld [vmem:[%s2187 + $0x8] sm:$0xff]
      %v2190 = vld [vmem:[%s2187 + $0x10] sm:$0xff]
      %v2191 = vld [vmem:[%s2187 + $0x18] sm:$0xff]
      %v2192 = vld [vmem:[%s2187 + $0x20] sm:$0xff]
      %v2193 = vld [vmem:[%s2187 + $0x28] sm:$0xff]
      %v2194 = vld [vmem:[%s2187 + $0x30] sm:$0xff]
      %v2195 = vld [vmem:[%s2187 + $0x38] sm:$0xff]
      %v2196 = vld [vmem:[%s2187 + $0x40] sm:$0xff]
      %v2197 = vld [vmem:[%s2187 + $0x48] sm:$0xff]
      %v2198 = vld [vmem:[%s2187 + $0x50] sm:$0xff]
      %v2199 = vld [vmem:[%s2187 + $0x58] sm:$0xff]
      %v2200 = vld [vmem:[%s2187 + $0x60] sm:$0xff]
      %v2201 = vld [vmem:[%s2187 + $0x68] sm:$0xff]
      %v2202 = vld [vmem:[%s2187 + $0x70] sm:$0xff]
      %v2203 = vld [vmem:[%s2187 + $0x78] sm:$0xff]
      %2204 = vmatprep.subr.mxu0 0.0
      %2205 = vmatpush1.msra.mxu0 %v2188
      %2206 = vmatprep.subr.mxu0 0.0
      %2207 = vmatpush1.msra.mxu0 %v2189
      %2208 = vmatprep.subr.mxu0 0.0
      %2209 = vmatpush1.msra.mxu0 %v2190
      %2210 = vmatprep.subr.mxu0 0.0
      %2211 = vmatpush1.msra.mxu0 %v2191
      %2212 = vmatprep.subr.mxu0 0.0
      %2213 = vmatpush1.msra.mxu0 %v2192
      %2214 = vmatprep.subr.mxu0 0.0
      %2215 = vmatpush1.msra.mxu0 %v2193
      %2216 = vmatprep.subr.mxu0 0.0
      %2217 = vmatpush1.msra.mxu0 %v2194
      %2218 = vmatprep.subr.mxu0 0.0
      %2219 = vmatpush1.msra.mxu0 %v2195
      %2220 = vmatprep.subr.mxu0 0.0
      %2221 = vmatpush1.msra.mxu0 %v2196
      %2222 = vmatprep.subr.mxu0 0.0
      %2223 = vmatpush1.msra.mxu0 %v2197
      %2224 = vmatprep.subr.mxu0 0.0
      %2225 = vmatpush1.msra.mxu0 %v2198
      %2226 = vmatprep.subr.mxu0 0.0
      %2227 = vmatpush1.msra.mxu0 %v2199
      %2228 = vmatprep.subr.mxu0 0.0
      %2229 = vmatpush1.msra.mxu0 %v2200
      %2230 = vmatprep.subr.mxu0 0.0
      %2231 = vmatpush1.msra.mxu0 %v2201
      %2232 = vmatprep.subr.mxu0 0.0
      %2233 = vmatpush1.msra.mxu0 %v2202
      %2234 = vmatprep.subr.mxu0 0.0
      %2235 = vmatpush1.msra.mxu0 %v2203
      %2236 = vmatprep.subr.mxu0 0.0
      %2237 = vmatpush1.msra.mxu0 0.0
      %2238 = vmatprep.subr.mxu0 0.0
      %2239 = vmatpush1.msra.mxu0 0.0
      %2240 = vmatprep.subr.mxu0 0.0
      %2241 = vmatpush1.msra.mxu0 0.0
      %2242 = vmatprep.subr.mxu0 0.0
      %2243 = vmatpush1.msra.mxu0 0.0
      %2244 = vmatprep.subr.mxu0 0.0
      %2245 = vmatpush1.msra.mxu0 0.0
      %2246 = vmatprep.subr.mxu0 0.0
      %2247 = vmatpush1.msra.mxu0 0.0
      %2248 = vmatprep.subr.mxu0 0.0
      %2249 = vmatpush1.msra.mxu0 0.0
      %2250 = vmatprep.subr.mxu0 0.0
      %2251 = vmatpush1.msra.mxu0 0.0
      %2252 = vmatprep.subr.mxu0 0.0
      %2253 = vmatpush1.msra.mxu0 0.0
      %2254 = vmatprep.subr.mxu0 0.0
      %2255 = vmatpush1.msra.mxu0 0.0
      %2256 = vmatprep.subr.mxu0 0.0
      %2257 = vmatpush1.msra.mxu0 0.0
      %2258 = vmatprep.subr.mxu0 0.0
      %2259 = vmatpush1.msra.mxu0 0.0
      %2260 = vmatprep.subr.mxu0 0.0
      %2261 = vmatpush1.msra.mxu0 0.0
      %2262 = vmatprep.subr.mxu0 0.0
      %2263 = vmatpush1.msra.mxu0 0.0
      %2264 = vmatprep.subr.mxu0 0.0
      %2265 = vmatpush1.msra.mxu0 0.0
      %2266 = vmatprep.subr.mxu0 0.0
      %2267 = vmatpush1.msra.mxu0 0.0
      %2268 = vmatprep.mubr.f32.mxu0 0.0
      %2269 = vmatmul.mubr.f32.gmra.mrb[0].mxu0 %v2155
      %v2270 = vpop.f32.mrb[0].mxu0
      %v2271 = vadd.f32 0.0, %v2270
      %v2272 = vpop.f32.mrb[0].mxu0
      %2273 = vmatprep.mubr.f32.mxu0 0.0
      %2274 = vmatmul.mubr.f32.gmra.mrb[0].mxu0 %v2156
      %v2275 = vpop.f32.mrb[0].mxu0
      %v2276 = vadd.f32 0.0, %v2275
      %v2277 = vpop.f32.mrb[0].mxu0
      %2278 = vmatprep.mubr.f32.mxu0 0.0
      %2279 = vmatmul.mubr.f32.gmra.mrb[0].mxu0 %v2157
      %v2280 = vpop.f32.mrb[0].mxu0
      %v2281 = vadd.f32 0.0, %v2280
      %v2282 = vpop.f32.mrb[0].mxu0
      %2283 = vmatprep.mubr.f32.mxu0 0.0
      %2284 = vmatmul.mubr.f32.gmra.mrb[0].mxu0 %v2158
      %v2285 = vpop.f32.mrb[0].mxu0
      %v2286 = vadd.f32 0.0, %v2285
      %v2287 = vpop.f32.mrb[0].mxu0
      %2288 = vmatprep.mubr.f32.mxu0 0.0
      %2289 = vmatmul.mubr.f32.gmra.mrb[0].mxu0 %v2159
      %v2290 = vpop.f32.mrb[0].mxu0
      %v2291 = vadd.f32 0.0, %v2290
      %v2292 = vpop.f32.mrb[0].mxu0
      %2293 = vmatprep.mubr.f32.mxu0 0.0
      %2294 = vmatmul.mubr.f32.gmra.mrb[0].mxu0 %v2160
      %v2295 = vpop.f32.mrb[0].mxu0
      %v2296 = vadd.f32 0.0, %v2295
      %v2297 = vpop.f32.mrb[0].mxu0
      %2298 = vmatprep.mubr.f32.mxu0 0.0
      %2299 = vmatmul.mubr.f32.gmra.mrb[0].mxu0 %v2161
      %v2300 = vpop.f32.mrb[0].mxu0
      %v2301 = vadd.f32 0.0, %v2300
      %v2302 = vpop.f32.mrb[0].mxu0
      %2303 = vmatprep.mubr.f32.mxu0 0.0
      %2304 = vmatmul.mubr.f32.gmra.mrb[0].mxu0 %v2162
      %v2305 = vpop.f32.mrb[0].mxu0
      %v2306 = vadd.f32 0.0, %v2305
      %v2307 = vpop.f32.mrb[0].mxu0
      %2308 = vmatprep.mubr.f32.mxu0 0.0
      %2309 = vmatmul.mubr.f32.gmra.mrb[0].mxu0 %v2163
      %v2310 = vpop.f32.mrb[0].mxu0
      %v2311 = vadd.f32 0.0, %v2310
      %v2312 = vpop.f32.mrb[0].mxu0
      %2313 = vmatprep.mubr.f32.mxu0 0.0
      %2314 = vmatmul.mubr.f32.gmra.mrb[0].mxu0 %v2164
      %v2315 = vpop.f32.mrb[0].mxu0
      %v2316 = vadd.f32 0.0, %v2315
      %v2317 = vpop.f32.mrb[0].mxu0
      %2318 = vmatprep.mubr.f32.mxu0 0.0
      %2319 = vmatmul.mubr.f32.gmra.mrb[0].mxu0 %v2165
      %v2320 = vpop.f32.mrb[0].mxu0
      %v2321 = vadd.f32 0.0, %v2320
      %v2322 = vpop.f32.mrb[0].mxu0
      %2323 = vmatprep.mubr.f32.mxu0 0.0
      %2324 = vmatmul.mubr.f32.gmra.mrb[0].mxu0 %v2166
      %v2325 = vpop.f32.mrb[0].mxu0
      %v2326 = vadd.f32 0.0, %v2325
      %v2327 = vpop.f32.mrb[0].mxu0
      %2328 = vmatprep.mubr.f32.mxu0 0.0
      %2329 = vmatmul.mubr.f32.gmra.mrb[0].mxu0 %v2167
      %v2330 = vpop.f32.mrb[0].mxu0
      %v2331 = vadd.f32 0.0, %v2330
      %v2332 = vpop.f32.mrb[0].mxu0
      %2333 = vmatprep.mubr.f32.mxu0 0.0
      %2334 = vmatmul.mubr.f32.gmra.mrb[0].mxu0 %v2168
      %v2335 = vpop.f32.mrb[0].mxu0
      %v2336 = vadd.f32 0.0, %v2335
      %v2337 = vpop.f32.mrb[0].mxu0
      %2338 = vmatprep.mubr.f32.mxu0 0.0
      %2339 = vmatmul.mubr.f32.gmra.mrb[0].mxu0 %v2169
      %v2340 = vpop.f32.mrb[0].mxu0
      %v2341 = vadd.f32 0.0, %v2340
      %v2342 = vpop.f32.mrb[0].mxu0
      %2343 = vmatprep.mubr.f32.mxu0 0.0
      %2344 = vmatmul.mubr.f32.gmra.mrb[0].mxu0 %v2170
      %v2345 = vpop.f32.mrb[0].mxu0
      %v2346 = vadd.f32 0.0, %v2345
      %v2347 = vpop.f32.mrb[0].mxu0
      %2348 = vmatprep.mubr.f32.mxu0 0.0
      %2349 = vmatmul.mubr.f32.gmra.mrb[0].mxu0 %v2171
      %v2350 = vpop.f32.mrb[0].mxu0
      %v2351 = vadd.f32 0.0, %v2350
      %v2352 = vpop.f32.mrb[0].mxu0
      %2353 = vmatprep.mubr.f32.mxu0 0.0
      %2354 = vmatmul.mubr.f32.gmra.mrb[0].mxu0 %v2172
      %v2355 = vpop.f32.mrb[0].mxu0
      %v2356 = vadd.f32 0.0, %v2355
      %v2357 = vpop.f32.mrb[0].mxu0
      %2358 = vmatprep.mubr.f32.mxu0 0.0
      %2359 = vmatmul.mubr.f32.gmra.mrb[0].mxu0 %v2173
      %v2360 = vpop.f32.mrb[0].mxu0
      %v2361 = vadd.f32 0.0, %v2360
      %v2362 = vpop.f32.mrb[0].mxu0
      %2363 = vmatprep.mubr.f32.mxu0 0.0
      %2364 = vmatmul.mubr.f32.gmra.mrb[0].mxu0 %v2174
      %v2365 = vpop.f32.mrb[0].mxu0
      %v2366 = vadd.f32 0.0, %v2365
      %v2367 = vpop.f32.mrb[0].mxu0
      %2368 = vmatprep.mubr.f32.mxu0 0.0
      %2369 = vmatmul.mubr.f32.gmra.mrb[0].mxu0 %v2175
      %v2370 = vpop.f32.mrb[0].mxu0
      %v2371 = vadd.f32 0.0, %v2370
      %v2372 = vpop.f32.mrb[0].mxu0
      %2373 = vmatprep.mubr.f32.mxu0 0.0
      %2374 = vmatmul.mubr.f32.gmra.mrb[0].mxu0 %v2176
      %v2375 = vpop.f32.mrb[0].mxu0
      %v2376 = vadd.f32 0.0, %v2375
      %v2377 = vpop.f32.mrb[0].mxu0
      %2378 = vmatprep.mubr.f32.mxu0 0.0
      %2379 = vmatmul.mubr.f32.gmra.mrb[0].mxu0 %v2177
      %v2380 = vpop.f32.mrb[0].mxu0
      %v2381 = vadd.f32 0.0, %v2380
      %v2382 = vpop.f32.mrb[0].mxu0
      %2383 = vmatprep.mubr.f32.mxu0 0.0
      %2384 = vmatmul.mubr.f32.gmra.mrb[0].mxu0 %v2178
      %v2385 = vpop.f32.mrb[0].mxu0
      %v2386 = vadd.f32 0.0, %v2385
      %v2387 = vpop.f32.mrb[0].mxu0
      %2388 = vmatprep.mubr.f32.mxu0 0.0
      %2389 = vmatmul.mubr.f32.gmra.mrb[0].mxu0 %v2179
      %v2390 = vpop.f32.mrb[0].mxu0
      %v2391 = vadd.f32 0.0, %v2390
      %v2392 = vpop.f32.mrb[0].mxu0
      %2393 = vmatprep.mubr.f32.mxu0 0.0
      %2394 = vmatmul.mubr.f32.gmra.mrb[0].mxu0 %v2180
      %v2395 = vpop.f32.mrb[0].mxu0
      %v2396 = vadd.f32 0.0, %v2395
      %v2397 = vpop.f32.mrb[0].mxu0
      %2398 = vmatprep.mubr.f32.mxu0 0.0
      %2399 = vmatmul.mubr.f32.gmra.mrb[0].mxu0 %v2181
      %v2400 = vpop.f32.mrb[0].mxu0
      %v2401 = vadd.f32 0.0, %v2400
      %v2402 = vpop.f32.mrb[0].mxu0
      %2403 = vmatprep.mubr.f32.mxu0 0.0
      %2404 = vmatmul.mubr.f32.gmra.mrb[0].mxu0 %v2182
      %v2405 = vpop.f32.mrb[0].mxu0
      %v2406 = vadd.f32 0.0, %v2405
      %v2407 = vpop.f32.mrb[0].mxu0
      %2408 = vmatprep.mubr.f32.mxu0 0.0
      %2409 = vmatmul.mubr.f32.gmra.mrb[0].mxu0 %v2183
      %v2410 = vpop.f32.mrb[0].mxu0
      %v2411 = vadd.f32 0.0, %v2410
      %v2412 = vpop.f32.mrb[0].mxu0
      %2413 = vmatprep.mubr.f32.mxu0 0.0
      %2414 = vmatmul.mubr.f32.gmra.mrb[0].mxu0 %v2184
      %v2415 = vpop.f32.mrb[0].mxu0
      %v2416 = vadd.f32 0.0, %v2415
      %v2417 = vpop.f32.mrb[0].mxu0
      %2418 = vmatprep.mubr.f32.mxu0 0.0
      %2419 = vmatmul.mubr.f32.gmra.mrb[0].mxu0 %v2185
      %v2420 = vpop.f32.mrb[0].mxu0
      %v2421 = vadd.f32 0.0, %v2420
      %v2422 = vpop.f32.mrb[0].mxu0
      %2423 = vmatprep.mubr.f32.mxu0 0.0
      %2424 = vmatmul.mubr.f32.gmra.mrb[0].mxu0 %v2186
      %v2425 = vpop.f32.mrb[0].mxu0
      %v2426 = vadd.f32 0.0, %v2425
      %v2427 = vpop.f32.mrb[0].mxu0
      %2428 = vdwg.mxu0
      %v2429 = vld [vmem:[%s224] sm:$0xff]
      %v2430 = vld [vmem:[%s224 + $0x8] sm:$0xff]
      %v2431 = vld [vmem:[%s224 + $0x10] sm:$0xff]
      %v2432 = vld [vmem:[%s224 + $0x18] sm:$0xff]
      %v2433 = vld [vmem:[%s224 + $0x20] sm:$0xff]
      %v2434 = vld [vmem:[%s224 + $0x28] sm:$0xff]
      %v2435 = vld [vmem:[%s224 + $0x30] sm:$0xff]
      %v2436 = vld [vmem:[%s224 + $0x38] sm:$0xff]
      %v2437 = vld [vmem:[%s224 + $0x40] sm:$0xff]
      %v2438 = vld [vmem:[%s224 + $0x48] sm:$0xff]
      %v2439 = vld [vmem:[%s224 + $0x50] sm:$0xff]
      %v2440 = vld [vmem:[%s224 + $0x58] sm:$0xff]
      %v2441 = vld [vmem:[%s224 + $0x60] sm:$0xff]
      %v2442 = vld [vmem:[%s224 + $0x68] sm:$0xff]
      %v2443 = vld [vmem:[%s224 + $0x70] sm:$0xff]
      %v2444 = vld [vmem:[%s224 + $0x78] sm:$0xff]
      %v2445 = vld [vmem:[%s224 + $0x80] sm:$0xff]
      %v2446 = vld [vmem:[%s224 + $0x88] sm:$0xff]
      %v2447 = vld [vmem:[%s224 + $0x90] sm:$0xff]
      %v2448 = vld [vmem:[%s224 + $0x98] sm:$0xff]
      %v2449 = vld [vmem:[%s224 + $0xa0] sm:$0xff]
      %v2450 = vld [vmem:[%s224 + $0xa8] sm:$0xff]
      %v2451 = vld [vmem:[%s224 + $0xb0] sm:$0xff]
      %v2452 = vld [vmem:[%s224 + $0xb8] sm:$0xff]
      %v2453 = vld [vmem:[%s224 + $0xc0] sm:$0xff]
      %v2454 = vld [vmem:[%s224 + $0xc8] sm:$0xff]
      %v2455 = vld [vmem:[%s224 + $0xd0] sm:$0xff]
      %v2456 = vld [vmem:[%s224 + $0xd8] sm:$0xff]
      %v2457 = vld [vmem:[%s224 + $0xe0] sm:$0xff]
      %v2458 = vld [vmem:[%s224 + $0xe8] sm:$0xff]
      %v2459 = vld [vmem:[%s224 + $0xf0] sm:$0xff]
      %v2460 = vld [vmem:[%s224 + $0xf8] sm:$0xff]
      %v2461 = vadd.f32 %v2429, %v2271
      %v2462 = vadd.f32 %v2430, %v2276
      %v2463 = vadd.f32 %v2431, %v2281
      %v2464 = vadd.f32 %v2432, %v2286
      %v2465 = vadd.f32 %v2433, %v2291
      %v2466 = vadd.f32 %v2434, %v2296
      %v2467 = vadd.f32 %v2435, %v2301
      %v2468 = vadd.f32 %v2436, %v2306
      %v2469 = vadd.f32 %v2437, %v2311
      %v2470 = vadd.f32 %v2438, %v2316
      %v2471 = vadd.f32 %v2439, %v2321
      %v2472 = vadd.f32 %v2440, %v2326
      %v2473 = vadd.f32 %v2441, %v2331
      %v2474 = vadd.f32 %v2442, %v2336
      %v2475 = vadd.f32 %v2443, %v2341
      %v2476 = vadd.f32 %v2444, %v2346
      %v2477 = vadd.f32 %v2445, %v2351
      %v2478 = vadd.f32 %v2446, %v2356
      %v2479 = vadd.f32 %v2447, %v2361
      %v2480 = vadd.f32 %v2448, %v2366
      %v2481 = vadd.f32 %v2449, %v2371
      %v2482 = vadd.f32 %v2450, %v2376
      %v2483 = vadd.f32 %v2451, %v2381
      %v2484 = vadd.f32 %v2452, %v2386
      %v2485 = vadd.f32 %v2453, %v2391
      %v2486 = vadd.f32 %v2454, %v2396
      %v2487 = vadd.f32 %v2455, %v2401
      %v2488 = vadd.f32 %v2456, %v2406
      %v2489 = vadd.f32 %v2457, %v2411
      %v2490 = vadd.f32 %v2458, %v2416
      %v2491 = vadd.f32 %v2459, %v2421
      %v2492 = vadd.f32 %v2460, %v2426
      %2493 = vst [vmem:[%s224] sm:$0xff] %v2461
      %2494 = vst [vmem:[%s224 + $0x8] sm:$0xff] %v2462
      %2495 = vst [vmem:[%s224 + $0x10] sm:$0xff] %v2463
      %2496 = vst [vmem:[%s224 + $0x18] sm:$0xff] %v2464
      %2497 = vst [vmem:[%s224 + $0x20] sm:$0xff] %v2465
      %2498 = vst [vmem:[%s224 + $0x28] sm:$0xff] %v2466
      %2499 = vst [vmem:[%s224 + $0x30] sm:$0xff] %v2467
      %2500 = vst [vmem:[%s224 + $0x38] sm:$0xff] %v2468
      %2501 = vst [vmem:[%s224 + $0x40] sm:$0xff] %v2469
      %2502 = vst [vmem:[%s224 + $0x48] sm:$0xff] %v2470
      %2503 = vst [vmem:[%s224 + $0x50] sm:$0xff] %v2471
      %2504 = vst [vmem:[%s224 + $0x58] sm:$0xff] %v2472
      %2505 = vst [vmem:[%s224 + $0x60] sm:$0xff] %v2473
      %2506 = vst [vmem:[%s224 + $0x68] sm:$0xff] %v2474
      %2507 = vst [vmem:[%s224 + $0x70] sm:$0xff] %v2475
      %2508 = vst [vmem:[%s224 + $0x78] sm:$0xff] %v2476
      %2509 = vst [vmem:[%s224 + $0x80] sm:$0xff] %v2477
      %2510 = vst [vmem:[%s224 + $0x88] sm:$0xff] %v2478
      %2511 = vst [vmem:[%s224 + $0x90] sm:$0xff] %v2479
      %2512 = vst [vmem:[%s224 + $0x98] sm:$0xff] %v2480
      %2513 = vst [vmem:[%s224 + $0xa0] sm:$0xff] %v2481
      %2514 = vst [vmem:[%s224 + $0xa8] sm:$0xff] %v2482
      %2515 = vst [vmem:[%s224 + $0xb0] sm:$0xff] %v2483
      %2516 = vst [vmem:[%s224 + $0xb8] sm:$0xff] %v2484
      %2517 = vst [vmem:[%s224 + $0xc0] sm:$0xff] %v2485
      %2518 = vst [vmem:[%s224 + $0xc8] sm:$0xff] %v2486
      %2519 = vst [vmem:[%s224 + $0xd0] sm:$0xff] %v2487
      %2520 = vst [vmem:[%s224 + $0xd8] sm:$0xff] %v2488
      %2521 = vst [vmem:[%s224 + $0xe0] sm:$0xff] %v2489
      %2522 = vst [vmem:[%s224 + $0xe8] sm:$0xff] %v2490
      %2523 = vst [vmem:[%s224 + $0xf0] sm:$0xff] %v2491
      %2524 = vst [vmem:[%s224 + $0xf8] sm:$0xff] %v2492
      %v2525 = vld [vmem:[#allocation2 + $0x18] sm:$0xff]
      %v2526 = vld [vmem:[#allocation2 + $0x20] sm:$0xff]
      %v2527 = vld [vmem:[#allocation2 + $0x28] sm:$0xff]
      %v2528 = vld [vmem:[#allocation2 + $0x30] sm:$0xff]
      %v2529 = vld [vmem:[#allocation2 + $0x38] sm:$0xff]
      %v2530 = vld [vmem:[#allocation2 + $0x40] sm:$0xff]
      %v2531 = vld [vmem:[#allocation2 + $0x48] sm:$0xff]
      %v2532 = vld [vmem:[#allocation2 + $0x50] sm:$0xff]
      %v2533 = vld [vmem:[#allocation2 + $0x58] sm:$0xff]
      %v2534 = vld [vmem:[#allocation2 + $0x60] sm:$0xff]
      %v2535 = vld [vmem:[#allocation2 + $0x68] sm:$0xff]
      %v2536 = vld [vmem:[#allocation2 + $0x70] sm:$0xff]
      %v2537 = vld [vmem:[#allocation2 + $0x78] sm:$0xff]
      %v2538 = vld [vmem:[#allocation2 + $0x80] sm:$0xff]
      %v2539 = vld [vmem:[#allocation2 + $0x88] sm:$0xff]
      %v2540 = vld [vmem:[#allocation2 + $0x90] sm:$0xff]
      %v2541 = vld [vmem:[#allocation2 + $0x98] sm:$0xff]
      %v2542 = vld [vmem:[#allocation2 + $0xa0] sm:$0xff]
      %v2543 = vld [vmem:[#allocation2 + $0xa8] sm:$0xff]
      %v2544 = vld [vmem:[#allocation2 + $0xb0] sm:$0xff]
      %v2545 = vld [vmem:[#allocation2 + $0xb8] sm:$0xff]
      %v2546 = vld [vmem:[#allocation2 + $0xc0] sm:$0xff]
      %v2547 = vld [vmem:[#allocation2 + $0xc8] sm:$0xff]
      %v2548 = vld [vmem:[#allocation2 + $0xd0] sm:$0xff]
      %v2549 = vld [vmem:[#allocation2 + $0xd8] sm:$0xff]
      %v2550 = vld [vmem:[#allocation2 + $0xe0] sm:$0xff]
      %v2551 = vld [vmem:[#allocation2 + $0xe8] sm:$0xff]
      %v2552 = vld [vmem:[#allocation2 + $0xf0] sm:$0xff]
      %v2553 = vld [vmem:[#allocation2 + $0xf8] sm:$0xff]
      %v2554 = vld [vmem:[#allocation2 + $0x100] sm:$0xff]
      %v2555 = vld [vmem:[#allocation2 + $0x108] sm:$0xff]
      %v2556 = vld [vmem:[#allocation2 + $0x110] sm:$0xff]
      %s2557 = scalar_lea.vmem %s3, 512
      %v2558 = vld [vmem:[%s2557] sm:$0xff]
      %v2559 = vld [vmem:[%s2557 + $0x8] sm:$0xff]
      %v2560 = vld [vmem:[%s2557 + $0x10] sm:$0xff]
      %v2561 = vld [vmem:[%s2557 + $0x18] sm:$0xff]
      %v2562 = vld [vmem:[%s2557 + $0x20] sm:$0xff]
      %v2563 = vld [vmem:[%s2557 + $0x28] sm:$0xff]
      %v2564 = vld [vmem:[%s2557 + $0x30] sm:$0xff]
      %v2565 = vld [vmem:[%s2557 + $0x38] sm:$0xff]
      %v2566 = vld [vmem:[%s2557 + $0x40] sm:$0xff]
      %v2567 = vld [vmem:[%s2557 + $0x48] sm:$0xff]
      %v2568 = vld [vmem:[%s2557 + $0x50] sm:$0xff]
      %v2569 = vld [vmem:[%s2557 + $0x58] sm:$0xff]
      %v2570 = vld [vmem:[%s2557 + $0x60] sm:$0xff]
      %v2571 = vld [vmem:[%s2557 + $0x68] sm:$0xff]
      %v2572 = vld [vmem:[%s2557 + $0x70] sm:$0xff]
      %v2573 = vld [vmem:[%s2557 + $0x78] sm:$0xff]
      %2574 = vmatprep.subr.mxu0 0.0
      %2575 = vmatpush1.msra.mxu0 %v2558
      %2576 = vmatprep.subr.mxu0 0.0
      %2577 = vmatpush1.msra.mxu0 %v2559
      %2578 = vmatprep.subr.mxu0 0.0
      %2579 = vmatpush1.msra.mxu0 %v2560
      %2580 = vmatprep.subr.mxu0 0.0
      %2581 = vmatpush1.msra.mxu0 %v2561
      %2582 = vmatprep.subr.mxu0 0.0
      %2583 = vmatpush1.msra.mxu0 %v2562
      %2584 = vmatprep.subr.mxu0 0.0
      %2585 = vmatpush1.msra.mxu0 %v2563
      %2586 = vmatprep.subr.mxu0 0.0
      %2587 = vmatpush1.msra.mxu0 %v2564
      %2588 = vmatprep.subr.mxu0 0.0
      %2589 = vmatpush1.msra.mxu0 %v2565
      %2590 = vmatprep.subr.mxu0 0.0
      %2591 = vmatpush1.msra.mxu0 %v2566
      %2592 = vmatprep.subr.mxu0 0.0
      %2593 = vmatpush1.msra.mxu0 %v2567
      %2594 = vmatprep.subr.mxu0 0.0
      %2595 = vmatpush1.msra.mxu0 %v2568
      %2596 = vmatprep.subr.mxu0 0.0
      %2597 = vmatpush1.msra.mxu0 %v2569
      %2598 = vmatprep.subr.mxu0 0.0
      %2599 = vmatpush1.msra.mxu0 %v2570
      %2600 = vmatprep.subr.mxu0 0.0
      %2601 = vmatpush1.msra.mxu0 %v2571
      %2602 = vmatprep.subr.mxu0 0.0
      %2603 = vmatpush1.msra.mxu0 %v2572
      %2604 = vmatprep.subr.mxu0 0.0
      %2605 = vmatpush1.msra.mxu0 %v2573
      %2606 = vmatprep.subr.mxu0 0.0
      %2607 = vmatpush1.msra.mxu0 0.0
      %2608 = vmatprep.subr.mxu0 0.0
      %2609 = vmatpush1.msra.mxu0 0.0
      %2610 = vmatprep.subr.mxu0 0.0
      %2611 = vmatpush1.msra.mxu0 0.0
      %2612 = vmatprep.subr.mxu0 0.0
      %2613 = vmatpush1.msra.mxu0 0.0
      %2614 = vmatprep.subr.mxu0 0.0
      %2615 = vmatpush1.msra.mxu0 0.0
      %2616 = vmatprep.subr.mxu0 0.0
      %2617 = vmatpush1.msra.mxu0 0.0
      %2618 = vmatprep.subr.mxu0 0.0
      %2619 = vmatpush1.msra.mxu0 0.0
      %2620 = vmatprep.subr.mxu0 0.0
      %2621 = vmatpush1.msra.mxu0 0.0
      %2622 = vmatprep.subr.mxu0 0.0
      %2623 = vmatpush1.msra.mxu0 0.0
      %2624 = vmatprep.subr.mxu0 0.0
      %2625 = vmatpush1.msra.mxu0 0.0
      %2626 = vmatprep.subr.mxu0 0.0
      %2627 = vmatpush1.msra.mxu0 0.0
      %2628 = vmatprep.subr.mxu0 0.0
      %2629 = vmatpush1.msra.mxu0 0.0
      %2630 = vmatprep.subr.mxu0 0.0
      %2631 = vmatpush1.msra.mxu0 0.0
      %2632 = vmatprep.subr.mxu0 0.0
      %2633 = vmatpush1.msra.mxu0 0.0
      %2634 = vmatprep.subr.mxu0 0.0
      %2635 = vmatpush1.msra.mxu0 0.0
      %2636 = vmatprep.subr.mxu0 0.0
      %2637 = vmatpush1.msra.mxu0 0.0
      %2638 = vmatprep.mubr.f32.mxu0 0.0
      %2639 = vmatmul.mubr.f32.gmra.mrb[0].mxu0 %v2525
      %v2640 = vpop.f32.mrb[0].mxu0
      %v2641 = vadd.f32 0.0, %v2640
      %v2642 = vpop.f32.mrb[0].mxu0
      %2643 = vmatprep.mubr.f32.mxu0 0.0
      %2644 = vmatmul.mubr.f32.gmra.mrb[0].mxu0 %v2526
      %v2645 = vpop.f32.mrb[0].mxu0
      %v2646 = vadd.f32 0.0, %v2645
      %v2647 = vpop.f32.mrb[0].mxu0
      %2648 = vmatprep.mubr.f32.mxu0 0.0
      %2649 = vmatmul.mubr.f32.gmra.mrb[0].mxu0 %v2527
      %v2650 = vpop.f32.mrb[0].mxu0
      %v2651 = vadd.f32 0.0, %v2650
      %v2652 = vpop.f32.mrb[0].mxu0
      %2653 = vmatprep.mubr.f32.mxu0 0.0
      %2654 = vmatmul.mubr.f32.gmra.mrb[0].mxu0 %v2528
      %v2655 = vpop.f32.mrb[0].mxu0
      %v2656 = vadd.f32 0.0, %v2655
      %v2657 = vpop.f32.mrb[0].mxu0
      %2658 = vmatprep.mubr.f32.mxu0 0.0
      %2659 = vmatmul.mubr.f32.gmra.mrb[0].mxu0 %v2529
      %v2660 = vpop.f32.mrb[0].mxu0
      %v2661 = vadd.f32 0.0, %v2660
      %v2662 = vpop.f32.mrb[0].mxu0
      %2663 = vmatprep.mubr.f32.mxu0 0.0
      %2664 = vmatmul.mubr.f32.gmra.mrb[0].mxu0 %v2530
      %v2665 = vpop.f32.mrb[0].mxu0
      %v2666 = vadd.f32 0.0, %v2665
      %v2667 = vpop.f32.mrb[0].mxu0
      %2668 = vmatprep.mubr.f32.mxu0 0.0
      %2669 = vmatmul.mubr.f32.gmra.mrb[0].mxu0 %v2531
      %v2670 = vpop.f32.mrb[0].mxu0
      %v2671 = vadd.f32 0.0, %v2670
      %v2672 = vpop.f32.mrb[0].mxu0
      %2673 = vmatprep.mubr.f32.mxu0 0.0
      %2674 = vmatmul.mubr.f32.gmra.mrb[0].mxu0 %v2532
      %v2675 = vpop.f32.mrb[0].mxu0
      %v2676 = vadd.f32 0.0, %v2675
      %v2677 = vpop.f32.mrb[0].mxu0
      %2678 = vmatprep.mubr.f32.mxu0 0.0
      %2679 = vmatmul.mubr.f32.gmra.mrb[0].mxu0 %v2533
      %v2680 = vpop.f32.mrb[0].mxu0
      %v2681 = vadd.f32 0.0, %v2680
      %v2682 = vpop.f32.mrb[0].mxu0
      %2683 = vmatprep.mubr.f32.mxu0 0.0
      %2684 = vmatmul.mubr.f32.gmra.mrb[0].mxu0 %v2534
      %v2685 = vpop.f32.mrb[0].mxu0
      %v2686 = vadd.f32 0.0, %v2685
      %v2687 = vpop.f32.mrb[0].mxu0
      %2688 = vmatprep.mubr.f32.mxu0 0.0
      %2689 = vmatmul.mubr.f32.gmra.mrb[0].mxu0 %v2535
      %v2690 = vpop.f32.mrb[0].mxu0
      %v2691 = vadd.f32 0.0, %v2690
      %v2692 = vpop.f32.mrb[0].mxu0
      %2693 = vmatprep.mubr.f32.mxu0 0.0
      %2694 = vmatmul.mubr.f32.gmra.mrb[0].mxu0 %v2536
      %v2695 = vpop.f32.mrb[0].mxu0
      %v2696 = vadd.f32 0.0, %v2695
      %v2697 = vpop.f32.mrb[0].mxu0
      %2698 = vmatprep.mubr.f32.mxu0 0.0
      %2699 = vmatmul.mubr.f32.gmra.mrb[0].mxu0 %v2537
      %v2700 = vpop.f32.mrb[0].mxu0
      %v2701 = vadd.f32 0.0, %v2700
      %v2702 = vpop.f32.mrb[0].mxu0
      %2703 = vmatprep.mubr.f32.mxu0 0.0
      %2704 = vmatmul.mubr.f32.gmra.mrb[0].mxu0 %v2538
      %v2705 = vpop.f32.mrb[0].mxu0
      %v2706 = vadd.f32 0.0, %v2705
      %v2707 = vpop.f32.mrb[0].mxu0
      %2708 = vmatprep.mubr.f32.mxu0 0.0
      %2709 = vmatmul.mubr.f32.gmra.mrb[0].mxu0 %v2539
      %v2710 = vpop.f32.mrb[0].mxu0
      %v2711 = vadd.f32 0.0, %v2710
      %v2712 = vpop.f32.mrb[0].mxu0
      %2713 = vmatprep.mubr.f32.mxu0 0.0
      %2714 = vmatmul.mubr.f32.gmra.mrb[0].mxu0 %v2540
      %v2715 = vpop.f32.mrb[0].mxu0
      %v2716 = vadd.f32 0.0, %v2715
      %v2717 = vpop.f32.mrb[0].mxu0
      %2718 = vmatprep.mubr.f32.mxu0 0.0
      %2719 = vmatmul.mubr.f32.gmra.mrb[0].mxu0 %v2541
      %v2720 = vpop.f32.mrb[0].mxu0
      %v2721 = vadd.f32 0.0, %v2720
      %v2722 = vpop.f32.mrb[0].mxu0
      %2723 = vmatprep.mubr.f32.mxu0 0.0
      %2724 = vmatmul.mubr.f32.gmra.mrb[0].mxu0 %v2542
      %v2725 = vpop.f32.mrb[0].mxu0
      %v2726 = vadd.f32 0.0, %v2725
      %v2727 = vpop.f32.mrb[0].mxu0
      %2728 = vmatprep.mubr.f32.mxu0 0.0
      %2729 = vmatmul.mubr.f32.gmra.mrb[0].mxu0 %v2543
      %v2730 = vpop.f32.mrb[0].mxu0
      %v2731 = vadd.f32 0.0, %v2730
      %v2732 = vpop.f32.mrb[0].mxu0
      %2733 = vmatprep.mubr.f32.mxu0 0.0
      %2734 = vmatmul.mubr.f32.gmra.mrb[0].mxu0 %v2544
      %v2735 = vpop.f32.mrb[0].mxu0
      %v2736 = vadd.f32 0.0, %v2735
      %v2737 = vpop.f32.mrb[0].mxu0
      %2738 = vmatprep.mubr.f32.mxu0 0.0
      %2739 = vmatmul.mubr.f32.gmra.mrb[0].mxu0 %v2545
      %v2740 = vpop.f32.mrb[0].mxu0
      %v2741 = vadd.f32 0.0, %v2740
      %v2742 = vpop.f32.mrb[0].mxu0
      %2743 = vmatprep.mubr.f32.mxu0 0.0
      %2744 = vmatmul.mubr.f32.gmra.mrb[0].mxu0 %v2546
      %v2745 = vpop.f32.mrb[0].mxu0
      %v2746 = vadd.f32 0.0, %v2745
      %v2747 = vpop.f32.mrb[0].mxu0
      %2748 = vmatprep.mubr.f32.mxu0 0.0
      %2749 = vmatmul.mubr.f32.gmra.mrb[0].mxu0 %v2547
      %v2750 = vpop.f32.mrb[0].mxu0
      %v2751 = vadd.f32 0.0, %v2750
      %v2752 = vpop.f32.mrb[0].mxu0
      %2753 = vmatprep.mubr.f32.mxu0 0.0
      %2754 = vmatmul.mubr.f32.gmra.mrb[0].mxu0 %v2548
      %v2755 = vpop.f32.mrb[0].mxu0
      %v2756 = vadd.f32 0.0, %v2755
      %v2757 = vpop.f32.mrb[0].mxu0
      %2758 = vmatprep.mubr.f32.mxu0 0.0
      %2759 = vmatmul.mubr.f32.gmra.mrb[0].mxu0 %v2549
      %v2760 = vpop.f32.mrb[0].mxu0
      %v2761 = vadd.f32 0.0, %v2760
      %v2762 = vpop.f32.mrb[0].mxu0
      %2763 = vmatprep.mubr.f32.mxu0 0.0
      %2764 = vmatmul.mubr.f32.gmra.mrb[0].mxu0 %v2550
      %v2765 = vpop.f32.mrb[0].mxu0
      %v2766 = vadd.f32 0.0, %v2765
      %v2767 = vpop.f32.mrb[0].mxu0
      %2768 = vmatprep.mubr.f32.mxu0 0.0
      %2769 = vmatmul.mubr.f32.gmra.mrb[0].mxu0 %v2551
      %v2770 = vpop.f32.mrb[0].mxu0
      %v2771 = vadd.f32 0.0, %v2770
      %v2772 = vpop.f32.mrb[0].mxu0
      %2773 = vmatprep.mubr.f32.mxu0 0.0
      %2774 = vmatmul.mubr.f32.gmra.mrb[0].mxu0 %v2552
      %v2775 = vpop.f32.mrb[0].mxu0
      %v2776 = vadd.f32 0.0, %v2775
      %v2777 = vpop.f32.mrb[0].mxu0
      %2778 = vmatprep.mubr.f32.mxu0 0.0
      %2779 = vmatmul.mubr.f32.gmra.mrb[0].mxu0 %v2553
      %v2780 = vpop.f32.mrb[0].mxu0
      %v2781 = vadd.f32 0.0, %v2780
      %v2782 = vpop.f32.mrb[0].mxu0
      %2783 = vmatprep.mubr.f32.mxu0 0.0
      %2784 = vmatmul.mubr.f32.gmra.mrb[0].mxu0 %v2554
      %v2785 = vpop.f32.mrb[0].mxu0
      %v2786 = vadd.f32 0.0, %v2785
      %v2787 = vpop.f32.mrb[0].mxu0
      %2788 = vmatprep.mubr.f32.mxu0 0.0
      %2789 = vmatmul.mubr.f32.gmra.mrb[0].mxu0 %v2555
      %v2790 = vpop.f32.mrb[0].mxu0
      %v2791 = vadd.f32 0.0, %v2790
      %v2792 = vpop.f32.mrb[0].mxu0
      %2793 = vmatprep.mubr.f32.mxu0 0.0
      %2794 = vmatmul.mubr.f32.gmra.mrb[0].mxu0 %v2556
      %v2795 = vpop.f32.mrb[0].mxu0
      %v2796 = vadd.f32 0.0, %v2795
      %v2797 = vpop.f32.mrb[0].mxu0
      %2798 = vdwg.mxu0
      %v2799 = vld [vmem:[%s224] sm:$0xff]
      %v2800 = vld [vmem:[%s224 + $0x8] sm:$0xff]
      %v2801 = vld [vmem:[%s224 + $0x10] sm:$0xff]
      %v2802 = vld [vmem:[%s224 + $0x18] sm:$0xff]
      %v2803 = vld [vmem:[%s224 + $0x20] sm:$0xff]
      %v2804 = vld [vmem:[%s224 + $0x28] sm:$0xff]
      %v2805 = vld [vmem:[%s224 + $0x30] sm:$0xff]
      %v2806 = vld [vmem:[%s224 + $0x38] sm:$0xff]
      %v2807 = vld [vmem:[%s224 + $0x40] sm:$0xff]
      %v2808 = vld [vmem:[%s224 + $0x48] sm:$0xff]
      %v2809 = vld [vmem:[%s224 + $0x50] sm:$0xff]
      %v2810 = vld [vmem:[%s224 + $0x58] sm:$0xff]
      %v2811 = vld [vmem:[%s224 + $0x60] sm:$0xff]
      %v2812 = vld [vmem:[%s224 + $0x68] sm:$0xff]
      %v2813 = vld [vmem:[%s224 + $0x70] sm:$0xff]
      %v2814 = vld [vmem:[%s224 + $0x78] sm:$0xff]
      %v2815 = vld [vmem:[%s224 + $0x80] sm:$0xff]
      %v2816 = vld [vmem:[%s224 + $0x88] sm:$0xff]
      %v2817 = vld [vmem:[%s224 + $0x90] sm:$0xff]
      %v2818 = vld [vmem:[%s224 + $0x98] sm:$0xff]
      %v2819 = vld [vmem:[%s224 + $0xa0] sm:$0xff]
      %v2820 = vld [vmem:[%s224 + $0xa8] sm:$0xff]
      %v2821 = vld [vmem:[%s224 + $0xb0] sm:$0xff]
      %v2822 = vld [vmem:[%s224 + $0xb8] sm:$0xff]
      %v2823 = vld [vmem:[%s224 + $0xc0] sm:$0xff]
      %v2824 = vld [vmem:[%s224 + $0xc8] sm:$0xff]
      %v2825 = vld [vmem:[%s224 + $0xd0] sm:$0xff]
      %v2826 = vld [vmem:[%s224 + $0xd8] sm:$0xff]
      %v2827 = vld [vmem:[%s224 + $0xe0] sm:$0xff]
      %v2828 = vld [vmem:[%s224 + $0xe8] sm:$0xff]
      %v2829 = vld [vmem:[%s224 + $0xf0] sm:$0xff]
      %v2830 = vld [vmem:[%s224 + $0xf8] sm:$0xff]
      %v2831 = vadd.f32 %v2799, %v2641
      %v2832 = vadd.f32 %v2800, %v2646
      %v2833 = vadd.f32 %v2801, %v2651
      %v2834 = vadd.f32 %v2802, %v2656
      %v2835 = vadd.f32 %v2803, %v2661
      %v2836 = vadd.f32 %v2804, %v2666
      %v2837 = vadd.f32 %v2805, %v2671
      %v2838 = vadd.f32 %v2806, %v2676
      %v2839 = vadd.f32 %v2807, %v2681
      %v2840 = vadd.f32 %v2808, %v2686
      %v2841 = vadd.f32 %v2809, %v2691
      %v2842 = vadd.f32 %v2810, %v2696
      %v2843 = vadd.f32 %v2811, %v2701
      %v2844 = vadd.f32 %v2812, %v2706
      %v2845 = vadd.f32 %v2813, %v2711
      %v2846 = vadd.f32 %v2814, %v2716
      %v2847 = vadd.f32 %v2815, %v2721
      %v2848 = vadd.f32 %v2816, %v2726
      %v2849 = vadd.f32 %v2817, %v2731
      %v2850 = vadd.f32 %v2818, %v2736
      %v2851 = vadd.f32 %v2819, %v2741
      %v2852 = vadd.f32 %v2820, %v2746
      %v2853 = vadd.f32 %v2821, %v2751
      %v2854 = vadd.f32 %v2822, %v2756
      %v2855 = vadd.f32 %v2823, %v2761
      %v2856 = vadd.f32 %v2824, %v2766
      %v2857 = vadd.f32 %v2825, %v2771
      %v2858 = vadd.f32 %v2826, %v2776
      %v2859 = vadd.f32 %v2827, %v2781
      %v2860 = vadd.f32 %v2828, %v2786
      %v2861 = vadd.f32 %v2829, %v2791
      %v2862 = vadd.f32 %v2830, %v2796
      %2863 = vst [vmem:[%s224] sm:$0xff] %v2831
      %2864 = vst [vmem:[%s224 + $0x8] sm:$0xff] %v2832
      %2865 = vst [vmem:[%s224 + $0x10] sm:$0xff] %v2833
      %2866 = vst [vmem:[%s224 + $0x18] sm:$0xff] %v2834
      %2867 = vst [vmem:[%s224 + $0x20] sm:$0xff] %v2835
      %2868 = vst [vmem:[%s224 + $0x28] sm:$0xff] %v2836
      %2869 = vst [vmem:[%s224 + $0x30] sm:$0xff] %v2837
      %2870 = vst [vmem:[%s224 + $0x38] sm:$0xff] %v2838
      %2871 = vst [vmem:[%s224 + $0x40] sm:$0xff] %v2839
      %2872 = vst [vmem:[%s224 + $0x48] sm:$0xff] %v2840
      %2873 = vst [vmem:[%s224 + $0x50] sm:$0xff] %v2841
      %2874 = vst [vmem:[%s224 + $0x58] sm:$0xff] %v2842
      %2875 = vst [vmem:[%s224 + $0x60] sm:$0xff] %v2843
      %2876 = vst [vmem:[%s224 + $0x68] sm:$0xff] %v2844
      %2877 = vst [vmem:[%s224 + $0x70] sm:$0xff] %v2845
      %2878 = vst [vmem:[%s224 + $0x78] sm:$0xff] %v2846
      %2879 = vst [vmem:[%s224 + $0x80] sm:$0xff] %v2847
      %2880 = vst [vmem:[%s224 + $0x88] sm:$0xff] %v2848
      %2881 = vst [vmem:[%s224 + $0x90] sm:$0xff] %v2849
      %2882 = vst [vmem:[%s224 + $0x98] sm:$0xff] %v2850
      %2883 = vst [vmem:[%s224 + $0xa0] sm:$0xff] %v2851
      %2884 = vst [vmem:[%s224 + $0xa8] sm:$0xff] %v2852
      %2885 = vst [vmem:[%s224 + $0xb0] sm:$0xff] %v2853
      %2886 = vst [vmem:[%s224 + $0xb8] sm:$0xff] %v2854
      %2887 = vst [vmem:[%s224 + $0xc0] sm:$0xff] %v2855
      %2888 = vst [vmem:[%s224 + $0xc8] sm:$0xff] %v2856
      %2889 = vst [vmem:[%s224 + $0xd0] sm:$0xff] %v2857
      %2890 = vst [vmem:[%s224 + $0xd8] sm:$0xff] %v2858
      %2891 = vst [vmem:[%s224 + $0xe0] sm:$0xff] %v2859
      %2892 = vst [vmem:[%s224 + $0xe8] sm:$0xff] %v2860
      %2893 = vst [vmem:[%s224 + $0xf0] sm:$0xff] %v2861
      %2894 = vst [vmem:[%s224 + $0xf8] sm:$0xff] %v2862
      %v2895 = vld [vmem:[#allocation2 + $0x19] sm:$0xff]
      %v2896 = vld [vmem:[#allocation2 + $0x21] sm:$0xff]
      %v2897 = vld [vmem:[#allocation2 + $0x29] sm:$0xff]
      %v2898 = vld [vmem:[#allocation2 + $0x31] sm:$0xff]
      %v2899 = vld [vmem:[#allocation2 + $0x39] sm:$0xff]
      %v2900 = vld [vmem:[#allocation2 + $0x41] sm:$0xff]
      %v2901 = vld [vmem:[#allocation2 + $0x49] sm:$0xff]
      %v2902 = vld [vmem:[#allocation2 + $0x51] sm:$0xff]
      %v2903 = vld [vmem:[#allocation2 + $0x59] sm:$0xff]
      %v2904 = vld [vmem:[#allocation2 + $0x61] sm:$0xff]
      %v2905 = vld [vmem:[#allocation2 + $0x69] sm:$0xff]
      %v2906 = vld [vmem:[#allocation2 + $0x71] sm:$0xff]
      %v2907 = vld [vmem:[#allocation2 + $0x79] sm:$0xff]
      %v2908 = vld [vmem:[#allocation2 + $0x81] sm:$0xff]
      %v2909 = vld [vmem:[#allocation2 + $0x89] sm:$0xff]
      %v2910 = vld [vmem:[#allocation2 + $0x91] sm:$0xff]
      %v2911 = vld [vmem:[#allocation2 + $0x99] sm:$0xff]
      %v2912 = vld [vmem:[#allocation2 + $0xa1] sm:$0xff]
      %v2913 = vld [vmem:[#allocation2 + $0xa9] sm:$0xff]
      %v2914 = vld [vmem:[#allocation2 + $0xb1] sm:$0xff]
      %v2915 = vld [vmem:[#allocation2 + $0xb9] sm:$0xff]
      %v2916 = vld [vmem:[#allocation2 + $0xc1] sm:$0xff]
      %v2917 = vld [vmem:[#allocation2 + $0xc9] sm:$0xff]
      %v2918 = vld [vmem:[#allocation2 + $0xd1] sm:$0xff]
      %v2919 = vld [vmem:[#allocation2 + $0xd9] sm:$0xff]
      %v2920 = vld [vmem:[#allocation2 + $0xe1] sm:$0xff]
      %v2921 = vld [vmem:[#allocation2 + $0xe9] sm:$0xff]
      %v2922 = vld [vmem:[#allocation2 + $0xf1] sm:$0xff]
      %v2923 = vld [vmem:[#allocation2 + $0xf9] sm:$0xff]
      %v2924 = vld [vmem:[#allocation2 + $0x101] sm:$0xff]
      %v2925 = vld [vmem:[#allocation2 + $0x109] sm:$0xff]
      %v2926 = vld [vmem:[#allocation2 + $0x111] sm:$0xff]
      %v2927 = vsel %vm1721, %v2895, 0.0
      %v2928 = vsel %vm1722, %v2896, 0.0
      %v2929 = vsel %vm1723, %v2897, 0.0
      %v2930 = vsel %vm1724, %v2898, 0.0
      %v2931 = vsel %vm1725, %v2899, 0.0
      %v2932 = vsel %vm1726, %v2900, 0.0
      %v2933 = vsel %vm1727, %v2901, 0.0
      %v2934 = vsel %vm1728, %v2902, 0.0
      %v2935 = vsel %vm1729, %v2903, 0.0
      %v2936 = vsel %vm1730, %v2904, 0.0
      %v2937 = vsel %vm1731, %v2905, 0.0
      %v2938 = vsel %vm1732, %v2906, 0.0
      %v2939 = vsel %vm1733, %v2907, 0.0
      %v2940 = vsel %vm1734, %v2908, 0.0
      %v2941 = vsel %vm1735, %v2909, 0.0
      %v2942 = vsel %vm1736, %v2910, 0.0
      %v2943 = vsel %vm1737, %v2911, 0.0
      %v2944 = vsel %vm1738, %v2912, 0.0
      %v2945 = vsel %vm1739, %v2913, 0.0
      %v2946 = vsel %vm1740, %v2914, 0.0
      %v2947 = vsel %vm1741, %v2915, 0.0
      %v2948 = vsel %vm1742, %v2916, 0.0
      %v2949 = vsel %vm1743, %v2917, 0.0
      %v2950 = vsel %vm1744, %v2918, 0.0
      %v2951 = vsel %vm1745, %v2919, 0.0
      %v2952 = vsel %vm1746, %v2920, 0.0
      %v2953 = vsel %vm1747, %v2921, 0.0
      %v2954 = vsel %vm1748, %v2922, 0.0
      %v2955 = vsel %vm1749, %v2923, 0.0
      %v2956 = vsel %vm1750, %v2924, 0.0
      %v2957 = vsel %vm1751, %v2925, 0.0
      %v2958 = vsel %vm1752, %v2926, 0.0
      %s2959 = scalar_lea.vmem %s3, 640
      %v2960 = vld [vmem:[%s2959] sm:$0xff]
      %v2961 = vld [vmem:[%s2959 + $0x8] sm:$0xff]
      %v2962 = vld [vmem:[%s2959 + $0x10] sm:$0xff]
      %v2963 = vld [vmem:[%s2959 + $0x18] sm:$0xff]
      %v2964 = vld [vmem:[%s2959 + $0x20] sm:$0xff]
      %v2965 = vld [vmem:[%s2959 + $0x28] sm:$0xff]
      %v2966 = vld [vmem:[%s2959 + $0x30] sm:$0xff]
      %v2967 = vld [vmem:[%s2959 + $0x38] sm:$0xff]
      %v2968 = vld [vmem:[%s2959 + $0x40] sm:$0xff]
      %v2969 = vld [vmem:[%s2959 + $0x48] sm:$0xff]
      %v2970 = vld [vmem:[%s2959 + $0x50] sm:$0xff]
      %v2971 = vld [vmem:[%s2959 + $0x58] sm:$0xff]
      %v2972 = vld [vmem:[%s2959 + $0x60] sm:$0xff]
      %v2973 = vld [vmem:[%s2959 + $0x68] sm:$0xff]
      %v2974 = vld [vmem:[%s2959 + $0x70] sm:$0xff]
      %v2975 = vld [vmem:[%s2959 + $0x78] sm:$0xff]
      %2976 = vmatprep.subr.mxu0 0.0
      %2977 = vmatpush1.msra.mxu0 %v2960
      %2978 = vmatprep.subr.mxu0 0.0
      %2979 = vmatpush1.msra.mxu0 %v2961
      %2980 = vmatprep.subr.mxu0 0.0
      %2981 = vmatpush1.msra.mxu0 %v2962
      %2982 = vmatprep.subr.mxu0 0.0
      %2983 = vmatpush1.msra.mxu0 %v2963
      %2984 = vmatprep.subr.mxu0 0.0
      %2985 = vmatpush1.msra.mxu0 %v2964
      %2986 = vmatprep.subr.mxu0 0.0
      %2987 = vmatpush1.msra.mxu0 %v2965
      %2988 = vmatprep.subr.mxu0 0.0
      %2989 = vmatpush1.msra.mxu0 %v2966
      %2990 = vmatprep.subr.mxu0 0.0
      %2991 = vmatpush1.msra.mxu0 %v2967
      %2992 = vmatprep.subr.mxu0 0.0
      %2993 = vmatpush1.msra.mxu0 %v2968
      %2994 = vmatprep.subr.mxu0 0.0
      %2995 = vmatpush1.msra.mxu0 %v2969
      %2996 = vmatprep.subr.mxu0 0.0
      %2997 = vmatpush1.msra.mxu0 %v2970
      %2998 = vmatprep.subr.mxu0 0.0
      %2999 = vmatpush1.msra.mxu0 %v2971
      %3000 = vmatprep.subr.mxu0 0.0
      %3001 = vmatpush1.msra.mxu0 %v2972
      %3002 = vmatprep.subr.mxu0 0.0
      %3003 = vmatpush1.msra.mxu0 %v2973
      %3004 = vmatprep.subr.mxu0 0.0
      %3005 = vmatpush1.msra.mxu0 %v2974
      %3006 = vmatprep.subr.mxu0 0.0
      %3007 = vmatpush1.msra.mxu0 %v2975
      %3008 = vmatprep.subr.mxu0 0.0
      %3009 = vmatpush1.msra.mxu0 0.0
      %3010 = vmatprep.subr.mxu0 0.0
      %3011 = vmatpush1.msra.mxu0 0.0
      %3012 = vmatprep.subr.mxu0 0.0
      %3013 = vmatpush1.msra.mxu0 0.0
      %3014 = vmatprep.subr.mxu0 0.0
      %3015 = vmatpush1.msra.mxu0 0.0
      %3016 = vmatprep.subr.mxu0 0.0
      %3017 = vmatpush1.msra.mxu0 0.0
      %3018 = vmatprep.subr.mxu0 0.0
      %3019 = vmatpush1.msra.mxu0 0.0
      %3020 = vmatprep.subr.mxu0 0.0
      %3021 = vmatpush1.msra.mxu0 0.0
      %3022 = vmatprep.subr.mxu0 0.0
      %3023 = vmatpush1.msra.mxu0 0.0
      %3024 = vmatprep.subr.mxu0 0.0
      %3025 = vmatpush1.msra.mxu0 0.0
      %3026 = vmatprep.subr.mxu0 0.0
      %3027 = vmatpush1.msra.mxu0 0.0
      %3028 = vmatprep.subr.mxu0 0.0
      %3029 = vmatpush1.msra.mxu0 0.0
      %3030 = vmatprep.subr.mxu0 0.0
      %3031 = vmatpush1.msra.mxu0 0.0
      %3032 = vmatprep.subr.mxu0 0.0
      %3033 = vmatpush1.msra.mxu0 0.0
      %3034 = vmatprep.subr.mxu0 0.0
      %3035 = vmatpush1.msra.mxu0 0.0
      %3036 = vmatprep.subr.mxu0 0.0
      %3037 = vmatpush1.msra.mxu0 0.0
      %3038 = vmatprep.subr.mxu0 0.0
      %3039 = vmatpush1.msra.mxu0 0.0
      %3040 = vmatprep.mubr.f32.mxu0 0.0
      %3041 = vmatmul.mubr.f32.gmra.mrb[0].mxu0 %v2927
      %v3042 = vpop.f32.mrb[0].mxu0
      %v3043 = vadd.f32 0.0, %v3042
      %v3044 = vpop.f32.mrb[0].mxu0
      %3045 = vmatprep.mubr.f32.mxu0 0.0
      %3046 = vmatmul.mubr.f32.gmra.mrb[0].mxu0 %v2928
      %v3047 = vpop.f32.mrb[0].mxu0
      %v3048 = vadd.f32 0.0, %v3047
      %v3049 = vpop.f32.mrb[0].mxu0
      %3050 = vmatprep.mubr.f32.mxu0 0.0
      %3051 = vmatmul.mubr.f32.gmra.mrb[0].mxu0 %v2929
      %v3052 = vpop.f32.mrb[0].mxu0
      %v3053 = vadd.f32 0.0, %v3052
      %v3054 = vpop.f32.mrb[0].mxu0
      %3055 = vmatprep.mubr.f32.mxu0 0.0
      %3056 = vmatmul.mubr.f32.gmra.mrb[0].mxu0 %v2930
      %v3057 = vpop.f32.mrb[0].mxu0
      %v3058 = vadd.f32 0.0, %v3057
      %v3059 = vpop.f32.mrb[0].mxu0
      %3060 = vmatprep.mubr.f32.mxu0 0.0
      %3061 = vmatmul.mubr.f32.gmra.mrb[0].mxu0 %v2931
      %v3062 = vpop.f32.mrb[0].mxu0
      %v3063 = vadd.f32 0.0, %v3062
      %v3064 = vpop.f32.mrb[0].mxu0
      %3065 = vmatprep.mubr.f32.mxu0 0.0
      %3066 = vmatmul.mubr.f32.gmra.mrb[0].mxu0 %v2932
      %v3067 = vpop.f32.mrb[0].mxu0
      %v3068 = vadd.f32 0.0, %v3067
      %v3069 = vpop.f32.mrb[0].mxu0
      %3070 = vmatprep.mubr.f32.mxu0 0.0
      %3071 = vmatmul.mubr.f32.gmra.mrb[0].mxu0 %v2933
      %v3072 = vpop.f32.mrb[0].mxu0
      %v3073 = vadd.f32 0.0, %v3072
      %v3074 = vpop.f32.mrb[0].mxu0
      %3075 = vmatprep.mubr.f32.mxu0 0.0
      %3076 = vmatmul.mubr.f32.gmra.mrb[0].mxu0 %v2934
      %v3077 = vpop.f32.mrb[0].mxu0
      %v3078 = vadd.f32 0.0, %v3077
      %v3079 = vpop.f32.mrb[0].mxu0
      %3080 = vmatprep.mubr.f32.mxu0 0.0
      %3081 = vmatmul.mubr.f32.gmra.mrb[0].mxu0 %v2935
      %v3082 = vpop.f32.mrb[0].mxu0
      %v3083 = vadd.f32 0.0, %v3082
      %v3084 = vpop.f32.mrb[0].mxu0
      %3085 = vmatprep.mubr.f32.mxu0 0.0
      %3086 = vmatmul.mubr.f32.gmra.mrb[0].mxu0 %v2936
      %v3087 = vpop.f32.mrb[0].mxu0
      %v3088 = vadd.f32 0.0, %v3087
      %v3089 = vpop.f32.mrb[0].mxu0
      %3090 = vmatprep.mubr.f32.mxu0 0.0
      %3091 = vmatmul.mubr.f32.gmra.mrb[0].mxu0 %v2937
      %v3092 = vpop.f32.mrb[0].mxu0
      %v3093 = vadd.f32 0.0, %v3092
      %v3094 = vpop.f32.mrb[0].mxu0
      %3095 = vmatprep.mubr.f32.mxu0 0.0
      %3096 = vmatmul.mubr.f32.gmra.mrb[0].mxu0 %v2938
      %v3097 = vpop.f32.mrb[0].mxu0
      %v3098 = vadd.f32 0.0, %v3097
      %v3099 = vpop.f32.mrb[0].mxu0
      %3100 = vmatprep.mubr.f32.mxu0 0.0
      %3101 = vmatmul.mubr.f32.gmra.mrb[0].mxu0 %v2939
      %v3102 = vpop.f32.mrb[0].mxu0
      %v3103 = vadd.f32 0.0, %v3102
      %v3104 = vpop.f32.mrb[0].mxu0
      %3105 = vmatprep.mubr.f32.mxu0 0.0
      %3106 = vmatmul.mubr.f32.gmra.mrb[0].mxu0 %v2940
      %v3107 = vpop.f32.mrb[0].mxu0
      %v3108 = vadd.f32 0.0, %v3107
      %v3109 = vpop.f32.mrb[0].mxu0
      %3110 = vmatprep.mubr.f32.mxu0 0.0
      %3111 = vmatmul.mubr.f32.gmra.mrb[0].mxu0 %v2941
      %v3112 = vpop.f32.mrb[0].mxu0
      %v3113 = vadd.f32 0.0, %v3112
      %v3114 = vpop.f32.mrb[0].mxu0
      %3115 = vmatprep.mubr.f32.mxu0 0.0
      %3116 = vmatmul.mubr.f32.gmra.mrb[0].mxu0 %v2942
      %v3117 = vpop.f32.mrb[0].mxu0
      %v3118 = vadd.f32 0.0, %v3117
      %v3119 = vpop.f32.mrb[0].mxu0
      %3120 = vmatprep.mubr.f32.mxu0 0.0
      %3121 = vmatmul.mubr.f32.gmra.mrb[0].mxu0 %v2943
      %v3122 = vpop.f32.mrb[0].mxu0
      %v3123 = vadd.f32 0.0, %v3122
      %v3124 = vpop.f32.mrb[0].mxu0
      %3125 = vmatprep.mubr.f32.mxu0 0.0
      %3126 = vmatmul.mubr.f32.gmra.mrb[0].mxu0 %v2944
      %v3127 = vpop.f32.mrb[0].mxu0
      %v3128 = vadd.f32 0.0, %v3127
      %v3129 = vpop.f32.mrb[0].mxu0
      %3130 = vmatprep.mubr.f32.mxu0 0.0
      %3131 = vmatmul.mubr.f32.gmra.mrb[0].mxu0 %v2945
      %v3132 = vpop.f32.mrb[0].mxu0
      %v3133 = vadd.f32 0.0, %v3132
      %v3134 = vpop.f32.mrb[0].mxu0
      %3135 = vmatprep.mubr.f32.mxu0 0.0
      %3136 = vmatmul.mubr.f32.gmra.mrb[0].mxu0 %v2946
      %v3137 = vpop.f32.mrb[0].mxu0
      %v3138 = vadd.f32 0.0, %v3137
      %v3139 = vpop.f32.mrb[0].mxu0
      %3140 = vmatprep.mubr.f32.mxu0 0.0
      %3141 = vmatmul.mubr.f32.gmra.mrb[0].mxu0 %v2947
      %v3142 = vpop.f32.mrb[0].mxu0
      %v3143 = vadd.f32 0.0, %v3142
      %v3144 = vpop.f32.mrb[0].mxu0
      %3145 = vmatprep.mubr.f32.mxu0 0.0
      %3146 = vmatmul.mubr.f32.gmra.mrb[0].mxu0 %v2948
      %v3147 = vpop.f32.mrb[0].mxu0
      %v3148 = vadd.f32 0.0, %v3147
      %v3149 = vpop.f32.mrb[0].mxu0
      %3150 = vmatprep.mubr.f32.mxu0 0.0
      %3151 = vmatmul.mubr.f32.gmra.mrb[0].mxu0 %v2949
      %v3152 = vpop.f32.mrb[0].mxu0
      %v3153 = vadd.f32 0.0, %v3152
      %v3154 = vpop.f32.mrb[0].mxu0
      %3155 = vmatprep.mubr.f32.mxu0 0.0
      %3156 = vmatmul.mubr.f32.gmra.mrb[0].mxu0 %v2950
      %v3157 = vpop.f32.mrb[0].mxu0
      %v3158 = vadd.f32 0.0, %v3157
      %v3159 = vpop.f32.mrb[0].mxu0
      %3160 = vmatprep.mubr.f32.mxu0 0.0
      %3161 = vmatmul.mubr.f32.gmra.mrb[0].mxu0 %v2951
      %v3162 = vpop.f32.mrb[0].mxu0
      %v3163 = vadd.f32 0.0, %v3162
      %v3164 = vpop.f32.mrb[0].mxu0
      %3165 = vmatprep.mubr.f32.mxu0 0.0
      %3166 = vmatmul.mubr.f32.gmra.mrb[0].mxu0 %v2952
      %v3167 = vpop.f32.mrb[0].mxu0
      %v3168 = vadd.f32 0.0, %v3167
      %v3169 = vpop.f32.mrb[0].mxu0
      %3170 = vmatprep.mubr.f32.mxu0 0.0
      %3171 = vmatmul.mubr.f32.gmra.mrb[0].mxu0 %v2953
      %v3172 = vpop.f32.mrb[0].mxu0
      %v3173 = vadd.f32 0.0, %v3172
      %v3174 = vpop.f32.mrb[0].mxu0
      %3175 = vmatprep.mubr.f32.mxu0 0.0
      %3176 = vmatmul.mubr.f32.gmra.mrb[0].mxu0 %v2954
      %v3177 = vpop.f32.mrb[0].mxu0
      %v3178 = vadd.f32 0.0, %v3177
      %v3179 = vpop.f32.mrb[0].mxu0
      %3180 = vmatprep.mubr.f32.mxu0 0.0
      %3181 = vmatmul.mubr.f32.gmra.mrb[0].mxu0 %v2955
      %v3182 = vpop.f32.mrb[0].mxu0
      %v3183 = vadd.f32 0.0, %v3182
      %v3184 = vpop.f32.mrb[0].mxu0
      %3185 = vmatprep.mubr.f32.mxu0 0.0
      %3186 = vmatmul.mubr.f32.gmra.mrb[0].mxu0 %v2956
      %v3187 = vpop.f32.mrb[0].mxu0
      %v3188 = vadd.f32 0.0, %v3187
      %v3189 = vpop.f32.mrb[0].mxu0
      %3190 = vmatprep.mubr.f32.mxu0 0.0
      %3191 = vmatmul.mubr.f32.gmra.mrb[0].mxu0 %v2957
      %v3192 = vpop.f32.mrb[0].mxu0
      %v3193 = vadd.f32 0.0, %v3192
      %v3194 = vpop.f32.mrb[0].mxu0
      %3195 = vmatprep.mubr.f32.mxu0 0.0
      %3196 = vmatmul.mubr.f32.gmra.mrb[0].mxu0 %v2958
      %v3197 = vpop.f32.mrb[0].mxu0
      %v3198 = vadd.f32 0.0, %v3197
      %v3199 = vpop.f32.mrb[0].mxu0
      %3200 = vdwg.mxu0
      %v3201 = vld [vmem:[%s224] sm:$0xff]
      %v3202 = vld [vmem:[%s224 + $0x8] sm:$0xff]
      %v3203 = vld [vmem:[%s224 + $0x10] sm:$0xff]
      %v3204 = vld [vmem:[%s224 + $0x18] sm:$0xff]
      %v3205 = vld [vmem:[%s224 + $0x20] sm:$0xff]
      %v3206 = vld [vmem:[%s224 + $0x28] sm:$0xff]
      %v3207 = vld [vmem:[%s224 + $0x30] sm:$0xff]
      %v3208 = vld [vmem:[%s224 + $0x38] sm:$0xff]
      %v3209 = vld [vmem:[%s224 + $0x40] sm:$0xff]
      %v3210 = vld [vmem:[%s224 + $0x48] sm:$0xff]
      %v3211 = vld [vmem:[%s224 + $0x50] sm:$0xff]
      %v3212 = vld [vmem:[%s224 + $0x58] sm:$0xff]
      %v3213 = vld [vmem:[%s224 + $0x60] sm:$0xff]
      %v3214 = vld [vmem:[%s224 + $0x68] sm:$0xff]
      %v3215 = vld [vmem:[%s224 + $0x70] sm:$0xff]
      %v3216 = vld [vmem:[%s224 + $0x78] sm:$0xff]
      %v3217 = vld [vmem:[%s224 + $0x80] sm:$0xff]
      %v3218 = vld [vmem:[%s224 + $0x88] sm:$0xff]
      %v3219 = vld [vmem:[%s224 + $0x90] sm:$0xff]
      %v3220 = vld [vmem:[%s224 + $0x98] sm:$0xff]
      %v3221 = vld [vmem:[%s224 + $0xa0] sm:$0xff]
      %v3222 = vld [vmem:[%s224 + $0xa8] sm:$0xff]
      %v3223 = vld [vmem:[%s224 + $0xb0] sm:$0xff]
      %v3224 = vld [vmem:[%s224 + $0xb8] sm:$0xff]
      %v3225 = vld [vmem:[%s224 + $0xc0] sm:$0xff]
      %v3226 = vld [vmem:[%s224 + $0xc8] sm:$0xff]
      %v3227 = vld [vmem:[%s224 + $0xd0] sm:$0xff]
      %v3228 = vld [vmem:[%s224 + $0xd8] sm:$0xff]
      %v3229 = vld [vmem:[%s224 + $0xe0] sm:$0xff]
      %v3230 = vld [vmem:[%s224 + $0xe8] sm:$0xff]
      %v3231 = vld [vmem:[%s224 + $0xf0] sm:$0xff]
      %v3232 = vld [vmem:[%s224 + $0xf8] sm:$0xff]
      %v3233 = vadd.f32 %v3201, %v3043
      %v3234 = vadd.f32 %v3202, %v3048
      %v3235 = vadd.f32 %v3203, %v3053
      %v3236 = vadd.f32 %v3204, %v3058
      %v3237 = vadd.f32 %v3205, %v3063
      %v3238 = vadd.f32 %v3206, %v3068
      %v3239 = vadd.f32 %v3207, %v3073
      %v3240 = vadd.f32 %v3208, %v3078
      %v3241 = vadd.f32 %v3209, %v3083
      %v3242 = vadd.f32 %v3210, %v3088
      %v3243 = vadd.f32 %v3211, %v3093
      %v3244 = vadd.f32 %v3212, %v3098
      %v3245 = vadd.f32 %v3213, %v3103
      %v3246 = vadd.f32 %v3214, %v3108
      %v3247 = vadd.f32 %v3215, %v3113
      %v3248 = vadd.f32 %v3216, %v3118
      %v3249 = vadd.f32 %v3217, %v3123
      %v3250 = vadd.f32 %v3218, %v3128
      %v3251 = vadd.f32 %v3219, %v3133
      %v3252 = vadd.f32 %v3220, %v3138
      %v3253 = vadd.f32 %v3221, %v3143
      %v3254 = vadd.f32 %v3222, %v3148
      %v3255 = vadd.f32 %v3223, %v3153
      %v3256 = vadd.f32 %v3224, %v3158
      %v3257 = vadd.f32 %v3225, %v3163
      %v3258 = vadd.f32 %v3226, %v3168
      %v3259 = vadd.f32 %v3227, %v3173
      %v3260 = vadd.f32 %v3228, %v3178
      %v3261 = vadd.f32 %v3229, %v3183
      %v3262 = vadd.f32 %v3230, %v3188
      %v3263 = vadd.f32 %v3231, %v3193
      %v3264 = vadd.f32 %v3232, %v3198
      %3265 = vst [vmem:[%s224] sm:$0xff] %v3233
      %3266 = vst [vmem:[%s224 + $0x8] sm:$0xff] %v3234
      %3267 = vst [vmem:[%s224 + $0x10] sm:$0xff] %v3235
      %3268 = vst [vmem:[%s224 + $0x18] sm:$0xff] %v3236
      %3269 = vst [vmem:[%s224 + $0x20] sm:$0xff] %v3237
      %3270 = vst [vmem:[%s224 + $0x28] sm:$0xff] %v3238
      %3271 = vst [vmem:[%s224 + $0x30] sm:$0xff] %v3239
      %3272 = vst [vmem:[%s224 + $0x38] sm:$0xff] %v3240
      %3273 = vst [vmem:[%s224 + $0x40] sm:$0xff] %v3241
      %3274 = vst [vmem:[%s224 + $0x48] sm:$0xff] %v3242
      %3275 = vst [vmem:[%s224 + $0x50] sm:$0xff] %v3243
      %3276 = vst [vmem:[%s224 + $0x58] sm:$0xff] %v3244
      %3277 = vst [vmem:[%s224 + $0x60] sm:$0xff] %v3245
      %3278 = vst [vmem:[%s224 + $0x68] sm:$0xff] %v3246
      %3279 = vst [vmem:[%s224 + $0x70] sm:$0xff] %v3247
      %3280 = vst [vmem:[%s224 + $0x78] sm:$0xff] %v3248
      %3281 = vst [vmem:[%s224 + $0x80] sm:$0xff] %v3249
      %3282 = vst [vmem:[%s224 + $0x88] sm:$0xff] %v3250
      %3283 = vst [vmem:[%s224 + $0x90] sm:$0xff] %v3251
      %3284 = vst [vmem:[%s224 + $0x98] sm:$0xff] %v3252
      %3285 = vst [vmem:[%s224 + $0xa0] sm:$0xff] %v3253
      %3286 = vst [vmem:[%s224 + $0xa8] sm:$0xff] %v3254
      %3287 = vst [vmem:[%s224 + $0xb0] sm:$0xff] %v3255
      %3288 = vst [vmem:[%s224 + $0xb8] sm:$0xff] %v3256
      %3289 = vst [vmem:[%s224 + $0xc0] sm:$0xff] %v3257
      %3290 = vst [vmem:[%s224 + $0xc8] sm:$0xff] %v3258
      %3291 = vst [vmem:[%s224 + $0xd0] sm:$0xff] %v3259
      %3292 = vst [vmem:[%s224 + $0xd8] sm:$0xff] %v3260
      %3293 = vst [vmem:[%s224 + $0xe0] sm:$0xff] %v3261
      %3294 = vst [vmem:[%s224 + $0xe8] sm:$0xff] %v3262
      %3295 = vst [vmem:[%s224 + $0xf0] sm:$0xff] %v3263
      %3296 = vst [vmem:[%s224 + $0xf8] sm:$0xff] %v3264
      %v3297 = vld [vmem:[#allocation2 + $0x27] sm:$0xff]
      %v3298 = vld [vmem:[#allocation2 + $0x2f] sm:$0xff]
      %v3299 = vld [vmem:[#allocation2 + $0x37] sm:$0xff]
      %v3300 = vld [vmem:[#allocation2 + $0x3f] sm:$0xff]
      %v3301 = vld [vmem:[#allocation2 + $0x47] sm:$0xff]
      %v3302 = vld [vmem:[#allocation2 + $0x4f] sm:$0xff]
      %v3303 = vld [vmem:[#allocation2 + $0x57] sm:$0xff]
      %v3304 = vld [vmem:[#allocation2 + $0x5f] sm:$0xff]
      %v3305 = vld [vmem:[#allocation2 + $0x67] sm:$0xff]
      %v3306 = vld [vmem:[#allocation2 + $0x6f] sm:$0xff]
      %v3307 = vld [vmem:[#allocation2 + $0x77] sm:$0xff]
      %v3308 = vld [vmem:[#allocation2 + $0x7f] sm:$0xff]
      %v3309 = vld [vmem:[#allocation2 + $0x87] sm:$0xff]
      %v3310 = vld [vmem:[#allocation2 + $0x8f] sm:$0xff]
      %v3311 = vld [vmem:[#allocation2 + $0x97] sm:$0xff]
      %v3312 = vld [vmem:[#allocation2 + $0x9f] sm:$0xff]
      %v3313 = vld [vmem:[#allocation2 + $0xa7] sm:$0xff]
      %v3314 = vld [vmem:[#allocation2 + $0xaf] sm:$0xff]
      %v3315 = vld [vmem:[#allocation2 + $0xb7] sm:$0xff]
      %v3316 = vld [vmem:[#allocation2 + $0xbf] sm:$0xff]
      %v3317 = vld [vmem:[#allocation2 + $0xc7] sm:$0xff]
      %v3318 = vld [vmem:[#allocation2 + $0xcf] sm:$0xff]
      %v3319 = vld [vmem:[#allocation2 + $0xd7] sm:$0xff]
      %v3320 = vld [vmem:[#allocation2 + $0xdf] sm:$0xff]
      %v3321 = vld [vmem:[#allocation2 + $0xe7] sm:$0xff]
      %v3322 = vld [vmem:[#allocation2 + $0xef] sm:$0xff]
      %v3323 = vld [vmem:[#allocation2 + $0xf7] sm:$0xff]
      %v3324 = vld [vmem:[#allocation2 + $0xff] sm:$0xff]
      %v3325 = vld [vmem:[#allocation2 + $0x107] sm:$0xff]
      %v3326 = vld [vmem:[#allocation2 + $0x10f] sm:$0xff]
      %v3327 = vld [vmem:[#allocation2 + $0x117] sm:$0xff]
      %v3328 = vld [vmem:[#allocation2 + $0x11f] sm:$0xff]
      %v3329 = vsel %vm950, %v3297, 0.0
      %v3330 = vsel %vm951, %v3298, 0.0
      %v3331 = vsel %vm952, %v3299, 0.0
      %v3332 = vsel %vm953, %v3300, 0.0
      %v3333 = vsel %vm954, %v3301, 0.0
      %v3334 = vsel %vm955, %v3302, 0.0
      %v3335 = vsel %vm956, %v3303, 0.0
      %v3336 = vsel %vm957, %v3304, 0.0
      %v3337 = vsel %vm958, %v3305, 0.0
      %v3338 = vsel %vm959, %v3306, 0.0
      %v3339 = vsel %vm960, %v3307, 0.0
      %v3340 = vsel %vm961, %v3308, 0.0
      %v3341 = vsel %vm962, %v3309, 0.0
      %v3342 = vsel %vm963, %v3310, 0.0
      %v3343 = vsel %vm964, %v3311, 0.0
      %v3344 = vsel %vm965, %v3312, 0.0
      %v3345 = vsel %vm966, %v3313, 0.0
      %v3346 = vsel %vm967, %v3314, 0.0
      %v3347 = vsel %vm968, %v3315, 0.0
      %v3348 = vsel %vm969, %v3316, 0.0
      %v3349 = vsel %vm970, %v3317, 0.0
      %v3350 = vsel %vm971, %v3318, 0.0
      %v3351 = vsel %vm972, %v3319, 0.0
      %v3352 = vsel %vm973, %v3320, 0.0
      %v3353 = vsel %vm974, %v3321, 0.0
      %v3354 = vsel %vm975, %v3322, 0.0
      %v3355 = vsel %vm976, %v3323, 0.0
      %v3356 = vsel %vm977, %v3324, 0.0
      %v3357 = vsel %vm978, %v3325, 0.0
      %v3358 = vsel %vm979, %v3326, 0.0
      %v3359 = vsel %vm980, %v3327, 0.0
      %v3360 = vsel %vm981, %v3328, 0.0
      %s3361 = scalar_lea.vmem %s3, 768
      %v3362 = vld [vmem:[%s3361] sm:$0xff]
      %v3363 = vld [vmem:[%s3361 + $0x8] sm:$0xff]
      %v3364 = vld [vmem:[%s3361 + $0x10] sm:$0xff]
      %v3365 = vld [vmem:[%s3361 + $0x18] sm:$0xff]
      %v3366 = vld [vmem:[%s3361 + $0x20] sm:$0xff]
      %v3367 = vld [vmem:[%s3361 + $0x28] sm:$0xff]
      %v3368 = vld [vmem:[%s3361 + $0x30] sm:$0xff]
      %v3369 = vld [vmem:[%s3361 + $0x38] sm:$0xff]
      %v3370 = vld [vmem:[%s3361 + $0x40] sm:$0xff]
      %v3371 = vld [vmem:[%s3361 + $0x48] sm:$0xff]
      %v3372 = vld [vmem:[%s3361 + $0x50] sm:$0xff]
      %v3373 = vld [vmem:[%s3361 + $0x58] sm:$0xff]
      %v3374 = vld [vmem:[%s3361 + $0x60] sm:$0xff]
      %v3375 = vld [vmem:[%s3361 + $0x68] sm:$0xff]
      %v3376 = vld [vmem:[%s3361 + $0x70] sm:$0xff]
      %v3377 = vld [vmem:[%s3361 + $0x78] sm:$0xff]
      %3378 = vmatprep.subr.mxu0 0.0
      %3379 = vmatpush1.msra.mxu0 %v3362
      %3380 = vmatprep.subr.mxu0 0.0
      %3381 = vmatpush1.msra.mxu0 %v3363
      %3382 = vmatprep.subr.mxu0 0.0
      %3383 = vmatpush1.msra.mxu0 %v3364
      %3384 = vmatprep.subr.mxu0 0.0
      %3385 = vmatpush1.msra.mxu0 %v3365
      %3386 = vmatprep.subr.mxu0 0.0
      %3387 = vmatpush1.msra.mxu0 %v3366
      %3388 = vmatprep.subr.mxu0 0.0
      %3389 = vmatpush1.msra.mxu0 %v3367
      %3390 = vmatprep.subr.mxu0 0.0
      %3391 = vmatpush1.msra.mxu0 %v3368
      %3392 = vmatprep.subr.mxu0 0.0
      %3393 = vmatpush1.msra.mxu0 %v3369
      %3394 = vmatprep.subr.mxu0 0.0
      %3395 = vmatpush1.msra.mxu0 %v3370
      %3396 = vmatprep.subr.mxu0 0.0
      %3397 = vmatpush1.msra.mxu0 %v3371
      %3398 = vmatprep.subr.mxu0 0.0
      %3399 = vmatpush1.msra.mxu0 %v3372
      %3400 = vmatprep.subr.mxu0 0.0
      %3401 = vmatpush1.msra.mxu0 %v3373
      %3402 = vmatprep.subr.mxu0 0.0
      %3403 = vmatpush1.msra.mxu0 %v3374
      %3404 = vmatprep.subr.mxu0 0.0
      %3405 = vmatpush1.msra.mxu0 %v3375
      %3406 = vmatprep.subr.mxu0 0.0
      %3407 = vmatpush1.msra.mxu0 %v3376
      %3408 = vmatprep.subr.mxu0 0.0
      %3409 = vmatpush1.msra.mxu0 %v3377
      %3410 = vmatprep.subr.mxu0 0.0
      %3411 = vmatpush1.msra.mxu0 0.0
      %3412 = vmatprep.subr.mxu0 0.0
      %3413 = vmatpush1.msra.mxu0 0.0
      %3414 = vmatprep.subr.mxu0 0.0
      %3415 = vmatpush1.msra.mxu0 0.0
      %3416 = vmatprep.subr.mxu0 0.0
      %3417 = vmatpush1.msra.mxu0 0.0
      %3418 = vmatprep.subr.mxu0 0.0
      %3419 = vmatpush1.msra.mxu0 0.0
      %3420 = vmatprep.subr.mxu0 0.0
      %3421 = vmatpush1.msra.mxu0 0.0
      %3422 = vmatprep.subr.mxu0 0.0
      %3423 = vmatpush1.msra.mxu0 0.0
      %3424 = vmatprep.subr.mxu0 0.0
      %3425 = vmatpush1.msra.mxu0 0.0
      %3426 = vmatprep.subr.mxu0 0.0
      %3427 = vmatpush1.msra.mxu0 0.0
      %3428 = vmatprep.subr.mxu0 0.0
      %3429 = vmatpush1.msra.mxu0 0.0
      %3430 = vmatprep.subr.mxu0 0.0
      %3431 = vmatpush1.msra.mxu0 0.0
      %3432 = vmatprep.subr.mxu0 0.0
      %3433 = vmatpush1.msra.mxu0 0.0
      %3434 = vmatprep.subr.mxu0 0.0
      %3435 = vmatpush1.msra.mxu0 0.0
      %3436 = vmatprep.subr.mxu0 0.0
      %3437 = vmatpush1.msra.mxu0 0.0
      %3438 = vmatprep.subr.mxu0 0.0
      %3439 = vmatpush1.msra.mxu0 0.0
      %3440 = vmatprep.subr.mxu0 0.0
      %3441 = vmatpush1.msra.mxu0 0.0
      %3442 = vmatprep.mubr.f32.mxu0 0.0
      %3443 = vmatmul.mubr.f32.gmra.mrb[0].mxu0 %v3329
      %v3444 = vpop.f32.mrb[0].mxu0
      %v3445 = vadd.f32 0.0, %v3444
      %v3446 = vpop.f32.mrb[0].mxu0
      %3447 = vmatprep.mubr.f32.mxu0 0.0
      %3448 = vmatmul.mubr.f32.gmra.mrb[0].mxu0 %v3330
      %v3449 = vpop.f32.mrb[0].mxu0
      %v3450 = vadd.f32 0.0, %v3449
      %v3451 = vpop.f32.mrb[0].mxu0
      %3452 = vmatprep.mubr.f32.mxu0 0.0
      %3453 = vmatmul.mubr.f32.gmra.mrb[0].mxu0 %v3331
      %v3454 = vpop.f32.mrb[0].mxu0
      %v3455 = vadd.f32 0.0, %v3454
      %v3456 = vpop.f32.mrb[0].mxu0
      %3457 = vmatprep.mubr.f32.mxu0 0.0
      %3458 = vmatmul.mubr.f32.gmra.mrb[0].mxu0 %v3332
      %v3459 = vpop.f32.mrb[0].mxu0
      %v3460 = vadd.f32 0.0, %v3459
      %v3461 = vpop.f32.mrb[0].mxu0
      %3462 = vmatprep.mubr.f32.mxu0 0.0
      %3463 = vmatmul.mubr.f32.gmra.mrb[0].mxu0 %v3333
      %v3464 = vpop.f32.mrb[0].mxu0
      %v3465 = vadd.f32 0.0, %v3464
      %v3466 = vpop.f32.mrb[0].mxu0
      %3467 = vmatprep.mubr.f32.mxu0 0.0
      %3468 = vmatmul.mubr.f32.gmra.mrb[0].mxu0 %v3334
      %v3469 = vpop.f32.mrb[0].mxu0
      %v3470 = vadd.f32 0.0, %v3469
      %v3471 = vpop.f32.mrb[0].mxu0
      %3472 = vmatprep.mubr.f32.mxu0 0.0
      %3473 = vmatmul.mubr.f32.gmra.mrb[0].mxu0 %v3335
      %v3474 = vpop.f32.mrb[0].mxu0
      %v3475 = vadd.f32 0.0, %v3474
      %v3476 = vpop.f32.mrb[0].mxu0
      %3477 = vmatprep.mubr.f32.mxu0 0.0
      %3478 = vmatmul.mubr.f32.gmra.mrb[0].mxu0 %v3336
      %v3479 = vpop.f32.mrb[0].mxu0
      %v3480 = vadd.f32 0.0, %v3479
      %v3481 = vpop.f32.mrb[0].mxu0
      %3482 = vmatprep.mubr.f32.mxu0 0.0
      %3483 = vmatmul.mubr.f32.gmra.mrb[0].mxu0 %v3337
      %v3484 = vpop.f32.mrb[0].mxu0
      %v3485 = vadd.f32 0.0, %v3484
      %v3486 = vpop.f32.mrb[0].mxu0
      %3487 = vmatprep.mubr.f32.mxu0 0.0
      %3488 = vmatmul.mubr.f32.gmra.mrb[0].mxu0 %v3338
      %v3489 = vpop.f32.mrb[0].mxu0
      %v3490 = vadd.f32 0.0, %v3489
      %v3491 = vpop.f32.mrb[0].mxu0
      %3492 = vmatprep.mubr.f32.mxu0 0.0
      %3493 = vmatmul.mubr.f32.gmra.mrb[0].mxu0 %v3339
      %v3494 = vpop.f32.mrb[0].mxu0
      %v3495 = vadd.f32 0.0, %v3494
      %v3496 = vpop.f32.mrb[0].mxu0
      %3497 = vmatprep.mubr.f32.mxu0 0.0
      %3498 = vmatmul.mubr.f32.gmra.mrb[0].mxu0 %v3340
      %v3499 = vpop.f32.mrb[0].mxu0
      %v3500 = vadd.f32 0.0, %v3499
      %v3501 = vpop.f32.mrb[0].mxu0
      %3502 = vmatprep.mubr.f32.mxu0 0.0
      %3503 = vmatmul.mubr.f32.gmra.mrb[0].mxu0 %v3341
      %v3504 = vpop.f32.mrb[0].mxu0
      %v3505 = vadd.f32 0.0, %v3504
      %v3506 = vpop.f32.mrb[0].mxu0
      %3507 = vmatprep.mubr.f32.mxu0 0.0
      %3508 = vmatmul.mubr.f32.gmra.mrb[0].mxu0 %v3342
      %v3509 = vpop.f32.mrb[0].mxu0
      %v3510 = vadd.f32 0.0, %v3509
      %v3511 = vpop.f32.mrb[0].mxu0
      %3512 = vmatprep.mubr.f32.mxu0 0.0
      %3513 = vmatmul.mubr.f32.gmra.mrb[0].mxu0 %v3343
      %v3514 = vpop.f32.mrb[0].mxu0
      %v3515 = vadd.f32 0.0, %v3514
      %v3516 = vpop.f32.mrb[0].mxu0
      %3517 = vmatprep.mubr.f32.mxu0 0.0
      %3518 = vmatmul.mubr.f32.gmra.mrb[0].mxu0 %v3344
      %v3519 = vpop.f32.mrb[0].mxu0
      %v3520 = vadd.f32 0.0, %v3519
      %v3521 = vpop.f32.mrb[0].mxu0
      %3522 = vmatprep.mubr.f32.mxu0 0.0
      %3523 = vmatmul.mubr.f32.gmra.mrb[0].mxu0 %v3345
      %v3524 = vpop.f32.mrb[0].mxu0
      %v3525 = vadd.f32 0.0, %v3524
      %v3526 = vpop.f32.mrb[0].mxu0
      %3527 = vmatprep.mubr.f32.mxu0 0.0
      %3528 = vmatmul.mubr.f32.gmra.mrb[0].mxu0 %v3346
      %v3529 = vpop.f32.mrb[0].mxu0
      %v3530 = vadd.f32 0.0, %v3529
      %v3531 = vpop.f32.mrb[0].mxu0
      %3532 = vmatprep.mubr.f32.mxu0 0.0
      %3533 = vmatmul.mubr.f32.gmra.mrb[0].mxu0 %v3347
      %v3534 = vpop.f32.mrb[0].mxu0
      %v3535 = vadd.f32 0.0, %v3534
      %v3536 = vpop.f32.mrb[0].mxu0
      %3537 = vmatprep.mubr.f32.mxu0 0.0
      %3538 = vmatmul.mubr.f32.gmra.mrb[0].mxu0 %v3348
      %v3539 = vpop.f32.mrb[0].mxu0
      %v3540 = vadd.f32 0.0, %v3539
      %v3541 = vpop.f32.mrb[0].mxu0
      %3542 = vmatprep.mubr.f32.mxu0 0.0
      %3543 = vmatmul.mubr.f32.gmra.mrb[0].mxu0 %v3349
      %v3544 = vpop.f32.mrb[0].mxu0
      %v3545 = vadd.f32 0.0, %v3544
      %v3546 = vpop.f32.mrb[0].mxu0
      %3547 = vmatprep.mubr.f32.mxu0 0.0
      %3548 = vmatmul.mubr.f32.gmra.mrb[0].mxu0 %v3350
      %v3549 = vpop.f32.mrb[0].mxu0
      %v3550 = vadd.f32 0.0, %v3549
      %v3551 = vpop.f32.mrb[0].mxu0
      %3552 = vmatprep.mubr.f32.mxu0 0.0
      %3553 = vmatmul.mubr.f32.gmra.mrb[0].mxu0 %v3351
      %v3554 = vpop.f32.mrb[0].mxu0
      %v3555 = vadd.f32 0.0, %v3554
      %v3556 = vpop.f32.mrb[0].mxu0
      %3557 = vmatprep.mubr.f32.mxu0 0.0
      %3558 = vmatmul.mubr.f32.gmra.mrb[0].mxu0 %v3352
      %v3559 = vpop.f32.mrb[0].mxu0
      %v3560 = vadd.f32 0.0, %v3559
      %v3561 = vpop.f32.mrb[0].mxu0
      %3562 = vmatprep.mubr.f32.mxu0 0.0
      %3563 = vmatmul.mubr.f32.gmra.mrb[0].mxu0 %v3353
      %v3564 = vpop.f32.mrb[0].mxu0
      %v3565 = vadd.f32 0.0, %v3564
      %v3566 = vpop.f32.mrb[0].mxu0
      %3567 = vmatprep.mubr.f32.mxu0 0.0
      %3568 = vmatmul.mubr.f32.gmra.mrb[0].mxu0 %v3354
      %v3569 = vpop.f32.mrb[0].mxu0
      %v3570 = vadd.f32 0.0, %v3569
      %v3571 = vpop.f32.mrb[0].mxu0
      %3572 = vmatprep.mubr.f32.mxu0 0.0
      %3573 = vmatmul.mubr.f32.gmra.mrb[0].mxu0 %v3355
      %v3574 = vpop.f32.mrb[0].mxu0
      %v3575 = vadd.f32 0.0, %v3574
      %v3576 = vpop.f32.mrb[0].mxu0
      %3577 = vmatprep.mubr.f32.mxu0 0.0
      %3578 = vmatmul.mubr.f32.gmra.mrb[0].mxu0 %v3356
      %v3579 = vpop.f32.mrb[0].mxu0
      %v3580 = vadd.f32 0.0, %v3579
      %v3581 = vpop.f32.mrb[0].mxu0
      %3582 = vmatprep.mubr.f32.mxu0 0.0
      %3583 = vmatmul.mubr.f32.gmra.mrb[0].mxu0 %v3357
      %v3584 = vpop.f32.mrb[0].mxu0
      %v3585 = vadd.f32 0.0, %v3584
      %v3586 = vpop.f32.mrb[0].mxu0
      %3587 = vmatprep.mubr.f32.mxu0 0.0
      %3588 = vmatmul.mubr.f32.gmra.mrb[0].mxu0 %v3358
      %v3589 = vpop.f32.mrb[0].mxu0
      %v3590 = vadd.f32 0.0, %v3589
      %v3591 = vpop.f32.mrb[0].mxu0
      %3592 = vmatprep.mubr.f32.mxu0 0.0
      %3593 = vmatmul.mubr.f32.gmra.mrb[0].mxu0 %v3359
      %v3594 = vpop.f32.mrb[0].mxu0
      %v3595 = vadd.f32 0.0, %v3594
      %v3596 = vpop.f32.mrb[0].mxu0
      %3597 = vmatprep.mubr.f32.mxu0 0.0
      %3598 = vmatmul.mubr.f32.gmra.mrb[0].mxu0 %v3360
      %v3599 = vpop.f32.mrb[0].mxu0
      %v3600 = vadd.f32 0.0, %v3599
      %v3601 = vpop.f32.mrb[0].mxu0
      %3602 = vdwg.mxu0
      %v3603 = vld [vmem:[%s224] sm:$0xff]
      %v3604 = vld [vmem:[%s224 + $0x8] sm:$0xff]
      %v3605 = vld [vmem:[%s224 + $0x10] sm:$0xff]
      %v3606 = vld [vmem:[%s224 + $0x18] sm:$0xff]
      %v3607 = vld [vmem:[%s224 + $0x20] sm:$0xff]
      %v3608 = vld [vmem:[%s224 + $0x28] sm:$0xff]
      %v3609 = vld [vmem:[%s224 + $0x30] sm:$0xff]
      %v3610 = vld [vmem:[%s224 + $0x38] sm:$0xff]
      %v3611 = vld [vmem:[%s224 + $0x40] sm:$0xff]
      %v3612 = vld [vmem:[%s224 + $0x48] sm:$0xff]
      %v3613 = vld [vmem:[%s224 + $0x50] sm:$0xff]
      %v3614 = vld [vmem:[%s224 + $0x58] sm:$0xff]
      %v3615 = vld [vmem:[%s224 + $0x60] sm:$0xff]
      %v3616 = vld [vmem:[%s224 + $0x68] sm:$0xff]
      %v3617 = vld [vmem:[%s224 + $0x70] sm:$0xff]
      %v3618 = vld [vmem:[%s224 + $0x78] sm:$0xff]
      %v3619 = vld [vmem:[%s224 + $0x80] sm:$0xff]
      %v3620 = vld [vmem:[%s224 + $0x88] sm:$0xff]
      %v3621 = vld [vmem:[%s224 + $0x90] sm:$0xff]
      %v3622 = vld [vmem:[%s224 + $0x98] sm:$0xff]
      %v3623 = vld [vmem:[%s224 + $0xa0] sm:$0xff]
      %v3624 = vld [vmem:[%s224 + $0xa8] sm:$0xff]
      %v3625 = vld [vmem:[%s224 + $0xb0] sm:$0xff]
      %v3626 = vld [vmem:[%s224 + $0xb8] sm:$0xff]
      %v3627 = vld [vmem:[%s224 + $0xc0] sm:$0xff]
      %v3628 = vld [vmem:[%s224 + $0xc8] sm:$0xff]
      %v3629 = vld [vmem:[%s224 + $0xd0] sm:$0xff]
      %v3630 = vld [vmem:[%s224 + $0xd8] sm:$0xff]
      %v3631 = vld [vmem:[%s224 + $0xe0] sm:$0xff]
      %v3632 = vld [vmem:[%s224 + $0xe8] sm:$0xff]
      %v3633 = vld [vmem:[%s224 + $0xf0] sm:$0xff]
      %v3634 = vld [vmem:[%s224 + $0xf8] sm:$0xff]
      %v3635 = vadd.f32 %v3603, %v3445
      %v3636 = vadd.f32 %v3604, %v3450
      %v3637 = vadd.f32 %v3605, %v3455
      %v3638 = vadd.f32 %v3606, %v3460
      %v3639 = vadd.f32 %v3607, %v3465
      %v3640 = vadd.f32 %v3608, %v3470
      %v3641 = vadd.f32 %v3609, %v3475
      %v3642 = vadd.f32 %v3610, %v3480
      %v3643 = vadd.f32 %v3611, %v3485
      %v3644 = vadd.f32 %v3612, %v3490
      %v3645 = vadd.f32 %v3613, %v3495
      %v3646 = vadd.f32 %v3614, %v3500
      %v3647 = vadd.f32 %v3615, %v3505
      %v3648 = vadd.f32 %v3616, %v3510
      %v3649 = vadd.f32 %v3617, %v3515
      %v3650 = vadd.f32 %v3618, %v3520
      %v3651 = vadd.f32 %v3619, %v3525
      %v3652 = vadd.f32 %v3620, %v3530
      %v3653 = vadd.f32 %v3621, %v3535
      %v3654 = vadd.f32 %v3622, %v3540
      %v3655 = vadd.f32 %v3623, %v3545
      %v3656 = vadd.f32 %v3624, %v3550
      %v3657 = vadd.f32 %v3625, %v3555
      %v3658 = vadd.f32 %v3626, %v3560
      %v3659 = vadd.f32 %v3627, %v3565
      %v3660 = vadd.f32 %v3628, %v3570
      %v3661 = vadd.f32 %v3629, %v3575
      %v3662 = vadd.f32 %v3630, %v3580
      %v3663 = vadd.f32 %v3631, %v3585
      %v3664 = vadd.f32 %v3632, %v3590
      %v3665 = vadd.f32 %v3633, %v3595
      %v3666 = vadd.f32 %v3634, %v3600
      %3667 = vst [vmem:[%s224] sm:$0xff] %v3635
      %3668 = vst [vmem:[%s224 + $0x8] sm:$0xff] %v3636
      %3669 = vst [vmem:[%s224 + $0x10] sm:$0xff] %v3637
      %3670 = vst [vmem:[%s224 + $0x18] sm:$0xff] %v3638
      %3671 = vst [vmem:[%s224 + $0x20] sm:$0xff] %v3639
      %3672 = vst [vmem:[%s224 + $0x28] sm:$0xff] %v3640
      %3673 = vst [vmem:[%s224 + $0x30] sm:$0xff] %v3641
      %3674 = vst [vmem:[%s224 + $0x38] sm:$0xff] %v3642
      %3675 = vst [vmem:[%s224 + $0x40] sm:$0xff] %v3643
      %3676 = vst [vmem:[%s224 + $0x48] sm:$0xff] %v3644
      %3677 = vst [vmem:[%s224 + $0x50] sm:$0xff] %v3645
      %3678 = vst [vmem:[%s224 + $0x58] sm:$0xff] %v3646
      %3679 = vst [vmem:[%s224 + $0x60] sm:$0xff] %v3647
      %3680 = vst [vmem:[%s224 + $0x68] sm:$0xff] %v3648
      %3681 = vst [vmem:[%s224 + $0x70] sm:$0xff] %v3649
      %3682 = vst [vmem:[%s224 + $0x78] sm:$0xff] %v3650
      %3683 = vst [vmem:[%s224 + $0x80] sm:$0xff] %v3651
      %3684 = vst [vmem:[%s224 + $0x88] sm:$0xff] %v3652
      %3685 = vst [vmem:[%s224 + $0x90] sm:$0xff] %v3653
      %3686 = vst [vmem:[%s224 + $0x98] sm:$0xff] %v3654
      %3687 = vst [vmem:[%s224 + $0xa0] sm:$0xff] %v3655
      %3688 = vst [vmem:[%s224 + $0xa8] sm:$0xff] %v3656
      %3689 = vst [vmem:[%s224 + $0xb0] sm:$0xff] %v3657
      %3690 = vst [vmem:[%s224 + $0xb8] sm:$0xff] %v3658
      %3691 = vst [vmem:[%s224 + $0xc0] sm:$0xff] %v3659
      %3692 = vst [vmem:[%s224 + $0xc8] sm:$0xff] %v3660
      %3693 = vst [vmem:[%s224 + $0xd0] sm:$0xff] %v3661
      %3694 = vst [vmem:[%s224 + $0xd8] sm:$0xff] %v3662
      %3695 = vst [vmem:[%s224 + $0xe0] sm:$0xff] %v3663
      %3696 = vst [vmem:[%s224 + $0xe8] sm:$0xff] %v3664
      %3697 = vst [vmem:[%s224 + $0xf0] sm:$0xff] %v3665
      %3698 = vst [vmem:[%s224 + $0xf8] sm:$0xff] %v3666
      %v3699 = vld [vmem:[#allocation2 + $0x28] sm:$0xff]
      %v3700 = vld [vmem:[#allocation2 + $0x30] sm:$0xff]
      %v3701 = vld [vmem:[#allocation2 + $0x38] sm:$0xff]
      %v3702 = vld [vmem:[#allocation2 + $0x40] sm:$0xff]
      %v3703 = vld [vmem:[#allocation2 + $0x48] sm:$0xff]
      %v3704 = vld [vmem:[#allocation2 + $0x50] sm:$0xff]
      %v3705 = vld [vmem:[#allocation2 + $0x58] sm:$0xff]
      %v3706 = vld [vmem:[#allocation2 + $0x60] sm:$0xff]
      %v3707 = vld [vmem:[#allocation2 + $0x68] sm:$0xff]
      %v3708 = vld [vmem:[#allocation2 + $0x70] sm:$0xff]
      %v3709 = vld [vmem:[#allocation2 + $0x78] sm:$0xff]
      %v3710 = vld [vmem:[#allocation2 + $0x80] sm:$0xff]
      %v3711 = vld [vmem:[#allocation2 + $0x88] sm:$0xff]
      %v3712 = vld [vmem:[#allocation2 + $0x90] sm:$0xff]
      %v3713 = vld [vmem:[#allocation2 + $0x98] sm:$0xff]
      %v3714 = vld [vmem:[#allocation2 + $0xa0] sm:$0xff]
      %v3715 = vld [vmem:[#allocation2 + $0xa8] sm:$0xff]
      %v3716 = vld [vmem:[#allocation2 + $0xb0] sm:$0xff]
      %v3717 = vld [vmem:[#allocation2 + $0xb8] sm:$0xff]
      %v3718 = vld [vmem:[#allocation2 + $0xc0] sm:$0xff]
      %v3719 = vld [vmem:[#allocation2 + $0xc8] sm:$0xff]
      %v3720 = vld [vmem:[#allocation2 + $0xd0] sm:$0xff]
      %v3721 = vld [vmem:[#allocation2 + $0xd8] sm:$0xff]
      %v3722 = vld [vmem:[#allocation2 + $0xe0] sm:$0xff]
      %v3723 = vld [vmem:[#allocation2 + $0xe8] sm:$0xff]
      %v3724 = vld [vmem:[#allocation2 + $0xf0] sm:$0xff]
      %v3725 = vld [vmem:[#allocation2 + $0xf8] sm:$0xff]
      %v3726 = vld [vmem:[#allocation2 + $0x100] sm:$0xff]
      %v3727 = vld [vmem:[#allocation2 + $0x108] sm:$0xff]
      %v3728 = vld [vmem:[#allocation2 + $0x110] sm:$0xff]
      %v3729 = vld [vmem:[#allocation2 + $0x118] sm:$0xff]
      %v3730 = vld [vmem:[#allocation2 + $0x120] sm:$0xff]
      %s3731 = scalar_lea.vmem %s3, 896
      %v3732 = vld [vmem:[%s3731] sm:$0xff]
      %v3733 = vld [vmem:[%s3731 + $0x8] sm:$0xff]
      %v3734 = vld [vmem:[%s3731 + $0x10] sm:$0xff]
      %v3735 = vld [vmem:[%s3731 + $0x18] sm:$0xff]
      %v3736 = vld [vmem:[%s3731 + $0x20] sm:$0xff]
      %v3737 = vld [vmem:[%s3731 + $0x28] sm:$0xff]
      %v3738 = vld [vmem:[%s3731 + $0x30] sm:$0xff]
      %v3739 = vld [vmem:[%s3731 + $0x38] sm:$0xff]
      %v3740 = vld [vmem:[%s3731 + $0x40] sm:$0xff]
      %v3741 = vld [vmem:[%s3731 + $0x48] sm:$0xff]
      %v3742 = vld [vmem:[%s3731 + $0x50] sm:$0xff]
      %v3743 = vld [vmem:[%s3731 + $0x58] sm:$0xff]
      %v3744 = vld [vmem:[%s3731 + $0x60] sm:$0xff]
      %v3745 = vld [vmem:[%s3731 + $0x68] sm:$0xff]
      %v3746 = vld [vmem:[%s3731 + $0x70] sm:$0xff]
      %v3747 = vld [vmem:[%s3731 + $0x78] sm:$0xff]
      %3748 = vmatprep.subr.mxu0 0.0
      %3749 = vmatpush1.msra.mxu0 %v3732
      %3750 = vmatprep.subr.mxu0 0.0
      %3751 = vmatpush1.msra.mxu0 %v3733
      %3752 = vmatprep.subr.mxu0 0.0
      %3753 = vmatpush1.msra.mxu0 %v3734
      %3754 = vmatprep.subr.mxu0 0.0
      %3755 = vmatpush1.msra.mxu0 %v3735
      %3756 = vmatprep.subr.mxu0 0.0
      %3757 = vmatpush1.msra.mxu0 %v3736
      %3758 = vmatprep.subr.mxu0 0.0
      %3759 = vmatpush1.msra.mxu0 %v3737
      %3760 = vmatprep.subr.mxu0 0.0
      %3761 = vmatpush1.msra.mxu0 %v3738
      %3762 = vmatprep.subr.mxu0 0.0
      %3763 = vmatpush1.msra.mxu0 %v3739
      %3764 = vmatprep.subr.mxu0 0.0
      %3765 = vmatpush1.msra.mxu0 %v3740
      %3766 = vmatprep.subr.mxu0 0.0
      %3767 = vmatpush1.msra.mxu0 %v3741
      %3768 = vmatprep.subr.mxu0 0.0
      %3769 = vmatpush1.msra.mxu0 %v3742
      %3770 = vmatprep.subr.mxu0 0.0
      %3771 = vmatpush1.msra.mxu0 %v3743
      %3772 = vmatprep.subr.mxu0 0.0
      %3773 = vmatpush1.msra.mxu0 %v3744
      %3774 = vmatprep.subr.mxu0 0.0
      %3775 = vmatpush1.msra.mxu0 %v3745
      %3776 = vmatprep.subr.mxu0 0.0
      %3777 = vmatpush1.msra.mxu0 %v3746
      %3778 = vmatprep.subr.mxu0 0.0
      %3779 = vmatpush1.msra.mxu0 %v3747
      %3780 = vmatprep.subr.mxu0 0.0
      %3781 = vmatpush1.msra.mxu0 0.0
      %3782 = vmatprep.subr.mxu0 0.0
      %3783 = vmatpush1.msra.mxu0 0.0
      %3784 = vmatprep.subr.mxu0 0.0
      %3785 = vmatpush1.msra.mxu0 0.0
      %3786 = vmatprep.subr.mxu0 0.0
      %3787 = vmatpush1.msra.mxu0 0.0
      %3788 = vmatprep.subr.mxu0 0.0
      %3789 = vmatpush1.msra.mxu0 0.0
      %3790 = vmatprep.subr.mxu0 0.0
      %3791 = vmatpush1.msra.mxu0 0.0
      %3792 = vmatprep.subr.mxu0 0.0
      %3793 = vmatpush1.msra.mxu0 0.0
      %3794 = vmatprep.subr.mxu0 0.0
      %3795 = vmatpush1.msra.mxu0 0.0
      %3796 = vmatprep.subr.mxu0 0.0
      %3797 = vmatpush1.msra.mxu0 0.0
      %3798 = vmatprep.subr.mxu0 0.0
      %3799 = vmatpush1.msra.mxu0 0.0
      %3800 = vmatprep.subr.mxu0 0.0
      %3801 = vmatpush1.msra.mxu0 0.0
      %3802 = vmatprep.subr.mxu0 0.0
      %3803 = vmatpush1.msra.mxu0 0.0
      %3804 = vmatprep.subr.mxu0 0.0
      %3805 = vmatpush1.msra.mxu0 0.0
      %3806 = vmatprep.subr.mxu0 0.0
      %3807 = vmatpush1.msra.mxu0 0.0
      %3808 = vmatprep.subr.mxu0 0.0
      %3809 = vmatpush1.msra.mxu0 0.0
      %3810 = vmatprep.subr.mxu0 0.0
      %3811 = vmatpush1.msra.mxu0 0.0
      %3812 = vmatprep.mubr.f32.mxu0 0.0
      %3813 = vmatmul.mubr.f32.gmra.mrb[0].mxu0 %v3699
      %v3814 = vpop.f32.mrb[0].mxu0
      %v3815 = vadd.f32 0.0, %v3814
      %v3816 = vpop.f32.mrb[0].mxu0
      %3817 = vmatprep.mubr.f32.mxu0 0.0
      %3818 = vmatmul.mubr.f32.gmra.mrb[0].mxu0 %v3700
      %v3819 = vpop.f32.mrb[0].mxu0
      %v3820 = vadd.f32 0.0, %v3819
      %v3821 = vpop.f32.mrb[0].mxu0
      %3822 = vmatprep.mubr.f32.mxu0 0.0
      %3823 = vmatmul.mubr.f32.gmra.mrb[0].mxu0 %v3701
      %v3824 = vpop.f32.mrb[0].mxu0
      %v3825 = vadd.f32 0.0, %v3824
      %v3826 = vpop.f32.mrb[0].mxu0
      %3827 = vmatprep.mubr.f32.mxu0 0.0
      %3828 = vmatmul.mubr.f32.gmra.mrb[0].mxu0 %v3702
      %v3829 = vpop.f32.mrb[0].mxu0
      %v3830 = vadd.f32 0.0, %v3829
      %v3831 = vpop.f32.mrb[0].mxu0
      %3832 = vmatprep.mubr.f32.mxu0 0.0
      %3833 = vmatmul.mubr.f32.gmra.mrb[0].mxu0 %v3703
      %v3834 = vpop.f32.mrb[0].mxu0
      %v3835 = vadd.f32 0.0, %v3834
      %v3836 = vpop.f32.mrb[0].mxu0
      %3837 = vmatprep.mubr.f32.mxu0 0.0
      %3838 = vmatmul.mubr.f32.gmra.mrb[0].mxu0 %v3704
      %v3839 = vpop.f32.mrb[0].mxu0
      %v3840 = vadd.f32 0.0, %v3839
      %v3841 = vpop.f32.mrb[0].mxu0
      %3842 = vmatprep.mubr.f32.mxu0 0.0
      %3843 = vmatmul.mubr.f32.gmra.mrb[0].mxu0 %v3705
      %v3844 = vpop.f32.mrb[0].mxu0
      %v3845 = vadd.f32 0.0, %v3844
      %v3846 = vpop.f32.mrb[0].mxu0
      %3847 = vmatprep.mubr.f32.mxu0 0.0
      %3848 = vmatmul.mubr.f32.gmra.mrb[0].mxu0 %v3706
      %v3849 = vpop.f32.mrb[0].mxu0
      %v3850 = vadd.f32 0.0, %v3849
      %v3851 = vpop.f32.mrb[0].mxu0
      %3852 = vmatprep.mubr.f32.mxu0 0.0
      %3853 = vmatmul.mubr.f32.gmra.mrb[0].mxu0 %v3707
      %v3854 = vpop.f32.mrb[0].mxu0
      %v3855 = vadd.f32 0.0, %v3854
      %v3856 = vpop.f32.mrb[0].mxu0
      %3857 = vmatprep.mubr.f32.mxu0 0.0
      %3858 = vmatmul.mubr.f32.gmra.mrb[0].mxu0 %v3708
      %v3859 = vpop.f32.mrb[0].mxu0
      %v3860 = vadd.f32 0.0, %v3859
      %v3861 = vpop.f32.mrb[0].mxu0
      %3862 = vmatprep.mubr.f32.mxu0 0.0
      %3863 = vmatmul.mubr.f32.gmra.mrb[0].mxu0 %v3709
      %v3864 = vpop.f32.mrb[0].mxu0
      %v3865 = vadd.f32 0.0, %v3864
      %v3866 = vpop.f32.mrb[0].mxu0
      %3867 = vmatprep.mubr.f32.mxu0 0.0
      %3868 = vmatmul.mubr.f32.gmra.mrb[0].mxu0 %v3710
      %v3869 = vpop.f32.mrb[0].mxu0
      %v3870 = vadd.f32 0.0, %v3869
      %v3871 = vpop.f32.mrb[0].mxu0
      %3872 = vmatprep.mubr.f32.mxu0 0.0
      %3873 = vmatmul.mubr.f32.gmra.mrb[0].mxu0 %v3711
      %v3874 = vpop.f32.mrb[0].mxu0
      %v3875 = vadd.f32 0.0, %v3874
      %v3876 = vpop.f32.mrb[0].mxu0
      %3877 = vmatprep.mubr.f32.mxu0 0.0
      %3878 = vmatmul.mubr.f32.gmra.mrb[0].mxu0 %v3712
      %v3879 = vpop.f32.mrb[0].mxu0
      %v3880 = vadd.f32 0.0, %v3879
      %v3881 = vpop.f32.mrb[0].mxu0
      %3882 = vmatprep.mubr.f32.mxu0 0.0
      %3883 = vmatmul.mubr.f32.gmra.mrb[0].mxu0 %v3713
      %v3884 = vpop.f32.mrb[0].mxu0
      %v3885 = vadd.f32 0.0, %v3884
      %v3886 = vpop.f32.mrb[0].mxu0
      %3887 = vmatprep.mubr.f32.mxu0 0.0
      %3888 = vmatmul.mubr.f32.gmra.mrb[0].mxu0 %v3714
      %v3889 = vpop.f32.mrb[0].mxu0
      %v3890 = vadd.f32 0.0, %v3889
      %v3891 = vpop.f32.mrb[0].mxu0
      %3892 = vmatprep.mubr.f32.mxu0 0.0
      %3893 = vmatmul.mubr.f32.gmra.mrb[0].mxu0 %v3715
      %v3894 = vpop.f32.mrb[0].mxu0
      %v3895 = vadd.f32 0.0, %v3894
      %v3896 = vpop.f32.mrb[0].mxu0
      %3897 = vmatprep.mubr.f32.mxu0 0.0
      %3898 = vmatmul.mubr.f32.gmra.mrb[0].mxu0 %v3716
      %v3899 = vpop.f32.mrb[0].mxu0
      %v3900 = vadd.f32 0.0, %v3899
      %v3901 = vpop.f32.mrb[0].mxu0
      %3902 = vmatprep.mubr.f32.mxu0 0.0
      %3903 = vmatmul.mubr.f32.gmra.mrb[0].mxu0 %v3717
      %v3904 = vpop.f32.mrb[0].mxu0
      %v3905 = vadd.f32 0.0, %v3904
      %v3906 = vpop.f32.mrb[0].mxu0
      %3907 = vmatprep.mubr.f32.mxu0 0.0
      %3908 = vmatmul.mubr.f32.gmra.mrb[0].mxu0 %v3718
      %v3909 = vpop.f32.mrb[0].mxu0
      %v3910 = vadd.f32 0.0, %v3909
      %v3911 = vpop.f32.mrb[0].mxu0
      %3912 = vmatprep.mubr.f32.mxu0 0.0
      %3913 = vmatmul.mubr.f32.gmra.mrb[0].mxu0 %v3719
      %v3914 = vpop.f32.mrb[0].mxu0
      %v3915 = vadd.f32 0.0, %v3914
      %v3916 = vpop.f32.mrb[0].mxu0
      %3917 = vmatprep.mubr.f32.mxu0 0.0
      %3918 = vmatmul.mubr.f32.gmra.mrb[0].mxu0 %v3720
      %v3919 = vpop.f32.mrb[0].mxu0
      %v3920 = vadd.f32 0.0, %v3919
      %v3921 = vpop.f32.mrb[0].mxu0
      %3922 = vmatprep.mubr.f32.mxu0 0.0
      %3923 = vmatmul.mubr.f32.gmra.mrb[0].mxu0 %v3721
      %v3924 = vpop.f32.mrb[0].mxu0
      %v3925 = vadd.f32 0.0, %v3924
      %v3926 = vpop.f32.mrb[0].mxu0
      %3927 = vmatprep.mubr.f32.mxu0 0.0
      %3928 = vmatmul.mubr.f32.gmra.mrb[0].mxu0 %v3722
      %v3929 = vpop.f32.mrb[0].mxu0
      %v3930 = vadd.f32 0.0, %v3929
      %v3931 = vpop.f32.mrb[0].mxu0
      %3932 = vmatprep.mubr.f32.mxu0 0.0
      %3933 = vmatmul.mubr.f32.gmra.mrb[0].mxu0 %v3723
      %v3934 = vpop.f32.mrb[0].mxu0
      %v3935 = vadd.f32 0.0, %v3934
      %v3936 = vpop.f32.mrb[0].mxu0
      %3937 = vmatprep.mubr.f32.mxu0 0.0
      %3938 = vmatmul.mubr.f32.gmra.mrb[0].mxu0 %v3724
      %v3939 = vpop.f32.mrb[0].mxu0
      %v3940 = vadd.f32 0.0, %v3939
      %v3941 = vpop.f32.mrb[0].mxu0
      %3942 = vmatprep.mubr.f32.mxu0 0.0
      %3943 = vmatmul.mubr.f32.gmra.mrb[0].mxu0 %v3725
      %v3944 = vpop.f32.mrb[0].mxu0
      %v3945 = vadd.f32 0.0, %v3944
      %v3946 = vpop.f32.mrb[0].mxu0
      %3947 = vmatprep.mubr.f32.mxu0 0.0
      %3948 = vmatmul.mubr.f32.gmra.mrb[0].mxu0 %v3726
      %v3949 = vpop.f32.mrb[0].mxu0
      %v3950 = vadd.f32 0.0, %v3949
      %v3951 = vpop.f32.mrb[0].mxu0
      %3952 = vmatprep.mubr.f32.mxu0 0.0
      %3953 = vmatmul.mubr.f32.gmra.mrb[0].mxu0 %v3727
      %v3954 = vpop.f32.mrb[0].mxu0
      %v3955 = vadd.f32 0.0, %v3954
      %v3956 = vpop.f32.mrb[0].mxu0
      %3957 = vmatprep.mubr.f32.mxu0 0.0
      %3958 = vmatmul.mubr.f32.gmra.mrb[0].mxu0 %v3728
      %v3959 = vpop.f32.mrb[0].mxu0
      %v3960 = vadd.f32 0.0, %v3959
      %v3961 = vpop.f32.mrb[0].mxu0
      %3962 = vmatprep.mubr.f32.mxu0 0.0
      %3963 = vmatmul.mubr.f32.gmra.mrb[0].mxu0 %v3729
      %v3964 = vpop.f32.mrb[0].mxu0
      %v3965 = vadd.f32 0.0, %v3964
      %v3966 = vpop.f32.mrb[0].mxu0
      %3967 = vmatprep.mubr.f32.mxu0 0.0
      %3968 = vmatmul.mubr.f32.gmra.mrb[0].mxu0 %v3730
      %v3969 = vpop.f32.mrb[0].mxu0
      %v3970 = vadd.f32 0.0, %v3969
      %v3971 = vpop.f32.mrb[0].mxu0
      %3972 = vdwg.mxu0
      %v3973 = vld [vmem:[%s224] sm:$0xff]
      %v3974 = vld [vmem:[%s224 + $0x8] sm:$0xff]
      %v3975 = vld [vmem:[%s224 + $0x10] sm:$0xff]
      %v3976 = vld [vmem:[%s224 + $0x18] sm:$0xff]
      %v3977 = vld [vmem:[%s224 + $0x20] sm:$0xff]
      %v3978 = vld [vmem:[%s224 + $0x28] sm:$0xff]
      %v3979 = vld [vmem:[%s224 + $0x30] sm:$0xff]
      %v3980 = vld [vmem:[%s224 + $0x38] sm:$0xff]
      %v3981 = vld [vmem:[%s224 + $0x40] sm:$0xff]
      %v3982 = vld [vmem:[%s224 + $0x48] sm:$0xff]
      %v3983 = vld [vmem:[%s224 + $0x50] sm:$0xff]
      %v3984 = vld [vmem:[%s224 + $0x58] sm:$0xff]
      %v3985 = vld [vmem:[%s224 + $0x60] sm:$0xff]
      %v3986 = vld [vmem:[%s224 + $0x68] sm:$0xff]
      %v3987 = vld [vmem:[%s224 + $0x70] sm:$0xff]
      %v3988 = vld [vmem:[%s224 + $0x78] sm:$0xff]
      %v3989 = vld [vmem:[%s224 + $0x80] sm:$0xff]
      %v3990 = vld [vmem:[%s224 + $0x88] sm:$0xff]
      %v3991 = vld [vmem:[%s224 + $0x90] sm:$0xff]
      %v3992 = vld [vmem:[%s224 + $0x98] sm:$0xff]
      %v3993 = vld [vmem:[%s224 + $0xa0] sm:$0xff]
      %v3994 = vld [vmem:[%s224 + $0xa8] sm:$0xff]
      %v3995 = vld [vmem:[%s224 + $0xb0] sm:$0xff]
      %v3996 = vld [vmem:[%s224 + $0xb8] sm:$0xff]
      %v3997 = vld [vmem:[%s224 + $0xc0] sm:$0xff]
      %v3998 = vld [vmem:[%s224 + $0xc8] sm:$0xff]
      %v3999 = vld [vmem:[%s224 + $0xd0] sm:$0xff]
      %v4000 = vld [vmem:[%s224 + $0xd8] sm:$0xff]
      %v4001 = vld [vmem:[%s224 + $0xe0] sm:$0xff]
      %v4002 = vld [vmem:[%s224 + $0xe8] sm:$0xff]
      %v4003 = vld [vmem:[%s224 + $0xf0] sm:$0xff]
      %v4004 = vld [vmem:[%s224 + $0xf8] sm:$0xff]
      %v4005 = vadd.f32 %v3973, %v3815
      %v4006 = vadd.f32 %v3974, %v3820
      %v4007 = vadd.f32 %v3975, %v3825
      %v4008 = vadd.f32 %v3976, %v3830
      %v4009 = vadd.f32 %v3977, %v3835
      %v4010 = vadd.f32 %v3978, %v3840
      %v4011 = vadd.f32 %v3979, %v3845
      %v4012 = vadd.f32 %v3980, %v3850
      %v4013 = vadd.f32 %v3981, %v3855
      %v4014 = vadd.f32 %v3982, %v3860
      %v4015 = vadd.f32 %v3983, %v3865
      %v4016 = vadd.f32 %v3984, %v3870
      %v4017 = vadd.f32 %v3985, %v3875
      %v4018 = vadd.f32 %v3986, %v3880
      %v4019 = vadd.f32 %v3987, %v3885
      %v4020 = vadd.f32 %v3988, %v3890
      %v4021 = vadd.f32 %v3989, %v3895
      %v4022 = vadd.f32 %v3990, %v3900
      %v4023 = vadd.f32 %v3991, %v3905
      %v4024 = vadd.f32 %v3992, %v3910
      %v4025 = vadd.f32 %v3993, %v3915
      %v4026 = vadd.f32 %v3994, %v3920
      %v4027 = vadd.f32 %v3995, %v3925
      %v4028 = vadd.f32 %v3996, %v3930
      %v4029 = vadd.f32 %v3997, %v3935
      %v4030 = vadd.f32 %v3998, %v3940
      %v4031 = vadd.f32 %v3999, %v3945
      %v4032 = vadd.f32 %v4000, %v3950
      %v4033 = vadd.f32 %v4001, %v3955
      %v4034 = vadd.f32 %v4002, %v3960
      %v4035 = vadd.f32 %v4003, %v3965
      %v4036 = vadd.f32 %v4004, %v3970
      %4037 = vst [vmem:[%s224] sm:$0xff] %v4005
      %4038 = vst [vmem:[%s224 + $0x8] sm:$0xff] %v4006
      %4039 = vst [vmem:[%s224 + $0x10] sm:$0xff] %v4007
      %4040 = vst [vmem:[%s224 + $0x18] sm:$0xff] %v4008
      %4041 = vst [vmem:[%s224 + $0x20] sm:$0xff] %v4009
      %4042 = vst [vmem:[%s224 + $0x28] sm:$0xff] %v4010
      %4043 = vst [vmem:[%s224 + $0x30] sm:$0xff] %v4011
      %4044 = vst [vmem:[%s224 + $0x38] sm:$0xff] %v4012
      %4045 = vst [vmem:[%s224 + $0x40] sm:$0xff] %v4013
      %4046 = vst [vmem:[%s224 + $0x48] sm:$0xff] %v4014
      %4047 = vst [vmem:[%s224 + $0x50] sm:$0xff] %v4015
      %4048 = vst [vmem:[%s224 + $0x58] sm:$0xff] %v4016
      %4049 = vst [vmem:[%s224 + $0x60] sm:$0xff] %v4017
      %4050 = vst [vmem:[%s224 + $0x68] sm:$0xff] %v4018
      %4051 = vst [vmem:[%s224 + $0x70] sm:$0xff] %v4019
      %4052 = vst [vmem:[%s224 + $0x78] sm:$0xff] %v4020
      %4053 = vst [vmem:[%s224 + $0x80] sm:$0xff] %v4021
      %4054 = vst [vmem:[%s224 + $0x88] sm:$0xff] %v4022
      %4055 = vst [vmem:[%s224 + $0x90] sm:$0xff] %v4023
      %4056 = vst [vmem:[%s224 + $0x98] sm:$0xff] %v4024
      %4057 = vst [vmem:[%s224 + $0xa0] sm:$0xff] %v4025
      %4058 = vst [vmem:[%s224 + $0xa8] sm:$0xff] %v4026
      %4059 = vst [vmem:[%s224 + $0xb0] sm:$0xff] %v4027
      %4060 = vst [vmem:[%s224 + $0xb8] sm:$0xff] %v4028
      %4061 = vst [vmem:[%s224 + $0xc0] sm:$0xff] %v4029
      %4062 = vst [vmem:[%s224 + $0xc8] sm:$0xff] %v4030
      %4063 = vst [vmem:[%s224 + $0xd0] sm:$0xff] %v4031
      %4064 = vst [vmem:[%s224 + $0xd8] sm:$0xff] %v4032
      %4065 = vst [vmem:[%s224 + $0xe0] sm:$0xff] %v4033
      %4066 = vst [vmem:[%s224 + $0xe8] sm:$0xff] %v4034
      %4067 = vst [vmem:[%s224 + $0xf0] sm:$0xff] %v4035
      %4068 = vst [vmem:[%s224 + $0xf8] sm:$0xff] %v4036
      %v4069 = vld [vmem:[#allocation2 + $0x29] sm:$0xff]
      %v4070 = vld [vmem:[#allocation2 + $0x31] sm:$0xff]
      %v4071 = vld [vmem:[#allocation2 + $0x39] sm:$0xff]
      %v4072 = vld [vmem:[#allocation2 + $0x41] sm:$0xff]
      %v4073 = vld [vmem:[#allocation2 + $0x49] sm:$0xff]
      %v4074 = vld [vmem:[#allocation2 + $0x51] sm:$0xff]
      %v4075 = vld [vmem:[#allocation2 + $0x59] sm:$0xff]
      %v4076 = vld [vmem:[#allocation2 + $0x61] sm:$0xff]
      %v4077 = vld [vmem:[#allocation2 + $0x69] sm:$0xff]
      %v4078 = vld [vmem:[#allocation2 + $0x71] sm:$0xff]
      %v4079 = vld [vmem:[#allocation2 + $0x79] sm:$0xff]
      %v4080 = vld [vmem:[#allocation2 + $0x81] sm:$0xff]
      %v4081 = vld [vmem:[#allocation2 + $0x89] sm:$0xff]
      %v4082 = vld [vmem:[#allocation2 + $0x91] sm:$0xff]
      %v4083 = vld [vmem:[#allocation2 + $0x99] sm:$0xff]
      %v4084 = vld [vmem:[#allocation2 + $0xa1] sm:$0xff]
      %v4085 = vld [vmem:[#allocation2 + $0xa9] sm:$0xff]
      %v4086 = vld [vmem:[#allocation2 + $0xb1] sm:$0xff]
      %v4087 = vld [vmem:[#allocation2 + $0xb9] sm:$0xff]
      %v4088 = vld [vmem:[#allocation2 + $0xc1] sm:$0xff]
      %v4089 = vld [vmem:[#allocation2 + $0xc9] sm:$0xff]
      %v4090 = vld [vmem:[#allocation2 + $0xd1] sm:$0xff]
      %v4091 = vld [vmem:[#allocation2 + $0xd9] sm:$0xff]
      %v4092 = vld [vmem:[#allocation2 + $0xe1] sm:$0xff]
      %v4093 = vld [vmem:[#allocation2 + $0xe9] sm:$0xff]
      %v4094 = vld [vmem:[#allocation2 + $0xf1] sm:$0xff]
      %v4095 = vld [vmem:[#allocation2 + $0xf9] sm:$0xff]
      %v4096 = vld [vmem:[#allocation2 + $0x101] sm:$0xff]
      %v4097 = vld [vmem:[#allocation2 + $0x109] sm:$0xff]
      %v4098 = vld [vmem:[#allocation2 + $0x111] sm:$0xff]
      %v4099 = vld [vmem:[#allocation2 + $0x119] sm:$0xff]
      %v4100 = vld [vmem:[#allocation2 + $0x121] sm:$0xff]
      %v4101 = vsel %vm1721, %v4069, 0.0
      %v4102 = vsel %vm1722, %v4070, 0.0
      %v4103 = vsel %vm1723, %v4071, 0.0
      %v4104 = vsel %vm1724, %v4072, 0.0
      %v4105 = vsel %vm1725, %v4073, 0.0
      %v4106 = vsel %vm1726, %v4074, 0.0
      %v4107 = vsel %vm1727, %v4075, 0.0
      %v4108 = vsel %vm1728, %v4076, 0.0
      %v4109 = vsel %vm1729, %v4077, 0.0
      %v4110 = vsel %vm1730, %v4078, 0.0
      %v4111 = vsel %vm1731, %v4079, 0.0
      %v4112 = vsel %vm1732, %v4080, 0.0
      %v4113 = vsel %vm1733, %v4081, 0.0
      %v4114 = vsel %vm1734, %v4082, 0.0
      %v4115 = vsel %vm1735, %v4083, 0.0
      %v4116 = vsel %vm1736, %v4084, 0.0
      %v4117 = vsel %vm1737, %v4085, 0.0
      %v4118 = vsel %vm1738, %v4086, 0.0
      %v4119 = vsel %vm1739, %v4087, 0.0
      %v4120 = vsel %vm1740, %v4088, 0.0
      %v4121 = vsel %vm1741, %v4089, 0.0
      %v4122 = vsel %vm1742, %v4090, 0.0
      %v4123 = vsel %vm1743, %v4091, 0.0
      %v4124 = vsel %vm1744, %v4092, 0.0
      %v4125 = vsel %vm1745, %v4093, 0.0
      %v4126 = vsel %vm1746, %v4094, 0.0
      %v4127 = vsel %vm1747, %v4095, 0.0
      %v4128 = vsel %vm1748, %v4096, 0.0
      %v4129 = vsel %vm1749, %v4097, 0.0
      %v4130 = vsel %vm1750, %v4098, 0.0
      %v4131 = vsel %vm1751, %v4099, 0.0
      %v4132 = vsel %vm1752, %v4100, 0.0
      %s4133 = scalar_lea.vmem %s3, 1024
      %v4134 = vld [vmem:[%s4133] sm:$0xff]
      %v4135 = vld [vmem:[%s4133 + $0x8] sm:$0xff]
      %v4136 = vld [vmem:[%s4133 + $0x10] sm:$0xff]
      %v4137 = vld [vmem:[%s4133 + $0x18] sm:$0xff]
      %v4138 = vld [vmem:[%s4133 + $0x20] sm:$0xff]
      %v4139 = vld [vmem:[%s4133 + $0x28] sm:$0xff]
      %v4140 = vld [vmem:[%s4133 + $0x30] sm:$0xff]
      %v4141 = vld [vmem:[%s4133 + $0x38] sm:$0xff]
      %v4142 = vld [vmem:[%s4133 + $0x40] sm:$0xff]
      %v4143 = vld [vmem:[%s4133 + $0x48] sm:$0xff]
      %v4144 = vld [vmem:[%s4133 + $0x50] sm:$0xff]
      %v4145 = vld [vmem:[%s4133 + $0x58] sm:$0xff]
      %v4146 = vld [vmem:[%s4133 + $0x60] sm:$0xff]
      %v4147 = vld [vmem:[%s4133 + $0x68] sm:$0xff]
      %v4148 = vld [vmem:[%s4133 + $0x70] sm:$0xff]
      %v4149 = vld [vmem:[%s4133 + $0x78] sm:$0xff]
      %4150 = vmatprep.subr.mxu0 0.0
      %4151 = vmatpush1.msra.mxu0 %v4134
      %4152 = vmatprep.subr.mxu0 0.0
      %4153 = vmatpush1.msra.mxu0 %v4135
      %4154 = vmatprep.subr.mxu0 0.0
      %4155 = vmatpush1.msra.mxu0 %v4136
      %4156 = vmatprep.subr.mxu0 0.0
      %4157 = vmatpush1.msra.mxu0 %v4137
      %4158 = vmatprep.subr.mxu0 0.0
      %4159 = vmatpush1.msra.mxu0 %v4138
      %4160 = vmatprep.subr.mxu0 0.0
      %4161 = vmatpush1.msra.mxu0 %v4139
      %4162 = vmatprep.subr.mxu0 0.0
      %4163 = vmatpush1.msra.mxu0 %v4140
      %4164 = vmatprep.subr.mxu0 0.0
      %4165 = vmatpush1.msra.mxu0 %v4141
      %4166 = vmatprep.subr.mxu0 0.0
      %4167 = vmatpush1.msra.mxu0 %v4142
      %4168 = vmatprep.subr.mxu0 0.0
      %4169 = vmatpush1.msra.mxu0 %v4143
      %4170 = vmatprep.subr.mxu0 0.0
      %4171 = vmatpush1.msra.mxu0 %v4144
      %4172 = vmatprep.subr.mxu0 0.0
      %4173 = vmatpush1.msra.mxu0 %v4145
      %4174 = vmatprep.subr.mxu0 0.0
      %4175 = vmatpush1.msra.mxu0 %v4146
      %4176 = vmatprep.subr.mxu0 0.0
      %4177 = vmatpush1.msra.mxu0 %v4147
      %4178 = vmatprep.subr.mxu0 0.0
      %4179 = vmatpush1.msra.mxu0 %v4148
      %4180 = vmatprep.subr.mxu0 0.0
      %4181 = vmatpush1.msra.mxu0 %v4149
      %4182 = vmatprep.subr.mxu0 0.0
      %4183 = vmatpush1.msra.mxu0 0.0
      %4184 = vmatprep.subr.mxu0 0.0
      %4185 = vmatpush1.msra.mxu0 0.0
      %4186 = vmatprep.subr.mxu0 0.0
      %4187 = vmatpush1.msra.mxu0 0.0
      %4188 = vmatprep.subr.mxu0 0.0
      %4189 = vmatpush1.msra.mxu0 0.0
      %4190 = vmatprep.subr.mxu0 0.0
      %4191 = vmatpush1.msra.mxu0 0.0
      %4192 = vmatprep.subr.mxu0 0.0
      %4193 = vmatpush1.msra.mxu0 0.0
      %4194 = vmatprep.subr.mxu0 0.0
      %4195 = vmatpush1.msra.mxu0 0.0
      %4196 = vmatprep.subr.mxu0 0.0
      %4197 = vmatpush1.msra.mxu0 0.0
      %4198 = vmatprep.subr.mxu0 0.0
      %4199 = vmatpush1.msra.mxu0 0.0
      %4200 = vmatprep.subr.mxu0 0.0
      %4201 = vmatpush1.msra.mxu0 0.0
      %4202 = vmatprep.subr.mxu0 0.0
      %4203 = vmatpush1.msra.mxu0 0.0
      %4204 = vmatprep.subr.mxu0 0.0
      %4205 = vmatpush1.msra.mxu0 0.0
      %4206 = vmatprep.subr.mxu0 0.0
      %4207 = vmatpush1.msra.mxu0 0.0
      %4208 = vmatprep.subr.mxu0 0.0
      %4209 = vmatpush1.msra.mxu0 0.0
      %4210 = vmatprep.subr.mxu0 0.0
      %4211 = vmatpush1.msra.mxu0 0.0
      %4212 = vmatprep.subr.mxu0 0.0
      %4213 = vmatpush1.msra.mxu0 0.0
      %4214 = vmatprep.mubr.f32.mxu0 0.0
      %4215 = vmatmul.mubr.f32.gmra.mrb[0].mxu0 %v4101
      %v4216 = vpop.f32.mrb[0].mxu0
      %v4217 = vadd.f32 0.0, %v4216
      %v4218 = vpop.f32.mrb[0].mxu0
      %4219 = vmatprep.mubr.f32.mxu0 0.0
      %4220 = vmatmul.mubr.f32.gmra.mrb[0].mxu0 %v4102
      %v4221 = vpop.f32.mrb[0].mxu0
      %v4222 = vadd.f32 0.0, %v4221
      %v4223 = vpop.f32.mrb[0].mxu0
      %4224 = vmatprep.mubr.f32.mxu0 0.0
      %4225 = vmatmul.mubr.f32.gmra.mrb[0].mxu0 %v4103
      %v4226 = vpop.f32.mrb[0].mxu0
      %v4227 = vadd.f32 0.0, %v4226
      %v4228 = vpop.f32.mrb[0].mxu0
      %4229 = vmatprep.mubr.f32.mxu0 0.0
      %4230 = vmatmul.mubr.f32.gmra.mrb[0].mxu0 %v4104
      %v4231 = vpop.f32.mrb[0].mxu0
      %v4232 = vadd.f32 0.0, %v4231
      %v4233 = vpop.f32.mrb[0].mxu0
      %4234 = vmatprep.mubr.f32.mxu0 0.0
      %4235 = vmatmul.mubr.f32.gmra.mrb[0].mxu0 %v4105
      %v4236 = vpop.f32.mrb[0].mxu0
      %v4237 = vadd.f32 0.0, %v4236
      %v4238 = vpop.f32.mrb[0].mxu0
      %4239 = vmatprep.mubr.f32.mxu0 0.0
      %4240 = vmatmul.mubr.f32.gmra.mrb[0].mxu0 %v4106
      %v4241 = vpop.f32.mrb[0].mxu0
      %v4242 = vadd.f32 0.0, %v4241
      %v4243 = vpop.f32.mrb[0].mxu0
      %4244 = vmatprep.mubr.f32.mxu0 0.0
      %4245 = vmatmul.mubr.f32.gmra.mrb[0].mxu0 %v4107
      %v4246 = vpop.f32.mrb[0].mxu0
      %v4247 = vadd.f32 0.0, %v4246
      %v4248 = vpop.f32.mrb[0].mxu0
      %4249 = vmatprep.mubr.f32.mxu0 0.0
      %4250 = vmatmul.mubr.f32.gmra.mrb[0].mxu0 %v4108
      %v4251 = vpop.f32.mrb[0].mxu0
      %v4252 = vadd.f32 0.0, %v4251
      %v4253 = vpop.f32.mrb[0].mxu0
      %4254 = vmatprep.mubr.f32.mxu0 0.0
      %4255 = vmatmul.mubr.f32.gmra.mrb[0].mxu0 %v4109
      %v4256 = vpop.f32.mrb[0].mxu0
      %v4257 = vadd.f32 0.0, %v4256
      %v4258 = vpop.f32.mrb[0].mxu0
      %4259 = vmatprep.mubr.f32.mxu0 0.0
      %4260 = vmatmul.mubr.f32.gmra.mrb[0].mxu0 %v4110
      %v4261 = vpop.f32.mrb[0].mxu0
      %v4262 = vadd.f32 0.0, %v4261
      %v4263 = vpop.f32.mrb[0].mxu0
      %4264 = vmatprep.mubr.f32.mxu0 0.0
      %4265 = vmatmul.mubr.f32.gmra.mrb[0].mxu0 %v4111
      %v4266 = vpop.f32.mrb[0].mxu0
      %v4267 = vadd.f32 0.0, %v4266
      %v4268 = vpop.f32.mrb[0].mxu0
      %4269 = vmatprep.mubr.f32.mxu0 0.0
      %4270 = vmatmul.mubr.f32.gmra.mrb[0].mxu0 %v4112
      %v4271 = vpop.f32.mrb[0].mxu0
      %v4272 = vadd.f32 0.0, %v4271
      %v4273 = vpop.f32.mrb[0].mxu0
      %4274 = vmatprep.mubr.f32.mxu0 0.0
      %4275 = vmatmul.mubr.f32.gmra.mrb[0].mxu0 %v4113
      %v4276 = vpop.f32.mrb[0].mxu0
      %v4277 = vadd.f32 0.0, %v4276
      %v4278 = vpop.f32.mrb[0].mxu0
      %4279 = vmatprep.mubr.f32.mxu0 0.0
      %4280 = vmatmul.mubr.f32.gmra.mrb[0].mxu0 %v4114
      %v4281 = vpop.f32.mrb[0].mxu0
      %v4282 = vadd.f32 0.0, %v4281
      %v4283 = vpop.f32.mrb[0].mxu0
      %4284 = vmatprep.mubr.f32.mxu0 0.0
      %4285 = vmatmul.mubr.f32.gmra.mrb[0].mxu0 %v4115
      %v4286 = vpop.f32.mrb[0].mxu0
      %v4287 = vadd.f32 0.0, %v4286
      %v4288 = vpop.f32.mrb[0].mxu0
      %4289 = vmatprep.mubr.f32.mxu0 0.0
      %4290 = vmatmul.mubr.f32.gmra.mrb[0].mxu0 %v4116
      %v4291 = vpop.f32.mrb[0].mxu0
      %v4292 = vadd.f32 0.0, %v4291
      %v4293 = vpop.f32.mrb[0].mxu0
      %4294 = vmatprep.mubr.f32.mxu0 0.0
      %4295 = vmatmul.mubr.f32.gmra.mrb[0].mxu0 %v4117
      %v4296 = vpop.f32.mrb[0].mxu0
      %v4297 = vadd.f32 0.0, %v4296
      %v4298 = vpop.f32.mrb[0].mxu0
      %4299 = vmatprep.mubr.f32.mxu0 0.0
      %4300 = vmatmul.mubr.f32.gmra.mrb[0].mxu0 %v4118
      %v4301 = vpop.f32.mrb[0].mxu0
      %v4302 = vadd.f32 0.0, %v4301
      %v4303 = vpop.f32.mrb[0].mxu0
      %4304 = vmatprep.mubr.f32.mxu0 0.0
      %4305 = vmatmul.mubr.f32.gmra.mrb[0].mxu0 %v4119
      %v4306 = vpop.f32.mrb[0].mxu0
      %v4307 = vadd.f32 0.0, %v4306
      %v4308 = vpop.f32.mrb[0].mxu0
      %4309 = vmatprep.mubr.f32.mxu0 0.0
      %4310 = vmatmul.mubr.f32.gmra.mrb[0].mxu0 %v4120
      %v4311 = vpop.f32.mrb[0].mxu0
      %v4312 = vadd.f32 0.0, %v4311
      %v4313 = vpop.f32.mrb[0].mxu0
      %4314 = vmatprep.mubr.f32.mxu0 0.0
      %4315 = vmatmul.mubr.f32.gmra.mrb[0].mxu0 %v4121
      %v4316 = vpop.f32.mrb[0].mxu0
      %v4317 = vadd.f32 0.0, %v4316
      %v4318 = vpop.f32.mrb[0].mxu0
      %4319 = vmatprep.mubr.f32.mxu0 0.0
      %4320 = vmatmul.mubr.f32.gmra.mrb[0].mxu0 %v4122
      %v4321 = vpop.f32.mrb[0].mxu0
      %v4322 = vadd.f32 0.0, %v4321
      %v4323 = vpop.f32.mrb[0].mxu0
      %4324 = vmatprep.mubr.f32.mxu0 0.0
      %4325 = vmatmul.mubr.f32.gmra.mrb[0].mxu0 %v4123
      %v4326 = vpop.f32.mrb[0].mxu0
      %v4327 = vadd.f32 0.0, %v4326
      %v4328 = vpop.f32.mrb[0].mxu0
      %4329 = vmatprep.mubr.f32.mxu0 0.0
      %4330 = vmatmul.mubr.f32.gmra.mrb[0].mxu0 %v4124
      %v4331 = vpop.f32.mrb[0].mxu0
      %v4332 = vadd.f32 0.0, %v4331
      %v4333 = vpop.f32.mrb[0].mxu0
      %4334 = vmatprep.mubr.f32.mxu0 0.0
      %4335 = vmatmul.mubr.f32.gmra.mrb[0].mxu0 %v4125
      %v4336 = vpop.f32.mrb[0].mxu0
      %v4337 = vadd.f32 0.0, %v4336
      %v4338 = vpop.f32.mrb[0].mxu0
      %4339 = vmatprep.mubr.f32.mxu0 0.0
      %4340 = vmatmul.mubr.f32.gmra.mrb[0].mxu0 %v4126
      %v4341 = vpop.f32.mrb[0].mxu0
      %v4342 = vadd.f32 0.0, %v4341
      %v4343 = vpop.f32.mrb[0].mxu0
      %4344 = vmatprep.mubr.f32.mxu0 0.0
      %4345 = vmatmul.mubr.f32.gmra.mrb[0].mxu0 %v4127
      %v4346 = vpop.f32.mrb[0].mxu0
      %v4347 = vadd.f32 0.0, %v4346
      %v4348 = vpop.f32.mrb[0].mxu0
      %4349 = vmatprep.mubr.f32.mxu0 0.0
      %4350 = vmatmul.mubr.f32.gmra.mrb[0].mxu0 %v4128
      %v4351 = vpop.f32.mrb[0].mxu0
      %v4352 = vadd.f32 0.0, %v4351
      %v4353 = vpop.f32.mrb[0].mxu0
      %4354 = vmatprep.mubr.f32.mxu0 0.0
      %4355 = vmatmul.mubr.f32.gmra.mrb[0].mxu0 %v4129
      %v4356 = vpop.f32.mrb[0].mxu0
      %v4357 = vadd.f32 0.0, %v4356
      %v4358 = vpop.f32.mrb[0].mxu0
      %4359 = vmatprep.mubr.f32.mxu0 0.0
      %4360 = vmatmul.mubr.f32.gmra.mrb[0].mxu0 %v4130
      %v4361 = vpop.f32.mrb[0].mxu0
      %v4362 = vadd.f32 0.0, %v4361
      %v4363 = vpop.f32.mrb[0].mxu0
      %4364 = vmatprep.mubr.f32.mxu0 0.0
      %4365 = vmatmul.mubr.f32.gmra.mrb[0].mxu0 %v4131
      %v4366 = vpop.f32.mrb[0].mxu0
      %v4367 = vadd.f32 0.0, %v4366
      %v4368 = vpop.f32.mrb[0].mxu0
      %4369 = vmatprep.mubr.f32.mxu0 0.0
      %4370 = vmatmul.mubr.f32.gmra.mrb[0].mxu0 %v4132
      %v4371 = vpop.f32.mrb[0].mxu0
      %v4372 = vadd.f32 0.0, %v4371
      %v4373 = vpop.f32.mrb[0].mxu0
      %4374 = vdwg.mxu0
      %v4375 = vld [vmem:[%s224] sm:$0xff]
      %v4376 = vld [vmem:[%s224 + $0x8] sm:$0xff]
      %v4377 = vld [vmem:[%s224 + $0x10] sm:$0xff]
      %v4378 = vld [vmem:[%s224 + $0x18] sm:$0xff]
      %v4379 = vld [vmem:[%s224 + $0x20] sm:$0xff]
      %v4380 = vld [vmem:[%s224 + $0x28] sm:$0xff]
      %v4381 = vld [vmem:[%s224 + $0x30] sm:$0xff]
      %v4382 = vld [vmem:[%s224 + $0x38] sm:$0xff]
      %v4383 = vld [vmem:[%s224 + $0x40] sm:$0xff]
      %v4384 = vld [vmem:[%s224 + $0x48] sm:$0xff]
      %v4385 = vld [vmem:[%s224 + $0x50] sm:$0xff]
      %v4386 = vld [vmem:[%s224 + $0x58] sm:$0xff]
      %v4387 = vld [vmem:[%s224 + $0x60] sm:$0xff]
      %v4388 = vld [vmem:[%s224 + $0x68] sm:$0xff]
      %v4389 = vld [vmem:[%s224 + $0x70] sm:$0xff]
      %v4390 = vld [vmem:[%s224 + $0x78] sm:$0xff]
      %v4391 = vld [vmem:[%s224 + $0x80] sm:$0xff]
      %v4392 = vld [vmem:[%s224 + $0x88] sm:$0xff]
      %v4393 = vld [vmem:[%s224 + $0x90] sm:$0xff]
      %v4394 = vld [vmem:[%s224 + $0x98] sm:$0xff]
      %v4395 = vld [vmem:[%s224 + $0xa0] sm:$0xff]
      %v4396 = vld [vmem:[%s224 + $0xa8] sm:$0xff]
      %v4397 = vld [vmem:[%s224 + $0xb0] sm:$0xff]
      %v4398 = vld [vmem:[%s224 + $0xb8] sm:$0xff]
      %v4399 = vld [vmem:[%s224 + $0xc0] sm:$0xff]
      %v4400 = vld [vmem:[%s224 + $0xc8] sm:$0xff]
      %v4401 = vld [vmem:[%s224 + $0xd0] sm:$0xff]
      %v4402 = vld [vmem:[%s224 + $0xd8] sm:$0xff]
      %v4403 = vld [vmem:[%s224 + $0xe0] sm:$0xff]
      %v4404 = vld [vmem:[%s224 + $0xe8] sm:$0xff]
      %v4405 = vld [vmem:[%s224 + $0xf0] sm:$0xff]
      %v4406 = vld [vmem:[%s224 + $0xf8] sm:$0xff]
      %v4407 = vadd.f32 %v4375, %v4217
      %v4408 = vadd.f32 %v4376, %v4222
      %v4409 = vadd.f32 %v4377, %v4227
      %v4410 = vadd.f32 %v4378, %v4232
      %v4411 = vadd.f32 %v4379, %v4237
      %v4412 = vadd.f32 %v4380, %v4242
      %v4413 = vadd.f32 %v4381, %v4247
      %v4414 = vadd.f32 %v4382, %v4252
      %v4415 = vadd.f32 %v4383, %v4257
      %v4416 = vadd.f32 %v4384, %v4262
      %v4417 = vadd.f32 %v4385, %v4267
      %v4418 = vadd.f32 %v4386, %v4272
      %v4419 = vadd.f32 %v4387, %v4277
      %v4420 = vadd.f32 %v4388, %v4282
      %v4421 = vadd.f32 %v4389, %v4287
      %v4422 = vadd.f32 %v4390, %v4292
      %v4423 = vadd.f32 %v4391, %v4297
      %v4424 = vadd.f32 %v4392, %v4302
      %v4425 = vadd.f32 %v4393, %v4307
      %v4426 = vadd.f32 %v4394, %v4312
      %v4427 = vadd.f32 %v4395, %v4317
      %v4428 = vadd.f32 %v4396, %v4322
      %v4429 = vadd.f32 %v4397, %v4327
      %v4430 = vadd.f32 %v4398, %v4332
      %v4431 = vadd.f32 %v4399, %v4337
      %v4432 = vadd.f32 %v4400, %v4342
      %v4433 = vadd.f32 %v4401, %v4347
      %v4434 = vadd.f32 %v4402, %v4352
      %v4435 = vadd.f32 %v4403, %v4357
      %v4436 = vadd.f32 %v4404, %v4362
      %v4437 = vadd.f32 %v4405, %v4367
      %v4438 = vadd.f32 %v4406, %v4372
      %4439 = vst [vmem:[%s224] sm:$0xff] %v4407
      %4440 = vst [vmem:[%s224 + $0x8] sm:$0xff] %v4408
      %4441 = vst [vmem:[%s224 + $0x10] sm:$0xff] %v4409
      %4442 = vst [vmem:[%s224 + $0x18] sm:$0xff] %v4410
      %4443 = vst [vmem:[%s224 + $0x20] sm:$0xff] %v4411
      %4444 = vst [vmem:[%s224 + $0x28] sm:$0xff] %v4412
      %4445 = vst [vmem:[%s224 + $0x30] sm:$0xff] %v4413
      %4446 = vst [vmem:[%s224 + $0x38] sm:$0xff] %v4414
      %4447 = vst [vmem:[%s224 + $0x40] sm:$0xff] %v4415
      %4448 = vst [vmem:[%s224 + $0x48] sm:$0xff] %v4416
      %4449 = vst [vmem:[%s224 + $0x50] sm:$0xff] %v4417
      %4450 = vst [vmem:[%s224 + $0x58] sm:$0xff] %v4418
      %4451 = vst [vmem:[%s224 + $0x60] sm:$0xff] %v4419
      %4452 = vst [vmem:[%s224 + $0x68] sm:$0xff] %v4420
      %4453 = vst [vmem:[%s224 + $0x70] sm:$0xff] %v4421
      %4454 = vst [vmem:[%s224 + $0x78] sm:$0xff] %v4422
      %4455 = vst [vmem:[%s224 + $0x80] sm:$0xff] %v4423
      %4456 = vst [vmem:[%s224 + $0x88] sm:$0xff] %v4424
      %4457 = vst [vmem:[%s224 + $0x90] sm:$0xff] %v4425
      %4458 = vst [vmem:[%s224 + $0x98] sm:$0xff] %v4426
      %4459 = vst [vmem:[%s224 + $0xa0] sm:$0xff] %v4427
      %4460 = vst [vmem:[%s224 + $0xa8] sm:$0xff] %v4428
      %4461 = vst [vmem:[%s224 + $0xb0] sm:$0xff] %v4429
      %4462 = vst [vmem:[%s224 + $0xb8] sm:$0xff] %v4430
      %4463 = vst [vmem:[%s224 + $0xc0] sm:$0xff] %v4431
      %4464 = vst [vmem:[%s224 + $0xc8] sm:$0xff] %v4432
      %4465 = vst [vmem:[%s224 + $0xd0] sm:$0xff] %v4433
      %4466 = vst [vmem:[%s224 + $0xd8] sm:$0xff] %v4434
      %4467 = vst [vmem:[%s224 + $0xe0] sm:$0xff] %v4435
      %4468 = vst [vmem:[%s224 + $0xe8] sm:$0xff] %v4436
      %4469 = vst [vmem:[%s224 + $0xf0] sm:$0xff] %v4437
      %4470 = vst [vmem:[%s224 + $0xf8] sm:$0xff] %v4438
      %v4471 = vld [vmem:[%s224] sm:$0xff]
      %v4472 = vld [vmem:[%s224 + $0x8] sm:$0xff]
      %v4473 = vld [vmem:[%s224 + $0x10] sm:$0xff]
      %v4474 = vld [vmem:[%s224 + $0x18] sm:$0xff]
      %v4475 = vld [vmem:[%s224 + $0x20] sm:$0xff]
      %v4476 = vld [vmem:[%s224 + $0x28] sm:$0xff]
      %v4477 = vld [vmem:[%s224 + $0x30] sm:$0xff]
      %v4478 = vld [vmem:[%s224 + $0x38] sm:$0xff]
      %v4479 = vld [vmem:[%s224 + $0x40] sm:$0xff]
      %v4480 = vld [vmem:[%s224 + $0x48] sm:$0xff]
      %v4481 = vld [vmem:[%s224 + $0x50] sm:$0xff]
      %v4482 = vld [vmem:[%s224 + $0x58] sm:$0xff]
      %v4483 = vld [vmem:[%s224 + $0x60] sm:$0xff]
      %v4484 = vld [vmem:[%s224 + $0x68] sm:$0xff]
      %v4485 = vld [vmem:[%s224 + $0x70] sm:$0xff]
      %v4486 = vld [vmem:[%s224 + $0x78] sm:$0xff]
      %v4487 = vld [vmem:[%s224 + $0x80] sm:$0xff]
      %v4488 = vld [vmem:[%s224 + $0x88] sm:$0xff]
      %v4489 = vld [vmem:[%s224 + $0x90] sm:$0xff]
      %v4490 = vld [vmem:[%s224 + $0x98] sm:$0xff]
      %v4491 = vld [vmem:[%s224 + $0xa0] sm:$0xff]
      %v4492 = vld [vmem:[%s224 + $0xa8] sm:$0xff]
      %v4493 = vld [vmem:[%s224 + $0xb0] sm:$0xff]
      %v4494 = vld [vmem:[%s224 + $0xb8] sm:$0xff]
      %v4495 = vld [vmem:[%s224 + $0xc0] sm:$0xff]
      %v4496 = vld [vmem:[%s224 + $0xc8] sm:$0xff]
      %v4497 = vld [vmem:[%s224 + $0xd0] sm:$0xff]
      %v4498 = vld [vmem:[%s224 + $0xd8] sm:$0xff]
      %v4499 = vld [vmem:[%s224 + $0xe0] sm:$0xff]
      %v4500 = vld [vmem:[%s224 + $0xe8] sm:$0xff]
      %v4501 = vld [vmem:[%s224 + $0xf0] sm:$0xff]
      %v4502 = vld [vmem:[%s224 + $0xf8] sm:$0xff]
      %v4503 = vld [vmem:[%s4] sm:$0x1]
      %v4505 = vlaneseq
      %v4506 = vshrl.u32 %v4505, 7
      %v4507 = vsub.s32 0, %v4506
      %v4508 = vrot.slane %v4503, %v4507
      %v4510 = vadd.f32 %v4471, %v4508
      %v4511 = vadd.f32 %v4472, %v4508
      %v4512 = vadd.f32 %v4473, %v4508
      %v4513 = vadd.f32 %v4474, %v4508
      %v4514 = vadd.f32 %v4475, %v4508
      %v4515 = vadd.f32 %v4476, %v4508
      %v4516 = vadd.f32 %v4477, %v4508
      %v4517 = vadd.f32 %v4478, %v4508
      %v4518 = vadd.f32 %v4479, %v4508
      %v4519 = vadd.f32 %v4480, %v4508
      %v4520 = vadd.f32 %v4481, %v4508
      %v4521 = vadd.f32 %v4482, %v4508
      %v4522 = vadd.f32 %v4483, %v4508
      %v4523 = vadd.f32 %v4484, %v4508
      %v4524 = vadd.f32 %v4485, %v4508
      %v4525 = vadd.f32 %v4486, %v4508
      %v4526 = vadd.f32 %v4487, %v4508
      %v4527 = vadd.f32 %v4488, %v4508
      %v4528 = vadd.f32 %v4489, %v4508
      %v4529 = vadd.f32 %v4490, %v4508
      %v4530 = vadd.f32 %v4491, %v4508
      %v4531 = vadd.f32 %v4492, %v4508
      %v4532 = vadd.f32 %v4493, %v4508
      %v4533 = vadd.f32 %v4494, %v4508
      %v4534 = vadd.f32 %v4495, %v4508
      %v4535 = vadd.f32 %v4496, %v4508
      %v4536 = vadd.f32 %v4497, %v4508
      %v4537 = vadd.f32 %v4498, %v4508
      %v4538 = vadd.f32 %v4499, %v4508
      %v4539 = vadd.f32 %v4500, %v4508
      %v4540 = vadd.f32 %v4501, %v4508
      %v4541 = vadd.f32 %v4502, %v4508
      %4542 = vst [vmem:[%s224] sm:$0xff] %v4510
      %4543 = vst [vmem:[%s224 + $0x8] sm:$0xff] %v4511
      %4544 = vst [vmem:[%s224 + $0x10] sm:$0xff] %v4512
      %4545 = vst [vmem:[%s224 + $0x18] sm:$0xff] %v4513
      %4546 = vst [vmem:[%s224 + $0x20] sm:$0xff] %v4514
      %4547 = vst [vmem:[%s224 + $0x28] sm:$0xff] %v4515
      %4548 = vst [vmem:[%s224 + $0x30] sm:$0xff] %v4516
      %4549 = vst [vmem:[%s224 + $0x38] sm:$0xff] %v4517
      %4550 = vst [vmem:[%s224 + $0x40] sm:$0xff] %v4518
      %4551 = vst [vmem:[%s224 + $0x48] sm:$0xff] %v4519
      %4552 = vst [vmem:[%s224 + $0x50] sm:$0xff] %v4520
      %4553 = vst [vmem:[%s224 + $0x58] sm:$0xff] %v4521
      %4554 = vst [vmem:[%s224 + $0x60] sm:$0xff] %v4522
      %4555 = vst [vmem:[%s224 + $0x68] sm:$0xff] %v4523
      %4556 = vst [vmem:[%s224 + $0x70] sm:$0xff] %v4524
      %4557 = vst [vmem:[%s224 + $0x78] sm:$0xff] %v4525
      %4558 = vst [vmem:[%s224 + $0x80] sm:$0xff] %v4526
      %4559 = vst [vmem:[%s224 + $0x88] sm:$0xff] %v4527
      %4560 = vst [vmem:[%s224 + $0x90] sm:$0xff] %v4528
      %4561 = vst [vmem:[%s224 + $0x98] sm:$0xff] %v4529
      %4562 = vst [vmem:[%s224 + $0xa0] sm:$0xff] %v4530
      %4563 = vst [vmem:[%s224 + $0xa8] sm:$0xff] %v4531
      %4564 = vst [vmem:[%s224 + $0xb0] sm:$0xff] %v4532
      %4565 = vst [vmem:[%s224 + $0xb8] sm:$0xff] %v4533
      %4566 = vst [vmem:[%s224 + $0xc0] sm:$0xff] %v4534
      %4567 = vst [vmem:[%s224 + $0xc8] sm:$0xff] %v4535
      %4568 = vst [vmem:[%s224 + $0xd0] sm:$0xff] %v4536
      %4569 = vst [vmem:[%s224 + $0xd8] sm:$0xff] %v4537
      %4570 = vst [vmem:[%s224 + $0xe0] sm:$0xff] %v4538
      %4571 = vst [vmem:[%s224 + $0xe8] sm:$0xff] %v4539
      %4572 = vst [vmem:[%s224 + $0xf0] sm:$0xff] %v4540
      %4573 = vst [vmem:[%s224 + $0xf8] sm:$0xff] %v4541
      %p4574 = scmp.lt.s32.totalorder %s16, 1
      %s4575 = scalar_select %p4574, %s16, 1
      %s4576 = smul.addr %s4575, 32
      %s4577 = smul.addr %s4576, 8
      %s4578 = scalar_lea.vmem %s5, %s4577
      // Predicated region
      $region41: #{unet_conv2_forward.4} parent=39 // pred_check
        %p4579 = pneg %p144
      $region42: #{unet_conv2_forward.4} parent=39 // pred_check_branch
        %4581 = sbr.rel (%p4579) target = $region44
      $region43: #{unet_conv2_forward.4} parent=39 // pred_region
        _
      $region44: #{unet_conv2_forward.4} parent=39 // pred_fallthru
        _
    $region40: #{unet_conv2_forward.4} parent=5 // pred_fallthru
      _
    %p4582 = scmp.le.s32.totalorder 2, %s11
    // Predicated region
    $region45: #{unet_conv2_forward.4} parent=5 // pred_check
      %p4583 = pneg %p4582
    $region46: #{unet_conv2_forward.4} parent=5 // pred_check_branch
      %4585 = sbr.rel (%p4583) target = $region48
    $region47: #{unet_conv2_forward.4} parent=5 // pred_region
      %s4586 = ssub.s32 %s11, 2
      // Predicated region
      $region49: #{unet_conv2_forward.4} parent=47 // pred_check
        %p4587 = pneg %p150
      $region50: #{unet_conv2_forward.4} parent=47 // pred_check_branch
        %4589 = sbr.rel (%p4587) target = $region52
      $region51: #{unet_conv2_forward.4} parent=47 // pred_region
        %p4590 = scmp.lt.s32.totalorder %s17, 1
        %s4591 = scalar_select %p4590, %s17, 1
        %s4592 = smul.addr %s4591, 32
        %s4593 = smul.addr %s4592, 8
        %s4594 = scalar_lea.vmem %s5, %s4593
      $region52: #{unet_conv2_forward.4} parent=47 // pred_fallthru
        _
    $region48: #{unet_conv2_forward.4} parent=5 // pred_fallthru
      _
  $region6: #{unet_conv2_forward.4} parent=0 // loop_footer
    %s15 = sadd.s32 1, %s11
  $region7: #{unet_conv2_forward.4} parent=0 // loop_footer_branch
    %10 = sbr.rel target = $region3
  $region8: #{unet_conv2_forward.4} parent=0 // loop_exit
    _

</llo_original>
